<compile_context>
chip_gen: v6e
topology: v6e:2x2x1
jax: 0.10.0
libtpu: 0.0.40
codegen_flags: <defaults>
</compile_context>

<pallas_src>
import functools

import jax
import jax.numpy as jnp
from jax.experimental import pallas as pl
from jax.experimental.pallas import tpu as pltpu


LANE = 128   # TPU lane width; feature / head minor dims are padded to this


def _round_up(x, m):
    return (x + m - 1) // m * m


# ----------------------------- Pallas kernel ---------------------------------

def metric_kernel(x_ref, wc_ref, bc_ref, wh_ref, bh_ref, w2_ref, b2_ref,
                  out_ref, acc_ref, *, H, W, C):
    """One batch tile per grid step; conv taps built in VMEM, GAP fused in f32.

    x_ref   : (B, PHW, C)    bf16  zero-padded image, (H+2)*(W+2) rows (+ pad rows)
    wc_ref  : (9*C, Fp)      bf16  conv weight, K unpadded, F padded to 128
    bc_ref  : (1, Fp)        f32   conv bias
    wh_ref  : (Fp, Fp+LANE)  bf16  fused [simclr_linear1 | shift_cls] weight
    bh_ref  : (1, Fp+LANE)   f32   fused [b1 | bs] bias
    w2_ref  : (Fp, Dp)       bf16  simclr_linear2 weight
    b2_ref  : (1, Dp)        f32   simclr_linear2 bias
    out_ref : (B, Dp+LANE)   f32   [simclr | shift (zero padded)] output slab
    acc_ref : (B*SLAB, Fp)   f32   conv accumulator scratch, SLAB = H*(W+2)
    """
    B = x_ref.shape[0]
    Fp = wc_ref.shape[1]
    Dp = w2_ref.shape[1]
    Wp = W + 2
    SLAB = H * Wp          # conv rows per element; columns W..W+1 of each row are junk

    # conv3x3 as in-kernel im2col: 9 shifted sublane slices of the padded image, each
    # contracted over the C input channels on the MXU and accumulated in f32.
    for t in range(9):
        di, dj = divmod(t, 3)
        off = di * Wp + dj                                    # static per-tap offset
        slab = x_ref[:, pl.ds(off, SLAB), :].reshape(B * SLAB, C)
        tap = jnp.dot(slab, wc_ref[pl.ds(t * C, C), :],
                      preferred_element_type=jnp.float32)     # (B*SLAB, Fp)
        if t == 0:
            acc_ref[...] = tap
        else:
            acc_ref[...] += tap

    conv = jnp.maximum(acc_ref[...] + bc_ref[...], 0.0)       # bias + ReLU (f32)

    # Fused global average pool: mask the 2 junk columns of each image row (their
    # positions are static), then a per-element sublane sum -- all in f32, no pool
    # matrix operand, no extra bf16 rounding of the conv activations.
    col = jax.lax.broadcasted_iota(jnp.int32, (B * SLAB, 1), 0) % Wp
    conv = jnp.where(col < W, conv, 0.0)
    feat = conv.reshape(B, SLAB, Fp).sum(axis=1) * (1.0 / (H * W))   # (B, Fp)

    # Fused head stage 1: feat @ [w1 | ws] in a single GEMM.
    z = jnp.dot(feat.astype(jnp.bfloat16), wh_ref[...],
                preferred_element_type=jnp.float32) + bh_ref[...]    # (B, Fp+LANE)

    # simclr head: ReLU on the first Fp columns, then linear2.
    h = jnp.maximum(z[:, :Fp], 0.0)
    simclr = jnp.dot(h.astype(jnp.bfloat16), w2_ref[...],
                     preferred_element_type=jnp.float32) + b2_ref[...]  # (B, Dp)

    # Lane-aligned, unmasked stores into the merged output slab.
    out_ref[:, :Dp] = simclr
    out_ref[:, Dp:] = z[:, Fp:]          # shift logits (zero padded to LANE)


# ------------------------------- wrapper --------------------------------------

def metric_model_forward(x_nchw, params, simclr_dim=128):
    """Equivalent of MetricModel.forward(x, shift=True). Returns dict(simclr, shift)."""
    N, C, H, W = x_nchw.shape
    F = params["wc"].shape[1]
    Fp = _round_up(F, LANE)
    Dp = _round_up(simclr_dim, LANE)

    Wp = W + 2
    SLAB = H * Wp
    PHW0 = (H + 2) * Wp
    PHW = _round_up(PHW0 + 2, 8)    # + room for the last tap's (masked) overrun

    # --- plain-JAX glue: layout only (no im2col, no K/C lane padding in HBM) ---
    x_nhwc = jnp.transpose(x_nchw, (0, 2, 3, 1))
    xp = jnp.pad(x_nhwc, ((0, 0), (1, 1), (1, 1), (0, 0)))          # conv padding=1
    xp = xp.reshape(N, PHW0, C)
    xp = jnp.pad(xp, ((0, 0), (0, PHW - PHW0), (0, 0))).astype(jnp.bfloat16)

    # Batch tiling: for small N a single step covers the exact batch (block == full
    # array dims -> no sublane-8 padding, no dead rows).  Larger batches use
    # multiple-of-8 tiles: >= 2 "parallel" steps (both TensorCores on v7x) and a
    # bigger M for MXU-efficient head GEMMs on v6e, while the per-step footprint
    # stays small enough for v7x's 64 MiB VMEM.
    if N <= 8:
        B = N
    else:
        B = 32 if N % 32 == 0 else 8
    Np = _round_up(N, B)
    if Np > N:
        xp = jnp.pad(xp, ((0, Np - N), (0, 0), (0, 0)))

    wc = jnp.pad(params["wc"], ((0, 0), (0, Fp - F))).astype(jnp.bfloat16)  # K unpadded
    bc = jnp.pad(params["bc"], ((0, 0), (0, Fp - F)))

    w1 = jnp.pad(params["w1"], ((0, Fp - F), (0, Fp - F)))
    b1 = jnp.pad(params["b1"], ((0, 0), (0, Fp - F)))
    ws = jnp.pad(params["ws"], ((0, Fp - F), (0, LANE - params["ws"].shape[1])))
    bs = jnp.pad(params["bs"], ((0, 0), (0, LANE - params["bs"].shape[1])))
    wh = jnp.concatenate([w1, ws], axis=1).astype(jnp.bfloat16)     # (Fp, Fp+LANE)
    bh = jnp.concatenate([b1, bs], axis=1)                          # (1, Fp+LANE)

    w2 = jnp.pad(params["w2"],
                 ((0, Fp - F), (0, Dp - simclr_dim))).astype(jnp.bfloat16)
    b2 = jnp.pad(params["b2"], ((0, 0), (0, Dp - simclr_dim)))

    rep2 = lambda i: (0, 0)             # weights: same full block every grid step
    cost = pl.CostEstimate(
        flops=2 * Np * (SLAB * 9 * C * Fp + Fp * (Fp + LANE) + Fp * Dp),
        transcendentals=0,
        bytes_accessed=(xp.size * 2 + wc.size * 2 + wh.size * 2 + w2.size * 2
                        + (bc.size + bh.size + b2.size + Np * (Dp + LANE)) * 4))

    kernel = functools.partial(metric_kernel, H=H, W=W, C=C)
    out = pl.pallas_call(
        kernel,
        out_shape=jax.ShapeDtypeStruct((Np, Dp + LANE), jnp.float32),
        grid=(Np // B,),
        in_specs=[
            pl.BlockSpec((B, PHW, C), lambda i: (i, 0, 0)),   # raw padded image tile
            pl.BlockSpec((9 * C, Fp), rep2),                  # conv W (K unpadded)
            pl.BlockSpec((1, Fp), rep2),                      # conv b
            pl.BlockSpec((Fp, Fp + LANE), rep2),              # fused [w1 | ws]
            pl.BlockSpec((1, Fp + LANE), rep2),               # fused [b1 | bs]
            pl.BlockSpec((Fp, Dp), rep2),                     # simclr linear2 W
            pl.BlockSpec((1, Dp), rep2),                      # simclr linear2 b
        ],
        out_specs=pl.BlockSpec((B, Dp + LANE), lambda i: (i, 0)),
        scratch_shapes=[pltpu.VMEM((B * SLAB, Fp), jnp.float32)],
        compiler_params=pltpu.CompilerParams(
            dimension_semantics=("parallel",),
            vmem_limit_bytes=32 * 1024 * 1024),
        cost_estimate=cost,
    )(xp, wc, bc, wh, bh, w2, b2)

    return {"simclr": out[:N, :simclr_dim],
            "shift": out[:N, Dp:Dp + 4]}


# ------------------------------- reference (JAX) ------------------------------

def im2col_3x3(x_nhwc):
    """3x3, stride 1, pad 1 patch extraction, (N, H*W, 9*C). Reference path only."""
    N, H, W, C = x_nhwc.shape
    xp = jnp.pad(x_nhwc, ((0, 0), (1, 1), (1, 1), (0, 0)))
    cols = []
    for di in range(3):
        for dj in range(3):
            cols.append(xp[:, di:di + H, dj:dj + W, :])
    patches = jnp.stack(cols, axis=3)            # (N, H, W, 9, C)
    return patches.reshape(N, H * W, 9 * C)


def init_params(key, c_in, num_features, simclr_dim):
    ks = jax.random.split(key, 9)
    s = 0.05
    # conv weight stored PyTorch-style (F, C, 3, 3), rearranged for the tap matmuls
    wconv = s * jax.random.normal(ks[0], (num_features, c_in, 3, 3), jnp.float32)
    wc = jnp.transpose(wconv, (2, 3, 1, 0)).reshape(9 * c_in, num_features)
    return {
        "wc": wc,
        "bc": s * jax.random.normal(ks[1], (1, num_features), jnp.float32),
        "w1": s * jax.random.normal(ks[2], (num_features, num_features), jnp.float32),
        "b1": s * jax.random.normal(ks[3], (1, num_features), jnp.float32),
        "w2": s * jax.random.normal(ks[4], (num_features, simclr_dim), jnp.float32),
        "b2": s * jax.random.normal(ks[5], (1, simclr_dim), jnp.float32),
        "ws": s * jax.random.normal(ks[6], (num_features, 4), jnp.float32),
        "bs": s * jax.random.normal(ks[7], (1, 4), jnp.float32),
    }


def reference_forward(x_nchw, params):
    """Pure-JAX f32 reference matching MetricModel.forward(x, shift=True)."""
    x_nhwc = jnp.transpose(x_nchw, (0, 2, 3, 1))
    patches = im2col_3x3(x_nhwc)                                       # (N,HW,9C)
    conv = jnp.maximum(patches @ params["wc"] + params["bc"], 0.0)     # (N,HW,F)
    feat = jnp.mean(conv, axis=1)                                      # (N,F)
    h = jnp.maximum(feat @ params["w1"] + params["b1"], 0.0)
    simclr = h @ params["w2"] + params["b2"]
    shift = feat @ params["ws"] + params["bs"]
    return {"simclr": simclr, "shift": shift}


if __name__ == "__main__":
    N, C, H, W = 2, 4, 16, 16
    num_features, simclr_dim = 32, 128

    key = jax.random.PRNGKey(0)
    kx, kp = jax.random.split(key)
    x_nchw = jax.random.normal(kx, (N, C, H, W), jnp.float32)   # PyTorch NCHW input

    params = init_params(kp, C, num_features, simclr_dim)

    fwd = jax.jit(functools.partial(metric_model_forward, simclr_dim=simclr_dim))
    out = jax.block_until_ready(fwd(x_nchw, params))

    ref = reference_forward(x_nchw, params)
    # bf16 matmul operands (f32 accumulation, f32 pooling) vs f32 reference.
    assert jnp.allclose(out["simclr"], ref["simclr"], atol=2e-2, rtol=2e-2)
    assert jnp.allclose(out["shift"], ref["shift"], atol=2e-2, rtol=2e-2)
    assert out["simclr"].shape == (N, simclr_dim)
    assert out["shift"].shape == (N, 4)

    print("KERNEL_OK")
</pallas_src>

<mosaic_0001>
module attributes {stable_mosaic.version = 11 : i64} {
  func.func @metric_kernel(%arg0: i32, %arg1: memref<2x328x4xbf16, #tpu.memory_space<vmem>>, %arg2: memref<36x128xbf16, #tpu.memory_space<vmem>>, %arg3: memref<1x128xf32, #tpu.memory_space<vmem>>, %arg4: memref<128x256xbf16, #tpu.memory_space<vmem>>, %arg5: memref<1x256xf32, #tpu.memory_space<vmem>>, %arg6: memref<128x128xbf16, #tpu.memory_space<vmem>>, %arg7: memref<1x128xf32, #tpu.memory_space<vmem>>, %arg8: memref<2x256xf32, #tpu.memory_space<vmem>>, %arg9: memref<576x128xf32, #tpu.memory_space<vmem>>) attributes {dimension_semantics = [#tpu.dimension_semantics<parallel>], iteration_bounds = array<i64: 1>, scalar_prefetch = 0 : i64, scratch_operands = 1 : i64, tpu.core_type = #tpu.core_type<tc>, window_params = [{transform_indices = @transform_0, window_bounds = array<i64: 2, 328, 4>}, {pipeline_mode = #tpu.pipeline_mode<synchronous>, transform_indices = @transform_1, window_bounds = array<i64: 36, 128>}, {pipeline_mode = #tpu.pipeline_mode<synchronous>, transform_indices = @transform_2, window_bounds = array<i64: 1, 128>}, {pipeline_mode = #tpu.pipeline_mode<synchronous>, transform_indices = @transform_3, window_bounds = array<i64: 128, 256>}, {pipeline_mode = #tpu.pipeline_mode<synchronous>, transform_indices = @transform_4, window_bounds = array<i64: 1, 256>}, {pipeline_mode = #tpu.pipeline_mode<synchronous>, transform_indices = @transform_5, window_bounds = array<i64: 128, 128>}, {pipeline_mode = #tpu.pipeline_mode<synchronous>, transform_indices = @transform_6, window_bounds = array<i64: 1, 128>}, {transform_indices = @transform_7, window_bounds = array<i64: 2, 256>}]} {
    %c0 = arith.constant 0 : index
    %c0_0 = arith.constant 0 : index
    %c0_1 = arith.constant 0 : index
    %0 = vector.load %arg1[%c0, %c0_0, %c0_1] : memref<2x328x4xbf16, #tpu.memory_space<vmem>>, vector<2x288x4xbf16>
    %1 = vector.shape_cast %0 : vector<2x288x4xbf16> to vector<576x4xbf16>
    %c0_2 = arith.constant 0 : index
    %c0_3 = arith.constant 0 : index
    %2 = vector.load %arg2[%c0_2, %c0_3] : memref<36x128xbf16, #tpu.memory_space<vmem>>, vector<4x128xbf16>
    %cst = arith.constant dense<0.000000e+00> : vector<576x128xf32>
    %3 = tpu.matmul %1, %2, %cst {dimension_numbers = #tpu.dot_dimension_numbers<[1], [0], [0], [1], [0, 0, 1, 1], [], []>} : vector<576x4xbf16>, vector<4x128xbf16>, vector<576x128xf32> -> vector<576x128xf32>
    %c0_4 = arith.constant 0 : index
    %c0_5 = arith.constant 0 : index
    %4 = vector.load %arg9[%c0_4, %c0_5] : memref<576x128xf32, #tpu.memory_space<vmem>>, vector<576x128xf32>
    tpu.vector_store %arg9[%c0_4, %c0_5], %3 {strides = array<i32>} : memref<576x128xf32, #tpu.memory_space<vmem>>, vector<576x128xf32>,
    %c0_6 = arith.constant 0 : index
    %c1 = arith.constant 1 : index
    %c0_7 = arith.constant 0 : index
    %5 = vector.load %arg1[%c0_6, %c1, %c0_7] : memref<2x328x4xbf16, #tpu.memory_space<vmem>>, vector<2x288x4xbf16>
    %6 = vector.shape_cast %5 : vector<2x288x4xbf16> to vector<576x4xbf16>
    %c4 = arith.constant 4 : index
    %c0_8 = arith.constant 0 : index
    %7 = vector.load %arg2[%c4, %c0_8] : memref<36x128xbf16, #tpu.memory_space<vmem>>, vector<4x128xbf16>
    %cst_9 = arith.constant dense<0.000000e+00> : vector<576x128xf32>
    %8 = tpu.matmul %6, %7, %cst_9 {dimension_numbers = #tpu.dot_dimension_numbers<[1], [0], [0], [1], [0, 0, 1, 1], [], []>} : vector<576x4xbf16>, vector<4x128xbf16>, vector<576x128xf32> -> vector<576x128xf32>
    %c0_10 = arith.constant 0 : index
    %c0_11 = arith.constant 0 : index
    %9 = vector.load %arg9[%c0_10, %c0_11] : memref<576x128xf32, #tpu.memory_space<vmem>>, vector<576x128xf32>
    %10 = arith.addf %9, %8 : vector<576x128xf32>
    %c0_12 = arith.constant 0 : index
    %c0_13 = arith.constant 0 : index
    %11 = vector.load %arg9[%c0_12, %c0_13] : memref<576x128xf32, #tpu.memory_space<vmem>>, vector<576x128xf32>
    tpu.vector_store %arg9[%c0_12, %c0_13], %10 {strides = array<i32>} : memref<576x128xf32, #tpu.memory_space<vmem>>, vector<576x128xf32>,
    %c0_14 = arith.constant 0 : index
    %c2 = arith.constant 2 : index
    %c0_15 = arith.constant 0 : index
    %12 = vector.load %arg1[%c0_14, %c2, %c0_15] : memref<2x328x4xbf16, #tpu.memory_space<vmem>>, vector<2x288x4xbf16>
    %13 = vector.shape_cast %12 : vector<2x288x4xbf16> to vector<576x4xbf16>
    %c8 = arith.constant 8 : index
    %c0_16 = arith.constant 0 : index
    %14 = vector.load %arg2[%c8, %c0_16] : memref<36x128xbf16, #tpu.memory_space<vmem>>, vector<4x128xbf16>
    %cst_17 = arith.constant dense<0.000000e+00> : vector<576x128xf32>
    %15 = tpu.matmul %13, %14, %cst_17 {dimension_numbers = #tpu.dot_dimension_numbers<[1], [0], [0], [1], [0, 0, 1, 1], [], []>} : vector<576x4xbf16>, vector<4x128xbf16>, vector<576x128xf32> -> vector<576x128xf32>
    %c0_18 = arith.constant 0 : index
    %c0_19 = arith.constant 0 : index
    %16 = vector.load %arg9[%c0_18, %c0_19] : memref<576x128xf32, #tpu.memory_space<vmem>>, vector<576x128xf32>
    %17 = arith.addf %16, %15 : vector<576x128xf32>
    %c0_20 = arith.constant 0 : index
    %c0_21 = arith.constant 0 : index
    %18 = vector.load %arg9[%c0_20, %c0_21] : memref<576x128xf32, #tpu.memory_space<vmem>>, vector<576x128xf32>
    tpu.vector_store %arg9[%c0_20, %c0_21], %17 {strides = array<i32>} : memref<576x128xf32, #tpu.memory_space<vmem>>, vector<576x128xf32>,
    %c0_22 = arith.constant 0 : index
    %c18 = arith.constant 18 : index
    %c0_23 = arith.constant 0 : index
    %19 = vector.load %arg1[%c0_22, %c18, %c0_23] : memref<2x328x4xbf16, #tpu.memory_space<vmem>>, vector<2x288x4xbf16>
    %20 = vector.shape_cast %19 : vector<2x288x4xbf16> to vector<576x4xbf16>
    %c12 = arith.constant 12 : index
    %c0_24 = arith.constant 0 : index
    %21 = vector.load %arg2[%c12, %c0_24] : memref<36x128xbf16, #tpu.memory_space<vmem>>, vector<4x128xbf16>
    %cst_25 = arith.constant dense<0.000000e+00> : vector<576x128xf32>
    %22 = tpu.matmul %20, %21, %cst_25 {dimension_numbers = #tpu.dot_dimension_numbers<[1], [0], [0], [1], [0, 0, 1, 1], [], []>} : vector<576x4xbf16>, vector<4x128xbf16>, vector<576x128xf32> -> vector<576x128xf32>
    %c0_26 = arith.constant 0 : index
    %c0_27 = arith.constant 0 : index
    %23 = vector.load %arg9[%c0_26, %c0_27] : memref<576x128xf32, #tpu.memory_space<vmem>>, vector<576x128xf32>
    %24 = arith.addf %23, %22 : vector<576x128xf32>
    %c0_28 = arith.constant 0 : index
    %c0_29 = arith.constant 0 : index
    %25 = vector.load %arg9[%c0_28, %c0_29] : memref<576x128xf32, #tpu.memory_space<vmem>>, vector<576x128xf32>
    tpu.vector_store %arg9[%c0_28, %c0_29], %24 {strides = array<i32>} : memref<576x128xf32, #tpu.memory_space<vmem>>, vector<576x128xf32>,
    %c0_30 = arith.constant 0 : index
    %c19 = arith.constant 19 : index
    %c0_31 = arith.constant 0 : index
    %26 = vector.load %arg1[%c0_30, %c19, %c0_31] : memref<2x328x4xbf16, #tpu.memory_space<vmem>>, vector<2x288x4xbf16>
    %27 = vector.shape_cast %26 : vector<2x288x4xbf16> to vector<576x4xbf16>
    %c16 = arith.constant 16 : index
    %c0_32 = arith.constant 0 : index
    %28 = vector.load %arg2[%c16, %c0_32] : memref<36x128xbf16, #tpu.memory_space<vmem>>, vector<4x128xbf16>
    %cst_33 = arith.constant dense<0.000000e+00> : vector<576x128xf32>
    %29 = tpu.matmul %27, %28, %cst_33 {dimension_numbers = #tpu.dot_dimension_numbers<[1], [0], [0], [1], [0, 0, 1, 1], [], []>} : vector<576x4xbf16>, vector<4x128xbf16>, vector<576x128xf32> -> vector<576x128xf32>
    %c0_34 = arith.constant 0 : index
    %c0_35 = arith.constant 0 : index
    %30 = vector.load %arg9[%c0_34, %c0_35] : memref<576x128xf32, #tpu.memory_space<vmem>>, vector<576x128xf32>
    %31 = arith.addf %30, %29 : vector<576x128xf32>
    %c0_36 = arith.constant 0 : index
    %c0_37 = arith.constant 0 : index
    %32 = vector.load %arg9[%c0_36, %c0_37] : memref<576x128xf32, #tpu.memory_space<vmem>>, vector<576x128xf32>
    tpu.vector_store %arg9[%c0_36, %c0_37], %31 {strides = array<i32>} : memref<576x128xf32, #tpu.memory_space<vmem>>, vector<576x128xf32>,
    %c0_38 = arith.constant 0 : index
    %c20 = arith.constant 20 : index
    %c0_39 = arith.constant 0 : index
    %33 = vector.load %arg1[%c0_38, %c20, %c0_39] : memref<2x328x4xbf16, #tpu.memory_space<vmem>>, vector<2x288x4xbf16>
    %34 = vector.shape_cast %33 : vector<2x288x4xbf16> to vector<576x4xbf16>
    %c20_40 = arith.constant 20 : index
    %c0_41 = arith.constant 0 : index
    %35 = vector.load %arg2[%c20_40, %c0_41] : memref<36x128xbf16, #tpu.memory_space<vmem>>, vector<4x128xbf16>
    %cst_42 = arith.constant dense<0.000000e+00> : vector<576x128xf32>
    %36 = tpu.matmul %34, %35, %cst_42 {dimension_numbers = #tpu.dot_dimension_numbers<[1], [0], [0], [1], [0, 0, 1, 1], [], []>} : vector<576x4xbf16>, vector<4x128xbf16>, vector<576x128xf32> -> vector<576x128xf32>
    %c0_43 = arith.constant 0 : index
    %c0_44 = arith.constant 0 : index
    %37 = vector.load %arg9[%c0_43, %c0_44] : memref<576x128xf32, #tpu.memory_space<vmem>>, vector<576x128xf32>
    %38 = arith.addf %37, %36 : vector<576x128xf32>
    %c0_45 = arith.constant 0 : index
    %c0_46 = arith.constant 0 : index
    %39 = vector.load %arg9[%c0_45, %c0_46] : memref<576x128xf32, #tpu.memory_space<vmem>>, vector<576x128xf32>
    tpu.vector_store %arg9[%c0_45, %c0_46], %38 {strides = array<i32>} : memref<576x128xf32, #tpu.memory_space<vmem>>, vector<576x128xf32>,
    %c0_47 = arith.constant 0 : index
    %c36 = arith.constant 36 : index
    %c0_48 = arith.constant 0 : index
    %40 = vector.load %arg1[%c0_47, %c36, %c0_48] : memref<2x328x4xbf16, #tpu.memory_space<vmem>>, vector<2x288x4xbf16>
    %41 = vector.shape_cast %40 : vector<2x288x4xbf16> to vector<576x4xbf16>
    %c24 = arith.constant 24 : index
    %c0_49 = arith.constant 0 : index
    %42 = vector.load %arg2[%c24, %c0_49] : memref<36x128xbf16, #tpu.memory_space<vmem>>, vector<4x128xbf16>
    %cst_50 = arith.constant dense<0.000000e+00> : vector<576x128xf32>
    %43 = tpu.matmul %41, %42, %cst_50 {dimension_numbers = #tpu.dot_dimension_numbers<[1], [0], [0], [1], [0, 0, 1, 1], [], []>} : vector<576x4xbf16>, vector<4x128xbf16>, vector<576x128xf32> -> vector<576x128xf32>
    %c0_51 = arith.constant 0 : index
    %c0_52 = arith.constant 0 : index
    %44 = vector.load %arg9[%c0_51, %c0_52] : memref<576x128xf32, #tpu.memory_space<vmem>>, vector<576x128xf32>
    %45 = arith.addf %44, %43 : vector<576x128xf32>
    %c0_53 = arith.constant 0 : index
    %c0_54 = arith.constant 0 : index
    %46 = vector.load %arg9[%c0_53, %c0_54] : memref<576x128xf32, #tpu.memory_space<vmem>>, vector<576x128xf32>
    tpu.vector_store %arg9[%c0_53, %c0_54], %45 {strides = array<i32>} : memref<576x128xf32, #tpu.memory_space<vmem>>, vector<576x128xf32>,
    %c0_55 = arith.constant 0 : index
    %c37 = arith.constant 37 : index
    %c0_56 = arith.constant 0 : index
    %47 = vector.load %arg1[%c0_55, %c37, %c0_56] : memref<2x328x4xbf16, #tpu.memory_space<vmem>>, vector<2x288x4xbf16>
    %48 = vector.shape_cast %47 : vector<2x288x4xbf16> to vector<576x4xbf16>
    %c28 = arith.constant 28 : index
    %c0_57 = arith.constant 0 : index
    %49 = vector.load %arg2[%c28, %c0_57] : memref<36x128xbf16, #tpu.memory_space<vmem>>, vector<4x128xbf16>
    %cst_58 = arith.constant dense<0.000000e+00> : vector<576x128xf32>
    %50 = tpu.matmul %48, %49, %cst_58 {dimension_numbers = #tpu.dot_dimension_numbers<[1], [0], [0], [1], [0, 0, 1, 1], [], []>} : vector<576x4xbf16>, vector<4x128xbf16>, vector<576x128xf32> -> vector<576x128xf32>
    %c0_59 = arith.constant 0 : index
    %c0_60 = arith.constant 0 : index
    %51 = vector.load %arg9[%c0_59, %c0_60] : memref<576x128xf32, #tpu.memory_space<vmem>>, vector<576x128xf32>
    %52 = arith.addf %51, %50 : vector<576x128xf32>
    %c0_61 = arith.constant 0 : index
    %c0_62 = arith.constant 0 : index
    %53 = vector.load %arg9[%c0_61, %c0_62] : memref<576x128xf32, #tpu.memory_space<vmem>>, vector<576x128xf32>
    tpu.vector_store %arg9[%c0_61, %c0_62], %52 {strides = array<i32>} : memref<576x128xf32, #tpu.memory_space<vmem>>, vector<576x128xf32>,
    %c0_63 = arith.constant 0 : index
    %c38 = arith.constant 38 : index
    %c0_64 = arith.constant 0 : index
    %54 = vector.load %arg1[%c0_63, %c38, %c0_64] : memref<2x328x4xbf16, #tpu.memory_space<vmem>>, vector<2x288x4xbf16>
    %55 = vector.shape_cast %54 : vector<2x288x4xbf16> to vector<576x4xbf16>
    %c32 = arith.constant 32 : index
    %c0_65 = arith.constant 0 : index
    %56 = vector.load %arg2[%c32, %c0_65] : memref<36x128xbf16, #tpu.memory_space<vmem>>, vector<4x128xbf16>
    %cst_66 = arith.constant dense<0.000000e+00> : vector<576x128xf32>
    %57 = tpu.matmul %55, %56, %cst_66 {dimension_numbers = #tpu.dot_dimension_numbers<[1], [0], [0], [1], [0, 0, 1, 1], [], []>} : vector<576x4xbf16>, vector<4x128xbf16>, vector<576x128xf32> -> vector<576x128xf32>
    %c0_67 = arith.constant 0 : index
    %c0_68 = arith.constant 0 : index
    %58 = vector.load %arg9[%c0_67, %c0_68] : memref<576x128xf32, #tpu.memory_space<vmem>>, vector<576x128xf32>
    %59 = arith.addf %58, %57 : vector<576x128xf32>
    %c0_69 = arith.constant 0 : index
    %c0_70 = arith.constant 0 : index
    %60 = vector.load %arg9[%c0_69, %c0_70] : memref<576x128xf32, #tpu.memory_space<vmem>>, vector<576x128xf32>
    tpu.vector_store %arg9[%c0_69, %c0_70], %59 {strides = array<i32>} : memref<576x128xf32, #tpu.memory_space<vmem>>, vector<576x128xf32>,
    %c0_71 = arith.constant 0 : index
    %c0_72 = arith.constant 0 : index
    %61 = vector.load %arg9[%c0_71, %c0_72] : memref<576x128xf32, #tpu.memory_space<vmem>>, vector<576x128xf32>
    %c0_73 = arith.constant 0 : index
    %c0_74 = arith.constant 0 : index
    %62 = vector.load %arg3[%c0_73, %c0_74] : memref<1x128xf32, #tpu.memory_space<vmem>>, vector<1x128xf32>
    %63 = vector.broadcast %62 : vector<1x128xf32> to vector<576x128xf32>
    %64 = arith.addf %61, %63 : vector<576x128xf32>
    %cst_75 = arith.constant 0.000000e+00 : f32
    %65 = vector.broadcast %cst_75 : f32 to vector<576x128xf32>
    %66 = arith.maximumf %64, %65 : vector<576x128xf32>
    %67 = tpu.iota {dimensions = array<i32: 0>} : vector<576x1xi32>
    %c18_i32 = arith.constant 18 : i32
    %c0_i32 = arith.constant 0 : i32
    %68 = arith.cmpi eq, %c18_i32, %c0_i32 : i32
    %c1_i32 = arith.constant 1 : i32
    %69 = arith.select %68, %c1_i32, %c18_i32 : i32
    %70 = vector.broadcast %69 : i32 to vector<576x1xi32>
    %71 = arith.remsi %67, %70 : vector<576x1xi32>
    %c0_i32_76 = arith.constant 0 : i32
    %72 = vector.broadcast %c0_i32_76 : i32 to vector<576x1xi32>
    %73 = arith.cmpi ne, %71, %72 : vector<576x1xi32>
    %c0_i32_77 = arith.constant 0 : i32
    %74 = vector.broadcast %c0_i32_77 : i32 to vector<576x1xi32>
    %75 = arith.cmpi slt, %71, %74 : vector<576x1xi32>
    %c0_i32_78 = arith.constant 0 : i32
    %76 = arith.cmpi slt, %69, %c0_i32_78 : i32
    %77 = vector.broadcast %76 : i1 to vector<576x1xi1>
    %78 = vector.broadcast %77 : vector<576x1xi1> to vector<576x1xi1>
    %79 = arith.xori %75, %78 : vector<576x1xi1>
    %80 = arith.andi %79, %73 : vector<576x1xi1>
    %81 = vector.broadcast %69 : i32 to vector<576x1xi32>
    %82 = arith.addi %71, %81 : vector<576x1xi32>
    %83 = arith.select %80, %82, %71 : vector<576x1xi1>, vector<576x1xi32>
    %c16_i32 = arith.constant 16 : i32
    %84 = vector.broadcast %c16_i32 : i32 to vector<576x1xi32>
    %85 = arith.cmpi slt, %83, %84 : vector<576x1xi32>
    %cst_79 = arith.constant 0.000000e+00 : f32
    %86 = vector.shape_cast %85 : vector<576x1xi1> to vector<576x1xi1>
    %87 = vector.broadcast %86 : vector<576x1xi1> to vector<576x128xi1>
    %88 = vector.broadcast %cst_79 : f32 to vector<576x128xf32>
    %89 = arith.select %87, %66, %88 : vector<576x128xi1>, vector<576x128xf32>
    %90 = vector.shape_cast %89 : vector<576x128xf32> to vector<2x288x128xf32>
    %cst_80 = arith.constant dense<0.000000e+00> : vector<2x128xf32>
    %91 = vector.multi_reduction <add>, %90, %cst_80 [1] : vector<2x288x128xf32> to vector<2x128xf32>
    %cst_81 = arith.constant 3.906250e-03 : f32
    %92 = vector.broadcast %cst_81 : f32 to vector<2x128xf32>
    %93 = arith.mulf %91, %92 : vector<2x128xf32>
    %94 = arith.truncf %93 : vector<2x128xf32> to vector<2x128xbf16>
    %c0_82 = arith.constant 0 : index
    %c0_83 = arith.constant 0 : index
    %95 = vector.load %arg4[%c0_82, %c0_83] : memref<128x256xbf16, #tpu.memory_space<vmem>>, vector<128x256xbf16>
    %cst_84 = arith.constant dense<0.000000e+00> : vector<2x256xf32>
    %96 = tpu.matmul %94, %95, %cst_84 {dimension_numbers = #tpu.dot_dimension_numbers<[1], [0], [0], [1], [0, 0, 1, 1], [], []>} : vector<2x128xbf16>, vector<128x256xbf16>, vector<2x256xf32> -> vector<2x256xf32>
    %c0_85 = arith.constant 0 : index
    %c0_86 = arith.constant 0 : index
    %97 = vector.load %arg5[%c0_85, %c0_86] : memref<1x256xf32, #tpu.memory_space<vmem>>, vector<1x256xf32>
    %98 = vector.broadcast %97 : vector<1x256xf32> to vector<2x256xf32>
    %99 = arith.addf %96, %98 : vector<2x256xf32>
    %100 = vector.extract_strided_slice %99 {offsets = [0, 0], sizes = [2, 128], strides = [1, 1]} : vector<2x256xf32> to vector<2x128xf32>
    %cst_87 = arith.constant 0.000000e+00 : f32
    %101 = vector.broadcast %cst_87 : f32 to vector<2x128xf32>
    %102 = arith.maximumf %100, %101 : vector<2x128xf32>
    %103 = arith.truncf %102 : vector<2x128xf32> to vector<2x128xbf16>
    %c0_88 = arith.constant 0 : index
    %c0_89 = arith.constant 0 : index
    %104 = vector.load %arg6[%c0_88, %c0_89] : memref<128x128xbf16, #tpu.memory_space<vmem>>, vector<128x128xbf16>
    %cst_90 = arith.constant dense<0.000000e+00> : vector<2x128xf32>
    %105 = tpu.matmul %103, %104, %cst_90 {dimension_numbers = #tpu.dot_dimension_numbers<[1], [0], [0], [1], [0, 0, 1, 1], [], []>} : vector<2x128xbf16>, vector<128x128xbf16>, vector<2x128xf32> -> vector<2x128xf32>
    %c0_91 = arith.constant 0 : index
    %c0_92 = arith.constant 0 : index
    %106 = vector.load %arg7[%c0_91, %c0_92] : memref<1x128xf32, #tpu.memory_space<vmem>>, vector<1x128xf32>
    %107 = vector.broadcast %106 : vector<1x128xf32> to vector<2x128xf32>
    %108 = arith.addf %105, %107 : vector<2x128xf32>
    %c0_93 = arith.constant 0 : index
    %c0_94 = arith.constant 0 : index
    %109 = vector.load %arg8[%c0_93, %c0_94] : memref<2x256xf32, #tpu.memory_space<vmem>>, vector<2x128xf32>
    tpu.vector_store %arg8[%c0_93, %c0_94], %108 {strides = array<i32>} : memref<2x256xf32, #tpu.memory_space<vmem>>, vector<2x128xf32>,
    %110 = vector.extract_strided_slice %99 {offsets = [0, 128], sizes = [2, 128], strides = [1, 1]} : vector<2x256xf32> to vector<2x128xf32>
    %c0_95 = arith.constant 0 : index
    %c128 = arith.constant 128 : index
    %111 = vector.load %arg8[%c0_95, %c128] : memref<2x256xf32, #tpu.memory_space<vmem>>, vector<2x128xf32>
    tpu.vector_store %arg8[%c0_95, %c128], %110 {strides = array<i32>} : memref<2x256xf32, #tpu.memory_space<vmem>>, vector<2x128xf32>,
    return
  }
  func.func @transform_0(%arg0: i32) -> (i32, i32, i32) {
    %c0_i32 = arith.constant 0 : i32
    %c0_i32_0 = arith.constant 0 : i32
    %c0_i32_1 = arith.constant 0 : i32
    return %arg0, %c0_i32, %c0_i32_0 : i32, i32, i32
  }
  func.func @transform_1(%arg0: i32) -> (i32, i32) {
    %c0_i32 = arith.constant 0 : i32
    %c0_i32_0 = arith.constant 0 : i32
    %c0_i32_1 = arith.constant 0 : i32
    return %c0_i32, %c0_i32_0 : i32, i32
  }
  func.func @transform_2(%arg0: i32) -> (i32, i32) {
    %c0_i32 = arith.constant 0 : i32
    %c0_i32_0 = arith.constant 0 : i32
    %c0_i32_1 = arith.constant 0 : i32
    return %c0_i32, %c0_i32_0 : i32, i32
  }
  func.func @transform_3(%arg0: i32) -> (i32, i32) {
    %c0_i32 = arith.constant 0 : i32
    %c0_i32_0 = arith.constant 0 : i32
    %c0_i32_1 = arith.constant 0 : i32
    return %c0_i32, %c0_i32_0 : i32, i32
  }
  func.func @transform_4(%arg0: i32) -> (i32, i32) {
    %c0_i32 = arith.constant 0 : i32
    %c0_i32_0 = arith.constant 0 : i32
    %c0_i32_1 = arith.constant 0 : i32
    return %c0_i32, %c0_i32_0 : i32, i32
  }
  func.func @transform_5(%arg0: i32) -> (i32, i32) {
    %c0_i32 = arith.constant 0 : i32
    %c0_i32_0 = arith.constant 0 : i32
    %c0_i32_1 = arith.constant 0 : i32
    return %c0_i32, %c0_i32_0 : i32, i32
  }
  func.func @transform_6(%arg0: i32) -> (i32, i32) {
    %c0_i32 = arith.constant 0 : i32
    %c0_i32_0 = arith.constant 0 : i32
    %c0_i32_1 = arith.constant 0 : i32
    return %c0_i32, %c0_i32_0 : i32, i32
  }
  func.func @transform_7(%arg0: i32) -> (i32, i32) {
    %c0_i32 = arith.constant 0 : i32
    %c0_i32_0 = arith.constant 0 : i32
    return %arg0, %c0_i32 : i32, i32
  }
}

</mosaic_0001>

<llo_original>
// kernel: metric_model_forward.1
$region0: #{metric_model_forward.1}
  #allocation0 [shape = 'u32[]', space=smem, size = 0x4, offset = 0x4, fixed_abs, tag = 'smem constant byte address 0x4 - core index']
  #allocation1 [shape = 'u32[144,128]{1,0:T(1,128)}', space=vmem, size = 0x12000, scoped, tag = 'internal scratch']
  #allocation2 [shape = 'f32[576,128]{1,0:T(8,128)}', space=vmem, size = 0x48000, scoped, tag = 'scratch operand']
  %s0 = inlined_call_operand.vmem [shape: bf16[2,328,4], index: 0, kind: input, shape index: {}]
  %s1 = inlined_call_operand.vmem [shape: bf16[36,128], index: 1, kind: input, shape index: {}]
  %s2 = inlined_call_operand.vmem [shape: f32[1,128], index: 2, kind: input, shape index: {}]
  %s3 = inlined_call_operand.vmem [shape: bf16[128,256], index: 3, kind: input, shape index: {}]
  %s4 = inlined_call_operand.vmem [shape: f32[1,256], index: 4, kind: input, shape index: {}]
  %s5 = inlined_call_operand.vmem [shape: bf16[128,128], index: 5, kind: input, shape index: {}]
  %s6 = inlined_call_operand.vmem [shape: f32[1,128], index: 6, kind: input, shape index: {}]
  %s7 = inlined_call_operand.vmem [shape: f32[2,256], index: 7, kind: output, shape index: {}]
  %s8 = sld [smem:[#allocation0]]
  $region38: #{metric_model_forward.1} parent=0
    _
  %s10 = ssub.s32 1, %s8
  %s11 = scalar_select 0, %s10, %s8
  // Predicated region
  $region2: #{metric_model_forward.1} parent=0 // pred_check
    _
  $region3: #{metric_model_forward.1} parent=0 // pred_check_branch
    %13 = sbr.rel (0) target = $region5
  $region4: #{metric_model_forward.1} parent=0 // pred_region
    _
  $region5: #{metric_model_forward.1} parent=0 // pred_fallthru
    _
  // Predicated region
  $region6: #{metric_model_forward.1} parent=0 // pred_check
    _
  $region7: #{metric_model_forward.1} parent=0 // pred_check_branch
    %15 = sbr.rel (0) target = $region9
  $region8: #{metric_model_forward.1} parent=0 // pred_region
    _
  $region9: #{metric_model_forward.1} parent=0 // pred_fallthru
    _
  // Predicated region
  $region10: #{metric_model_forward.1} parent=0 // pred_check
    _
  $region11: #{metric_model_forward.1} parent=0 // pred_check_branch
    %17 = sbr.rel (0) target = $region13
  $region12: #{metric_model_forward.1} parent=0 // pred_region
    _
  $region13: #{metric_model_forward.1} parent=0 // pred_fallthru
    _
  // Predicated region
  $region14: #{metric_model_forward.1} parent=0 // pred_check
    _
  $region15: #{metric_model_forward.1} parent=0 // pred_check_branch
    %19 = sbr.rel (0) target = $region17
  $region16: #{metric_model_forward.1} parent=0 // pred_region
    _
  $region17: #{metric_model_forward.1} parent=0 // pred_fallthru
    _
  // Predicated region
  $region18: #{metric_model_forward.1} parent=0 // pred_check
    _
  $region19: #{metric_model_forward.1} parent=0 // pred_check_branch
    %21 = sbr.rel (0) target = $region21
  $region20: #{metric_model_forward.1} parent=0 // pred_region
    _
  $region21: #{metric_model_forward.1} parent=0 // pred_fallthru
    _
  // Predicated region
  $region22: #{metric_model_forward.1} parent=0 // pred_check
    _
  $region23: #{metric_model_forward.1} parent=0 // pred_check_branch
    %23 = sbr.rel (0) target = $region25
  $region24: #{metric_model_forward.1} parent=0 // pred_region
    _
  $region25: #{metric_model_forward.1} parent=0 // pred_fallthru
    _
  // Predicated region
  $region26: #{metric_model_forward.1} parent=0 // pred_check
    _
  $region27: #{metric_model_forward.1} parent=0 // pred_check_branch
    %25 = sbr.rel (0) target = $region29
  $region28: #{metric_model_forward.1} parent=0 // pred_region
    _
  $region29: #{metric_model_forward.1} parent=0 // pred_fallthru
    _
  %v27 = vld [vmem:[%s0] sm:$0xf]
  %v28 = vld [vmem:[%s0 + $0x4] sm:$0xf]
  %v29 = vld [vmem:[%s0 + $0x8] sm:$0xf]
  %v30 = vld [vmem:[%s0 + $0xc] sm:$0xf]
  %v31 = vld [vmem:[%s0 + $0x10] sm:$0xf]
  %v32 = vld [vmem:[%s0 + $0x14] sm:$0xf]
  %v33 = vld [vmem:[%s0 + $0x18] sm:$0xf]
  %v34 = vld [vmem:[%s0 + $0x1c] sm:$0xf]
  %v35 = vld [vmem:[%s0 + $0x20] sm:$0xf]
  %v36 = vld [vmem:[%s0 + $0x24] sm:$0xf]
  %v37 = vld [vmem:[%s0 + $0x28] sm:$0xf]
  %v38 = vld [vmem:[%s0 + $0x2c] sm:$0xf]
  %v39 = vld [vmem:[%s0 + $0x30] sm:$0xf]
  %v40 = vld [vmem:[%s0 + $0x34] sm:$0xf]
  %v41 = vld [vmem:[%s0 + $0x38] sm:$0xf]
  %v42 = vld [vmem:[%s0 + $0x3c] sm:$0xf]
  %v43 = vld [vmem:[%s0 + $0x40] sm:$0xf]
  %v44 = vld [vmem:[%s0 + $0x44] sm:$0xf]
  %v45 = vld [vmem:[%s0 + $0x48] sm:$0xf]
  %v46 = vld [vmem:[%s0 + $0x4c] sm:$0xf]
  %v47 = vld [vmem:[%s0 + $0x50] sm:$0xf]
  %v48 = vld [vmem:[%s0 + $0x54] sm:$0xf]
  %v49 = vld [vmem:[%s0 + $0x58] sm:$0xf]
  %v50 = vld [vmem:[%s0 + $0x5c] sm:$0xf]
  %v51 = vld [vmem:[%s0 + $0x60] sm:$0xf]
  %v52 = vld [vmem:[%s0 + $0x64] sm:$0xf]
  %v53 = vld [vmem:[%s0 + $0x68] sm:$0xf]
  %v54 = vld [vmem:[%s0 + $0x6c] sm:$0xf]
  %v55 = vld [vmem:[%s0 + $0x70] sm:$0xf]
  %v56 = vld [vmem:[%s0 + $0x74] sm:$0xf]
  %v57 = vld [vmem:[%s0 + $0x78] sm:$0xf]
  %v58 = vld [vmem:[%s0 + $0x7c] sm:$0xf]
  %v59 = vld [vmem:[%s0 + $0x80] sm:$0xf]
  %v60 = vld [vmem:[%s0 + $0x84] sm:$0xf]
  %v61 = vld [vmem:[%s0 + $0x88] sm:$0xf]
  %v62 = vld [vmem:[%s0 + $0x8c] sm:$0xf]
  %v63 = vld [vmem:[%s0 + $0xa4] sm:$0xf]
  %v64 = vld [vmem:[%s0 + $0xa8] sm:$0xf]
  %v65 = vld [vmem:[%s0 + $0xac] sm:$0xf]
  %v66 = vld [vmem:[%s0 + $0xb0] sm:$0xf]
  %v67 = vld [vmem:[%s0 + $0xb4] sm:$0xf]
  %v68 = vld [vmem:[%s0 + $0xb8] sm:$0xf]
  %v69 = vld [vmem:[%s0 + $0xbc] sm:$0xf]
  %v70 = vld [vmem:[%s0 + $0xc0] sm:$0xf]
  %v71 = vld [vmem:[%s0 + $0xc4] sm:$0xf]
  %v72 = vld [vmem:[%s0 + $0xc8] sm:$0xf]
  %v73 = vld [vmem:[%s0 + $0xcc] sm:$0xf]
  %v74 = vld [vmem:[%s0 + $0xd0] sm:$0xf]
  %v75 = vld [vmem:[%s0 + $0xd4] sm:$0xf]
  %v76 = vld [vmem:[%s0 + $0xd8] sm:$0xf]
  %v77 = vld [vmem:[%s0 + $0xdc] sm:$0xf]
  %v78 = vld [vmem:[%s0 + $0xe0] sm:$0xf]
  %v79 = vld [vmem:[%s0 + $0xe4] sm:$0xf]
  %v80 = vld [vmem:[%s0 + $0xe8] sm:$0xf]
  %v81 = vld [vmem:[%s0 + $0xec] sm:$0xf]
  %v82 = vld [vmem:[%s0 + $0xf0] sm:$0xf]
  %v83 = vld [vmem:[%s0 + $0xf4] sm:$0xf]
  %v84 = vld [vmem:[%s0 + $0xf8] sm:$0xf]
  %v85 = vld [vmem:[%s0 + $0xfc] sm:$0xf]
  %v86 = vld [vmem:[%s0 + $0x100] sm:$0xf]
  %v87 = vld [vmem:[%s0 + $0x104] sm:$0xf]
  %v88 = vld [vmem:[%s0 + $0x108] sm:$0xf]
  %v89 = vld [vmem:[%s0 + $0x10c] sm:$0xf]
  %v90 = vld [vmem:[%s0 + $0x110] sm:$0xf]
  %v91 = vld [vmem:[%s0 + $0x114] sm:$0xf]
  %v92 = vld [vmem:[%s0 + $0x118] sm:$0xf]
  %v93 = vld [vmem:[%s0 + $0x11c] sm:$0xf]
  %v94 = vld [vmem:[%s0 + $0x120] sm:$0xf]
  %v95 = vld [vmem:[%s0 + $0x124] sm:$0xf]
  %v96 = vld [vmem:[%s0 + $0x128] sm:$0xf]
  %v97 = vld [vmem:[%s0 + $0x12c] sm:$0xf]
  %v98 = vld [vmem:[%s0 + $0x130] sm:$0xf]
  %v99 = vld [vmem:[%s1] sm:$0x3]
  %v172 = vunpack.c.l.b16 %v27
  %v173 = vunpack.c.l.b16 %v28
  %v174 = vunpack.c.l.b16 %v29
  %v175 = vunpack.c.l.b16 %v30
  %v176 = vunpack.c.l.b16 %v31
  %v177 = vunpack.c.l.b16 %v32
  %v178 = vunpack.c.l.b16 %v33
  %v179 = vunpack.c.l.b16 %v34
  %v180 = vunpack.c.l.b16 %v35
  %v181 = vunpack.c.l.b16 %v36
  %v182 = vunpack.c.l.b16 %v37
  %v183 = vunpack.c.l.b16 %v38
  %v184 = vunpack.c.l.b16 %v39
  %v185 = vunpack.c.l.b16 %v40
  %v186 = vunpack.c.l.b16 %v41
  %v187 = vunpack.c.l.b16 %v42
  %v188 = vunpack.c.l.b16 %v43
  %v189 = vunpack.c.l.b16 %v44
  %v190 = vunpack.c.l.b16 %v45
  %v191 = vunpack.c.l.b16 %v46
  %v192 = vunpack.c.l.b16 %v47
  %v193 = vunpack.c.l.b16 %v48
  %v194 = vunpack.c.l.b16 %v49
  %v195 = vunpack.c.l.b16 %v50
  %v196 = vunpack.c.l.b16 %v51
  %v197 = vunpack.c.l.b16 %v52
  %v198 = vunpack.c.l.b16 %v53
  %v199 = vunpack.c.l.b16 %v54
  %v200 = vunpack.c.l.b16 %v55
  %v201 = vunpack.c.l.b16 %v56
  %v202 = vunpack.c.l.b16 %v57
  %v203 = vunpack.c.l.b16 %v58
  %v204 = vunpack.c.l.b16 %v59
  %v205 = vunpack.c.l.b16 %v60
  %v206 = vunpack.c.l.b16 %v61
  %v207 = vunpack.c.l.b16 %v62
  %v208 = vunpack.c.l.b16 %v63
  %v209 = vunpack.c.l.b16 %v64
  %v210 = vunpack.c.l.b16 %v65
  %v211 = vunpack.c.l.b16 %v66
  %v212 = vunpack.c.l.b16 %v67
  %v213 = vunpack.c.l.b16 %v68
  %v214 = vunpack.c.l.b16 %v69
  %v215 = vunpack.c.l.b16 %v70
  %v216 = vunpack.c.l.b16 %v71
  %v217 = vunpack.c.l.b16 %v72
  %v218 = vunpack.c.l.b16 %v73
  %v219 = vunpack.c.l.b16 %v74
  %v220 = vunpack.c.l.b16 %v75
  %v221 = vunpack.c.l.b16 %v76
  %v222 = vunpack.c.l.b16 %v77
  %v223 = vunpack.c.l.b16 %v78
  %v224 = vunpack.c.l.b16 %v79
  %v225 = vunpack.c.l.b16 %v80
  %v226 = vunpack.c.l.b16 %v81
  %v227 = vunpack.c.l.b16 %v82
  %v228 = vunpack.c.l.b16 %v83
  %v229 = vunpack.c.l.b16 %v84
  %v230 = vunpack.c.l.b16 %v85
  %v231 = vunpack.c.l.b16 %v86
  %v232 = vunpack.c.l.b16 %v87
  %v233 = vunpack.c.l.b16 %v88
  %v234 = vunpack.c.l.b16 %v89
  %v235 = vunpack.c.l.b16 %v90
  %v236 = vunpack.c.l.b16 %v91
  %v237 = vunpack.c.l.b16 %v92
  %v238 = vunpack.c.l.b16 %v93
  %v239 = vunpack.c.l.b16 %v94
  %v240 = vunpack.c.l.b16 %v95
  %v241 = vunpack.c.l.b16 %v96
  %v242 = vunpack.c.l.b16 %v97
  %v243 = vunpack.c.l.b16 %v98
  %v244 = vpack.c.b16 %v173, %v172
  %v245 = vpack.c.b16 %v175, %v174
  %v246 = vpack.c.b16 %v177, %v176
  %v247 = vpack.c.b16 %v179, %v178
  %v248 = vpack.c.b16 %v181, %v180
  %v249 = vpack.c.b16 %v183, %v182
  %v250 = vpack.c.b16 %v185, %v184
  %v251 = vpack.c.b16 %v187, %v186
  %v252 = vpack.c.b16 %v189, %v188
  %v253 = vpack.c.b16 %v191, %v190
  %v254 = vpack.c.b16 %v193, %v192
  %v255 = vpack.c.b16 %v195, %v194
  %v256 = vpack.c.b16 %v197, %v196
  %v257 = vpack.c.b16 %v199, %v198
  %v258 = vpack.c.b16 %v201, %v200
  %v259 = vpack.c.b16 %v203, %v202
  %v260 = vpack.c.b16 %v205, %v204
  %v261 = vpack.c.b16 %v207, %v206
  %v262 = vpack.c.b16 %v209, %v208
  %v263 = vpack.c.b16 %v211, %v210
  %v264 = vpack.c.b16 %v213, %v212
  %v265 = vpack.c.b16 %v215, %v214
  %v266 = vpack.c.b16 %v217, %v216
  %v267 = vpack.c.b16 %v219, %v218
  %v268 = vpack.c.b16 %v221, %v220
  %v269 = vpack.c.b16 %v223, %v222
  %v270 = vpack.c.b16 %v225, %v224
  %v271 = vpack.c.b16 %v227, %v226
  %v272 = vpack.c.b16 %v229, %v228
  %v273 = vpack.c.b16 %v231, %v230
  %v274 = vpack.c.b16 %v233, %v232
  %v275 = vpack.c.b16 %v235, %v234
  %v276 = vpack.c.b16 %v237, %v236
  %v277 = vpack.c.b16 %v239, %v238
  %v278 = vpack.c.b16 %v241, %v240
  %v279 = vpack.c.b16 %v243, %v242
  %vm280 = vcmask 31744
  %v282 = vsel %vm280, %v244, 0
  %v285 = vsel %vm280, %v245, 0
  %v288 = vsel %vm280, %v246, 0
  %v291 = vsel %vm280, %v247, 0
  %v294 = vsel %vm280, %v248, 0
  %v297 = vsel %vm280, %v249, 0
  %v300 = vsel %vm280, %v250, 0
  %v303 = vsel %vm280, %v251, 0
  %v306 = vsel %vm280, %v252, 0
  %v309 = vsel %vm280, %v253, 0
  %v312 = vsel %vm280, %v254, 0
  %v315 = vsel %vm280, %v255, 0
  %v318 = vsel %vm280, %v256, 0
  %v321 = vsel %vm280, %v257, 0
  %v324 = vsel %vm280, %v258, 0
  %v327 = vsel %vm280, %v259, 0
  %v330 = vsel %vm280, %v260, 0
  %v333 = vsel %vm280, %v261, 0
  %v336 = vsel %vm280, %v262, 0
  %v339 = vsel %vm280, %v263, 0
  %v342 = vsel %vm280, %v264, 0
  %v345 = vsel %vm280, %v265, 0
  %v348 = vsel %vm280, %v266, 0
  %v351 = vsel %vm280, %v267, 0
  %v354 = vsel %vm280, %v268, 0
  %v357 = vsel %vm280, %v269, 0
  %v360 = vsel %vm280, %v270, 0
  %v363 = vsel %vm280, %v271, 0
  %v366 = vsel %vm280, %v272, 0
  %v369 = vsel %vm280, %v273, 0
  %v372 = vsel %vm280, %v274, 0
  %v375 = vsel %vm280, %v275, 0
  %v378 = vsel %vm280, %v276, 0
  %v381 = vsel %vm280, %v277, 0
  %v384 = vsel %vm280, %v278, 0
  %v387 = vsel %vm280, %v279, 0
  %vm389 = vcmask 1041408
  %v391 = vsel %vm389, %v99, 0
  %393 = vmatprep.subr.bf16.mxu0 0
  %394 = vmatpush1.bf16.msra.mxu0 0
  %395 = vmatprep.subr.bf16.mxu0 0
  %396 = vmatpush1.bf16.msra.mxu0 0
  %397 = vmatprep.subr.bf16.mxu0 0
  %398 = vmatpush1.bf16.msra.mxu0 0
  %399 = vmatprep.subr.bf16.mxu0 0
  %400 = vmatpush1.bf16.msra.mxu0 0
  %401 = vmatprep.subr.bf16.mxu0 0
  %402 = vmatpush1.bf16.msra.mxu0 0
  %403 = vmatprep.subr.bf16.mxu0 0
  %404 = vmatpush1.bf16.msra.mxu0 0
  %405 = vmatprep.subr.bf16.mxu0 0
  %406 = vmatpush1.bf16.msra.mxu0 0
  %407 = vmatprep.subr.bf16.mxu0 0
  %408 = vmatpush1.bf16.msra.mxu0 %v391
  %409 = vmatprep.subr.bf16.mxu0 0
  %410 = vmatpush2.bf16.msra.mxu0 0
  %411 = vmatprep.subr.bf16.mxu0 0
  %412 = vmatpush2.bf16.msra.mxu0 0
  %413 = vmatprep.subr.bf16.mxu0 0
  %414 = vmatpush2.bf16.msra.mxu0 0
  %415 = vmatprep.subr.bf16.mxu0 0
  %416 = vmatpush2.bf16.msra.mxu0 0
  %417 = vmatprep.subr.bf16.mxu0 0
  %418 = vmatpush2.bf16.msra.mxu0 0
  %419 = vmatprep.subr.bf16.mxu0 0
  %420 = vmatpush2.bf16.msra.mxu0 0
  %421 = vmatprep.subr.bf16.mxu0 0
  %422 = vmatpush2.bf16.msra.mxu0 0
  %423 = vmatprep.subr.bf16.mxu0 0
  %424 = vmatpush2.bf16.msra.mxu0 0
  %425 = vmatprep.mubr.bf16.mxu0 0
  %426 = vmatmul.mubr.bf16.gmra.mxu0 %v282
  %v427 = vpop.f32.mrf.mxu0
  %v428 = vadd.f32 0.0, %v427
  %v429 = vpop.f32.mrf.mxu0
  %v430 = vpop.f32.mrf.mxu0
  %v431 = vadd.f32 0.0, %v430
  %v432 = vpop.f32.mrf.mxu0
  %433 = vmatprep.mubr.bf16.mxu0 0
  %434 = vmatmul.mubr.bf16.gmra.mxu0 %v285
  %v435 = vpop.f32.mrf.mxu0
  %v436 = vadd.f32 0.0, %v435
  %v437 = vpop.f32.mrf.mxu0
  %v438 = vpop.f32.mrf.mxu0
  %v439 = vadd.f32 0.0, %v438
  %v440 = vpop.f32.mrf.mxu0
  %441 = vmatprep.mubr.bf16.mxu0 0
  %442 = vmatmul.mubr.bf16.gmra.mxu0 %v288
  %v443 = vpop.f32.mrf.mxu0
  %v444 = vadd.f32 0.0, %v443
  %v445 = vpop.f32.mrf.mxu0
  %v446 = vpop.f32.mrf.mxu0
  %v447 = vadd.f32 0.0, %v446
  %v448 = vpop.f32.mrf.mxu0
  %449 = vmatprep.mubr.bf16.mxu0 0
  %450 = vmatmul.mubr.bf16.gmra.mxu0 %v291
  %v451 = vpop.f32.mrf.mxu0
  %v452 = vadd.f32 0.0, %v451
  %v453 = vpop.f32.mrf.mxu0
  %v454 = vpop.f32.mrf.mxu0
  %v455 = vadd.f32 0.0, %v454
  %v456 = vpop.f32.mrf.mxu0
  %457 = vmatprep.mubr.bf16.mxu0 0
  %458 = vmatmul.mubr.bf16.gmra.mxu0 %v294
  %v459 = vpop.f32.mrf.mxu0
  %v460 = vadd.f32 0.0, %v459
  %v461 = vpop.f32.mrf.mxu0
  %v462 = vpop.f32.mrf.mxu0
  %v463 = vadd.f32 0.0, %v462
  %v464 = vpop.f32.mrf.mxu0
  %465 = vmatprep.mubr.bf16.mxu0 0
  %466 = vmatmul.mubr.bf16.gmra.mxu0 %v297
  %v467 = vpop.f32.mrf.mxu0
  %v468 = vadd.f32 0.0, %v467
  %v469 = vpop.f32.mrf.mxu0
  %v470 = vpop.f32.mrf.mxu0
  %v471 = vadd.f32 0.0, %v470
  %v472 = vpop.f32.mrf.mxu0
  %473 = vmatprep.mubr.bf16.mxu0 0
  %474 = vmatmul.mubr.bf16.gmra.mxu0 %v300
  %v475 = vpop.f32.mrf.mxu0
  %v476 = vadd.f32 0.0, %v475
  %v477 = vpop.f32.mrf.mxu0
  %v478 = vpop.f32.mrf.mxu0
  %v479 = vadd.f32 0.0, %v478
  %v480 = vpop.f32.mrf.mxu0
  %481 = vmatprep.mubr.bf16.mxu0 0
  %482 = vmatmul.mubr.bf16.gmra.mxu0 %v303
  %v483 = vpop.f32.mrf.mxu0
  %v484 = vadd.f32 0.0, %v483
  %v485 = vpop.f32.mrf.mxu0
  %v486 = vpop.f32.mrf.mxu0
  %v487 = vadd.f32 0.0, %v486
  %v488 = vpop.f32.mrf.mxu0
  %489 = vmatprep.mubr.bf16.mxu0 0
  %490 = vmatmul.mubr.bf16.gmra.mxu0 %v306
  %v491 = vpop.f32.mrf.mxu0
  %v492 = vadd.f32 0.0, %v491
  %v493 = vpop.f32.mrf.mxu0
  %v494 = vpop.f32.mrf.mxu0
  %v495 = vadd.f32 0.0, %v494
  %v496 = vpop.f32.mrf.mxu0
  %497 = vmatprep.mubr.bf16.mxu0 0
  %498 = vmatmul.mubr.bf16.gmra.mxu0 %v309
  %v499 = vpop.f32.mrf.mxu0
  %v500 = vadd.f32 0.0, %v499
  %v501 = vpop.f32.mrf.mxu0
  %v502 = vpop.f32.mrf.mxu0
  %v503 = vadd.f32 0.0, %v502
  %v504 = vpop.f32.mrf.mxu0
  %505 = vmatprep.mubr.bf16.mxu0 0
  %506 = vmatmul.mubr.bf16.gmra.mxu0 %v312
  %v507 = vpop.f32.mrf.mxu0
  %v508 = vadd.f32 0.0, %v507
  %v509 = vpop.f32.mrf.mxu0
  %v510 = vpop.f32.mrf.mxu0
  %v511 = vadd.f32 0.0, %v510
  %v512 = vpop.f32.mrf.mxu0
  %513 = vmatprep.mubr.bf16.mxu0 0
  %514 = vmatmul.mubr.bf16.gmra.mxu0 %v315
  %v515 = vpop.f32.mrf.mxu0
  %v516 = vadd.f32 0.0, %v515
  %v517 = vpop.f32.mrf.mxu0
  %v518 = vpop.f32.mrf.mxu0
  %v519 = vadd.f32 0.0, %v518
  %v520 = vpop.f32.mrf.mxu0
  %521 = vmatprep.mubr.bf16.mxu0 0
  %522 = vmatmul.mubr.bf16.gmra.mxu0 %v318
  %v523 = vpop.f32.mrf.mxu0
  %v524 = vadd.f32 0.0, %v523
  %v525 = vpop.f32.mrf.mxu0
  %v526 = vpop.f32.mrf.mxu0
  %v527 = vadd.f32 0.0, %v526
  %v528 = vpop.f32.mrf.mxu0
  %529 = vmatprep.mubr.bf16.mxu0 0
  %530 = vmatmul.mubr.bf16.gmra.mxu0 %v321
  %v531 = vpop.f32.mrf.mxu0
  %v532 = vadd.f32 0.0, %v531
  %v533 = vpop.f32.mrf.mxu0
  %v534 = vpop.f32.mrf.mxu0
  %v535 = vadd.f32 0.0, %v534
  %v536 = vpop.f32.mrf.mxu0
  %537 = vmatprep.mubr.bf16.mxu0 0
  %538 = vmatmul.mubr.bf16.gmra.mxu0 %v324
  %v539 = vpop.f32.mrf.mxu0
  %v540 = vadd.f32 0.0, %v539
  %v541 = vpop.f32.mrf.mxu0
  %v542 = vpop.f32.mrf.mxu0
  %v543 = vadd.f32 0.0, %v542
  %v544 = vpop.f32.mrf.mxu0
  %545 = vmatprep.mubr.bf16.mxu0 0
  %546 = vmatmul.mubr.bf16.gmra.mxu0 %v327
  %v547 = vpop.f32.mrf.mxu0
  %v548 = vadd.f32 0.0, %v547
  %v549 = vpop.f32.mrf.mxu0
  %v550 = vpop.f32.mrf.mxu0
  %v551 = vadd.f32 0.0, %v550
  %v552 = vpop.f32.mrf.mxu0
  %553 = vmatprep.mubr.bf16.mxu0 0
  %554 = vmatmul.mubr.bf16.gmra.mxu0 %v330
  %v555 = vpop.f32.mrf.mxu0
  %v556 = vadd.f32 0.0, %v555
  %v557 = vpop.f32.mrf.mxu0
  %v558 = vpop.f32.mrf.mxu0
  %v559 = vadd.f32 0.0, %v558
  %v560 = vpop.f32.mrf.mxu0
  %561 = vmatprep.mubr.bf16.mxu0 0
  %562 = vmatmul.mubr.bf16.gmra.mxu0 %v333
  %v563 = vpop.f32.mrf.mxu0
  %v564 = vadd.f32 0.0, %v563
  %v565 = vpop.f32.mrf.mxu0
  %v566 = vpop.f32.mrf.mxu0
  %v567 = vadd.f32 0.0, %v566
  %v568 = vpop.f32.mrf.mxu0
  %569 = vmatprep.mubr.bf16.mxu0 0
  %570 = vmatmul.mubr.bf16.gmra.mxu0 %v336
  %v571 = vpop.f32.mrf.mxu0
  %v572 = vadd.f32 0.0, %v571
  %v573 = vpop.f32.mrf.mxu0
  %v574 = vpop.f32.mrf.mxu0
  %v575 = vadd.f32 0.0, %v574
  %v576 = vpop.f32.mrf.mxu0
  %577 = vmatprep.mubr.bf16.mxu0 0
  %578 = vmatmul.mubr.bf16.gmra.mxu0 %v339
  %v579 = vpop.f32.mrf.mxu0
  %v580 = vadd.f32 0.0, %v579
  %v581 = vpop.f32.mrf.mxu0
  %v582 = vpop.f32.mrf.mxu0
  %v583 = vadd.f32 0.0, %v582
  %v584 = vpop.f32.mrf.mxu0
  %585 = vmatprep.mubr.bf16.mxu0 0
  %586 = vmatmul.mubr.bf16.gmra.mxu0 %v342
  %v587 = vpop.f32.mrf.mxu0
  %v588 = vadd.f32 0.0, %v587
  %v589 = vpop.f32.mrf.mxu0
  %v590 = vpop.f32.mrf.mxu0
  %v591 = vadd.f32 0.0, %v590
  %v592 = vpop.f32.mrf.mxu0
  %593 = vmatprep.mubr.bf16.mxu0 0
  %594 = vmatmul.mubr.bf16.gmra.mxu0 %v345
  %v595 = vpop.f32.mrf.mxu0
  %v596 = vadd.f32 0.0, %v595
  %v597 = vpop.f32.mrf.mxu0
  %v598 = vpop.f32.mrf.mxu0
  %v599 = vadd.f32 0.0, %v598
  %v600 = vpop.f32.mrf.mxu0
  %601 = vmatprep.mubr.bf16.mxu0 0
  %602 = vmatmul.mubr.bf16.gmra.mxu0 %v348
  %v603 = vpop.f32.mrf.mxu0
  %v604 = vadd.f32 0.0, %v603
  %v605 = vpop.f32.mrf.mxu0
  %v606 = vpop.f32.mrf.mxu0
  %v607 = vadd.f32 0.0, %v606
  %v608 = vpop.f32.mrf.mxu0
  %609 = vmatprep.mubr.bf16.mxu0 0
  %610 = vmatmul.mubr.bf16.gmra.mxu0 %v351
  %v611 = vpop.f32.mrf.mxu0
  %v612 = vadd.f32 0.0, %v611
  %v613 = vpop.f32.mrf.mxu0
  %v614 = vpop.f32.mrf.mxu0
  %v615 = vadd.f32 0.0, %v614
  %v616 = vpop.f32.mrf.mxu0
  %617 = vmatprep.mubr.bf16.mxu0 0
  %618 = vmatmul.mubr.bf16.gmra.mxu0 %v354
  %v619 = vpop.f32.mrf.mxu0
  %v620 = vadd.f32 0.0, %v619
  %v621 = vpop.f32.mrf.mxu0
  %v622 = vpop.f32.mrf.mxu0
  %v623 = vadd.f32 0.0, %v622
  %v624 = vpop.f32.mrf.mxu0
  %625 = vmatprep.mubr.bf16.mxu0 0
  %626 = vmatmul.mubr.bf16.gmra.mxu0 %v357
  %v627 = vpop.f32.mrf.mxu0
  %v628 = vadd.f32 0.0, %v627
  %v629 = vpop.f32.mrf.mxu0
  %v630 = vpop.f32.mrf.mxu0
  %v631 = vadd.f32 0.0, %v630
  %v632 = vpop.f32.mrf.mxu0
  %633 = vmatprep.mubr.bf16.mxu0 0
  %634 = vmatmul.mubr.bf16.gmra.mxu0 %v360
  %v635 = vpop.f32.mrf.mxu0
  %v636 = vadd.f32 0.0, %v635
  %v637 = vpop.f32.mrf.mxu0
  %v638 = vpop.f32.mrf.mxu0
  %v639 = vadd.f32 0.0, %v638
  %v640 = vpop.f32.mrf.mxu0
  %641 = vmatprep.mubr.bf16.mxu0 0
  %642 = vmatmul.mubr.bf16.gmra.mxu0 %v363
  %v643 = vpop.f32.mrf.mxu0
  %v644 = vadd.f32 0.0, %v643
  %v645 = vpop.f32.mrf.mxu0
  %v646 = vpop.f32.mrf.mxu0
  %v647 = vadd.f32 0.0, %v646
  %v648 = vpop.f32.mrf.mxu0
  %649 = vmatprep.mubr.bf16.mxu0 0
  %650 = vmatmul.mubr.bf16.gmra.mxu0 %v366
  %v651 = vpop.f32.mrf.mxu0
  %v652 = vadd.f32 0.0, %v651
  %v653 = vpop.f32.mrf.mxu0
  %v654 = vpop.f32.mrf.mxu0
  %v655 = vadd.f32 0.0, %v654
  %v656 = vpop.f32.mrf.mxu0
  %657 = vmatprep.mubr.bf16.mxu0 0
  %658 = vmatmul.mubr.bf16.gmra.mxu0 %v369
  %v659 = vpop.f32.mrf.mxu0
  %v660 = vadd.f32 0.0, %v659
  %v661 = vpop.f32.mrf.mxu0
  %v662 = vpop.f32.mrf.mxu0
  %v663 = vadd.f32 0.0, %v662
  %v664 = vpop.f32.mrf.mxu0
  %665 = vmatprep.mubr.bf16.mxu0 0
  %666 = vmatmul.mubr.bf16.gmra.mxu0 %v372
  %v667 = vpop.f32.mrf.mxu0
  %v668 = vadd.f32 0.0, %v667
  %v669 = vpop.f32.mrf.mxu0
  %v670 = vpop.f32.mrf.mxu0
  %v671 = vadd.f32 0.0, %v670
  %v672 = vpop.f32.mrf.mxu0
  %673 = vmatprep.mubr.bf16.mxu0 0
  %674 = vmatmul.mubr.bf16.gmra.mxu0 %v375
  %v675 = vpop.f32.mrf.mxu0
  %v676 = vadd.f32 0.0, %v675
  %v677 = vpop.f32.mrf.mxu0
  %v678 = vpop.f32.mrf.mxu0
  %v679 = vadd.f32 0.0, %v678
  %v680 = vpop.f32.mrf.mxu0
  %681 = vmatprep.mubr.bf16.mxu0 0
  %682 = vmatmul.mubr.bf16.gmra.mxu0 %v378
  %v683 = vpop.f32.mrf.mxu0
  %v684 = vadd.f32 0.0, %v683
  %v685 = vpop.f32.mrf.mxu0
  %v686 = vpop.f32.mrf.mxu0
  %v687 = vadd.f32 0.0, %v686
  %v688 = vpop.f32.mrf.mxu0
  %689 = vmatprep.mubr.bf16.mxu0 0
  %690 = vmatmul.mubr.bf16.gmra.mxu0 %v381
  %v691 = vpop.f32.mrf.mxu0
  %v692 = vadd.f32 0.0, %v691
  %v693 = vpop.f32.mrf.mxu0
  %v694 = vpop.f32.mrf.mxu0
  %v695 = vadd.f32 0.0, %v694
  %v696 = vpop.f32.mrf.mxu0
  %697 = vmatprep.mubr.bf16.mxu0 0
  %698 = vmatmul.mubr.bf16.gmra.mxu0 %v384
  %v699 = vpop.f32.mrf.mxu0
  %v700 = vadd.f32 0.0, %v699
  %v701 = vpop.f32.mrf.mxu0
  %v702 = vpop.f32.mrf.mxu0
  %v703 = vadd.f32 0.0, %v702
  %v704 = vpop.f32.mrf.mxu0
  %705 = vmatprep.mubr.bf16.mxu0 0
  %706 = vmatmul.mubr.bf16.gmra.mxu0 %v387
  %v707 = vpop.f32.mrf.mxu0
  %v708 = vadd.f32 0.0, %v707
  %v709 = vpop.f32.mrf.mxu0
  %v710 = vpop.f32.mrf.mxu0
  %v711 = vadd.f32 0.0, %v710
  %v712 = vpop.f32.mrf.mxu0
  %713 = vdwg.mxu0
  %714 = vst [vmem:[#allocation2] sm:$0xff] %v428
  %715 = vst [vmem:[#allocation2 + $0x8] sm:$0xff] %v431
  %716 = vst [vmem:[#allocation2 + $0x10] sm:$0xff] %v436
  %717 = vst [vmem:[#allocation2 + $0x18] sm:$0xff] %v439
  %718 = vst [vmem:[#allocation2 + $0x20] sm:$0xff] %v444
  %719 = vst [vmem:[#allocation2 + $0x28] sm:$0xff] %v447
  %720 = vst [vmem:[#allocation2 + $0x30] sm:$0xff] %v452
  %721 = vst [vmem:[#allocation2 + $0x38] sm:$0xff] %v455
  %722 = vst [vmem:[#allocation2 + $0x40] sm:$0xff] %v460
  %723 = vst [vmem:[#allocation2 + $0x48] sm:$0xff] %v463
  %724 = vst [vmem:[#allocation2 + $0x50] sm:$0xff] %v468
  %725 = vst [vmem:[#allocation2 + $0x58] sm:$0xff] %v471
  %726 = vst [vmem:[#allocation2 + $0x60] sm:$0xff] %v476
  %727 = vst [vmem:[#allocation2 + $0x68] sm:$0xff] %v479
  %728 = vst [vmem:[#allocation2 + $0x70] sm:$0xff] %v484
  %729 = vst [vmem:[#allocation2 + $0x78] sm:$0xff] %v487
  %730 = vst [vmem:[#allocation2 + $0x80] sm:$0xff] %v492
  %731 = vst [vmem:[#allocation2 + $0x88] sm:$0xff] %v495
  %732 = vst [vmem:[#allocation2 + $0x90] sm:$0xff] %v500
  %733 = vst [vmem:[#allocation2 + $0x98] sm:$0xff] %v503
  %734 = vst [vmem:[#allocation2 + $0xa0] sm:$0xff] %v508
  %735 = vst [vmem:[#allocation2 + $0xa8] sm:$0xff] %v511
  %736 = vst [vmem:[#allocation2 + $0xb0] sm:$0xff] %v516
  %737 = vst [vmem:[#allocation2 + $0xb8] sm:$0xff] %v519
  %738 = vst [vmem:[#allocation2 + $0xc0] sm:$0xff] %v524
  %739 = vst [vmem:[#allocation2 + $0xc8] sm:$0xff] %v527
  %740 = vst [vmem:[#allocation2 + $0xd0] sm:$0xff] %v532
  %741 = vst [vmem:[#allocation2 + $0xd8] sm:$0xff] %v535
  %742 = vst [vmem:[#allocation2 + $0xe0] sm:$0xff] %v540
  %743 = vst [vmem:[#allocation2 + $0xe8] sm:$0xff] %v543
  %744 = vst [vmem:[#allocation2 + $0xf0] sm:$0xff] %v548
  %745 = vst [vmem:[#allocation2 + $0xf8] sm:$0xff] %v551
  %746 = vst [vmem:[#allocation2 + $0x100] sm:$0xff] %v556
  %747 = vst [vmem:[#allocation2 + $0x108] sm:$0xff] %v559
  %748 = vst [vmem:[#allocation2 + $0x110] sm:$0xff] %v564
  %749 = vst [vmem:[#allocation2 + $0x118] sm:$0xff] %v567
  %750 = vst [vmem:[#allocation2 + $0x120] sm:$0xff] %v572
  %751 = vst [vmem:[#allocation2 + $0x128] sm:$0xff] %v575
  %752 = vst [vmem:[#allocation2 + $0x130] sm:$0xff] %v580
  %753 = vst [vmem:[#allocation2 + $0x138] sm:$0xff] %v583
  %754 = vst [vmem:[#allocation2 + $0x140] sm:$0xff] %v588
  %755 = vst [vmem:[#allocation2 + $0x148] sm:$0xff] %v591
  %756 = vst [vmem:[#allocation2 + $0x150] sm:$0xff] %v596
  %757 = vst [vmem:[#allocation2 + $0x158] sm:$0xff] %v599
  %758 = vst [vmem:[#allocation2 + $0x160] sm:$0xff] %v604
  %759 = vst [vmem:[#allocation2 + $0x168] sm:$0xff] %v607
  %760 = vst [vmem:[#allocation2 + $0x170] sm:$0xff] %v612
  %761 = vst [vmem:[#allocation2 + $0x178] sm:$0xff] %v615
  %762 = vst [vmem:[#allocation2 + $0x180] sm:$0xff] %v620
  %763 = vst [vmem:[#allocation2 + $0x188] sm:$0xff] %v623
  %764 = vst [vmem:[#allocation2 + $0x190] sm:$0xff] %v628
  %765 = vst [vmem:[#allocation2 + $0x198] sm:$0xff] %v631
  %766 = vst [vmem:[#allocation2 + $0x1a0] sm:$0xff] %v636
  %767 = vst [vmem:[#allocation2 + $0x1a8] sm:$0xff] %v639
  %768 = vst [vmem:[#allocation2 + $0x1b0] sm:$0xff] %v644
  %769 = vst [vmem:[#allocation2 + $0x1b8] sm:$0xff] %v647
  %770 = vst [vmem:[#allocation2 + $0x1c0] sm:$0xff] %v652
  %771 = vst [vmem:[#allocation2 + $0x1c8] sm:$0xff] %v655
  %772 = vst [vmem:[#allocation2 + $0x1d0] sm:$0xff] %v660
  %773 = vst [vmem:[#allocation2 + $0x1d8] sm:$0xff] %v663
  %774 = vst [vmem:[#allocation2 + $0x1e0] sm:$0xff] %v668
  %775 = vst [vmem:[#allocation2 + $0x1e8] sm:$0xff] %v671
  %776 = vst [vmem:[#allocation2 + $0x1f0] sm:$0xff] %v676
  %777 = vst [vmem:[#allocation2 + $0x1f8] sm:$0xff] %v679
  %778 = vst [vmem:[#allocation2 + $0x200] sm:$0xff] %v684
  %779 = vst [vmem:[#allocation2 + $0x208] sm:$0xff] %v687
  %780 = vst [vmem:[#allocation2 + $0x210] sm:$0xff] %v692
  %781 = vst [vmem:[#allocation2 + $0x218] sm:$0xff] %v695
  %782 = vst [vmem:[#allocation2 + $0x220] sm:$0xff] %v700
  %783 = vst [vmem:[#allocation2 + $0x228] sm:$0xff] %v703
  %784 = vst [vmem:[#allocation2 + $0x230] sm:$0xff] %v708
  %785 = vst [vmem:[#allocation2 + $0x238] sm:$0xff] %v711
  %v786 = vld [vmem:[%s0] sm:$0xf]
  %v787 = vld [vmem:[%s0 + $0x4] sm:$0xf]
  %v788 = vld [vmem:[%s0 + $0x8] sm:$0xf]
  %v789 = vld [vmem:[%s0 + $0xc] sm:$0xf]
  %v790 = vld [vmem:[%s0 + $0x10] sm:$0xf]
  %v791 = vld [vmem:[%s0 + $0x14] sm:$0xf]
  %v792 = vld [vmem:[%s0 + $0x18] sm:$0xf]
  %v793 = vld [vmem:[%s0 + $0x1c] sm:$0xf]
  %v794 = vld [vmem:[%s0 + $0x20] sm:$0xf]
  %v795 = vld [vmem:[%s0 + $0x24] sm:$0xf]
  %v796 = vld [vmem:[%s0 + $0x28] sm:$0xf]
  %v797 = vld [vmem:[%s0 + $0x2c] sm:$0xf]
  %v798 = vld [vmem:[%s0 + $0x30] sm:$0xf]
  %v799 = vld [vmem:[%s0 + $0x34] sm:$0xf]
  %v800 = vld [vmem:[%s0 + $0x38] sm:$0xf]
  %v801 = vld [vmem:[%s0 + $0x3c] sm:$0xf]
  %v802 = vld [vmem:[%s0 + $0x40] sm:$0xf]
  %v803 = vld [vmem:[%s0 + $0x44] sm:$0xf]
  %v804 = vld [vmem:[%s0 + $0x48] sm:$0xf]
  %v805 = vld [vmem:[%s0 + $0x4c] sm:$0xf]
  %v806 = vld [vmem:[%s0 + $0x50] sm:$0xf]
  %v807 = vld [vmem:[%s0 + $0x54] sm:$0xf]
  %v808 = vld [vmem:[%s0 + $0x58] sm:$0xf]
  %v809 = vld [vmem:[%s0 + $0x5c] sm:$0xf]
  %v810 = vld [vmem:[%s0 + $0x60] sm:$0xf]
  %v811 = vld [vmem:[%s0 + $0x64] sm:$0xf]
  %v812 = vld [vmem:[%s0 + $0x68] sm:$0xf]
  %v813 = vld [vmem:[%s0 + $0x6c] sm:$0xf]
  %v814 = vld [vmem:[%s0 + $0x70] sm:$0xf]
  %v815 = vld [vmem:[%s0 + $0x74] sm:$0xf]
  %v816 = vld [vmem:[%s0 + $0x78] sm:$0xf]
  %v817 = vld [vmem:[%s0 + $0x7c] sm:$0xf]
  %v818 = vld [vmem:[%s0 + $0x80] sm:$0xf]
  %v819 = vld [vmem:[%s0 + $0x84] sm:$0xf]
  %v820 = vld [vmem:[%s0 + $0x88] sm:$0xf]
  %v821 = vld [vmem:[%s0 + $0x8c] sm:$0xf]
  %v822 = vld [vmem:[%s0 + $0x90] sm:$0x1]
  %v823 = vld [vmem:[%s0 + $0xa4] sm:$0xf]
  %v824 = vld [vmem:[%s0 + $0xa8] sm:$0xf]
  %v825 = vld [vmem:[%s0 + $0xac] sm:$0xf]
  %v826 = vld [vmem:[%s0 + $0xb0] sm:$0xf]
  %v827 = vld [vmem:[%s0 + $0xb4] sm:$0xf]
  %v828 = vld [vmem:[%s0 + $0xb8] sm:$0xf]
  %v829 = vld [vmem:[%s0 + $0xbc] sm:$0xf]
  %v830 = vld [vmem:[%s0 + $0xc0] sm:$0xf]
  %v831 = vld [vmem:[%s0 + $0xc4] sm:$0xf]
  %v832 = vld [vmem:[%s0 + $0xc8] sm:$0xf]
  %v833 = vld [vmem:[%s0 + $0xcc] sm:$0xf]
  %v834 = vld [vmem:[%s0 + $0xd0] sm:$0xf]
  %v835 = vld [vmem:[%s0 + $0xd4] sm:$0xf]
  %v836 = vld [vmem:[%s0 + $0xd8] sm:$0xf]
  %v837 = vld [vmem:[%s0 + $0xdc] sm:$0xf]
  %v838 = vld [vmem:[%s0 + $0xe0] sm:$0xf]
  %v839 = vld [vmem:[%s0 + $0xe4] sm:$0xf]
  %v840 = vld [vmem:[%s0 + $0xe8] sm:$0xf]
  %v841 = vld [vmem:[%s0 + $0xec] sm:$0xf]
  %v842 = vld [vmem:[%s0 + $0xf0] sm:$0xf]
  %v843 = vld [vmem:[%s0 + $0xf4] sm:$0xf]
  %v844 = vld [vmem:[%s0 + $0xf8] sm:$0xf]
  %v845 = vld [vmem:[%s0 + $0xfc] sm:$0xf]
  %v846 = vld [vmem:[%s0 + $0x100] sm:$0xf]
  %v847 = vld [vmem:[%s0 + $0x104] sm:$0xf]
  %v848 = vld [vmem:[%s0 + $0x108] sm:$0xf]
  %v849 = vld [vmem:[%s0 + $0x10c] sm:$0xf]
  %v850 = vld [vmem:[%s0 + $0x110] sm:$0xf]
  %v851 = vld [vmem:[%s0 + $0x114] sm:$0xf]
  %v852 = vld [vmem:[%s0 + $0x118] sm:$0xf]
  %v853 = vld [vmem:[%s0 + $0x11c] sm:$0xf]
  %v854 = vld [vmem:[%s0 + $0x120] sm:$0xf]
  %v855 = vld [vmem:[%s0 + $0x124] sm:$0xf]
  %v856 = vld [vmem:[%s0 + $0x128] sm:$0xf]
  %v857 = vld [vmem:[%s0 + $0x12c] sm:$0xf]
  %v858 = vld [vmem:[%s0 + $0x130] sm:$0xf]
  %v859 = vld [vmem:[%s0 + $0x134] sm:$0x1]
  %vm860 = vsmask.f32 3328
  %vm861 = vsmask.f32 7440
  %vm862 = vmor %vm860, %vm861
  %v864 = vshrl.u32 %v786, 16
  %v866 = vrot.slane %v864, 4
  %v867 = vshll.u32 %v786, 16
  %v869 = vrot.slane %v867, 5
  %v870 = vor.u32 %v866, %v869
  %v871 = vrot.slane %v870, 4
  %v873 = vshll.u32 %v787, 16
  %v875 = vrot.slane %v873, 5
  %v876 = vsel %vm862, %v871, %v875
  %v877 = vshrl.u32 %v787, 16
  %v879 = vrot.slane %v877, 4
  %v880 = vor.u32 %v879, %v875
  %v881 = vrot.slane %v880, 4
  %v883 = vshll.u32 %v788, 16
  %v885 = vrot.slane %v883, 5
  %v886 = vsel %vm862, %v881, %v885
  %v887 = vshrl.u32 %v788, 16
  %v889 = vrot.slane %v887, 4
  %v890 = vor.u32 %v889, %v885
  %v891 = vrot.slane %v890, 4
  %v893 = vshll.u32 %v789, 16
  %v895 = vrot.slane %v893, 5
  %v896 = vsel %vm862, %v891, %v895
  %v897 = vshrl.u32 %v789, 16
  %v899 = vrot.slane %v897, 4
  %v900 = vor.u32 %v899, %v895
  %v901 = vrot.slane %v900, 4
  %v903 = vshll.u32 %v790, 16
  %v905 = vrot.slane %v903, 5
  %v906 = vsel %vm862, %v901, %v905
  %v907 = vshrl.u32 %v790, 16
  %v909 = vrot.slane %v907, 4
  %v910 = vor.u32 %v909, %v905
  %v911 = vrot.slane %v910, 4
  %v913 = vshll.u32 %v791, 16
  %v915 = vrot.slane %v913, 5
  %v916 = vsel %vm862, %v911, %v915
  %v917 = vshrl.u32 %v791, 16
  %v919 = vrot.slane %v917, 4
  %v920 = vor.u32 %v919, %v915
  %v921 = vrot.slane %v920, 4
  %v923 = vshll.u32 %v792, 16
  %v925 = vrot.slane %v923, 5
  %v926 = vsel %vm862, %v921, %v925
  %v927 = vshrl.u32 %v792, 16
  %v929 = vrot.slane %v927, 4
  %v930 = vor.u32 %v929, %v925
  %v931 = vrot.slane %v930, 4
  %v933 = vshll.u32 %v793, 16
  %v935 = vrot.slane %v933, 5
  %v936 = vsel %vm862, %v931, %v935
  %v937 = vshrl.u32 %v793, 16
  %v939 = vrot.slane %v937, 4
  %v940 = vor.u32 %v939, %v935
  %v941 = vrot.slane %v940, 4
  %v943 = vshll.u32 %v794, 16
  %v945 = vrot.slane %v943, 5
  %v946 = vsel %vm862, %v941, %v945
  %v947 = vshrl.u32 %v794, 16
  %v949 = vrot.slane %v947, 4
  %v950 = vor.u32 %v949, %v945
  %v951 = vrot.slane %v950, 4
  %v953 = vshll.u32 %v795, 16
  %v955 = vrot.slane %v953, 5
  %v956 = vsel %vm862, %v951, %v955
  %v957 = vshrl.u32 %v795, 16
  %v959 = vrot.slane %v957, 4
  %v960 = vor.u32 %v959, %v955
  %v961 = vrot.slane %v960, 4
  %v963 = vshll.u32 %v796, 16
  %v965 = vrot.slane %v963, 5
  %v966 = vsel %vm862, %v961, %v965
  %v967 = vshrl.u32 %v796, 16
  %v969 = vrot.slane %v967, 4
  %v970 = vor.u32 %v969, %v965
  %v971 = vrot.slane %v970, 4
  %v973 = vshll.u32 %v797, 16
  %v975 = vrot.slane %v973, 5
  %v976 = vsel %vm862, %v971, %v975
  %v977 = vshrl.u32 %v797, 16
  %v979 = vrot.slane %v977, 4
  %v980 = vor.u32 %v979, %v975
  %v981 = vrot.slane %v980, 4
  %v983 = vshll.u32 %v798, 16
  %v985 = vrot.slane %v983, 5
  %v986 = vsel %vm862, %v981, %v985
  %v987 = vshrl.u32 %v798, 16
  %v989 = vrot.slane %v987, 4
  %v990 = vor.u32 %v989, %v985
  %v991 = vrot.slane %v990, 4
  %v993 = vshll.u32 %v799, 16
  %v995 = vrot.slane %v993, 5
  %v996 = vsel %vm862, %v991, %v995
  %v997 = vshrl.u32 %v799, 16
  %v999 = vrot.slane %v997, 4
  %v1000 = vor.u32 %v999, %v995
  %v1001 = vrot.slane %v1000, 4
  %v1003 = vshll.u32 %v800, 16
  %v1005 = vrot.slane %v1003, 5
  %v1006 = vsel %vm862, %v1001, %v1005
  %v1007 = vshrl.u32 %v800, 16
  %v1009 = vrot.slane %v1007, 4
  %v1010 = vor.u32 %v1009, %v1005
  %v1011 = vrot.slane %v1010, 4
  %v1013 = vshll.u32 %v801, 16
  %v1015 = vrot.slane %v1013, 5
  %v1016 = vsel %vm862, %v1011, %v1015
  %v1017 = vshrl.u32 %v801, 16
  %v1019 = vrot.slane %v1017, 4
  %v1020 = vor.u32 %v1019, %v1015
  %v1021 = vrot.slane %v1020, 4
  %v1023 = vshll.u32 %v802, 16
  %v1025 = vrot.slane %v1023, 5
  %v1026 = vsel %vm862, %v1021, %v1025
  %v1027 = vshrl.u32 %v802, 16
  %v1029 = vrot.slane %v1027, 4
  %v1030 = vor.u32 %v1029, %v1025
  %v1031 = vrot.slane %v1030, 4
  %v1033 = vshll.u32 %v803, 16
  %v1035 = vrot.slane %v1033, 5
  %v1036 = vsel %vm862, %v1031, %v1035
  %v1037 = vshrl.u32 %v803, 16
  %v1039 = vrot.slane %v1037, 4
  %v1040 = vor.u32 %v1039, %v1035
  %v1041 = vrot.slane %v1040, 4
  %v1043 = vshll.u32 %v804, 16
  %v1045 = vrot.slane %v1043, 5
  %v1046 = vsel %vm862, %v1041, %v1045
  %v1047 = vshrl.u32 %v804, 16
  %v1049 = vrot.slane %v1047, 4
  %v1050 = vor.u32 %v1049, %v1045
  %v1051 = vrot.slane %v1050, 4
  %v1053 = vshll.u32 %v805, 16
  %v1055 = vrot.slane %v1053, 5
  %v1056 = vsel %vm862, %v1051, %v1055
  %v1057 = vshrl.u32 %v805, 16
  %v1059 = vrot.slane %v1057, 4
  %v1060 = vor.u32 %v1059, %v1055
  %v1061 = vrot.slane %v1060, 4
  %v1063 = vshll.u32 %v806, 16
  %v1065 = vrot.slane %v1063, 5
  %v1066 = vsel %vm862, %v1061, %v1065
  %v1067 = vshrl.u32 %v806, 16
  %v1069 = vrot.slane %v1067, 4
  %v1070 = vor.u32 %v1069, %v1065
  %v1071 = vrot.slane %v1070, 4
  %v1073 = vshll.u32 %v807, 16
  %v1075 = vrot.slane %v1073, 5
  %v1076 = vsel %vm862, %v1071, %v1075
  %v1077 = vshrl.u32 %v807, 16
  %v1079 = vrot.slane %v1077, 4
  %v1080 = vor.u32 %v1079, %v1075
  %v1081 = vrot.slane %v1080, 4
  %v1083 = vshll.u32 %v808, 16
  %v1085 = vrot.slane %v1083, 5
  %v1086 = vsel %vm862, %v1081, %v1085
  %v1087 = vshrl.u32 %v808, 16
  %v1089 = vrot.slane %v1087, 4
  %v1090 = vor.u32 %v1089, %v1085
  %v1091 = vrot.slane %v1090, 4
  %v1093 = vshll.u32 %v809, 16
  %v1095 = vrot.slane %v1093, 5
  %v1096 = vsel %vm862, %v1091, %v1095
  %v1097 = vshrl.u32 %v809, 16
  %v1099 = vrot.slane %v1097, 4
  %v1100 = vor.u32 %v1099, %v1095
  %v1101 = vrot.slane %v1100, 4
  %v1103 = vshll.u32 %v810, 16
  %v1105 = vrot.slane %v1103, 5
  %v1106 = vsel %vm862, %v1101, %v1105
  %v1107 = vshrl.u32 %v810, 16
  %v1109 = vrot.slane %v1107, 4
  %v1110 = vor.u32 %v1109, %v1105
  %v1111 = vrot.slane %v1110, 4
  %v1113 = vshll.u32 %v811, 16
  %v1115 = vrot.slane %v1113, 5
  %v1116 = vsel %vm862, %v1111, %v1115
  %v1117 = vshrl.u32 %v811, 16
  %v1119 = vrot.slane %v1117, 4
  %v1120 = vor.u32 %v1119, %v1115
  %v1121 = vrot.slane %v1120, 4
  %v1123 = vshll.u32 %v812, 16
  %v1125 = vrot.slane %v1123, 5
  %v1126 = vsel %vm862, %v1121, %v1125
  %v1127 = vshrl.u32 %v812, 16
  %v1129 = vrot.slane %v1127, 4
  %v1130 = vor.u32 %v1129, %v1125
  %v1131 = vrot.slane %v1130, 4
  %v1133 = vshll.u32 %v813, 16
  %v1135 = vrot.slane %v1133, 5
  %v1136 = vsel %vm862, %v1131, %v1135
  %v1137 = vshrl.u32 %v813, 16
  %v1139 = vrot.slane %v1137, 4
  %v1140 = vor.u32 %v1139, %v1135
  %v1141 = vrot.slane %v1140, 4
  %v1143 = vshll.u32 %v814, 16
  %v1145 = vrot.slane %v1143, 5
  %v1146 = vsel %vm862, %v1141, %v1145
  %v1147 = vshrl.u32 %v814, 16
  %v1149 = vrot.slane %v1147, 4
  %v1150 = vor.u32 %v1149, %v1145
  %v1151 = vrot.slane %v1150, 4
  %v1153 = vshll.u32 %v815, 16
  %v1155 = vrot.slane %v1153, 5
  %v1156 = vsel %vm862, %v1151, %v1155
  %v1157 = vshrl.u32 %v815, 16
  %v1159 = vrot.slane %v1157, 4
  %v1160 = vor.u32 %v1159, %v1155
  %v1161 = vrot.slane %v1160, 4
  %v1163 = vshll.u32 %v816, 16
  %v1165 = vrot.slane %v1163, 5
  %v1166 = vsel %vm862, %v1161, %v1165
  %v1167 = vshrl.u32 %v816, 16
  %v1169 = vrot.slane %v1167, 4
  %v1170 = vor.u32 %v1169, %v1165
  %v1171 = vrot.slane %v1170, 4
  %v1173 = vshll.u32 %v817, 16
  %v1175 = vrot.slane %v1173, 5
  %v1176 = vsel %vm862, %v1171, %v1175
  %v1177 = vshrl.u32 %v817, 16
  %v1179 = vrot.slane %v1177, 4
  %v1180 = vor.u32 %v1179, %v1175
  %v1181 = vrot.slane %v1180, 4
  %v1183 = vshll.u32 %v818, 16
  %v1185 = vrot.slane %v1183, 5
  %v1186 = vsel %vm862, %v1181, %v1185
  %v1187 = vshrl.u32 %v818, 16
  %v1189 = vrot.slane %v1187, 4
  %v1190 = vor.u32 %v1189, %v1185
  %v1191 = vrot.slane %v1190, 4
  %v1193 = vshll.u32 %v819, 16
  %v1195 = vrot.slane %v1193, 5
  %v1196 = vsel %vm862, %v1191, %v1195
  %v1197 = vshrl.u32 %v819, 16
  %v1199 = vrot.slane %v1197, 4
  %v1200 = vor.u32 %v1199, %v1195
  %v1201 = vrot.slane %v1200, 4
  %v1203 = vshll.u32 %v820, 16
  %v1205 = vrot.slane %v1203, 5
  %v1206 = vsel %vm862, %v1201, %v1205
  %v1207 = vshrl.u32 %v820, 16
  %v1209 = vrot.slane %v1207, 4
  %v1210 = vor.u32 %v1209, %v1205
  %v1211 = vrot.slane %v1210, 4
  %v1213 = vshll.u32 %v821, 16
  %v1215 = vrot.slane %v1213, 5
  %v1216 = vsel %vm862, %v1211, %v1215
  %v1217 = vshrl.u32 %v821, 16
  %v1219 = vrot.slane %v1217, 4
  %v1220 = vor.u32 %v1219, %v1215
  %v1221 = vrot.slane %v1220, 4
  %v1223 = vshll.u32 %v822, 16
  %v1225 = vrot.slane %v1223, 5
  %v1226 = vsel %vm862, %v1221, %v1225
  %v1228 = vshrl.u32 %v823, 16
  %v1230 = vrot.slane %v1228, 4
  %v1231 = vshll.u32 %v823, 16
  %v1233 = vrot.slane %v1231, 5
  %v1234 = vor.u32 %v1230, %v1233
  %v1235 = vrot.slane %v1234, 4
  %v1237 = vshll.u32 %v824, 16
  %v1239 = vrot.slane %v1237, 5
  %v1240 = vsel %vm862, %v1235, %v1239
  %v1241 = vshrl.u32 %v824, 16
  %v1243 = vrot.slane %v1241, 4
  %v1244 = vor.u32 %v1243, %v1239
  %v1245 = vrot.slane %v1244, 4
  %v1247 = vshll.u32 %v825, 16
  %v1249 = vrot.slane %v1247, 5
  %v1250 = vsel %vm862, %v1245, %v1249
  %v1251 = vshrl.u32 %v825, 16
  %v1253 = vrot.slane %v1251, 4
  %v1254 = vor.u32 %v1253, %v1249
  %v1255 = vrot.slane %v1254, 4
  %v1257 = vshll.u32 %v826, 16
  %v1259 = vrot.slane %v1257, 5
  %v1260 = vsel %vm862, %v1255, %v1259
  %v1261 = vshrl.u32 %v826, 16
  %v1263 = vrot.slane %v1261, 4
  %v1264 = vor.u32 %v1263, %v1259
  %v1265 = vrot.slane %v1264, 4
  %v1267 = vshll.u32 %v827, 16
  %v1269 = vrot.slane %v1267, 5
  %v1270 = vsel %vm862, %v1265, %v1269
  %v1271 = vshrl.u32 %v827, 16
  %v1273 = vrot.slane %v1271, 4
  %v1274 = vor.u32 %v1273, %v1269
  %v1275 = vrot.slane %v1274, 4
  %v1277 = vshll.u32 %v828, 16
  %v1279 = vrot.slane %v1277, 5
  %v1280 = vsel %vm862, %v1275, %v1279
  %v1281 = vshrl.u32 %v828, 16
  %v1283 = vrot.slane %v1281, 4
  %v1284 = vor.u32 %v1283, %v1279
  %v1285 = vrot.slane %v1284, 4
  %v1287 = vshll.u32 %v829, 16
  %v1289 = vrot.slane %v1287, 5
  %v1290 = vsel %vm862, %v1285, %v1289
  %v1291 = vshrl.u32 %v829, 16
  %v1293 = vrot.slane %v1291, 4
  %v1294 = vor.u32 %v1293, %v1289
  %v1295 = vrot.slane %v1294, 4
  %v1297 = vshll.u32 %v830, 16
  %v1299 = vrot.slane %v1297, 5
  %v1300 = vsel %vm862, %v1295, %v1299
  %v1301 = vshrl.u32 %v830, 16
  %v1303 = vrot.slane %v1301, 4
  %v1304 = vor.u32 %v1303, %v1299
  %v1305 = vrot.slane %v1304, 4
  %v1307 = vshll.u32 %v831, 16
  %v1309 = vrot.slane %v1307, 5
  %v1310 = vsel %vm862, %v1305, %v1309
  %v1311 = vshrl.u32 %v831, 16
  %v1313 = vrot.slane %v1311, 4
  %v1314 = vor.u32 %v1313, %v1309
  %v1315 = vrot.slane %v1314, 4
  %v1317 = vshll.u32 %v832, 16
  %v1319 = vrot.slane %v1317, 5
  %v1320 = vsel %vm862, %v1315, %v1319
  %v1321 = vshrl.u32 %v832, 16
  %v1323 = vrot.slane %v1321, 4
  %v1324 = vor.u32 %v1323, %v1319
  %v1325 = vrot.slane %v1324, 4
  %v1327 = vshll.u32 %v833, 16
  %v1329 = vrot.slane %v1327, 5
  %v1330 = vsel %vm862, %v1325, %v1329
  %v1331 = vshrl.u32 %v833, 16
  %v1333 = vrot.slane %v1331, 4
  %v1334 = vor.u32 %v1333, %v1329
  %v1335 = vrot.slane %v1334, 4
  %v1337 = vshll.u32 %v834, 16
  %v1339 = vrot.slane %v1337, 5
  %v1340 = vsel %vm862, %v1335, %v1339
  %v1341 = vshrl.u32 %v834, 16
  %v1343 = vrot.slane %v1341, 4
  %v1344 = vor.u32 %v1343, %v1339
  %v1345 = vrot.slane %v1344, 4
  %v1347 = vshll.u32 %v835, 16
  %v1349 = vrot.slane %v1347, 5
  %v1350 = vsel %vm862, %v1345, %v1349
  %v1351 = vshrl.u32 %v835, 16
  %v1353 = vrot.slane %v1351, 4
  %v1354 = vor.u32 %v1353, %v1349
  %v1355 = vrot.slane %v1354, 4
  %v1357 = vshll.u32 %v836, 16
  %v1359 = vrot.slane %v1357, 5
  %v1360 = vsel %vm862, %v1355, %v1359
  %v1361 = vshrl.u32 %v836, 16
  %v1363 = vrot.slane %v1361, 4
  %v1364 = vor.u32 %v1363, %v1359
  %v1365 = vrot.slane %v1364, 4
  %v1367 = vshll.u32 %v837, 16
  %v1369 = vrot.slane %v1367, 5
  %v1370 = vsel %vm862, %v1365, %v1369
  %v1371 = vshrl.u32 %v837, 16
  %v1373 = vrot.slane %v1371, 4
  %v1374 = vor.u32 %v1373, %v1369
  %v1375 = vrot.slane %v1374, 4
  %v1377 = vshll.u32 %v838, 16
  %v1379 = vrot.slane %v1377, 5
  %v1380 = vsel %vm862, %v1375, %v1379
  %v1381 = vshrl.u32 %v838, 16
  %v1383 = vrot.slane %v1381, 4
  %v1384 = vor.u32 %v1383, %v1379
  %v1385 = vrot.slane %v1384, 4
  %v1387 = vshll.u32 %v839, 16
  %v1389 = vrot.slane %v1387, 5
  %v1390 = vsel %vm862, %v1385, %v1389
  %v1391 = vshrl.u32 %v839, 16
  %v1393 = vrot.slane %v1391, 4
  %v1394 = vor.u32 %v1393, %v1389
  %v1395 = vrot.slane %v1394, 4
  %v1397 = vshll.u32 %v840, 16
  %v1399 = vrot.slane %v1397, 5
  %v1400 = vsel %vm862, %v1395, %v1399
  %v1401 = vshrl.u32 %v840, 16
  %v1403 = vrot.slane %v1401, 4
  %v1404 = vor.u32 %v1403, %v1399
  %v1405 = vrot.slane %v1404, 4
  %v1407 = vshll.u32 %v841, 16
  %v1409 = vrot.slane %v1407, 5
  %v1410 = vsel %vm862, %v1405, %v1409
  %v1411 = vshrl.u32 %v841, 16
  %v1413 = vrot.slane %v1411, 4
  %v1414 = vor.u32 %v1413, %v1409
  %v1415 = vrot.slane %v1414, 4
  %v1417 = vshll.u32 %v842, 16
  %v1419 = vrot.slane %v1417, 5
  %v1420 = vsel %vm862, %v1415, %v1419
  %v1421 = vshrl.u32 %v842, 16
  %v1423 = vrot.slane %v1421, 4
  %v1424 = vor.u32 %v1423, %v1419
  %v1425 = vrot.slane %v1424, 4
  %v1427 = vshll.u32 %v843, 16
  %v1429 = vrot.slane %v1427, 5
  %v1430 = vsel %vm862, %v1425, %v1429
  %v1431 = vshrl.u32 %v843, 16
  %v1433 = vrot.slane %v1431, 4
  %v1434 = vor.u32 %v1433, %v1429
  %v1435 = vrot.slane %v1434, 4
  %v1437 = vshll.u32 %v844, 16
  %v1439 = vrot.slane %v1437, 5
  %v1440 = vsel %vm862, %v1435, %v1439
  %v1441 = vshrl.u32 %v844, 16
  %v1443 = vrot.slane %v1441, 4
  %v1444 = vor.u32 %v1443, %v1439
  %v1445 = vrot.slane %v1444, 4
  %v1447 = vshll.u32 %v845, 16
  %v1449 = vrot.slane %v1447, 5
  %v1450 = vsel %vm862, %v1445, %v1449
  %v1451 = vshrl.u32 %v845, 16
  %v1453 = vrot.slane %v1451, 4
  %v1454 = vor.u32 %v1453, %v1449
  %v1455 = vrot.slane %v1454, 4
  %v1457 = vshll.u32 %v846, 16
  %v1459 = vrot.slane %v1457, 5
  %v1460 = vsel %vm862, %v1455, %v1459
  %v1461 = vshrl.u32 %v846, 16
  %v1463 = vrot.slane %v1461, 4
  %v1464 = vor.u32 %v1463, %v1459
  %v1465 = vrot.slane %v1464, 4
  %v1467 = vshll.u32 %v847, 16
  %v1469 = vrot.slane %v1467, 5
  %v1470 = vsel %vm862, %v1465, %v1469
  %v1471 = vshrl.u32 %v847, 16
  %v1473 = vrot.slane %v1471, 4
  %v1474 = vor.u32 %v1473, %v1469
  %v1475 = vrot.slane %v1474, 4
  %v1477 = vshll.u32 %v848, 16
  %v1479 = vrot.slane %v1477, 5
  %v1480 = vsel %vm862, %v1475, %v1479
  %v1481 = vshrl.u32 %v848, 16
  %v1483 = vrot.slane %v1481, 4
  %v1484 = vor.u32 %v1483, %v1479
  %v1485 = vrot.slane %v1484, 4
  %v1487 = vshll.u32 %v849, 16
  %v1489 = vrot.slane %v1487, 5
  %v1490 = vsel %vm862, %v1485, %v1489
  %v1491 = vshrl.u32 %v849, 16
  %v1493 = vrot.slane %v1491, 4
  %v1494 = vor.u32 %v1493, %v1489
  %v1495 = vrot.slane %v1494, 4
  %v1497 = vshll.u32 %v850, 16
  %v1499 = vrot.slane %v1497, 5
  %v1500 = vsel %vm862, %v1495, %v1499
  %v1501 = vshrl.u32 %v850, 16
  %v1503 = vrot.slane %v1501, 4
  %v1504 = vor.u32 %v1503, %v1499
  %v1505 = vrot.slane %v1504, 4
  %v1507 = vshll.u32 %v851, 16
  %v1509 = vrot.slane %v1507, 5
  %v1510 = vsel %vm862, %v1505, %v1509
  %v1511 = vshrl.u32 %v851, 16
  %v1513 = vrot.slane %v1511, 4
  %v1514 = vor.u32 %v1513, %v1509
  %v1515 = vrot.slane %v1514, 4
  %v1517 = vshll.u32 %v852, 16
  %v1519 = vrot.slane %v1517, 5
  %v1520 = vsel %vm862, %v1515, %v1519
  %v1521 = vshrl.u32 %v852, 16
  %v1523 = vrot.slane %v1521, 4
  %v1524 = vor.u32 %v1523, %v1519
  %v1525 = vrot.slane %v1524, 4
  %v1527 = vshll.u32 %v853, 16
  %v1529 = vrot.slane %v1527, 5
  %v1530 = vsel %vm862, %v1525, %v1529
  %v1531 = vshrl.u32 %v853, 16
  %v1533 = vrot.slane %v1531, 4
  %v1534 = vor.u32 %v1533, %v1529
  %v1535 = vrot.slane %v1534, 4
  %v1537 = vshll.u32 %v854, 16
  %v1539 = vrot.slane %v1537, 5
  %v1540 = vsel %vm862, %v1535, %v1539
  %v1541 = vshrl.u32 %v854, 16
  %v1543 = vrot.slane %v1541, 4
  %v1544 = vor.u32 %v1543, %v1539
  %v1545 = vrot.slane %v1544, 4
  %v1547 = vshll.u32 %v855, 16
  %v1549 = vrot.slane %v1547, 5
  %v1550 = vsel %vm862, %v1545, %v1549
  %v1551 = vshrl.u32 %v855, 16
  %v1553 = vrot.slane %v1551, 4
  %v1554 = vor.u32 %v1553, %v1549
  %v1555 = vrot.slane %v1554, 4
  %v1557 = vshll.u32 %v856, 16
  %v1559 = vrot.slane %v1557, 5
  %v1560 = vsel %vm862, %v1555, %v1559
  %v1561 = vshrl.u32 %v856, 16
  %v1563 = vrot.slane %v1561, 4
  %v1564 = vor.u32 %v1563, %v1559
  %v1565 = vrot.slane %v1564, 4
  %v1567 = vshll.u32 %v857, 16
  %v1569 = vrot.slane %v1567, 5
  %v1570 = vsel %vm862, %v1565, %v1569
  %v1571 = vshrl.u32 %v857, 16
  %v1573 = vrot.slane %v1571, 4
  %v1574 = vor.u32 %v1573, %v1569
  %v1575 = vrot.slane %v1574, 4
  %v1577 = vshll.u32 %v858, 16
  %v1579 = vrot.slane %v1577, 5
  %v1580 = vsel %vm862, %v1575, %v1579
  %v1581 = vshrl.u32 %v858, 16
  %v1583 = vrot.slane %v1581, 4
  %v1584 = vor.u32 %v1583, %v1579
  %v1585 = vrot.slane %v1584, 4
  %v1587 = vshll.u32 %v859, 16
  %v1589 = vrot.slane %v1587, 5
  %v1590 = vsel %vm862, %v1585, %v1589
  %v1591 = vld [vmem:[%s1] sm:$0xc]
  %v1592 = vunpack.c.l.b16 %v876
  %v1593 = vunpack.c.l.b16 %v886
  %v1594 = vunpack.c.l.b16 %v896
  %v1595 = vunpack.c.l.b16 %v906
  %v1596 = vunpack.c.l.b16 %v916
  %v1597 = vunpack.c.l.b16 %v926
  %v1598 = vunpack.c.l.b16 %v936
  %v1599 = vunpack.c.l.b16 %v946
  %v1600 = vunpack.c.l.b16 %v956
  %v1601 = vunpack.c.l.b16 %v966
  %v1602 = vunpack.c.l.b16 %v976
  %v1603 = vunpack.c.l.b16 %v986
  %v1604 = vunpack.c.l.b16 %v996
  %v1605 = vunpack.c.l.b16 %v1006
  %v1606 = vunpack.c.l.b16 %v1016
  %v1607 = vunpack.c.l.b16 %v1026
  %v1608 = vunpack.c.l.b16 %v1036
  %v1609 = vunpack.c.l.b16 %v1046
  %v1610 = vunpack.c.l.b16 %v1056
  %v1611 = vunpack.c.l.b16 %v1066
  %v1612 = vunpack.c.l.b16 %v1076
  %v1613 = vunpack.c.l.b16 %v1086
  %v1614 = vunpack.c.l.b16 %v1096
  %v1615 = vunpack.c.l.b16 %v1106
  %v1616 = vunpack.c.l.b16 %v1116
  %v1617 = vunpack.c.l.b16 %v1126
  %v1618 = vunpack.c.l.b16 %v1136
  %v1619 = vunpack.c.l.b16 %v1146
  %v1620 = vunpack.c.l.b16 %v1156
  %v1621 = vunpack.c.l.b16 %v1166
  %v1622 = vunpack.c.l.b16 %v1176
  %v1623 = vunpack.c.l.b16 %v1186
  %v1624 = vunpack.c.l.b16 %v1196
  %v1625 = vunpack.c.l.b16 %v1206
  %v1626 = vunpack.c.l.b16 %v1216
  %v1627 = vunpack.c.l.b16 %v1226
  %v1628 = vunpack.c.l.b16 %v1240
  %v1629 = vunpack.c.l.b16 %v1250
  %v1630 = vunpack.c.l.b16 %v1260
  %v1631 = vunpack.c.l.b16 %v1270
  %v1632 = vunpack.c.l.b16 %v1280
  %v1633 = vunpack.c.l.b16 %v1290
  %v1634 = vunpack.c.l.b16 %v1300
  %v1635 = vunpack.c.l.b16 %v1310
  %v1636 = vunpack.c.l.b16 %v1320
  %v1637 = vunpack.c.l.b16 %v1330
  %v1638 = vunpack.c.l.b16 %v1340
  %v1639 = vunpack.c.l.b16 %v1350
  %v1640 = vunpack.c.l.b16 %v1360
  %v1641 = vunpack.c.l.b16 %v1370
  %v1642 = vunpack.c.l.b16 %v1380
  %v1643 = vunpack.c.l.b16 %v1390
  %v1644 = vunpack.c.l.b16 %v1400
  %v1645 = vunpack.c.l.b16 %v1410
  %v1646 = vunpack.c.l.b16 %v1420
  %v1647 = vunpack.c.l.b16 %v1430
  %v1648 = vunpack.c.l.b16 %v1440
  %v1649 = vunpack.c.l.b16 %v1450
  %v1650 = vunpack.c.l.b16 %v1460
  %v1651 = vunpack.c.l.b16 %v1470
  %v1652 = vunpack.c.l.b16 %v1480
  %v1653 = vunpack.c.l.b16 %v1490
  %v1654 = vunpack.c.l.b16 %v1500
  %v1655 = vunpack.c.l.b16 %v1510
  %v1656 = vunpack.c.l.b16 %v1520
  %v1657 = vunpack.c.l.b16 %v1530
  %v1658 = vunpack.c.l.b16 %v1540
  %v1659 = vunpack.c.l.b16 %v1550
  %v1660 = vunpack.c.l.b16 %v1560
  %v1661 = vunpack.c.l.b16 %v1570
  %v1662 = vunpack.c.l.b16 %v1580
  %v1663 = vunpack.c.l.b16 %v1590
  %v1664 = vpack.c.b16 %v1593, %v1592
  %v1665 = vpack.c.b16 %v1595, %v1594
  %v1666 = vpack.c.b16 %v1597, %v1596
  %v1667 = vpack.c.b16 %v1599, %v1598
  %v1668 = vpack.c.b16 %v1601, %v1600
  %v1669 = vpack.c.b16 %v1603, %v1602
  %v1670 = vpack.c.b16 %v1605, %v1604
  %v1671 = vpack.c.b16 %v1607, %v1606
  %v1672 = vpack.c.b16 %v1609, %v1608
  %v1673 = vpack.c.b16 %v1611, %v1610
  %v1674 = vpack.c.b16 %v1613, %v1612
  %v1675 = vpack.c.b16 %v1615, %v1614
  %v1676 = vpack.c.b16 %v1617, %v1616
  %v1677 = vpack.c.b16 %v1619, %v1618
  %v1678 = vpack.c.b16 %v1621, %v1620
  %v1679 = vpack.c.b16 %v1623, %v1622
  %v1680 = vpack.c.b16 %v1625, %v1624
  %v1681 = vpack.c.b16 %v1627, %v1626
  %v1682 = vpack.c.b16 %v1629, %v1628
  %v1683 = vpack.c.b16 %v1631, %v1630
  %v1684 = vpack.c.b16 %v1633, %v1632
  %v1685 = vpack.c.b16 %v1635, %v1634
  %v1686 = vpack.c.b16 %v1637, %v1636
  %v1687 = vpack.c.b16 %v1639, %v1638
  %v1688 = vpack.c.b16 %v1641, %v1640
  %v1689 = vpack.c.b16 %v1643, %v1642
  %v1690 = vpack.c.b16 %v1645, %v1644
  %v1691 = vpack.c.b16 %v1647, %v1646
  %v1692 = vpack.c.b16 %v1649, %v1648
  %v1693 = vpack.c.b16 %v1651, %v1650
  %v1694 = vpack.c.b16 %v1653, %v1652
  %v1695 = vpack.c.b16 %v1655, %v1654
  %v1696 = vpack.c.b16 %v1657, %v1656
  %v1697 = vpack.c.b16 %v1659, %v1658
  %v1698 = vpack.c.b16 %v1661, %v1660
  %v1699 = vpack.c.b16 %v1663, %v1662
  %v1701 = vunpack.c.l.b16 %v1591
  %v1702 = vpack.c.b16 %v1701, %v1701
  %v1703 = vrot.slane %v1702, 2
  %v1705 = vsel %vm280, %v1664, 0
  %v1708 = vsel %vm280, %v1665, 0
  %v1711 = vsel %vm280, %v1666, 0
  %v1714 = vsel %vm280, %v1667, 0
  %v1717 = vsel %vm280, %v1668, 0
  %v1720 = vsel %vm280, %v1669, 0
  %v1723 = vsel %vm280, %v1670, 0
  %v1726 = vsel %vm280, %v1671, 0
  %v1729 = vsel %vm280, %v1672, 0
  %v1732 = vsel %vm280, %v1673, 0
  %v1735 = vsel %vm280, %v1674, 0
  %v1738 = vsel %vm280, %v1675, 0
  %v1741 = vsel %vm280, %v1676, 0
  %v1744 = vsel %vm280, %v1677, 0
  %v1747 = vsel %vm280, %v1678, 0
  %v1750 = vsel %vm280, %v1679, 0
  %v1753 = vsel %vm280, %v1680, 0
  %v1756 = vsel %vm280, %v1681, 0
  %v1759 = vsel %vm280, %v1682, 0
  %v1762 = vsel %vm280, %v1683, 0
  %v1765 = vsel %vm280, %v1684, 0
  %v1768 = vsel %vm280, %v1685, 0
  %v1771 = vsel %vm280, %v1686, 0
  %v1774 = vsel %vm280, %v1687, 0
  %v1777 = vsel %vm280, %v1688, 0
  %v1780 = vsel %vm280, %v1689, 0
  %v1783 = vsel %vm280, %v1690, 0
  %v1786 = vsel %vm280, %v1691, 0
  %v1789 = vsel %vm280, %v1692, 0
  %v1792 = vsel %vm280, %v1693, 0
  %v1795 = vsel %vm280, %v1694, 0
  %v1798 = vsel %vm280, %v1695, 0
  %v1801 = vsel %vm280, %v1696, 0
  %v1804 = vsel %vm280, %v1697, 0
  %v1807 = vsel %vm280, %v1698, 0
  %v1810 = vsel %vm280, %v1699, 0
  %v1813 = vsel %vm389, %v1703, 0
  %1815 = vmatprep.subr.bf16.mxu0 0
  %1816 = vmatpush1.bf16.msra.mxu0 0
  %1817 = vmatprep.subr.bf16.mxu0 0
  %1818 = vmatpush1.bf16.msra.mxu0 0
  %1819 = vmatprep.subr.bf16.mxu0 0
  %1820 = vmatpush1.bf16.msra.mxu0 0
  %1821 = vmatprep.subr.bf16.mxu0 0
  %1822 = vmatpush1.bf16.msra.mxu0 0
  %1823 = vmatprep.subr.bf16.mxu0 0
  %1824 = vmatpush1.bf16.msra.mxu0 0
  %1825 = vmatprep.subr.bf16.mxu0 0
  %1826 = vmatpush1.bf16.msra.mxu0 0
  %1827 = vmatprep.subr.bf16.mxu0 0
  %1828 = vmatpush1.bf16.msra.mxu0 0
  %1829 = vmatprep.subr.bf16.mxu0 0
  %1830 = vmatpush1.bf16.msra.mxu0 %v1813
  %1831 = vmatprep.subr.bf16.mxu0 0
  %1832 = vmatpush2.bf16.msra.mxu0 0
  %1833 = vmatprep.subr.bf16.mxu0 0
  %1834 = vmatpush2.bf16.msra.mxu0 0
  %1835 = vmatprep.subr.bf16.mxu0 0
  %1836 = vmatpush2.bf16.msra.mxu0 0
  %1837 = vmatprep.subr.bf16.mxu0 0
  %1838 = vmatpush2.bf16.msra.mxu0 0
  %1839 = vmatprep.subr.bf16.mxu0 0
  %1840 = vmatpush2.bf16.msra.mxu0 0
  %1841 = vmatprep.subr.bf16.mxu0 0
  %1842 = vmatpush2.bf16.msra.mxu0 0
  %1843 = vmatprep.subr.bf16.mxu0 0
  %1844 = vmatpush2.bf16.msra.mxu0 0
  %1845 = vmatprep.subr.bf16.mxu0 0
  %1846 = vmatpush2.bf16.msra.mxu0 0
  %1847 = vmatprep.mubr.bf16.mxu0 0
  %1848 = vmatmul.mubr.bf16.gmra.mxu0 %v1705
  %v1849 = vpop.f32.mrf.mxu0
  %v1850 = vadd.f32 0.0, %v1849
  %v1851 = vpop.f32.mrf.mxu0
  %v1852 = vpop.f32.mrf.mxu0
  %v1853 = vadd.f32 0.0, %v1852
  %v1854 = vpop.f32.mrf.mxu0
  %1855 = vmatprep.mubr.bf16.mxu0 0
  %1856 = vmatmul.mubr.bf16.gmra.mxu0 %v1708
  %v1857 = vpop.f32.mrf.mxu0
  %v1858 = vadd.f32 0.0, %v1857
  %v1859 = vpop.f32.mrf.mxu0
  %v1860 = vpop.f32.mrf.mxu0
  %v1861 = vadd.f32 0.0, %v1860
  %v1862 = vpop.f32.mrf.mxu0
  %1863 = vmatprep.mubr.bf16.mxu0 0
  %1864 = vmatmul.mubr.bf16.gmra.mxu0 %v1711
  %v1865 = vpop.f32.mrf.mxu0
  %v1866 = vadd.f32 0.0, %v1865
  %v1867 = vpop.f32.mrf.mxu0
  %v1868 = vpop.f32.mrf.mxu0
  %v1869 = vadd.f32 0.0, %v1868
  %v1870 = vpop.f32.mrf.mxu0
  %1871 = vmatprep.mubr.bf16.mxu0 0
  %1872 = vmatmul.mubr.bf16.gmra.mxu0 %v1714
  %v1873 = vpop.f32.mrf.mxu0
  %v1874 = vadd.f32 0.0, %v1873
  %v1875 = vpop.f32.mrf.mxu0
  %v1876 = vpop.f32.mrf.mxu0
  %v1877 = vadd.f32 0.0, %v1876
  %v1878 = vpop.f32.mrf.mxu0
  %1879 = vmatprep.mubr.bf16.mxu0 0
  %1880 = vmatmul.mubr.bf16.gmra.mxu0 %v1717
  %v1881 = vpop.f32.mrf.mxu0
  %v1882 = vadd.f32 0.0, %v1881
  %v1883 = vpop.f32.mrf.mxu0
  %v1884 = vpop.f32.mrf.mxu0
  %v1885 = vadd.f32 0.0, %v1884
  %v1886 = vpop.f32.mrf.mxu0
  %1887 = vmatprep.mubr.bf16.mxu0 0
  %1888 = vmatmul.mubr.bf16.gmra.mxu0 %v1720
  %v1889 = vpop.f32.mrf.mxu0
  %v1890 = vadd.f32 0.0, %v1889
  %v1891 = vpop.f32.mrf.mxu0
  %v1892 = vpop.f32.mrf.mxu0
  %v1893 = vadd.f32 0.0, %v1892
  %v1894 = vpop.f32.mrf.mxu0
  %1895 = vmatprep.mubr.bf16.mxu0 0
  %1896 = vmatmul.mubr.bf16.gmra.mxu0 %v1723
  %v1897 = vpop.f32.mrf.mxu0
  %v1898 = vadd.f32 0.0, %v1897
  %v1899 = vpop.f32.mrf.mxu0
  %v1900 = vpop.f32.mrf.mxu0
  %v1901 = vadd.f32 0.0, %v1900
  %v1902 = vpop.f32.mrf.mxu0
  %1903 = vmatprep.mubr.bf16.mxu0 0
  %1904 = vmatmul.mubr.bf16.gmra.mxu0 %v1726
  %v1905 = vpop.f32.mrf.mxu0
  %v1906 = vadd.f32 0.0, %v1905
  %v1907 = vpop.f32.mrf.mxu0
  %v1908 = vpop.f32.mrf.mxu0
  %v1909 = vadd.f32 0.0, %v1908
  %v1910 = vpop.f32.mrf.mxu0
  %1911 = vmatprep.mubr.bf16.mxu0 0
  %1912 = vmatmul.mubr.bf16.gmra.mxu0 %v1729
  %v1913 = vpop.f32.mrf.mxu0
  %v1914 = vadd.f32 0.0, %v1913
  %v1915 = vpop.f32.mrf.mxu0
  %v1916 = vpop.f32.mrf.mxu0
  %v1917 = vadd.f32 0.0, %v1916
  %v1918 = vpop.f32.mrf.mxu0
  %1919 = vmatprep.mubr.bf16.mxu0 0
  %1920 = vmatmul.mubr.bf16.gmra.mxu0 %v1732
  %v1921 = vpop.f32.mrf.mxu0
  %v1922 = vadd.f32 0.0, %v1921
  %v1923 = vpop.f32.mrf.mxu0
  %v1924 = vpop.f32.mrf.mxu0
  %v1925 = vadd.f32 0.0, %v1924
  %v1926 = vpop.f32.mrf.mxu0
  %1927 = vmatprep.mubr.bf16.mxu0 0
  %1928 = vmatmul.mubr.bf16.gmra.mxu0 %v1735
  %v1929 = vpop.f32.mrf.mxu0
  %v1930 = vadd.f32 0.0, %v1929
  %v1931 = vpop.f32.mrf.mxu0
  %v1932 = vpop.f32.mrf.mxu0
  %v1933 = vadd.f32 0.0, %v1932
  %v1934 = vpop.f32.mrf.mxu0
  %1935 = vmatprep.mubr.bf16.mxu0 0
  %1936 = vmatmul.mubr.bf16.gmra.mxu0 %v1738
  %v1937 = vpop.f32.mrf.mxu0
  %v1938 = vadd.f32 0.0, %v1937
  %v1939 = vpop.f32.mrf.mxu0
  %v1940 = vpop.f32.mrf.mxu0
  %v1941 = vadd.f32 0.0, %v1940
  %v1942 = vpop.f32.mrf.mxu0
  %1943 = vmatprep.mubr.bf16.mxu0 0
  %1944 = vmatmul.mubr.bf16.gmra.mxu0 %v1741
  %v1945 = vpop.f32.mrf.mxu0
  %v1946 = vadd.f32 0.0, %v1945
  %v1947 = vpop.f32.mrf.mxu0
  %v1948 = vpop.f32.mrf.mxu0
  %v1949 = vadd.f32 0.0, %v1948
  %v1950 = vpop.f32.mrf.mxu0
  %1951 = vmatprep.mubr.bf16.mxu0 0
  %1952 = vmatmul.mubr.bf16.gmra.mxu0 %v1744
  %v1953 = vpop.f32.mrf.mxu0
  %v1954 = vadd.f32 0.0, %v1953
  %v1955 = vpop.f32.mrf.mxu0
  %v1956 = vpop.f32.mrf.mxu0
  %v1957 = vadd.f32 0.0, %v1956
  %v1958 = vpop.f32.mrf.mxu0
  %1959 = vmatprep.mubr.bf16.mxu0 0
  %1960 = vmatmul.mubr.bf16.gmra.mxu0 %v1747
  %v1961 = vpop.f32.mrf.mxu0
  %v1962 = vadd.f32 0.0, %v1961
  %v1963 = vpop.f32.mrf.mxu0
  %v1964 = vpop.f32.mrf.mxu0
  %v1965 = vadd.f32 0.0, %v1964
  %v1966 = vpop.f32.mrf.mxu0
  %1967 = vmatprep.mubr.bf16.mxu0 0
  %1968 = vmatmul.mubr.bf16.gmra.mxu0 %v1750
  %v1969 = vpop.f32.mrf.mxu0
  %v1970 = vadd.f32 0.0, %v1969
  %v1971 = vpop.f32.mrf.mxu0
  %v1972 = vpop.f32.mrf.mxu0
  %v1973 = vadd.f32 0.0, %v1972
  %v1974 = vpop.f32.mrf.mxu0
  %1975 = vmatprep.mubr.bf16.mxu0 0
  %1976 = vmatmul.mubr.bf16.gmra.mxu0 %v1753
  %v1977 = vpop.f32.mrf.mxu0
  %v1978 = vadd.f32 0.0, %v1977
  %v1979 = vpop.f32.mrf.mxu0
  %v1980 = vpop.f32.mrf.mxu0
  %v1981 = vadd.f32 0.0, %v1980
  %v1982 = vpop.f32.mrf.mxu0
  %1983 = vmatprep.mubr.bf16.mxu0 0
  %1984 = vmatmul.mubr.bf16.gmra.mxu0 %v1756
  %v1985 = vpop.f32.mrf.mxu0
  %v1986 = vadd.f32 0.0, %v1985
  %v1987 = vpop.f32.mrf.mxu0
  %v1988 = vpop.f32.mrf.mxu0
  %v1989 = vadd.f32 0.0, %v1988
  %v1990 = vpop.f32.mrf.mxu0
  %1991 = vmatprep.mubr.bf16.mxu0 0
  %1992 = vmatmul.mubr.bf16.gmra.mxu0 %v1759
  %v1993 = vpop.f32.mrf.mxu0
  %v1994 = vadd.f32 0.0, %v1993
  %v1995 = vpop.f32.mrf.mxu0
  %v1996 = vpop.f32.mrf.mxu0
  %v1997 = vadd.f32 0.0, %v1996
  %v1998 = vpop.f32.mrf.mxu0
  %1999 = vmatprep.mubr.bf16.mxu0 0
  %2000 = vmatmul.mubr.bf16.gmra.mxu0 %v1762
  %v2001 = vpop.f32.mrf.mxu0
  %v2002 = vadd.f32 0.0, %v2001
  %v2003 = vpop.f32.mrf.mxu0
  %v2004 = vpop.f32.mrf.mxu0
  %v2005 = vadd.f32 0.0, %v2004
  %v2006 = vpop.f32.mrf.mxu0
  %2007 = vmatprep.mubr.bf16.mxu0 0
  %2008 = vmatmul.mubr.bf16.gmra.mxu0 %v1765
  %v2009 = vpop.f32.mrf.mxu0
  %v2010 = vadd.f32 0.0, %v2009
  %v2011 = vpop.f32.mrf.mxu0
  %v2012 = vpop.f32.mrf.mxu0
  %v2013 = vadd.f32 0.0, %v2012
  %v2014 = vpop.f32.mrf.mxu0
  %2015 = vmatprep.mubr.bf16.mxu0 0
  %2016 = vmatmul.mubr.bf16.gmra.mxu0 %v1768
  %v2017 = vpop.f32.mrf.mxu0
  %v2018 = vadd.f32 0.0, %v2017
  %v2019 = vpop.f32.mrf.mxu0
  %v2020 = vpop.f32.mrf.mxu0
  %v2021 = vadd.f32 0.0, %v2020
  %v2022 = vpop.f32.mrf.mxu0
  %2023 = vmatprep.mubr.bf16.mxu0 0
  %2024 = vmatmul.mubr.bf16.gmra.mxu0 %v1771
  %v2025 = vpop.f32.mrf.mxu0
  %v2026 = vadd.f32 0.0, %v2025
  %v2027 = vpop.f32.mrf.mxu0
  %v2028 = vpop.f32.mrf.mxu0
  %v2029 = vadd.f32 0.0, %v2028
  %v2030 = vpop.f32.mrf.mxu0
  %2031 = vmatprep.mubr.bf16.mxu0 0
  %2032 = vmatmul.mubr.bf16.gmra.mxu0 %v1774
  %v2033 = vpop.f32.mrf.mxu0
  %v2034 = vadd.f32 0.0, %v2033
  %v2035 = vpop.f32.mrf.mxu0
  %v2036 = vpop.f32.mrf.mxu0
  %v2037 = vadd.f32 0.0, %v2036
  %v2038 = vpop.f32.mrf.mxu0
  %2039 = vmatprep.mubr.bf16.mxu0 0
  %2040 = vmatmul.mubr.bf16.gmra.mxu0 %v1777
  %v2041 = vpop.f32.mrf.mxu0
  %v2042 = vadd.f32 0.0, %v2041
  %v2043 = vpop.f32.mrf.mxu0
  %v2044 = vpop.f32.mrf.mxu0
  %v2045 = vadd.f32 0.0, %v2044
  %v2046 = vpop.f32.mrf.mxu0
  %2047 = vmatprep.mubr.bf16.mxu0 0
  %2048 = vmatmul.mubr.bf16.gmra.mxu0 %v1780
  %v2049 = vpop.f32.mrf.mxu0
  %v2050 = vadd.f32 0.0, %v2049
  %v2051 = vpop.f32.mrf.mxu0
  %v2052 = vpop.f32.mrf.mxu0
  %v2053 = vadd.f32 0.0, %v2052
  %v2054 = vpop.f32.mrf.mxu0
  %2055 = vmatprep.mubr.bf16.mxu0 0
  %2056 = vmatmul.mubr.bf16.gmra.mxu0 %v1783
  %v2057 = vpop.f32.mrf.mxu0
  %v2058 = vadd.f32 0.0, %v2057
  %v2059 = vpop.f32.mrf.mxu0
  %v2060 = vpop.f32.mrf.mxu0
  %v2061 = vadd.f32 0.0, %v2060
  %v2062 = vpop.f32.mrf.mxu0
  %2063 = vmatprep.mubr.bf16.mxu0 0
  %2064 = vmatmul.mubr.bf16.gmra.mxu0 %v1786
  %v2065 = vpop.f32.mrf.mxu0
  %v2066 = vadd.f32 0.0, %v2065
  %v2067 = vpop.f32.mrf.mxu0
  %v2068 = vpop.f32.mrf.mxu0
  %v2069 = vadd.f32 0.0, %v2068
  %v2070 = vpop.f32.mrf.mxu0
  %2071 = vmatprep.mubr.bf16.mxu0 0
  %2072 = vmatmul.mubr.bf16.gmra.mxu0 %v1789
  %v2073 = vpop.f32.mrf.mxu0
  %v2074 = vadd.f32 0.0, %v2073
  %v2075 = vpop.f32.mrf.mxu0
  %v2076 = vpop.f32.mrf.mxu0
  %v2077 = vadd.f32 0.0, %v2076
  %v2078 = vpop.f32.mrf.mxu0
  %2079 = vmatprep.mubr.bf16.mxu0 0
  %2080 = vmatmul.mubr.bf16.gmra.mxu0 %v1792
  %v2081 = vpop.f32.mrf.mxu0
  %v2082 = vadd.f32 0.0, %v2081
  %v2083 = vpop.f32.mrf.mxu0
  %v2084 = vpop.f32.mrf.mxu0
  %v2085 = vadd.f32 0.0, %v2084
  %v2086 = vpop.f32.mrf.mxu0
  %2087 = vmatprep.mubr.bf16.mxu0 0
  %2088 = vmatmul.mubr.bf16.gmra.mxu0 %v1795
  %v2089 = vpop.f32.mrf.mxu0
  %v2090 = vadd.f32 0.0, %v2089
  %v2091 = vpop.f32.mrf.mxu0
  %v2092 = vpop.f32.mrf.mxu0
  %v2093 = vadd.f32 0.0, %v2092
  %v2094 = vpop.f32.mrf.mxu0
  %2095 = vmatprep.mubr.bf16.mxu0 0
  %2096 = vmatmul.mubr.bf16.gmra.mxu0 %v1798
  %v2097 = vpop.f32.mrf.mxu0
  %v2098 = vadd.f32 0.0, %v2097
  %v2099 = vpop.f32.mrf.mxu0
  %v2100 = vpop.f32.mrf.mxu0
  %v2101 = vadd.f32 0.0, %v2100
  %v2102 = vpop.f32.mrf.mxu0
  %2103 = vmatprep.mubr.bf16.mxu0 0
  %2104 = vmatmul.mubr.bf16.gmra.mxu0 %v1801
  %v2105 = vpop.f32.mrf.mxu0
  %v2106 = vadd.f32 0.0, %v2105
  %v2107 = vpop.f32.mrf.mxu0
  %v2108 = vpop.f32.mrf.mxu0
  %v2109 = vadd.f32 0.0, %v2108
  %v2110 = vpop.f32.mrf.mxu0
  %2111 = vmatprep.mubr.bf16.mxu0 0
  %2112 = vmatmul.mubr.bf16.gmra.mxu0 %v1804
  %v2113 = vpop.f32.mrf.mxu0
  %v2114 = vadd.f32 0.0, %v2113
  %v2115 = vpop.f32.mrf.mxu0
  %v2116 = vpop.f32.mrf.mxu0
  %v2117 = vadd.f32 0.0, %v2116
  %v2118 = vpop.f32.mrf.mxu0
  %2119 = vmatprep.mubr.bf16.mxu0 0
  %2120 = vmatmul.mubr.bf16.gmra.mxu0 %v1807
  %v2121 = vpop.f32.mrf.mxu0
  %v2122 = vadd.f32 0.0, %v2121
  %v2123 = vpop.f32.mrf.mxu0
  %v2124 = vpop.f32.mrf.mxu0
  %v2125 = vadd.f32 0.0, %v2124
  %v2126 = vpop.f32.mrf.mxu0
  %2127 = vmatprep.mubr.bf16.mxu0 0
  %2128 = vmatmul.mubr.bf16.gmra.mxu0 %v1810
  %v2129 = vpop.f32.mrf.mxu0
  %v2130 = vadd.f32 0.0, %v2129
  %v2131 = vpop.f32.mrf.mxu0
  %v2132 = vpop.f32.mrf.mxu0
  %v2133 = vadd.f32 0.0, %v2132
  %v2134 = vpop.f32.mrf.mxu0
  %2135 = vdwg.mxu0
  %v2136 = vld [vmem:[#allocation2] sm:$0xff]
  %v2137 = vld [vmem:[#allocation2 + $0x8] sm:$0xff]
  %v2138 = vld [vmem:[#allocation2 + $0x10] sm:$0xff]
  %v2139 = vld [vmem:[#allocation2 + $0x18] sm:$0xff]
  %v2140 = vld [vmem:[#allocation2 + $0x20] sm:$0xff]
  %v2141 = vld [vmem:[#allocation2 + $0x28] sm:$0xff]
  %v2142 = vld [vmem:[#allocation2 + $0x30] sm:$0xff]
  %v2143 = vld [vmem:[#allocation2 + $0x38] sm:$0xff]
  %v2144 = vld [vmem:[#allocation2 + $0x40] sm:$0xff]
  %v2145 = vld [vmem:[#allocation2 + $0x48] sm:$0xff]
  %v2146 = vld [vmem:[#allocation2 + $0x50] sm:$0xff]
  %v2147 = vld [vmem:[#allocation2 + $0x58] sm:$0xff]
  %v2148 = vld [vmem:[#allocation2 + $0x60] sm:$0xff]
  %v2149 = vld [vmem:[#allocation2 + $0x68] sm:$0xff]
  %v2150 = vld [vmem:[#allocation2 + $0x70] sm:$0xff]
  %v2151 = vld [vmem:[#allocation2 + $0x78] sm:$0xff]
  %v2152 = vld [vmem:[#allocation2 + $0x80] sm:$0xff]
  %v2153 = vld [vmem:[#allocation2 + $0x88] sm:$0xff]
  %v2154 = vld [vmem:[#allocation2 + $0x90] sm:$0xff]
  %v2155 = vld [vmem:[#allocation2 + $0x98] sm:$0xff]
  %v2156 = vld [vmem:[#allocation2 + $0xa0] sm:$0xff]
  %v2157 = vld [vmem:[#allocation2 + $0xa8] sm:$0xff]
  %v2158 = vld [vmem:[#allocation2 + $0xb0] sm:$0xff]
  %v2159 = vld [vmem:[#allocation2 + $0xb8] sm:$0xff]
  %v2160 = vld [vmem:[#allocation2 + $0xc0] sm:$0xff]
  %v2161 = vld [vmem:[#allocation2 + $0xc8] sm:$0xff]
  %v2162 = vld [vmem:[#allocation2 + $0xd0] sm:$0xff]
  %v2163 = vld [vmem:[#allocation2 + $0xd8] sm:$0xff]
  %v2164 = vld [vmem:[#allocation2 + $0xe0] sm:$0xff]
  %v2165 = vld [vmem:[#allocation2 + $0xe8] sm:$0xff]
  %v2166 = vld [vmem:[#allocation2 + $0xf0] sm:$0xff]
  %v2167 = vld [vmem:[#allocation2 + $0xf8] sm:$0xff]
  %v2168 = vld [vmem:[#allocation2 + $0x100] sm:$0xff]
  %v2169 = vld [vmem:[#allocation2 + $0x108] sm:$0xff]
  %v2170 = vld [vmem:[#allocation2 + $0x110] sm:$0xff]
  %v2171 = vld [vmem:[#allocation2 + $0x118] sm:$0xff]
  %v2172 = vld [vmem:[#allocation2 + $0x120] sm:$0xff]
  %v2173 = vld [vmem:[#allocation2 + $0x128] sm:$0xff]
  %v2174 = vld [vmem:[#allocation2 + $0x130] sm:$0xff]
  %v2175 = vld [vmem:[#allocation2 + $0x138] sm:$0xff]
  %v2176 = vld [vmem:[#allocation2 + $0x140] sm:$0xff]
  %v2177 = vld [vmem:[#allocation2 + $0x148] sm:$0xff]
  %v2178 = vld [vmem:[#allocation2 + $0x150] sm:$0xff]
  %v2179 = vld [vmem:[#allocation2 + $0x158] sm:$0xff]
  %v2180 = vld [vmem:[#allocation2 + $0x160] sm:$0xff]
  %v2181 = vld [vmem:[#allocation2 + $0x168] sm:$0xff]
  %v2182 = vld [vmem:[#allocation2 + $0x170] sm:$0xff]
  %v2183 = vld [vmem:[#allocation2 + $0x178] sm:$0xff]
  %v2184 = vld [vmem:[#allocation2 + $0x180] sm:$0xff]
  %v2185 = vld [vmem:[#allocation2 + $0x188] sm:$0xff]
  %v2186 = vld [vmem:[#allocation2 + $0x190] sm:$0xff]
  %v2187 = vld [vmem:[#allocation2 + $0x198] sm:$0xff]
  %v2188 = vld [vmem:[#allocation2 + $0x1a0] sm:$0xff]
  %v2189 = vld [vmem:[#allocation2 + $0x1a8] sm:$0xff]
  %v2190 = vld [vmem:[#allocation2 + $0x1b0] sm:$0xff]
  %v2191 = vld [vmem:[#allocation2 + $0x1b8] sm:$0xff]
  %v2192 = vld [vmem:[#allocation2 + $0x1c0] sm:$0xff]
  %v2193 = vld [vmem:[#allocation2 + $0x1c8] sm:$0xff]
  %v2194 = vld [vmem:[#allocation2 + $0x1d0] sm:$0xff]
  %v2195 = vld [vmem:[#allocation2 + $0x1d8] sm:$0xff]
  %v2196 = vld [vmem:[#allocation2 + $0x1e0] sm:$0xff]
  %v2197 = vld [vmem:[#allocation2 + $0x1e8] sm:$0xff]
  %v2198 = vld [vmem:[#allocation2 + $0x1f0] sm:$0xff]
  %v2199 = vld [vmem:[#allocation2 + $0x1f8] sm:$0xff]
  %v2200 = vld [vmem:[#allocation2 + $0x200] sm:$0xff]
  %v2201 = vld [vmem:[#allocation2 + $0x208] sm:$0xff]
  %v2202 = vld [vmem:[#allocation2 + $0x210] sm:$0xff]
  %v2203 = vld [vmem:[#allocation2 + $0x218] sm:$0xff]
  %v2204 = vld [vmem:[#allocation2 + $0x220] sm:$0xff]
  %v2205 = vld [vmem:[#allocation2 + $0x228] sm:$0xff]
  %v2206 = vld [vmem:[#allocation2 + $0x230] sm:$0xff]
  %v2207 = vld [vmem:[#allocation2 + $0x238] sm:$0xff]
  %v2208 = vadd.f32 %v2136, %v1850
  %v2209 = vadd.f32 %v2137, %v1853
  %v2210 = vadd.f32 %v2138, %v1858
  %v2211 = vadd.f32 %v2139, %v1861
  %v2212 = vadd.f32 %v2140, %v1866
  %v2213 = vadd.f32 %v2141, %v1869
  %v2214 = vadd.f32 %v2142, %v1874
  %v2215 = vadd.f32 %v2143, %v1877
  %v2216 = vadd.f32 %v2144, %v1882
  %v2217 = vadd.f32 %v2145, %v1885
  %v2218 = vadd.f32 %v2146, %v1890
  %v2219 = vadd.f32 %v2147, %v1893
  %v2220 = vadd.f32 %v2148, %v1898
  %v2221 = vadd.f32 %v2149, %v1901
  %v2222 = vadd.f32 %v2150, %v1906
  %v2223 = vadd.f32 %v2151, %v1909
  %v2224 = vadd.f32 %v2152, %v1914
  %v2225 = vadd.f32 %v2153, %v1917
  %v2226 = vadd.f32 %v2154, %v1922
  %v2227 = vadd.f32 %v2155, %v1925
  %v2228 = vadd.f32 %v2156, %v1930
  %v2229 = vadd.f32 %v2157, %v1933
  %v2230 = vadd.f32 %v2158, %v1938
  %v2231 = vadd.f32 %v2159, %v1941
  %v2232 = vadd.f32 %v2160, %v1946
  %v2233 = vadd.f32 %v2161, %v1949
  %v2234 = vadd.f32 %v2162, %v1954
  %v2235 = vadd.f32 %v2163, %v1957
  %v2236 = vadd.f32 %v2164, %v1962
  %v2237 = vadd.f32 %v2165, %v1965
  %v2238 = vadd.f32 %v2166, %v1970
  %v2239 = vadd.f32 %v2167, %v1973
  %v2240 = vadd.f32 %v2168, %v1978
  %v2241 = vadd.f32 %v2169, %v1981
  %v2242 = vadd.f32 %v2170, %v1986
  %v2243 = vadd.f32 %v2171, %v1989
  %v2244 = vadd.f32 %v2172, %v1994
  %v2245 = vadd.f32 %v2173, %v1997
  %v2246 = vadd.f32 %v2174, %v2002
  %v2247 = vadd.f32 %v2175, %v2005
  %v2248 = vadd.f32 %v2176, %v2010
  %v2249 = vadd.f32 %v2177, %v2013
  %v2250 = vadd.f32 %v2178, %v2018
  %v2251 = vadd.f32 %v2179, %v2021
  %v2252 = vadd.f32 %v2180, %v2026
  %v2253 = vadd.f32 %v2181, %v2029
  %v2254 = vadd.f32 %v2182, %v2034
  %v2255 = vadd.f32 %v2183, %v2037
  %v2256 = vadd.f32 %v2184, %v2042
  %v2257 = vadd.f32 %v2185, %v2045
  %v2258 = vadd.f32 %v2186, %v2050
  %v2259 = vadd.f32 %v2187, %v2053
  %v2260 = vadd.f32 %v2188, %v2058
  %v2261 = vadd.f32 %v2189, %v2061
  %v2262 = vadd.f32 %v2190, %v2066
  %v2263 = vadd.f32 %v2191, %v2069
  %v2264 = vadd.f32 %v2192, %v2074
  %v2265 = vadd.f32 %v2193, %v2077
  %v2266 = vadd.f32 %v2194, %v2082
  %v2267 = vadd.f32 %v2195, %v2085
  %v2268 = vadd.f32 %v2196, %v2090
  %v2269 = vadd.f32 %v2197, %v2093
  %v2270 = vadd.f32 %v2198, %v2098
  %v2271 = vadd.f32 %v2199, %v2101
  %v2272 = vadd.f32 %v2200, %v2106
  %v2273 = vadd.f32 %v2201, %v2109
  %v2274 = vadd.f32 %v2202, %v2114
  %v2275 = vadd.f32 %v2203, %v2117
  %v2276 = vadd.f32 %v2204, %v2122
  %v2277 = vadd.f32 %v2205, %v2125
  %v2278 = vadd.f32 %v2206, %v2130
  %v2279 = vadd.f32 %v2207, %v2133
  %2280 = vst [vmem:[#allocation2] sm:$0xff] %v2208
  %2281 = vst [vmem:[#allocation2 + $0x8] sm:$0xff] %v2209
  %2282 = vst [vmem:[#allocation2 + $0x10] sm:$0xff] %v2210
  %2283 = vst [vmem:[#allocation2 + $0x18] sm:$0xff] %v2211
  %2284 = vst [vmem:[#allocation2 + $0x20] sm:$0xff] %v2212
  %2285 = vst [vmem:[#allocation2 + $0x28] sm:$0xff] %v2213
  %2286 = vst [vmem:[#allocation2 + $0x30] sm:$0xff] %v2214
  %2287 = vst [vmem:[#allocation2 + $0x38] sm:$0xff] %v2215
  %2288 = vst [vmem:[#allocation2 + $0x40] sm:$0xff] %v2216
  %2289 = vst [vmem:[#allocation2 + $0x48] sm:$0xff] %v2217
  %2290 = vst [vmem:[#allocation2 + $0x50] sm:$0xff] %v2218
  %2291 = vst [vmem:[#allocation2 + $0x58] sm:$0xff] %v2219
  %2292 = vst [vmem:[#allocation2 + $0x60] sm:$0xff] %v2220
  %2293 = vst [vmem:[#allocation2 + $0x68] sm:$0xff] %v2221
  %2294 = vst [vmem:[#allocation2 + $0x70] sm:$0xff] %v2222
  %2295 = vst [vmem:[#allocation2 + $0x78] sm:$0xff] %v2223
  %2296 = vst [vmem:[#allocation2 + $0x80] sm:$0xff] %v2224
  %2297 = vst [vmem:[#allocation2 + $0x88] sm:$0xff] %v2225
  %2298 = vst [vmem:[#allocation2 + $0x90] sm:$0xff] %v2226
  %2299 = vst [vmem:[#allocation2 + $0x98] sm:$0xff] %v2227
  %2300 = vst [vmem:[#allocation2 + $0xa0] sm:$0xff] %v2228
  %2301 = vst [vmem:[#allocation2 + $0xa8] sm:$0xff] %v2229
  %2302 = vst [vmem:[#allocation2 + $0xb0] sm:$0xff] %v2230
  %2303 = vst [vmem:[#allocation2 + $0xb8] sm:$0xff] %v2231
  %2304 = vst [vmem:[#allocation2 + $0xc0] sm:$0xff] %v2232
  %2305 = vst [vmem:[#allocation2 + $0xc8] sm:$0xff] %v2233
  %2306 = vst [vmem:[#allocation2 + $0xd0] sm:$0xff] %v2234
  %2307 = vst [vmem:[#allocation2 + $0xd8] sm:$0xff] %v2235
  %2308 = vst [vmem:[#allocation2 + $0xe0] sm:$0xff] %v2236
  %2309 = vst [vmem:[#allocation2 + $0xe8] sm:$0xff] %v2237
  %2310 = vst [vmem:[#allocation2 + $0xf0] sm:$0xff] %v2238
  %2311 = vst [vmem:[#allocation2 + $0xf8] sm:$0xff] %v2239
  %2312 = vst [vmem:[#allocation2 + $0x100] sm:$0xff] %v2240
  %2313 = vst [vmem:[#allocation2 + $0x108] sm:$0xff] %v2241
  %2314 = vst [vmem:[#allocation2 + $0x110] sm:$0xff] %v2242
  %2315 = vst [vmem:[#allocation2 + $0x118] sm:$0xff] %v2243
  %2316 = vst [vmem:[#allocation2 + $0x120] sm:$0xff] %v2244
  %2317 = vst [vmem:[#allocation2 + $0x128] sm:$0xff] %v2245
  %2318 = vst [vmem:[#allocation2 + $0x130] sm:$0xff] %v2246
  %2319 = vst [vmem:[#allocation2 + $0x138] sm:$0xff] %v2247
  %2320 = vst [vmem:[#allocation2 + $0x140] sm:$0xff] %v2248
  %2321 = vst [vmem:[#allocation2 + $0x148] sm:$0xff] %v2249
  %2322 = vst [vmem:[#allocation2 + $0x150] sm:$0xff] %v2250
  %2323 = vst [vmem:[#allocation2 + $0x158] sm:$0xff] %v2251
  %2324 = vst [vmem:[#allocation2 + $0x160] sm:$0xff] %v2252
  %2325 = vst [vmem:[#allocation2 + $0x168] sm:$0xff] %v2253
  %2326 = vst [vmem:[#allocation2 + $0x170] sm:$0xff] %v2254
  %2327 = vst [vmem:[#allocation2 + $0x178] sm:$0xff] %v2255
  %2328 = vst [vmem:[#allocation2 + $0x180] sm:$0xff] %v2256
  %2329 = vst [vmem:[#allocation2 + $0x188] sm:$0xff] %v2257
  %2330 = vst [vmem:[#allocation2 + $0x190] sm:$0xff] %v2258
  %2331 = vst [vmem:[#allocation2 + $0x198] sm:$0xff] %v2259
  %2332 = vst [vmem:[#allocation2 + $0x1a0] sm:$0xff] %v2260
  %2333 = vst [vmem:[#allocation2 + $0x1a8] sm:$0xff] %v2261
  %2334 = vst [vmem:[#allocation2 + $0x1b0] sm:$0xff] %v2262
  %2335 = vst [vmem:[#allocation2 + $0x1b8] sm:$0xff] %v2263
  %2336 = vst [vmem:[#allocation2 + $0x1c0] sm:$0xff] %v2264
  %2337 = vst [vmem:[#allocation2 + $0x1c8] sm:$0xff] %v2265
  %2338 = vst [vmem:[#allocation2 + $0x1d0] sm:$0xff] %v2266
  %2339 = vst [vmem:[#allocation2 + $0x1d8] sm:$0xff] %v2267
  %2340 = vst [vmem:[#allocation2 + $0x1e0] sm:$0xff] %v2268
  %2341 = vst [vmem:[#allocation2 + $0x1e8] sm:$0xff] %v2269
  %2342 = vst [vmem:[#allocation2 + $0x1f0] sm:$0xff] %v2270
  %2343 = vst [vmem:[#allocation2 + $0x1f8] sm:$0xff] %v2271
  %2344 = vst [vmem:[#allocation2 + $0x200] sm:$0xff] %v2272
  %2345 = vst [vmem:[#allocation2 + $0x208] sm:$0xff] %v2273
  %2346 = vst [vmem:[#allocation2 + $0x210] sm:$0xff] %v2274
  %2347 = vst [vmem:[#allocation2 + $0x218] sm:$0xff] %v2275
  %2348 = vst [vmem:[#allocation2 + $0x220] sm:$0xff] %v2276
  %2349 = vst [vmem:[#allocation2 + $0x228] sm:$0xff] %v2277
  %2350 = vst [vmem:[#allocation2 + $0x230] sm:$0xff] %v2278
  %2351 = vst [vmem:[#allocation2 + $0x238] sm:$0xff] %v2279
  %v2352 = vld [vmem:[%s0] sm:$0xe]
  %v2353 = vld [vmem:[%s0 + $0x4] sm:$0xf]
  %v2354 = vld [vmem:[%s0 + $0x8] sm:$0xf]
  %v2355 = vld [vmem:[%s0 + $0xc] sm:$0xf]
  %v2356 = vld [vmem:[%s0 + $0x10] sm:$0xf]
  %v2357 = vld [vmem:[%s0 + $0x14] sm:$0xf]
  %v2358 = vld [vmem:[%s0 + $0x18] sm:$0xf]
  %v2359 = vld [vmem:[%s0 + $0x1c] sm:$0xf]
  %v2360 = vld [vmem:[%s0 + $0x20] sm:$0xf]
  %v2361 = vld [vmem:[%s0 + $0x24] sm:$0xf]
  %v2362 = vld [vmem:[%s0 + $0x28] sm:$0xf]
  %v2363 = vld [vmem:[%s0 + $0x2c] sm:$0xf]
  %v2364 = vld [vmem:[%s0 + $0x30] sm:$0xf]
  %v2365 = vld [vmem:[%s0 + $0x34] sm:$0xf]
  %v2366 = vld [vmem:[%s0 + $0x38] sm:$0xf]
  %v2367 = vld [vmem:[%s0 + $0x3c] sm:$0xf]
  %v2368 = vld [vmem:[%s0 + $0x40] sm:$0xf]
  %v2369 = vld [vmem:[%s0 + $0x44] sm:$0xf]
  %v2370 = vld [vmem:[%s0 + $0x48] sm:$0xf]
  %v2371 = vld [vmem:[%s0 + $0x4c] sm:$0xf]
  %v2372 = vld [vmem:[%s0 + $0x50] sm:$0xf]
  %v2373 = vld [vmem:[%s0 + $0x54] sm:$0xf]
  %v2374 = vld [vmem:[%s0 + $0x58] sm:$0xf]
  %v2375 = vld [vmem:[%s0 + $0x5c] sm:$0xf]
  %v2376 = vld [vmem:[%s0 + $0x60] sm:$0xf]
  %v2377 = vld [vmem:[%s0 + $0x64] sm:$0xf]
  %v2378 = vld [vmem:[%s0 + $0x68] sm:$0xf]
  %v2379 = vld [vmem:[%s0 + $0x6c] sm:$0xf]
  %v2380 = vld [vmem:[%s0 + $0x70] sm:$0xf]
  %v2381 = vld [vmem:[%s0 + $0x74] sm:$0xf]
  %v2382 = vld [vmem:[%s0 + $0x78] sm:$0xf]
  %v2383 = vld [vmem:[%s0 + $0x7c] sm:$0xf]
  %v2384 = vld [vmem:[%s0 + $0x80] sm:$0xf]
  %v2385 = vld [vmem:[%s0 + $0x84] sm:$0xf]
  %v2386 = vld [vmem:[%s0 + $0x88] sm:$0xf]
  %v2387 = vld [vmem:[%s0 + $0x8c] sm:$0xf]
  %v2388 = vld [vmem:[%s0 + $0x90] sm:$0x1]
  %v2389 = vld [vmem:[%s0 + $0xa4] sm:$0xe]
  %v2390 = vld [vmem:[%s0 + $0xa8] sm:$0xf]
  %v2391 = vld [vmem:[%s0 + $0xac] sm:$0xf]
  %v2392 = vld [vmem:[%s0 + $0xb0] sm:$0xf]
  %v2393 = vld [vmem:[%s0 + $0xb4] sm:$0xf]
  %v2394 = vld [vmem:[%s0 + $0xb8] sm:$0xf]
  %v2395 = vld [vmem:[%s0 + $0xbc] sm:$0xf]
  %v2396 = vld [vmem:[%s0 + $0xc0] sm:$0xf]
  %v2397 = vld [vmem:[%s0 + $0xc4] sm:$0xf]
  %v2398 = vld [vmem:[%s0 + $0xc8] sm:$0xf]
  %v2399 = vld [vmem:[%s0 + $0xcc] sm:$0xf]
  %v2400 = vld [vmem:[%s0 + $0xd0] sm:$0xf]
  %v2401 = vld [vmem:[%s0 + $0xd4] sm:$0xf]
  %v2402 = vld [vmem:[%s0 + $0xd8] sm:$0xf]
  %v2403 = vld [vmem:[%s0 + $0xdc] sm:$0xf]
  %v2404 = vld [vmem:[%s0 + $0xe0] sm:$0xf]
  %v2405 = vld [vmem:[%s0 + $0xe4] sm:$0xf]
  %v2406 = vld [vmem:[%s0 + $0xe8] sm:$0xf]
  %v2407 = vld [vmem:[%s0 + $0xec] sm:$0xf]
  %v2408 = vld [vmem:[%s0 + $0xf0] sm:$0xf]
  %v2409 = vld [vmem:[%s0 + $0xf4] sm:$0xf]
  %v2410 = vld [vmem:[%s0 + $0xf8] sm:$0xf]
  %v2411 = vld [vmem:[%s0 + $0xfc] sm:$0xf]
  %v2412 = vld [vmem:[%s0 + $0x100] sm:$0xf]
  %v2413 = vld [vmem:[%s0 + $0x104] sm:$0xf]
  %v2414 = vld [vmem:[%s0 + $0x108] sm:$0xf]
  %v2415 = vld [vmem:[%s0 + $0x10c] sm:$0xf]
  %v2416 = vld [vmem:[%s0 + $0x110] sm:$0xf]
  %v2417 = vld [vmem:[%s0 + $0x114] sm:$0xf]
  %v2418 = vld [vmem:[%s0 + $0x118] sm:$0xf]
  %v2419 = vld [vmem:[%s0 + $0x11c] sm:$0xf]
  %v2420 = vld [vmem:[%s0 + $0x120] sm:$0xf]
  %v2421 = vld [vmem:[%s0 + $0x124] sm:$0xf]
  %v2422 = vld [vmem:[%s0 + $0x128] sm:$0xf]
  %v2423 = vld [vmem:[%s0 + $0x12c] sm:$0xf]
  %v2424 = vld [vmem:[%s0 + $0x130] sm:$0xf]
  %v2425 = vld [vmem:[%s0 + $0x134] sm:$0x1]
  %vm2500 = vcmask 1042432
  %vm2501 = vcmask 1046532
  %vm2502 = vmor %vm2500, %vm2501
  %v2503 = vrot.slane %v2352, 5
  %v2504 = vrot.slane %v2503, 4
  %v2505 = vrot.slane %v2353, 5
  %v2506 = vsel %vm2502, %v2504, %v2505
  %v2507 = vrot.slane %v2505, 4
  %v2508 = vrot.slane %v2354, 5
  %v2509 = vsel %vm2502, %v2507, %v2508
  %v2510 = vrot.slane %v2508, 4
  %v2511 = vrot.slane %v2355, 5
  %v2512 = vsel %vm2502, %v2510, %v2511
  %v2513 = vrot.slane %v2511, 4
  %v2514 = vrot.slane %v2356, 5
  %v2515 = vsel %vm2502, %v2513, %v2514
  %v2516 = vrot.slane %v2514, 4
  %v2517 = vrot.slane %v2357, 5
  %v2518 = vsel %vm2502, %v2516, %v2517
  %v2519 = vrot.slane %v2517, 4
  %v2520 = vrot.slane %v2358, 5
  %v2521 = vsel %vm2502, %v2519, %v2520
  %v2522 = vrot.slane %v2520, 4
  %v2523 = vrot.slane %v2359, 5
  %v2524 = vsel %vm2502, %v2522, %v2523
  %v2525 = vrot.slane %v2523, 4
  %v2526 = vrot.slane %v2360, 5
  %v2527 = vsel %vm2502, %v2525, %v2526
  %v2528 = vrot.slane %v2526, 4
  %v2529 = vrot.slane %v2361, 5
  %v2530 = vsel %vm2502, %v2528, %v2529
  %v2531 = vrot.slane %v2529, 4
  %v2532 = vrot.slane %v2362, 5
  %v2533 = vsel %vm2502, %v2531, %v2532
  %v2534 = vrot.slane %v2532, 4
  %v2535 = vrot.slane %v2363, 5
  %v2536 = vsel %vm2502, %v2534, %v2535
  %v2537 = vrot.slane %v2535, 4
  %v2538 = vrot.slane %v2364, 5
  %v2539 = vsel %vm2502, %v2537, %v2538
  %v2540 = vrot.slane %v2538, 4
  %v2541 = vrot.slane %v2365, 5
  %v2542 = vsel %vm2502, %v2540, %v2541
  %v2543 = vrot.slane %v2541, 4
  %v2544 = vrot.slane %v2366, 5
  %v2545 = vsel %vm2502, %v2543, %v2544
  %v2546 = vrot.slane %v2544, 4
  %v2547 = vrot.slane %v2367, 5
  %v2548 = vsel %vm2502, %v2546, %v2547
  %v2549 = vrot.slane %v2547, 4
  %v2550 = vrot.slane %v2368, 5
  %v2551 = vsel %vm2502, %v2549, %v2550
  %v2552 = vrot.slane %v2550, 4
  %v2553 = vrot.slane %v2369, 5
  %v2554 = vsel %vm2502, %v2552, %v2553
  %v2555 = vrot.slane %v2553, 4
  %v2556 = vrot.slane %v2370, 5
  %v2557 = vsel %vm2502, %v2555, %v2556
  %v2558 = vrot.slane %v2556, 4
  %v2559 = vrot.slane %v2371, 5
  %v2560 = vsel %vm2502, %v2558, %v2559
  %v2561 = vrot.slane %v2559, 4
  %v2562 = vrot.slane %v2372, 5
  %v2563 = vsel %vm2502, %v2561, %v2562
  %v2564 = vrot.slane %v2562, 4
  %v2565 = vrot.slane %v2373, 5
  %v2566 = vsel %vm2502, %v2564, %v2565
  %v2567 = vrot.slane %v2565, 4
  %v2568 = vrot.slane %v2374, 5
  %v2569 = vsel %vm2502, %v2567, %v2568
  %v2570 = vrot.slane %v2568, 4
  %v2571 = vrot.slane %v2375, 5
  %v2572 = vsel %vm2502, %v2570, %v2571
  %v2573 = vrot.slane %v2571, 4
  %v2574 = vrot.slane %v2376, 5
  %v2575 = vsel %vm2502, %v2573, %v2574
  %v2576 = vrot.slane %v2574, 4
  %v2577 = vrot.slane %v2377, 5
  %v2578 = vsel %vm2502, %v2576, %v2577
  %v2579 = vrot.slane %v2577, 4
  %v2580 = vrot.slane %v2378, 5
  %v2581 = vsel %vm2502, %v2579, %v2580
  %v2582 = vrot.slane %v2580, 4
  %v2583 = vrot.slane %v2379, 5
  %v2584 = vsel %vm2502, %v2582, %v2583
  %v2585 = vrot.slane %v2583, 4
  %v2586 = vrot.slane %v2380, 5
  %v2587 = vsel %vm2502, %v2585, %v2586
  %v2588 = vrot.slane %v2586, 4
  %v2589 = vrot.slane %v2381, 5
  %v2590 = vsel %vm2502, %v2588, %v2589
  %v2591 = vrot.slane %v2589, 4
  %v2592 = vrot.slane %v2382, 5
  %v2593 = vsel %vm2502, %v2591, %v2592
  %v2594 = vrot.slane %v2592, 4
  %v2595 = vrot.slane %v2383, 5
  %v2596 = vsel %vm2502, %v2594, %v2595
  %v2597 = vrot.slane %v2595, 4
  %v2598 = vrot.slane %v2384, 5
  %v2599 = vsel %vm2502, %v2597, %v2598
  %v2600 = vrot.slane %v2598, 4
  %v2601 = vrot.slane %v2385, 5
  %v2602 = vsel %vm2502, %v2600, %v2601
  %v2603 = vrot.slane %v2601, 4
  %v2604 = vrot.slane %v2386, 5
  %v2605 = vsel %vm2502, %v2603, %v2604
  %v2606 = vrot.slane %v2604, 4
  %v2607 = vrot.slane %v2387, 5
  %v2608 = vsel %vm2502, %v2606, %v2607
  %v2609 = vrot.slane %v2607, 4
  %v2610 = vrot.slane %v2388, 5
  %v2611 = vsel %vm2502, %v2609, %v2610
  %v2612 = vrot.slane %v2389, 5
  %v2613 = vrot.slane %v2612, 4
  %v2614 = vrot.slane %v2390, 5
  %v2615 = vsel %vm2502, %v2613, %v2614
  %v2616 = vrot.slane %v2614, 4
  %v2617 = vrot.slane %v2391, 5
  %v2618 = vsel %vm2502, %v2616, %v2617
  %v2619 = vrot.slane %v2617, 4
  %v2620 = vrot.slane %v2392, 5
  %v2621 = vsel %vm2502, %v2619, %v2620
  %v2622 = vrot.slane %v2620, 4
  %v2623 = vrot.slane %v2393, 5
  %v2624 = vsel %vm2502, %v2622, %v2623
  %v2625 = vrot.slane %v2623, 4
  %v2626 = vrot.slane %v2394, 5
  %v2627 = vsel %vm2502, %v2625, %v2626
  %v2628 = vrot.slane %v2626, 4
  %v2629 = vrot.slane %v2395, 5
  %v2630 = vsel %vm2502, %v2628, %v2629
  %v2631 = vrot.slane %v2629, 4
  %v2632 = vrot.slane %v2396, 5
  %v2633 = vsel %vm2502, %v2631, %v2632
  %v2634 = vrot.slane %v2632, 4
  %v2635 = vrot.slane %v2397, 5
  %v2636 = vsel %vm2502, %v2634, %v2635
  %v2637 = vrot.slane %v2635, 4
  %v2638 = vrot.slane %v2398, 5
  %v2639 = vsel %vm2502, %v2637, %v2638
  %v2640 = vrot.slane %v2638, 4
  %v2641 = vrot.slane %v2399, 5
  %v2642 = vsel %vm2502, %v2640, %v2641
  %v2643 = vrot.slane %v2641, 4
  %v2644 = vrot.slane %v2400, 5
  %v2645 = vsel %vm2502, %v2643, %v2644
  %v2646 = vrot.slane %v2644, 4
  %v2647 = vrot.slane %v2401, 5
  %v2648 = vsel %vm2502, %v2646, %v2647
  %v2649 = vrot.slane %v2647, 4
  %v2650 = vrot.slane %v2402, 5
  %v2651 = vsel %vm2502, %v2649, %v2650
  %v2652 = vrot.slane %v2650, 4
  %v2653 = vrot.slane %v2403, 5
  %v2654 = vsel %vm2502, %v2652, %v2653
  %v2655 = vrot.slane %v2653, 4
  %v2656 = vrot.slane %v2404, 5
  %v2657 = vsel %vm2502, %v2655, %v2656
  %v2658 = vrot.slane %v2656, 4
  %v2659 = vrot.slane %v2405, 5
  %v2660 = vsel %vm2502, %v2658, %v2659
  %v2661 = vrot.slane %v2659, 4
  %v2662 = vrot.slane %v2406, 5
  %v2663 = vsel %vm2502, %v2661, %v2662
  %v2664 = vrot.slane %v2662, 4
  %v2665 = vrot.slane %v2407, 5
  %v2666 = vsel %vm2502, %v2664, %v2665
  %v2667 = vrot.slane %v2665, 4
  %v2668 = vrot.slane %v2408, 5
  %v2669 = vsel %vm2502, %v2667, %v2668
  %v2670 = vrot.slane %v2668, 4
  %v2671 = vrot.slane %v2409, 5
  %v2672 = vsel %vm2502, %v2670, %v2671
  %v2673 = vrot.slane %v2671, 4
  %v2674 = vrot.slane %v2410, 5
  %v2675 = vsel %vm2502, %v2673, %v2674
  %v2676 = vrot.slane %v2674, 4
  %v2677 = vrot.slane %v2411, 5
  %v2678 = vsel %vm2502, %v2676, %v2677
  %v2679 = vrot.slane %v2677, 4
  %v2680 = vrot.slane %v2412, 5
  %v2681 = vsel %vm2502, %v2679, %v2680
  %v2682 = vrot.slane %v2680, 4
  %v2683 = vrot.slane %v2413, 5
  %v2684 = vsel %vm2502, %v2682, %v2683
  %v2685 = vrot.slane %v2683, 4
  %v2686 = vrot.slane %v2414, 5
  %v2687 = vsel %vm2502, %v2685, %v2686
  %v2688 = vrot.slane %v2686, 4
  %v2689 = vrot.slane %v2415, 5
  %v2690 = vsel %vm2502, %v2688, %v2689
  %v2691 = vrot.slane %v2689, 4
  %v2692 = vrot.slane %v2416, 5
  %v2693 = vsel %vm2502, %v2691, %v2692
  %v2694 = vrot.slane %v2692, 4
  %v2695 = vrot.slane %v2417, 5
  %v2696 = vsel %vm2502, %v2694, %v2695
  %v2697 = vrot.slane %v2695, 4
  %v2698 = vrot.slane %v2418, 5
  %v2699 = vsel %vm2502, %v2697, %v2698
  %v2700 = vrot.slane %v2698, 4
  %v2701 = vrot.slane %v2419, 5
  %v2702 = vsel %vm2502, %v2700, %v2701
  %v2703 = vrot.slane %v2701, 4
  %v2704 = vrot.slane %v2420, 5
  %v2705 = vsel %vm2502, %v2703, %v2704
  %v2706 = vrot.slane %v2704, 4
  %v2707 = vrot.slane %v2421, 5
  %v2708 = vsel %vm2502, %v2706, %v2707
  %v2709 = vrot.slane %v2707, 4
  %v2710 = vrot.slane %v2422, 5
  %v2711 = vsel %vm2502, %v2709, %v2710
  %v2712 = vrot.slane %v2710, 4
  %v2713 = vrot.slane %v2423, 5
  %v2714 = vsel %vm2502, %v2712, %v2713
  %v2715 = vrot.slane %v2713, 4
  %v2716 = vrot.slane %v2424, 5
  %v2717 = vsel %vm2502, %v2715, %v2716
  %v2718 = vrot.slane %v2716, 4
  %v2719 = vrot.slane %v2425, 5
  %v2720 = vsel %vm2502, %v2718, %v2719
  %v2721 = vld [vmem:[%s1 + $0x4] sm:$0x3]
  %v2722 = vunpack.c.l.b16 %v2506
  %v2723 = vunpack.c.l.b16 %v2509
  %v2724 = vunpack.c.l.b16 %v2512
  %v2725 = vunpack.c.l.b16 %v2515
  %v2726 = vunpack.c.l.b16 %v2518
  %v2727 = vunpack.c.l.b16 %v2521
  %v2728 = vunpack.c.l.b16 %v2524
  %v2729 = vunpack.c.l.b16 %v2527
  %v2730 = vunpack.c.l.b16 %v2530
  %v2731 = vunpack.c.l.b16 %v2533
  %v2732 = vunpack.c.l.b16 %v2536
  %v2733 = vunpack.c.l.b16 %v2539
  %v2734 = vunpack.c.l.b16 %v2542
  %v2735 = vunpack.c.l.b16 %v2545
  %v2736 = vunpack.c.l.b16 %v2548
  %v2737 = vunpack.c.l.b16 %v2551
  %v2738 = vunpack.c.l.b16 %v2554
  %v2739 = vunpack.c.l.b16 %v2557
  %v2740 = vunpack.c.l.b16 %v2560
  %v2741 = vunpack.c.l.b16 %v2563
  %v2742 = vunpack.c.l.b16 %v2566
  %v2743 = vunpack.c.l.b16 %v2569
  %v2744 = vunpack.c.l.b16 %v2572
  %v2745 = vunpack.c.l.b16 %v2575
  %v2746 = vunpack.c.l.b16 %v2578
  %v2747 = vunpack.c.l.b16 %v2581
  %v2748 = vunpack.c.l.b16 %v2584
  %v2749 = vunpack.c.l.b16 %v2587
  %v2750 = vunpack.c.l.b16 %v2590
  %v2751 = vunpack.c.l.b16 %v2593
  %v2752 = vunpack.c.l.b16 %v2596
  %v2753 = vunpack.c.l.b16 %v2599
  %v2754 = vunpack.c.l.b16 %v2602
  %v2755 = vunpack.c.l.b16 %v2605
  %v2756 = vunpack.c.l.b16 %v2608
  %v2757 = vunpack.c.l.b16 %v2611
  %v2758 = vunpack.c.l.b16 %v2615
  %v2759 = vunpack.c.l.b16 %v2618
  %v2760 = vunpack.c.l.b16 %v2621
  %v2761 = vunpack.c.l.b16 %v2624
  %v2762 = vunpack.c.l.b16 %v2627
  %v2763 = vunpack.c.l.b16 %v2630
  %v2764 = vunpack.c.l.b16 %v2633
  %v2765 = vunpack.c.l.b16 %v2636
  %v2766 = vunpack.c.l.b16 %v2639
  %v2767 = vunpack.c.l.b16 %v2642
  %v2768 = vunpack.c.l.b16 %v2645
  %v2769 = vunpack.c.l.b16 %v2648
  %v2770 = vunpack.c.l.b16 %v2651
  %v2771 = vunpack.c.l.b16 %v2654
  %v2772 = vunpack.c.l.b16 %v2657
  %v2773 = vunpack.c.l.b16 %v2660
  %v2774 = vunpack.c.l.b16 %v2663
  %v2775 = vunpack.c.l.b16 %v2666
  %v2776 = vunpack.c.l.b16 %v2669
  %v2777 = vunpack.c.l.b16 %v2672
  %v2778 = vunpack.c.l.b16 %v2675
  %v2779 = vunpack.c.l.b16 %v2678
  %v2780 = vunpack.c.l.b16 %v2681
  %v2781 = vunpack.c.l.b16 %v2684
  %v2782 = vunpack.c.l.b16 %v2687
  %v2783 = vunpack.c.l.b16 %v2690
  %v2784 = vunpack.c.l.b16 %v2693
  %v2785 = vunpack.c.l.b16 %v2696
  %v2786 = vunpack.c.l.b16 %v2699
  %v2787 = vunpack.c.l.b16 %v2702
  %v2788 = vunpack.c.l.b16 %v2705
  %v2789 = vunpack.c.l.b16 %v2708
  %v2790 = vunpack.c.l.b16 %v2711
  %v2791 = vunpack.c.l.b16 %v2714
  %v2792 = vunpack.c.l.b16 %v2717
  %v2793 = vunpack.c.l.b16 %v2720
  %v2794 = vpack.c.b16 %v2723, %v2722
  %v2795 = vpack.c.b16 %v2725, %v2724
  %v2796 = vpack.c.b16 %v2727, %v2726
  %v2797 = vpack.c.b16 %v2729, %v2728
  %v2798 = vpack.c.b16 %v2731, %v2730
  %v2799 = vpack.c.b16 %v2733, %v2732
  %v2800 = vpack.c.b16 %v2735, %v2734
  %v2801 = vpack.c.b16 %v2737, %v2736
  %v2802 = vpack.c.b16 %v2739, %v2738
  %v2803 = vpack.c.b16 %v2741, %v2740
  %v2804 = vpack.c.b16 %v2743, %v2742
  %v2805 = vpack.c.b16 %v2745, %v2744
  %v2806 = vpack.c.b16 %v2747, %v2746
  %v2807 = vpack.c.b16 %v2749, %v2748
  %v2808 = vpack.c.b16 %v2751, %v2750
  %v2809 = vpack.c.b16 %v2753, %v2752
  %v2810 = vpack.c.b16 %v2755, %v2754
  %v2811 = vpack.c.b16 %v2757, %v2756
  %v2812 = vpack.c.b16 %v2759, %v2758
  %v2813 = vpack.c.b16 %v2761, %v2760
  %v2814 = vpack.c.b16 %v2763, %v2762
  %v2815 = vpack.c.b16 %v2765, %v2764
  %v2816 = vpack.c.b16 %v2767, %v2766
  %v2817 = vpack.c.b16 %v2769, %v2768
  %v2818 = vpack.c.b16 %v2771, %v2770
  %v2819 = vpack.c.b16 %v2773, %v2772
  %v2820 = vpack.c.b16 %v2775, %v2774
  %v2821 = vpack.c.b16 %v2777, %v2776
  %v2822 = vpack.c.b16 %v2779, %v2778
  %v2823 = vpack.c.b16 %v2781, %v2780
  %v2824 = vpack.c.b16 %v2783, %v2782
  %v2825 = vpack.c.b16 %v2785, %v2784
  %v2826 = vpack.c.b16 %v2787, %v2786
  %v2827 = vpack.c.b16 %v2789, %v2788
  %v2828 = vpack.c.b16 %v2791, %v2790
  %v2829 = vpack.c.b16 %v2793, %v2792
  %v2831 = vsel %vm280, %v2794, 0
  %v2834 = vsel %vm280, %v2795, 0
  %v2837 = vsel %vm280, %v2796, 0
  %v2840 = vsel %vm280, %v2797, 0
  %v2843 = vsel %vm280, %v2798, 0
  %v2846 = vsel %vm280, %v2799, 0
  %v2849 = vsel %vm280, %v2800, 0
  %v2852 = vsel %vm280, %v2801, 0
  %v2855 = vsel %vm280, %v2802, 0
  %v2858 = vsel %vm280, %v2803, 0
  %v2861 = vsel %vm280, %v2804, 0
  %v2864 = vsel %vm280, %v2805, 0
  %v2867 = vsel %vm280, %v2806, 0
  %v2870 = vsel %vm280, %v2807, 0
  %v2873 = vsel %vm280, %v2808, 0
  %v2876 = vsel %vm280, %v2809, 0
  %v2879 = vsel %vm280, %v2810, 0
  %v2882 = vsel %vm280, %v2811, 0
  %v2885 = vsel %vm280, %v2812, 0
  %v2888 = vsel %vm280, %v2813, 0
  %v2891 = vsel %vm280, %v2814, 0
  %v2894 = vsel %vm280, %v2815, 0
  %v2897 = vsel %vm280, %v2816, 0
  %v2900 = vsel %vm280, %v2817, 0
  %v2903 = vsel %vm280, %v2818, 0
  %v2906 = vsel %vm280, %v2819, 0
  %v2909 = vsel %vm280, %v2820, 0
  %v2912 = vsel %vm280, %v2821, 0
  %v2915 = vsel %vm280, %v2822, 0
  %v2918 = vsel %vm280, %v2823, 0
  %v2921 = vsel %vm280, %v2824, 0
  %v2924 = vsel %vm280, %v2825, 0
  %v2927 = vsel %vm280, %v2826, 0
  %v2930 = vsel %vm280, %v2827, 0
  %v2933 = vsel %vm280, %v2828, 0
  %v2936 = vsel %vm280, %v2829, 0
  %v2939 = vsel %vm389, %v2721, 0
  %2941 = vmatprep.subr.bf16.mxu0 0
  %2942 = vmatpush1.bf16.msra.mxu0 0
  %2943 = vmatprep.subr.bf16.mxu0 0
  %2944 = vmatpush1.bf16.msra.mxu0 0
  %2945 = vmatprep.subr.bf16.mxu0 0
  %2946 = vmatpush1.bf16.msra.mxu0 0
  %2947 = vmatprep.subr.bf16.mxu0 0
  %2948 = vmatpush1.bf16.msra.mxu0 0
  %2949 = vmatprep.subr.bf16.mxu0 0
  %2950 = vmatpush1.bf16.msra.mxu0 0
  %2951 = vmatprep.subr.bf16.mxu0 0
  %2952 = vmatpush1.bf16.msra.mxu0 0
  %2953 = vmatprep.subr.bf16.mxu0 0
  %2954 = vmatpush1.bf16.msra.mxu0 0
  %2955 = vmatprep.subr.bf16.mxu0 0
  %2956 = vmatpush1.bf16.msra.mxu0 %v2939
  %2957 = vmatprep.subr.bf16.mxu0 0
  %2958 = vmatpush2.bf16.msra.mxu0 0
  %2959 = vmatprep.subr.bf16.mxu0 0
  %2960 = vmatpush2.bf16.msra.mxu0 0
  %2961 = vmatprep.subr.bf16.mxu0 0
  %2962 = vmatpush2.bf16.msra.mxu0 0
  %2963 = vmatprep.subr.bf16.mxu0 0
  %2964 = vmatpush2.bf16.msra.mxu0 0
  %2965 = vmatprep.subr.bf16.mxu0 0
  %2966 = vmatpush2.bf16.msra.mxu0 0
  %2967 = vmatprep.subr.bf16.mxu0 0
  %2968 = vmatpush2.bf16.msra.mxu0 0
  %2969 = vmatprep.subr.bf16.mxu0 0
  %2970 = vmatpush2.bf16.msra.mxu0 0
  %2971 = vmatprep.subr.bf16.mxu0 0
  %2972 = vmatpush2.bf16.msra.mxu0 0
  %2973 = vmatprep.mubr.bf16.mxu0 0
  %2974 = vmatmul.mubr.bf16.gmra.mxu0 %v2831
  %v2975 = vpop.f32.mrf.mxu0
  %v2976 = vadd.f32 0.0, %v2975
  %v2977 = vpop.f32.mrf.mxu0
  %v2978 = vpop.f32.mrf.mxu0
  %v2979 = vadd.f32 0.0, %v2978
  %v2980 = vpop.f32.mrf.mxu0
  %2981 = vmatprep.mubr.bf16.mxu0 0
  %2982 = vmatmul.mubr.bf16.gmra.mxu0 %v2834
  %v2983 = vpop.f32.mrf.mxu0
  %v2984 = vadd.f32 0.0, %v2983
  %v2985 = vpop.f32.mrf.mxu0
  %v2986 = vpop.f32.mrf.mxu0
  %v2987 = vadd.f32 0.0, %v2986
  %v2988 = vpop.f32.mrf.mxu0
  %2989 = vmatprep.mubr.bf16.mxu0 0
  %2990 = vmatmul.mubr.bf16.gmra.mxu0 %v2837
  %v2991 = vpop.f32.mrf.mxu0
  %v2992 = vadd.f32 0.0, %v2991
  %v2993 = vpop.f32.mrf.mxu0
  %v2994 = vpop.f32.mrf.mxu0
  %v2995 = vadd.f32 0.0, %v2994
  %v2996 = vpop.f32.mrf.mxu0
  %2997 = vmatprep.mubr.bf16.mxu0 0
  %2998 = vmatmul.mubr.bf16.gmra.mxu0 %v2840
  %v2999 = vpop.f32.mrf.mxu0
  %v3000 = vadd.f32 0.0, %v2999
  %v3001 = vpop.f32.mrf.mxu0
  %v3002 = vpop.f32.mrf.mxu0
  %v3003 = vadd.f32 0.0, %v3002
  %v3004 = vpop.f32.mrf.mxu0
  %3005 = vmatprep.mubr.bf16.mxu0 0
  %3006 = vmatmul.mubr.bf16.gmra.mxu0 %v2843
  %v3007 = vpop.f32.mrf.mxu0
  %v3008 = vadd.f32 0.0, %v3007
  %v3009 = vpop.f32.mrf.mxu0
  %v3010 = vpop.f32.mrf.mxu0
  %v3011 = vadd.f32 0.0, %v3010
  %v3012 = vpop.f32.mrf.mxu0
  %3013 = vmatprep.mubr.bf16.mxu0 0
  %3014 = vmatmul.mubr.bf16.gmra.mxu0 %v2846
  %v3015 = vpop.f32.mrf.mxu0
  %v3016 = vadd.f32 0.0, %v3015
  %v3017 = vpop.f32.mrf.mxu0
  %v3018 = vpop.f32.mrf.mxu0
  %v3019 = vadd.f32 0.0, %v3018
  %v3020 = vpop.f32.mrf.mxu0
  %3021 = vmatprep.mubr.bf16.mxu0 0
  %3022 = vmatmul.mubr.bf16.gmra.mxu0 %v2849
  %v3023 = vpop.f32.mrf.mxu0
  %v3024 = vadd.f32 0.0, %v3023
  %v3025 = vpop.f32.mrf.mxu0
  %v3026 = vpop.f32.mrf.mxu0
  %v3027 = vadd.f32 0.0, %v3026
  %v3028 = vpop.f32.mrf.mxu0
  %3029 = vmatprep.mubr.bf16.mxu0 0
  %3030 = vmatmul.mubr.bf16.gmra.mxu0 %v2852
  %v3031 = vpop.f32.mrf.mxu0
  %v3032 = vadd.f32 0.0, %v3031
  %v3033 = vpop.f32.mrf.mxu0
  %v3034 = vpop.f32.mrf.mxu0
  %v3035 = vadd.f32 0.0, %v3034
  %v3036 = vpop.f32.mrf.mxu0
  %3037 = vmatprep.mubr.bf16.mxu0 0
  %3038 = vmatmul.mubr.bf16.gmra.mxu0 %v2855
  %v3039 = vpop.f32.mrf.mxu0
  %v3040 = vadd.f32 0.0, %v3039
  %v3041 = vpop.f32.mrf.mxu0
  %v3042 = vpop.f32.mrf.mxu0
  %v3043 = vadd.f32 0.0, %v3042
  %v3044 = vpop.f32.mrf.mxu0
  %3045 = vmatprep.mubr.bf16.mxu0 0
  %3046 = vmatmul.mubr.bf16.gmra.mxu0 %v2858
  %v3047 = vpop.f32.mrf.mxu0
  %v3048 = vadd.f32 0.0, %v3047
  %v3049 = vpop.f32.mrf.mxu0
  %v3050 = vpop.f32.mrf.mxu0
  %v3051 = vadd.f32 0.0, %v3050
  %v3052 = vpop.f32.mrf.mxu0
  %3053 = vmatprep.mubr.bf16.mxu0 0
  %3054 = vmatmul.mubr.bf16.gmra.mxu0 %v2861
  %v3055 = vpop.f32.mrf.mxu0
  %v3056 = vadd.f32 0.0, %v3055
  %v3057 = vpop.f32.mrf.mxu0
  %v3058 = vpop.f32.mrf.mxu0
  %v3059 = vadd.f32 0.0, %v3058
  %v3060 = vpop.f32.mrf.mxu0
  %3061 = vmatprep.mubr.bf16.mxu0 0
  %3062 = vmatmul.mubr.bf16.gmra.mxu0 %v2864
  %v3063 = vpop.f32.mrf.mxu0
  %v3064 = vadd.f32 0.0, %v3063
  %v3065 = vpop.f32.mrf.mxu0
  %v3066 = vpop.f32.mrf.mxu0
  %v3067 = vadd.f32 0.0, %v3066
  %v3068 = vpop.f32.mrf.mxu0
  %3069 = vmatprep.mubr.bf16.mxu0 0
  %3070 = vmatmul.mubr.bf16.gmra.mxu0 %v2867
  %v3071 = vpop.f32.mrf.mxu0
  %v3072 = vadd.f32 0.0, %v3071
  %v3073 = vpop.f32.mrf.mxu0
  %v3074 = vpop.f32.mrf.mxu0
  %v3075 = vadd.f32 0.0, %v3074
  %v3076 = vpop.f32.mrf.mxu0
  %3077 = vmatprep.mubr.bf16.mxu0 0
  %3078 = vmatmul.mubr.bf16.gmra.mxu0 %v2870
  %v3079 = vpop.f32.mrf.mxu0
  %v3080 = vadd.f32 0.0, %v3079
  %v3081 = vpop.f32.mrf.mxu0
  %v3082 = vpop.f32.mrf.mxu0
  %v3083 = vadd.f32 0.0, %v3082
  %v3084 = vpop.f32.mrf.mxu0
  %3085 = vmatprep.mubr.bf16.mxu0 0
  %3086 = vmatmul.mubr.bf16.gmra.mxu0 %v2873
  %v3087 = vpop.f32.mrf.mxu0
  %v3088 = vadd.f32 0.0, %v3087
  %v3089 = vpop.f32.mrf.mxu0
  %v3090 = vpop.f32.mrf.mxu0
  %v3091 = vadd.f32 0.0, %v3090
  %v3092 = vpop.f32.mrf.mxu0
  %3093 = vmatprep.mubr.bf16.mxu0 0
  %3094 = vmatmul.mubr.bf16.gmra.mxu0 %v2876
  %v3095 = vpop.f32.mrf.mxu0
  %v3096 = vadd.f32 0.0, %v3095
  %v3097 = vpop.f32.mrf.mxu0
  %v3098 = vpop.f32.mrf.mxu0
  %v3099 = vadd.f32 0.0, %v3098
  %v3100 = vpop.f32.mrf.mxu0
  %3101 = vmatprep.mubr.bf16.mxu0 0
  %3102 = vmatmul.mubr.bf16.gmra.mxu0 %v2879
  %v3103 = vpop.f32.mrf.mxu0
  %v3104 = vadd.f32 0.0, %v3103
  %v3105 = vpop.f32.mrf.mxu0
  %v3106 = vpop.f32.mrf.mxu0
  %v3107 = vadd.f32 0.0, %v3106
  %v3108 = vpop.f32.mrf.mxu0
  %3109 = vmatprep.mubr.bf16.mxu0 0
  %3110 = vmatmul.mubr.bf16.gmra.mxu0 %v2882
  %v3111 = vpop.f32.mrf.mxu0
  %v3112 = vadd.f32 0.0, %v3111
  %v3113 = vpop.f32.mrf.mxu0
  %v3114 = vpop.f32.mrf.mxu0
  %v3115 = vadd.f32 0.0, %v3114
  %v3116 = vpop.f32.mrf.mxu0
  %3117 = vmatprep.mubr.bf16.mxu0 0
  %3118 = vmatmul.mubr.bf16.gmra.mxu0 %v2885
  %v3119 = vpop.f32.mrf.mxu0
  %v3120 = vadd.f32 0.0, %v3119
  %v3121 = vpop.f32.mrf.mxu0
  %v3122 = vpop.f32.mrf.mxu0
  %v3123 = vadd.f32 0.0, %v3122
  %v3124 = vpop.f32.mrf.mxu0
  %3125 = vmatprep.mubr.bf16.mxu0 0
  %3126 = vmatmul.mubr.bf16.gmra.mxu0 %v2888
  %v3127 = vpop.f32.mrf.mxu0
  %v3128 = vadd.f32 0.0, %v3127
  %v3129 = vpop.f32.mrf.mxu0
  %v3130 = vpop.f32.mrf.mxu0
  %v3131 = vadd.f32 0.0, %v3130
  %v3132 = vpop.f32.mrf.mxu0
  %3133 = vmatprep.mubr.bf16.mxu0 0
  %3134 = vmatmul.mubr.bf16.gmra.mxu0 %v2891
  %v3135 = vpop.f32.mrf.mxu0
  %v3136 = vadd.f32 0.0, %v3135
  %v3137 = vpop.f32.mrf.mxu0
  %v3138 = vpop.f32.mrf.mxu0
  %v3139 = vadd.f32 0.0, %v3138
  %v3140 = vpop.f32.mrf.mxu0
  %3141 = vmatprep.mubr.bf16.mxu0 0
  %3142 = vmatmul.mubr.bf16.gmra.mxu0 %v2894
  %v3143 = vpop.f32.mrf.mxu0
  %v3144 = vadd.f32 0.0, %v3143
  %v3145 = vpop.f32.mrf.mxu0
  %v3146 = vpop.f32.mrf.mxu0
  %v3147 = vadd.f32 0.0, %v3146
  %v3148 = vpop.f32.mrf.mxu0
  %3149 = vmatprep.mubr.bf16.mxu0 0
  %3150 = vmatmul.mubr.bf16.gmra.mxu0 %v2897
  %v3151 = vpop.f32.mrf.mxu0
  %v3152 = vadd.f32 0.0, %v3151
  %v3153 = vpop.f32.mrf.mxu0
  %v3154 = vpop.f32.mrf.mxu0
  %v3155 = vadd.f32 0.0, %v3154
  %v3156 = vpop.f32.mrf.mxu0
  %3157 = vmatprep.mubr.bf16.mxu0 0
  %3158 = vmatmul.mubr.bf16.gmra.mxu0 %v2900
  %v3159 = vpop.f32.mrf.mxu0
  %v3160 = vadd.f32 0.0, %v3159
  %v3161 = vpop.f32.mrf.mxu0
  %v3162 = vpop.f32.mrf.mxu0
  %v3163 = vadd.f32 0.0, %v3162
  %v3164 = vpop.f32.mrf.mxu0
  %3165 = vmatprep.mubr.bf16.mxu0 0
  %3166 = vmatmul.mubr.bf16.gmra.mxu0 %v2903
  %v3167 = vpop.f32.mrf.mxu0
  %v3168 = vadd.f32 0.0, %v3167
  %v3169 = vpop.f32.mrf.mxu0
  %v3170 = vpop.f32.mrf.mxu0
  %v3171 = vadd.f32 0.0, %v3170
  %v3172 = vpop.f32.mrf.mxu0
  %3173 = vmatprep.mubr.bf16.mxu0 0
  %3174 = vmatmul.mubr.bf16.gmra.mxu0 %v2906
  %v3175 = vpop.f32.mrf.mxu0
  %v3176 = vadd.f32 0.0, %v3175
  %v3177 = vpop.f32.mrf.mxu0
  %v3178 = vpop.f32.mrf.mxu0
  %v3179 = vadd.f32 0.0, %v3178
  %v3180 = vpop.f32.mrf.mxu0
  %3181 = vmatprep.mubr.bf16.mxu0 0
  %3182 = vmatmul.mubr.bf16.gmra.mxu0 %v2909
  %v3183 = vpop.f32.mrf.mxu0
  %v3184 = vadd.f32 0.0, %v3183
  %v3185 = vpop.f32.mrf.mxu0
  %v3186 = vpop.f32.mrf.mxu0
  %v3187 = vadd.f32 0.0, %v3186
  %v3188 = vpop.f32.mrf.mxu0
  %3189 = vmatprep.mubr.bf16.mxu0 0
  %3190 = vmatmul.mubr.bf16.gmra.mxu0 %v2912
  %v3191 = vpop.f32.mrf.mxu0
  %v3192 = vadd.f32 0.0, %v3191
  %v3193 = vpop.f32.mrf.mxu0
  %v3194 = vpop.f32.mrf.mxu0
  %v3195 = vadd.f32 0.0, %v3194
  %v3196 = vpop.f32.mrf.mxu0
  %3197 = vmatprep.mubr.bf16.mxu0 0
  %3198 = vmatmul.mubr.bf16.gmra.mxu0 %v2915
  %v3199 = vpop.f32.mrf.mxu0
  %v3200 = vadd.f32 0.0, %v3199
  %v3201 = vpop.f32.mrf.mxu0
  %v3202 = vpop.f32.mrf.mxu0
  %v3203 = vadd.f32 0.0, %v3202
  %v3204 = vpop.f32.mrf.mxu0
  %3205 = vmatprep.mubr.bf16.mxu0 0
  %3206 = vmatmul.mubr.bf16.gmra.mxu0 %v2918
  %v3207 = vpop.f32.mrf.mxu0
  %v3208 = vadd.f32 0.0, %v3207
  %v3209 = vpop.f32.mrf.mxu0
  %v3210 = vpop.f32.mrf.mxu0
  %v3211 = vadd.f32 0.0, %v3210
  %v3212 = vpop.f32.mrf.mxu0
  %3213 = vmatprep.mubr.bf16.mxu0 0
  %3214 = vmatmul.mubr.bf16.gmra.mxu0 %v2921
  %v3215 = vpop.f32.mrf.mxu0
  %v3216 = vadd.f32 0.0, %v3215
  %v3217 = vpop.f32.mrf.mxu0
  %v3218 = vpop.f32.mrf.mxu0
  %v3219 = vadd.f32 0.0, %v3218
  %v3220 = vpop.f32.mrf.mxu0
  %3221 = vmatprep.mubr.bf16.mxu0 0
  %3222 = vmatmul.mubr.bf16.gmra.mxu0 %v2924
  %v3223 = vpop.f32.mrf.mxu0
  %v3224 = vadd.f32 0.0, %v3223
  %v3225 = vpop.f32.mrf.mxu0
  %v3226 = vpop.f32.mrf.mxu0
  %v3227 = vadd.f32 0.0, %v3226
  %v3228 = vpop.f32.mrf.mxu0
  %3229 = vmatprep.mubr.bf16.mxu0 0
  %3230 = vmatmul.mubr.bf16.gmra.mxu0 %v2927
  %v3231 = vpop.f32.mrf.mxu0
  %v3232 = vadd.f32 0.0, %v3231
  %v3233 = vpop.f32.mrf.mxu0
  %v3234 = vpop.f32.mrf.mxu0
  %v3235 = vadd.f32 0.0, %v3234
  %v3236 = vpop.f32.mrf.mxu0
  %3237 = vmatprep.mubr.bf16.mxu0 0
  %3238 = vmatmul.mubr.bf16.gmra.mxu0 %v2930
  %v3239 = vpop.f32.mrf.mxu0
  %v3240 = vadd.f32 0.0, %v3239
  %v3241 = vpop.f32.mrf.mxu0
  %v3242 = vpop.f32.mrf.mxu0
  %v3243 = vadd.f32 0.0, %v3242
  %v3244 = vpop.f32.mrf.mxu0
  %3245 = vmatprep.mubr.bf16.mxu0 0
  %3246 = vmatmul.mubr.bf16.gmra.mxu0 %v2933
  %v3247 = vpop.f32.mrf.mxu0
  %v3248 = vadd.f32 0.0, %v3247
  %v3249 = vpop.f32.mrf.mxu0
  %v3250 = vpop.f32.mrf.mxu0
  %v3251 = vadd.f32 0.0, %v3250
  %v3252 = vpop.f32.mrf.mxu0
  %3253 = vmatprep.mubr.bf16.mxu0 0
  %3254 = vmatmul.mubr.bf16.gmra.mxu0 %v2936
  %v3255 = vpop.f32.mrf.mxu0
  %v3256 = vadd.f32 0.0, %v3255
  %v3257 = vpop.f32.mrf.mxu0
  %v3258 = vpop.f32.mrf.mxu0
  %v3259 = vadd.f32 0.0, %v3258
  %v3260 = vpop.f32.mrf.mxu0
  %3261 = vdwg.mxu0
  %v3262 = vld [vmem:[#allocation2] sm:$0xff]
  %v3263 = vld [vmem:[#allocation2 + $0x8] sm:$0xff]
  %v3264 = vld [vmem:[#allocation2 + $0x10] sm:$0xff]
  %v3265 = vld [vmem:[#allocation2 + $0x18] sm:$0xff]
  %v3266 = vld [vmem:[#allocation2 + $0x20] sm:$0xff]
  %v3267 = vld [vmem:[#allocation2 + $0x28] sm:$0xff]
  %v3268 = vld [vmem:[#allocation2 + $0x30] sm:$0xff]
  %v3269 = vld [vmem:[#allocation2 + $0x38] sm:$0xff]
  %v3270 = vld [vmem:[#allocation2 + $0x40] sm:$0xff]
  %v3271 = vld [vmem:[#allocation2 + $0x48] sm:$0xff]
  %v3272 = vld [vmem:[#allocation2 + $0x50] sm:$0xff]
  %v3273 = vld [vmem:[#allocation2 + $0x58] sm:$0xff]
  %v3274 = vld [vmem:[#allocation2 + $0x60] sm:$0xff]
  %v3275 = vld [vmem:[#allocation2 + $0x68] sm:$0xff]
  %v3276 = vld [vmem:[#allocation2 + $0x70] sm:$0xff]
  %v3277 = vld [vmem:[#allocation2 + $0x78] sm:$0xff]
  %v3278 = vld [vmem:[#allocation2 + $0x80] sm:$0xff]
  %v3279 = vld [vmem:[#allocation2 + $0x88] sm:$0xff]
  %v3280 = vld [vmem:[#allocation2 + $0x90] sm:$0xff]
  %v3281 = vld [vmem:[#allocation2 + $0x98] sm:$0xff]
  %v3282 = vld [vmem:[#allocation2 + $0xa0] sm:$0xff]
  %v3283 = vld [vmem:[#allocation2 + $0xa8] sm:$0xff]
  %v3284 = vld [vmem:[#allocation2 + $0xb0] sm:$0xff]
  %v3285 = vld [vmem:[#allocation2 + $0xb8] sm:$0xff]
  %v3286 = vld [vmem:[#allocation2 + $0xc0] sm:$0xff]
  %v3287 = vld [vmem:[#allocation2 + $0xc8] sm:$0xff]
  %v3288 = vld [vmem:[#allocation2 + $0xd0] sm:$0xff]
  %v3289 = vld [vmem:[#allocation2 + $0xd8] sm:$0xff]
  %v3290 = vld [vmem:[#allocation2 + $0xe0] sm:$0xff]
  %v3291 = vld [vmem:[#allocation2 + $0xe8] sm:$0xff]
  %v3292 = vld [vmem:[#allocation2 + $0xf0] sm:$0xff]
  %v3293 = vld [vmem:[#allocation2 + $0xf8] sm:$0xff]
  %v3294 = vld [vmem:[#allocation2 + $0x100] sm:$0xff]
  %v3295 = vld [vmem:[#allocation2 + $0x108] sm:$0xff]
  %v3296 = vld [vmem:[#allocation2 + $0x110] sm:$0xff]
  %v3297 = vld [vmem:[#allocation2 + $0x118] sm:$0xff]
  %v3298 = vld [vmem:[#allocation2 + $0x120] sm:$0xff]
  %v3299 = vld [vmem:[#allocation2 + $0x128] sm:$0xff]
  %v3300 = vld [vmem:[#allocation2 + $0x130] sm:$0xff]
  %v3301 = vld [vmem:[#allocation2 + $0x138] sm:$0xff]
  %v3302 = vld [vmem:[#allocation2 + $0x140] sm:$0xff]
  %v3303 = vld [vmem:[#allocation2 + $0x148] sm:$0xff]
  %v3304 = vld [vmem:[#allocation2 + $0x150] sm:$0xff]
  %v3305 = vld [vmem:[#allocation2 + $0x158] sm:$0xff]
  %v3306 = vld [vmem:[#allocation2 + $0x160] sm:$0xff]
  %v3307 = vld [vmem:[#allocation2 + $0x168] sm:$0xff]
  %v3308 = vld [vmem:[#allocation2 + $0x170] sm:$0xff]
  %v3309 = vld [vmem:[#allocation2 + $0x178] sm:$0xff]
  %v3310 = vld [vmem:[#allocation2 + $0x180] sm:$0xff]
  %v3311 = vld [vmem:[#allocation2 + $0x188] sm:$0xff]
  %v3312 = vld [vmem:[#allocation2 + $0x190] sm:$0xff]
  %v3313 = vld [vmem:[#allocation2 + $0x198] sm:$0xff]
  %v3314 = vld [vmem:[#allocation2 + $0x1a0] sm:$0xff]
  %v3315 = vld [vmem:[#allocation2 + $0x1a8] sm:$0xff]
  %v3316 = vld [vmem:[#allocation2 + $0x1b0] sm:$0xff]
  %v3317 = vld [vmem:[#allocation2 + $0x1b8] sm:$0xff]
  %v3318 = vld [vmem:[#allocation2 + $0x1c0] sm:$0xff]
  %v3319 = vld [vmem:[#allocation2 + $0x1c8] sm:$0xff]
  %v3320 = vld [vmem:[#allocation2 + $0x1d0] sm:$0xff]
  %v3321 = vld [vmem:[#allocation2 + $0x1d8] sm:$0xff]
  %v3322 = vld [vmem:[#allocation2 + $0x1e0] sm:$0xff]
  %v3323 = vld [vmem:[#allocation2 + $0x1e8] sm:$0xff]
  %v3324 = vld [vmem:[#allocation2 + $0x1f0] sm:$0xff]
  %v3325 = vld [vmem:[#allocation2 + $0x1f8] sm:$0xff]
  %v3326 = vld [vmem:[#allocation2 + $0x200] sm:$0xff]
  %v3327 = vld [vmem:[#allocation2 + $0x208] sm:$0xff]
  %v3328 = vld [vmem:[#allocation2 + $0x210] sm:$0xff]
  %v3329 = vld [vmem:[#allocation2 + $0x218] sm:$0xff]
  %v3330 = vld [vmem:[#allocation2 + $0x220] sm:$0xff]
  %v3331 = vld [vmem:[#allocation2 + $0x228] sm:$0xff]
  %v3332 = vld [vmem:[#allocation2 + $0x230] sm:$0xff]
  %v3333 = vld [vmem:[#allocation2 + $0x238] sm:$0xff]
  %v3334 = vadd.f32 %v3262, %v2976
  %v3335 = vadd.f32 %v3263, %v2979
  %v3336 = vadd.f32 %v3264, %v2984
  %v3337 = vadd.f32 %v3265, %v2987
  %v3338 = vadd.f32 %v3266, %v2992
  %v3339 = vadd.f32 %v3267, %v2995
  %v3340 = vadd.f32 %v3268, %v3000
  %v3341 = vadd.f32 %v3269, %v3003
  %v3342 = vadd.f32 %v3270, %v3008
  %v3343 = vadd.f32 %v3271, %v3011
  %v3344 = vadd.f32 %v3272, %v3016
  %v3345 = vadd.f32 %v3273, %v3019
  %v3346 = vadd.f32 %v3274, %v3024
  %v3347 = vadd.f32 %v3275, %v3027
  %v3348 = vadd.f32 %v3276, %v3032
  %v3349 = vadd.f32 %v3277, %v3035
  %v3350 = vadd.f32 %v3278, %v3040
  %v3351 = vadd.f32 %v3279, %v3043
  %v3352 = vadd.f32 %v3280, %v3048
  %v3353 = vadd.f32 %v3281, %v3051
  %v3354 = vadd.f32 %v3282, %v3056
  %v3355 = vadd.f32 %v3283, %v3059
  %v3356 = vadd.f32 %v3284, %v3064
  %v3357 = vadd.f32 %v3285, %v3067
  %v3358 = vadd.f32 %v3286, %v3072
  %v3359 = vadd.f32 %v3287, %v3075
  %v3360 = vadd.f32 %v3288, %v3080
  %v3361 = vadd.f32 %v3289, %v3083
  %v3362 = vadd.f32 %v3290, %v3088
  %v3363 = vadd.f32 %v3291, %v3091
  %v3364 = vadd.f32 %v3292, %v3096
  %v3365 = vadd.f32 %v3293, %v3099
  %v3366 = vadd.f32 %v3294, %v3104
  %v3367 = vadd.f32 %v3295, %v3107
  %v3368 = vadd.f32 %v3296, %v3112
  %v3369 = vadd.f32 %v3297, %v3115
  %v3370 = vadd.f32 %v3298, %v3120
  %v3371 = vadd.f32 %v3299, %v3123
  %v3372 = vadd.f32 %v3300, %v3128
  %v3373 = vadd.f32 %v3301, %v3131
  %v3374 = vadd.f32 %v3302, %v3136
  %v3375 = vadd.f32 %v3303, %v3139
  %v3376 = vadd.f32 %v3304, %v3144
  %v3377 = vadd.f32 %v3305, %v3147
  %v3378 = vadd.f32 %v3306, %v3152
  %v3379 = vadd.f32 %v3307, %v3155
  %v3380 = vadd.f32 %v3308, %v3160
  %v3381 = vadd.f32 %v3309, %v3163
  %v3382 = vadd.f32 %v3310, %v3168
  %v3383 = vadd.f32 %v3311, %v3171
  %v3384 = vadd.f32 %v3312, %v3176
  %v3385 = vadd.f32 %v3313, %v3179
  %v3386 = vadd.f32 %v3314, %v3184
  %v3387 = vadd.f32 %v3315, %v3187
  %v3388 = vadd.f32 %v3316, %v3192
  %v3389 = vadd.f32 %v3317, %v3195
  %v3390 = vadd.f32 %v3318, %v3200
  %v3391 = vadd.f32 %v3319, %v3203
  %v3392 = vadd.f32 %v3320, %v3208
  %v3393 = vadd.f32 %v3321, %v3211
  %v3394 = vadd.f32 %v3322, %v3216
  %v3395 = vadd.f32 %v3323, %v3219
  %v3396 = vadd.f32 %v3324, %v3224
  %v3397 = vadd.f32 %v3325, %v3227
  %v3398 = vadd.f32 %v3326, %v3232
  %v3399 = vadd.f32 %v3327, %v3235
  %v3400 = vadd.f32 %v3328, %v3240
  %v3401 = vadd.f32 %v3329, %v3243
  %v3402 = vadd.f32 %v3330, %v3248
  %v3403 = vadd.f32 %v3331, %v3251
  %v3404 = vadd.f32 %v3332, %v3256
  %v3405 = vadd.f32 %v3333, %v3259
  %3406 = vst [vmem:[#allocation2] sm:$0xff] %v3334
  %3407 = vst [vmem:[#allocation2 + $0x8] sm:$0xff] %v3335
  %3408 = vst [vmem:[#allocation2 + $0x10] sm:$0xff] %v3336
  %3409 = vst [vmem:[#allocation2 + $0x18] sm:$0xff] %v3337
  %3410 = vst [vmem:[#allocation2 + $0x20] sm:$0xff] %v3338
  %3411 = vst [vmem:[#allocation2 + $0x28] sm:$0xff] %v3339
  %3412 = vst [vmem:[#allocation2 + $0x30] sm:$0xff] %v3340
  %3413 = vst [vmem:[#allocation2 + $0x38] sm:$0xff] %v3341
  %3414 = vst [vmem:[#allocation2 + $0x40] sm:$0xff] %v3342
  %3415 = vst [vmem:[#allocation2 + $0x48] sm:$0xff] %v3343
  %3416 = vst [vmem:[#allocation2 + $0x50] sm:$0xff] %v3344
  %3417 = vst [vmem:[#allocation2 + $0x58] sm:$0xff] %v3345
  %3418 = vst [vmem:[#allocation2 + $0x60] sm:$0xff] %v3346
  %3419 = vst [vmem:[#allocation2 + $0x68] sm:$0xff] %v3347
  %3420 = vst [vmem:[#allocation2 + $0x70] sm:$0xff] %v3348
  %3421 = vst [vmem:[#allocation2 + $0x78] sm:$0xff] %v3349
  %3422 = vst [vmem:[#allocation2 + $0x80] sm:$0xff] %v3350
  %3423 = vst [vmem:[#allocation2 + $0x88] sm:$0xff] %v3351
  %3424 = vst [vmem:[#allocation2 + $0x90] sm:$0xff] %v3352
  %3425 = vst [vmem:[#allocation2 + $0x98] sm:$0xff] %v3353
  %3426 = vst [vmem:[#allocation2 + $0xa0] sm:$0xff] %v3354
  %3427 = vst [vmem:[#allocation2 + $0xa8] sm:$0xff] %v3355
  %3428 = vst [vmem:[#allocation2 + $0xb0] sm:$0xff] %v3356
  %3429 = vst [vmem:[#allocation2 + $0xb8] sm:$0xff] %v3357
  %3430 = vst [vmem:[#allocation2 + $0xc0] sm:$0xff] %v3358
  %3431 = vst [vmem:[#allocation2 + $0xc8] sm:$0xff] %v3359
  %3432 = vst [vmem:[#allocation2 + $0xd0] sm:$0xff] %v3360
  %3433 = vst [vmem:[#allocation2 + $0xd8] sm:$0xff] %v3361
  %3434 = vst [vmem:[#allocation2 + $0xe0] sm:$0xff] %v3362
  %3435 = vst [vmem:[#allocation2 + $0xe8] sm:$0xff] %v3363
  %3436 = vst [vmem:[#allocation2 + $0xf0] sm:$0xff] %v3364
  %3437 = vst [vmem:[#allocation2 + $0xf8] sm:$0xff] %v3365
  %3438 = vst [vmem:[#allocation2 + $0x100] sm:$0xff] %v3366
  %3439 = vst [vmem:[#allocation2 + $0x108] sm:$0xff] %v3367
  %3440 = vst [vmem:[#allocation2 + $0x110] sm:$0xff] %v3368
  %3441 = vst [vmem:[#allocation2 + $0x118] sm:$0xff] %v3369
  %3442 = vst [vmem:[#allocation2 + $0x120] sm:$0xff] %v3370
  %3443 = vst [vmem:[#allocation2 + $0x128] sm:$0xff] %v3371
  %3444 = vst [vmem:[#allocation2 + $0x130] sm:$0xff] %v3372
  %3445 = vst [vmem:[#allocation2 + $0x138] sm:$0xff] %v3373
  %3446 = vst [vmem:[#allocation2 + $0x140] sm:$0xff] %v3374
  %3447 = vst [vmem:[#allocation2 + $0x148] sm:$0xff] %v3375
  %3448 = vst [vmem:[#allocation2 + $0x150] sm:$0xff] %v3376
  %3449 = vst [vmem:[#allocation2 + $0x158] sm:$0xff] %v3377
  %3450 = vst [vmem:[#allocation2 + $0x160] sm:$0xff] %v3378
  %3451 = vst [vmem:[#allocation2 + $0x168] sm:$0xff] %v3379
  %3452 = vst [vmem:[#allocation2 + $0x170] sm:$0xff] %v3380
  %3453 = vst [vmem:[#allocation2 + $0x178] sm:$0xff] %v3381
  %3454 = vst [vmem:[#allocation2 + $0x180] sm:$0xff] %v3382
  %3455 = vst [vmem:[#allocation2 + $0x188] sm:$0xff] %v3383
  %3456 = vst [vmem:[#allocation2 + $0x190] sm:$0xff] %v3384
  %3457 = vst [vmem:[#allocation2 + $0x198] sm:$0xff] %v3385
  %3458 = vst [vmem:[#allocation2 + $0x1a0] sm:$0xff] %v3386
  %3459 = vst [vmem:[#allocation2 + $0x1a8] sm:$0xff] %v3387
  %3460 = vst [vmem:[#allocation2 + $0x1b0] sm:$0xff] %v3388
  %3461 = vst [vmem:[#allocation2 + $0x1b8] sm:$0xff] %v3389
  %3462 = vst [vmem:[#allocation2 + $0x1c0] sm:$0xff] %v3390
  %3463 = vst [vmem:[#allocation2 + $0x1c8] sm:$0xff] %v3391
  %3464 = vst [vmem:[#allocation2 + $0x1d0] sm:$0xff] %v3392
  %3465 = vst [vmem:[#allocation2 + $0x1d8] sm:$0xff] %v3393
  %3466 = vst [vmem:[#allocation2 + $0x1e0] sm:$0xff] %v3394
  %3467 = vst [vmem:[#allocation2 + $0x1e8] sm:$0xff] %v3395
  %3468 = vst [vmem:[#allocation2 + $0x1f0] sm:$0xff] %v3396
  %3469 = vst [vmem:[#allocation2 + $0x1f8] sm:$0xff] %v3397
  %3470 = vst [vmem:[#allocation2 + $0x200] sm:$0xff] %v3398
  %3471 = vst [vmem:[#allocation2 + $0x208] sm:$0xff] %v3399
  %3472 = vst [vmem:[#allocation2 + $0x210] sm:$0xff] %v3400
  %3473 = vst [vmem:[#allocation2 + $0x218] sm:$0xff] %v3401
  %3474 = vst [vmem:[#allocation2 + $0x220] sm:$0xff] %v3402
  %3475 = vst [vmem:[#allocation2 + $0x228] sm:$0xff] %v3403
  %3476 = vst [vmem:[#allocation2 + $0x230] sm:$0xff] %v3404
  %3477 = vst [vmem:[#allocation2 + $0x238] sm:$0xff] %v3405
  %v3478 = vld [vmem:[%s0 + $0x8] sm:$0xe]
  %v3479 = vld [vmem:[%s0 + $0xc] sm:$0xf]
  %v3480 = vld [vmem:[%s0 + $0x10] sm:$0xf]
  %v3481 = vld [vmem:[%s0 + $0x14] sm:$0xf]
  %v3482 = vld [vmem:[%s0 + $0x18] sm:$0xf]
  %v3483 = vld [vmem:[%s0 + $0x1c] sm:$0xf]
  %v3484 = vld [vmem:[%s0 + $0x20] sm:$0xf]
  %v3485 = vld [vmem:[%s0 + $0x24] sm:$0xf]
  %v3486 = vld [vmem:[%s0 + $0x28] sm:$0xf]
  %v3487 = vld [vmem:[%s0 + $0x2c] sm:$0xf]
  %v3488 = vld [vmem:[%s0 + $0x30] sm:$0xf]
  %v3489 = vld [vmem:[%s0 + $0x34] sm:$0xf]
  %v3490 = vld [vmem:[%s0 + $0x38] sm:$0xf]
  %v3491 = vld [vmem:[%s0 + $0x3c] sm:$0xf]
  %v3492 = vld [vmem:[%s0 + $0x40] sm:$0xf]
  %v3493 = vld [vmem:[%s0 + $0x44] sm:$0xf]
  %v3494 = vld [vmem:[%s0 + $0x48] sm:$0xf]
  %v3495 = vld [vmem:[%s0 + $0x4c] sm:$0xf]
  %v3496 = vld [vmem:[%s0 + $0x50] sm:$0xf]
  %v3497 = vld [vmem:[%s0 + $0x54] sm:$0xf]
  %v3498 = vld [vmem:[%s0 + $0x58] sm:$0xf]
  %v3499 = vld [vmem:[%s0 + $0x5c] sm:$0xf]
  %v3500 = vld [vmem:[%s0 + $0x60] sm:$0xf]
  %v3501 = vld [vmem:[%s0 + $0x64] sm:$0xf]
  %v3502 = vld [vmem:[%s0 + $0x68] sm:$0xf]
  %v3503 = vld [vmem:[%s0 + $0x6c] sm:$0xf]
  %v3504 = vld [vmem:[%s0 + $0x70] sm:$0xf]
  %v3505 = vld [vmem:[%s0 + $0x74] sm:$0xf]
  %v3506 = vld [vmem:[%s0 + $0x78] sm:$0xf]
  %v3507 = vld [vmem:[%s0 + $0x7c] sm:$0xf]
  %v3508 = vld [vmem:[%s0 + $0x80] sm:$0xf]
  %v3509 = vld [vmem:[%s0 + $0x84] sm:$0xf]
  %v3510 = vld [vmem:[%s0 + $0x88] sm:$0xf]
  %v3511 = vld [vmem:[%s0 + $0x8c] sm:$0xf]
  %v3512 = vld [vmem:[%s0 + $0x90] sm:$0xf]
  %v3513 = vld [vmem:[%s0 + $0x94] sm:$0xf]
  %v3514 = vld [vmem:[%s0 + $0x98] sm:$0x1]
  %v3515 = vld [vmem:[%s0 + $0xac] sm:$0xe]
  %v3516 = vld [vmem:[%s0 + $0xb0] sm:$0xf]
  %v3517 = vld [vmem:[%s0 + $0xb4] sm:$0xf]
  %v3518 = vld [vmem:[%s0 + $0xb8] sm:$0xf]
  %v3519 = vld [vmem:[%s0 + $0xbc] sm:$0xf]
  %v3520 = vld [vmem:[%s0 + $0xc0] sm:$0xf]
  %v3521 = vld [vmem:[%s0 + $0xc4] sm:$0xf]
  %v3522 = vld [vmem:[%s0 + $0xc8] sm:$0xf]
  %v3523 = vld [vmem:[%s0 + $0xcc] sm:$0xf]
  %v3524 = vld [vmem:[%s0 + $0xd0] sm:$0xf]
  %v3525 = vld [vmem:[%s0 + $0xd4] sm:$0xf]
  %v3526 = vld [vmem:[%s0 + $0xd8] sm:$0xf]
  %v3527 = vld [vmem:[%s0 + $0xdc] sm:$0xf]
  %v3528 = vld [vmem:[%s0 + $0xe0] sm:$0xf]
  %v3529 = vld [vmem:[%s0 + $0xe4] sm:$0xf]
  %v3530 = vld [vmem:[%s0 + $0xe8] sm:$0xf]
  %v3531 = vld [vmem:[%s0 + $0xec] sm:$0xf]
  %v3532 = vld [vmem:[%s0 + $0xf0] sm:$0xf]
  %v3533 = vld [vmem:[%s0 + $0xf4] sm:$0xf]
  %v3534 = vld [vmem:[%s0 + $0xf8] sm:$0xf]
  %v3535 = vld [vmem:[%s0 + $0xfc] sm:$0xf]
  %v3536 = vld [vmem:[%s0 + $0x100] sm:$0xf]
  %v3537 = vld [vmem:[%s0 + $0x104] sm:$0xf]
  %v3538 = vld [vmem:[%s0 + $0x108] sm:$0xf]
  %v3539 = vld [vmem:[%s0 + $0x10c] sm:$0xf]
  %v3540 = vld [vmem:[%s0 + $0x110] sm:$0xf]
  %v3541 = vld [vmem:[%s0 + $0x114] sm:$0xf]
  %v3542 = vld [vmem:[%s0 + $0x118] sm:$0xf]
  %v3543 = vld [vmem:[%s0 + $0x11c] sm:$0xf]
  %v3544 = vld [vmem:[%s0 + $0x120] sm:$0xf]
  %v3545 = vld [vmem:[%s0 + $0x124] sm:$0xf]
  %v3546 = vld [vmem:[%s0 + $0x128] sm:$0xf]
  %v3547 = vld [vmem:[%s0 + $0x12c] sm:$0xf]
  %v3548 = vld [vmem:[%s0 + $0x130] sm:$0xf]
  %v3549 = vld [vmem:[%s0 + $0x134] sm:$0xf]
  %v3550 = vld [vmem:[%s0 + $0x138] sm:$0xf]
  %v3551 = vld [vmem:[%s0 + $0x13c] sm:$0x1]
  %v3626 = vrot.slane %v3478, 5
  %v3627 = vrot.slane %v3626, 4
  %v3628 = vrot.slane %v3479, 5
  %v3629 = vsel %vm2502, %v3627, %v3628
  %v3630 = vrot.slane %v3628, 4
  %v3631 = vrot.slane %v3480, 5
  %v3632 = vsel %vm2502, %v3630, %v3631
  %v3633 = vrot.slane %v3631, 4
  %v3634 = vrot.slane %v3481, 5
  %v3635 = vsel %vm2502, %v3633, %v3634
  %v3636 = vrot.slane %v3634, 4
  %v3637 = vrot.slane %v3482, 5
  %v3638 = vsel %vm2502, %v3636, %v3637
  %v3639 = vrot.slane %v3637, 4
  %v3640 = vrot.slane %v3483, 5
  %v3641 = vsel %vm2502, %v3639, %v3640
  %v3642 = vrot.slane %v3640, 4
  %v3643 = vrot.slane %v3484, 5
  %v3644 = vsel %vm2502, %v3642, %v3643
  %v3645 = vrot.slane %v3643, 4
  %v3646 = vrot.slane %v3485, 5
  %v3647 = vsel %vm2502, %v3645, %v3646
  %v3648 = vrot.slane %v3646, 4
  %v3649 = vrot.slane %v3486, 5
  %v3650 = vsel %vm2502, %v3648, %v3649
  %v3651 = vrot.slane %v3649, 4
  %v3652 = vrot.slane %v3487, 5
  %v3653 = vsel %vm2502, %v3651, %v3652
  %v3654 = vrot.slane %v3652, 4
  %v3655 = vrot.slane %v3488, 5
  %v3656 = vsel %vm2502, %v3654, %v3655
  %v3657 = vrot.slane %v3655, 4
  %v3658 = vrot.slane %v3489, 5
  %v3659 = vsel %vm2502, %v3657, %v3658
  %v3660 = vrot.slane %v3658, 4
  %v3661 = vrot.slane %v3490, 5
  %v3662 = vsel %vm2502, %v3660, %v3661
  %v3663 = vrot.slane %v3661, 4
  %v3664 = vrot.slane %v3491, 5
  %v3665 = vsel %vm2502, %v3663, %v3664
  %v3666 = vrot.slane %v3664, 4
  %v3667 = vrot.slane %v3492, 5
  %v3668 = vsel %vm2502, %v3666, %v3667
  %v3669 = vrot.slane %v3667, 4
  %v3670 = vrot.slane %v3493, 5
  %v3671 = vsel %vm2502, %v3669, %v3670
  %v3672 = vrot.slane %v3670, 4
  %v3673 = vrot.slane %v3494, 5
  %v3674 = vsel %vm2502, %v3672, %v3673
  %v3675 = vrot.slane %v3673, 4
  %v3676 = vrot.slane %v3495, 5
  %v3677 = vsel %vm2502, %v3675, %v3676
  %v3678 = vrot.slane %v3676, 4
  %v3679 = vrot.slane %v3496, 5
  %v3680 = vsel %vm2502, %v3678, %v3679
  %v3681 = vrot.slane %v3679, 4
  %v3682 = vrot.slane %v3497, 5
  %v3683 = vsel %vm2502, %v3681, %v3682
  %v3684 = vrot.slane %v3682, 4
  %v3685 = vrot.slane %v3498, 5
  %v3686 = vsel %vm2502, %v3684, %v3685
  %v3687 = vrot.slane %v3685, 4
  %v3688 = vrot.slane %v3499, 5
  %v3689 = vsel %vm2502, %v3687, %v3688
  %v3690 = vrot.slane %v3688, 4
  %v3691 = vrot.slane %v3500, 5
  %v3692 = vsel %vm2502, %v3690, %v3691
  %v3693 = vrot.slane %v3691, 4
  %v3694 = vrot.slane %v3501, 5
  %v3695 = vsel %vm2502, %v3693, %v3694
  %v3696 = vrot.slane %v3694, 4
  %v3697 = vrot.slane %v3502, 5
  %v3698 = vsel %vm2502, %v3696, %v3697
  %v3699 = vrot.slane %v3697, 4
  %v3700 = vrot.slane %v3503, 5
  %v3701 = vsel %vm2502, %v3699, %v3700
  %v3702 = vrot.slane %v3700, 4
  %v3703 = vrot.slane %v3504, 5
  %v3704 = vsel %vm2502, %v3702, %v3703
  %v3705 = vrot.slane %v3703, 4
  %v3706 = vrot.slane %v3505, 5
  %v3707 = vsel %vm2502, %v3705, %v3706
  %v3708 = vrot.slane %v3706, 4
  %v3709 = vrot.slane %v3506, 5
  %v3710 = vsel %vm2502, %v3708, %v3709
  %v3711 = vrot.slane %v3709, 4
  %v3712 = vrot.slane %v3507, 5
  %v3713 = vsel %vm2502, %v3711, %v3712
  %v3714 = vrot.slane %v3712, 4
  %v3715 = vrot.slane %v3508, 5
  %v3716 = vsel %vm2502, %v3714, %v3715
  %v3717 = vrot.slane %v3715, 4
  %v3718 = vrot.slane %v3509, 5
  %v3719 = vsel %vm2502, %v3717, %v3718
  %v3720 = vrot.slane %v3718, 4
  %v3721 = vrot.slane %v3510, 5
  %v3722 = vsel %vm2502, %v3720, %v3721
  %v3723 = vrot.slane %v3721, 4
  %v3724 = vrot.slane %v3511, 5
  %v3725 = vsel %vm2502, %v3723, %v3724
  %v3726 = vrot.slane %v3724, 4
  %v3727 = vrot.slane %v3512, 5
  %v3728 = vsel %vm2502, %v3726, %v3727
  %v3729 = vrot.slane %v3727, 4
  %v3730 = vrot.slane %v3513, 5
  %v3731 = vsel %vm2502, %v3729, %v3730
  %v3732 = vrot.slane %v3730, 4
  %v3733 = vrot.slane %v3514, 5
  %v3734 = vsel %vm2502, %v3732, %v3733
  %v3735 = vrot.slane %v3515, 5
  %v3736 = vrot.slane %v3735, 4
  %v3737 = vrot.slane %v3516, 5
  %v3738 = vsel %vm2502, %v3736, %v3737
  %v3739 = vrot.slane %v3737, 4
  %v3740 = vrot.slane %v3517, 5
  %v3741 = vsel %vm2502, %v3739, %v3740
  %v3742 = vrot.slane %v3740, 4
  %v3743 = vrot.slane %v3518, 5
  %v3744 = vsel %vm2502, %v3742, %v3743
  %v3745 = vrot.slane %v3743, 4
  %v3746 = vrot.slane %v3519, 5
  %v3747 = vsel %vm2502, %v3745, %v3746
  %v3748 = vrot.slane %v3746, 4
  %v3749 = vrot.slane %v3520, 5
  %v3750 = vsel %vm2502, %v3748, %v3749
  %v3751 = vrot.slane %v3749, 4
  %v3752 = vrot.slane %v3521, 5
  %v3753 = vsel %vm2502, %v3751, %v3752
  %v3754 = vrot.slane %v3752, 4
  %v3755 = vrot.slane %v3522, 5
  %v3756 = vsel %vm2502, %v3754, %v3755
  %v3757 = vrot.slane %v3755, 4
  %v3758 = vrot.slane %v3523, 5
  %v3759 = vsel %vm2502, %v3757, %v3758
  %v3760 = vrot.slane %v3758, 4
  %v3761 = vrot.slane %v3524, 5
  %v3762 = vsel %vm2502, %v3760, %v3761
  %v3763 = vrot.slane %v3761, 4
  %v3764 = vrot.slane %v3525, 5
  %v3765 = vsel %vm2502, %v3763, %v3764
  %v3766 = vrot.slane %v3764, 4
  %v3767 = vrot.slane %v3526, 5
  %v3768 = vsel %vm2502, %v3766, %v3767
  %v3769 = vrot.slane %v3767, 4
  %v3770 = vrot.slane %v3527, 5
  %v3771 = vsel %vm2502, %v3769, %v3770
  %v3772 = vrot.slane %v3770, 4
  %v3773 = vrot.slane %v3528, 5
  %v3774 = vsel %vm2502, %v3772, %v3773
  %v3775 = vrot.slane %v3773, 4
  %v3776 = vrot.slane %v3529, 5
  %v3777 = vsel %vm2502, %v3775, %v3776
  %v3778 = vrot.slane %v3776, 4
  %v3779 = vrot.slane %v3530, 5
  %v3780 = vsel %vm2502, %v3778, %v3779
  %v3781 = vrot.slane %v3779, 4
  %v3782 = vrot.slane %v3531, 5
  %v3783 = vsel %vm2502, %v3781, %v3782
  %v3784 = vrot.slane %v3782, 4
  %v3785 = vrot.slane %v3532, 5
  %v3786 = vsel %vm2502, %v3784, %v3785
  %v3787 = vrot.slane %v3785, 4
  %v3788 = vrot.slane %v3533, 5
  %v3789 = vsel %vm2502, %v3787, %v3788
  %v3790 = vrot.slane %v3788, 4
  %v3791 = vrot.slane %v3534, 5
  %v3792 = vsel %vm2502, %v3790, %v3791
  %v3793 = vrot.slane %v3791, 4
  %v3794 = vrot.slane %v3535, 5
  %v3795 = vsel %vm2502, %v3793, %v3794
  %v3796 = vrot.slane %v3794, 4
  %v3797 = vrot.slane %v3536, 5
  %v3798 = vsel %vm2502, %v3796, %v3797
  %v3799 = vrot.slane %v3797, 4
  %v3800 = vrot.slane %v3537, 5
  %v3801 = vsel %vm2502, %v3799, %v3800
  %v3802 = vrot.slane %v3800, 4
  %v3803 = vrot.slane %v3538, 5
  %v3804 = vsel %vm2502, %v3802, %v3803
  %v3805 = vrot.slane %v3803, 4
  %v3806 = vrot.slane %v3539, 5
  %v3807 = vsel %vm2502, %v3805, %v3806
  %v3808 = vrot.slane %v3806, 4
  %v3809 = vrot.slane %v3540, 5
  %v3810 = vsel %vm2502, %v3808, %v3809
  %v3811 = vrot.slane %v3809, 4
  %v3812 = vrot.slane %v3541, 5
  %v3813 = vsel %vm2502, %v3811, %v3812
  %v3814 = vrot.slane %v3812, 4
  %v3815 = vrot.slane %v3542, 5
  %v3816 = vsel %vm2502, %v3814, %v3815
  %v3817 = vrot.slane %v3815, 4
  %v3818 = vrot.slane %v3543, 5
  %v3819 = vsel %vm2502, %v3817, %v3818
  %v3820 = vrot.slane %v3818, 4
  %v3821 = vrot.slane %v3544, 5
  %v3822 = vsel %vm2502, %v3820, %v3821
  %v3823 = vrot.slane %v3821, 4
  %v3824 = vrot.slane %v3545, 5
  %v3825 = vsel %vm2502, %v3823, %v3824
  %v3826 = vrot.slane %v3824, 4
  %v3827 = vrot.slane %v3546, 5
  %v3828 = vsel %vm2502, %v3826, %v3827
  %v3829 = vrot.slane %v3827, 4
  %v3830 = vrot.slane %v3547, 5
  %v3831 = vsel %vm2502, %v3829, %v3830
  %v3832 = vrot.slane %v3830, 4
  %v3833 = vrot.slane %v3548, 5
  %v3834 = vsel %vm2502, %v3832, %v3833
  %v3835 = vrot.slane %v3833, 4
  %v3836 = vrot.slane %v3549, 5
  %v3837 = vsel %vm2502, %v3835, %v3836
  %v3838 = vrot.slane %v3836, 4
  %v3839 = vrot.slane %v3550, 5
  %v3840 = vsel %vm2502, %v3838, %v3839
  %v3841 = vrot.slane %v3839, 4
  %v3842 = vrot.slane %v3551, 5
  %v3843 = vsel %vm2502, %v3841, %v3842
  %v3844 = vld [vmem:[%s1 + $0x4] sm:$0xc]
  %v3845 = vunpack.c.l.b16 %v3629
  %v3846 = vunpack.c.l.b16 %v3632
  %v3847 = vunpack.c.l.b16 %v3635
  %v3848 = vunpack.c.l.b16 %v3638
  %v3849 = vunpack.c.l.b16 %v3641
  %v3850 = vunpack.c.l.b16 %v3644
  %v3851 = vunpack.c.l.b16 %v3647
  %v3852 = vunpack.c.l.b16 %v3650
  %v3853 = vunpack.c.l.b16 %v3653
  %v3854 = vunpack.c.l.b16 %v3656
  %v3855 = vunpack.c.l.b16 %v3659
  %v3856 = vunpack.c.l.b16 %v3662
  %v3857 = vunpack.c.l.b16 %v3665
  %v3858 = vunpack.c.l.b16 %v3668
  %v3859 = vunpack.c.l.b16 %v3671
  %v3860 = vunpack.c.l.b16 %v3674
  %v3861 = vunpack.c.l.b16 %v3677
  %v3862 = vunpack.c.l.b16 %v3680
  %v3863 = vunpack.c.l.b16 %v3683
  %v3864 = vunpack.c.l.b16 %v3686
  %v3865 = vunpack.c.l.b16 %v3689
  %v3866 = vunpack.c.l.b16 %v3692
  %v3867 = vunpack.c.l.b16 %v3695
  %v3868 = vunpack.c.l.b16 %v3698
  %v3869 = vunpack.c.l.b16 %v3701
  %v3870 = vunpack.c.l.b16 %v3704
  %v3871 = vunpack.c.l.b16 %v3707
  %v3872 = vunpack.c.l.b16 %v3710
  %v3873 = vunpack.c.l.b16 %v3713
  %v3874 = vunpack.c.l.b16 %v3716
  %v3875 = vunpack.c.l.b16 %v3719
  %v3876 = vunpack.c.l.b16 %v3722
  %v3877 = vunpack.c.l.b16 %v3725
  %v3878 = vunpack.c.l.b16 %v3728
  %v3879 = vunpack.c.l.b16 %v3731
  %v3880 = vunpack.c.l.b16 %v3734
  %v3881 = vunpack.c.l.b16 %v3738
  %v3882 = vunpack.c.l.b16 %v3741
  %v3883 = vunpack.c.l.b16 %v3744
  %v3884 = vunpack.c.l.b16 %v3747
  %v3885 = vunpack.c.l.b16 %v3750
  %v3886 = vunpack.c.l.b16 %v3753
  %v3887 = vunpack.c.l.b16 %v3756
  %v3888 = vunpack.c.l.b16 %v3759
  %v3889 = vunpack.c.l.b16 %v3762
  %v3890 = vunpack.c.l.b16 %v3765
  %v3891 = vunpack.c.l.b16 %v3768
  %v3892 = vunpack.c.l.b16 %v3771
  %v3893 = vunpack.c.l.b16 %v3774
  %v3894 = vunpack.c.l.b16 %v3777
  %v3895 = vunpack.c.l.b16 %v3780
  %v3896 = vunpack.c.l.b16 %v3783
  %v3897 = vunpack.c.l.b16 %v3786
  %v3898 = vunpack.c.l.b16 %v3789
  %v3899 = vunpack.c.l.b16 %v3792
  %v3900 = vunpack.c.l.b16 %v3795
  %v3901 = vunpack.c.l.b16 %v3798
  %v3902 = vunpack.c.l.b16 %v3801
  %v3903 = vunpack.c.l.b16 %v3804
  %v3904 = vunpack.c.l.b16 %v3807
  %v3905 = vunpack.c.l.b16 %v3810
  %v3906 = vunpack.c.l.b16 %v3813
  %v3907 = vunpack.c.l.b16 %v3816
  %v3908 = vunpack.c.l.b16 %v3819
  %v3909 = vunpack.c.l.b16 %v3822
  %v3910 = vunpack.c.l.b16 %v3825
  %v3911 = vunpack.c.l.b16 %v3828
  %v3912 = vunpack.c.l.b16 %v3831
  %v3913 = vunpack.c.l.b16 %v3834
  %v3914 = vunpack.c.l.b16 %v3837
  %v3915 = vunpack.c.l.b16 %v3840
  %v3916 = vunpack.c.l.b16 %v3843
  %v3917 = vpack.c.b16 %v3846, %v3845
  %v3918 = vpack.c.b16 %v3848, %v3847
  %v3919 = vpack.c.b16 %v3850, %v3849
  %v3920 = vpack.c.b16 %v3852, %v3851
  %v3921 = vpack.c.b16 %v3854, %v3853
  %v3922 = vpack.c.b16 %v3856, %v3855
  %v3923 = vpack.c.b16 %v3858, %v3857
  %v3924 = vpack.c.b16 %v3860, %v3859
  %v3925 = vpack.c.b16 %v3862, %v3861
  %v3926 = vpack.c.b16 %v3864, %v3863
  %v3927 = vpack.c.b16 %v3866, %v3865
  %v3928 = vpack.c.b16 %v3868, %v3867
  %v3929 = vpack.c.b16 %v3870, %v3869
  %v3930 = vpack.c.b16 %v3872, %v3871
  %v3931 = vpack.c.b16 %v3874, %v3873
  %v3932 = vpack.c.b16 %v3876, %v3875
  %v3933 = vpack.c.b16 %v3878, %v3877
  %v3934 = vpack.c.b16 %v3880, %v3879
  %v3935 = vpack.c.b16 %v3882, %v3881
  %v3936 = vpack.c.b16 %v3884, %v3883
  %v3937 = vpack.c.b16 %v3886, %v3885
  %v3938 = vpack.c.b16 %v3888, %v3887
  %v3939 = vpack.c.b16 %v3890, %v3889
  %v3940 = vpack.c.b16 %v3892, %v3891
  %v3941 = vpack.c.b16 %v3894, %v3893
  %v3942 = vpack.c.b16 %v3896, %v3895
  %v3943 = vpack.c.b16 %v3898, %v3897
  %v3944 = vpack.c.b16 %v3900, %v3899
  %v3945 = vpack.c.b16 %v3902, %v3901
  %v3946 = vpack.c.b16 %v3904, %v3903
  %v3947 = vpack.c.b16 %v3906, %v3905
  %v3948 = vpack.c.b16 %v3908, %v3907
  %v3949 = vpack.c.b16 %v3910, %v3909
  %v3950 = vpack.c.b16 %v3912, %v3911
  %v3951 = vpack.c.b16 %v3914, %v3913
  %v3952 = vpack.c.b16 %v3916, %v3915
  %v3954 = vunpack.c.l.b16 %v3844
  %v3955 = vpack.c.b16 %v3954, %v3954
  %v3956 = vrot.slane %v3955, 2
  %v3958 = vsel %vm280, %v3917, 0
  %v3961 = vsel %vm280, %v3918, 0
  %v3964 = vsel %vm280, %v3919, 0
  %v3967 = vsel %vm280, %v3920, 0
  %v3970 = vsel %vm280, %v3921, 0
  %v3973 = vsel %vm280, %v3922, 0
  %v3976 = vsel %vm280, %v3923, 0
  %v3979 = vsel %vm280, %v3924, 0
  %v3982 = vsel %vm280, %v3925, 0
  %v3985 = vsel %vm280, %v3926, 0
  %v3988 = vsel %vm280, %v3927, 0
  %v3991 = vsel %vm280, %v3928, 0
  %v3994 = vsel %vm280, %v3929, 0
  %v3997 = vsel %vm280, %v3930, 0
  %v4000 = vsel %vm280, %v3931, 0
  %v4003 = vsel %vm280, %v3932, 0
  %v4006 = vsel %vm280, %v3933, 0
  %v4009 = vsel %vm280, %v3934, 0
  %v4012 = vsel %vm280, %v3935, 0
  %v4015 = vsel %vm280, %v3936, 0
  %v4018 = vsel %vm280, %v3937, 0
  %v4021 = vsel %vm280, %v3938, 0
  %v4024 = vsel %vm280, %v3939, 0
  %v4027 = vsel %vm280, %v3940, 0
  %v4030 = vsel %vm280, %v3941, 0
  %v4033 = vsel %vm280, %v3942, 0
  %v4036 = vsel %vm280, %v3943, 0
  %v4039 = vsel %vm280, %v3944, 0
  %v4042 = vsel %vm280, %v3945, 0
  %v4045 = vsel %vm280, %v3946, 0
  %v4048 = vsel %vm280, %v3947, 0
  %v4051 = vsel %vm280, %v3948, 0
  %v4054 = vsel %vm280, %v3949, 0
  %v4057 = vsel %vm280, %v3950, 0
  %v4060 = vsel %vm280, %v3951, 0
  %v4063 = vsel %vm280, %v3952, 0
  %v4066 = vsel %vm389, %v3956, 0
  %4068 = vmatprep.subr.bf16.mxu0 0
  %4069 = vmatpush1.bf16.msra.mxu0 0
  %4070 = vmatprep.subr.bf16.mxu0 0
  %4071 = vmatpush1.bf16.msra.mxu0 0
  %4072 = vmatprep.subr.bf16.mxu0 0
  %4073 = vmatpush1.bf16.msra.mxu0 0
  %4074 = vmatprep.subr.bf16.mxu0 0
  %4075 = vmatpush1.bf16.msra.mxu0 0
  %4076 = vmatprep.subr.bf16.mxu0 0
  %4077 = vmatpush1.bf16.msra.mxu0 0
  %4078 = vmatprep.subr.bf16.mxu0 0
  %4079 = vmatpush1.bf16.msra.mxu0 0
  %4080 = vmatprep.subr.bf16.mxu0 0
  %4081 = vmatpush1.bf16.msra.mxu0 0
  %4082 = vmatprep.subr.bf16.mxu0 0
  %4083 = vmatpush1.bf16.msra.mxu0 %v4066
  %4084 = vmatprep.subr.bf16.mxu0 0
  %4085 = vmatpush2.bf16.msra.mxu0 0
  %4086 = vmatprep.subr.bf16.mxu0 0
  %4087 = vmatpush2.bf16.msra.mxu0 0
  %4088 = vmatprep.subr.bf16.mxu0 0
  %4089 = vmatpush2.bf16.msra.mxu0 0
  %4090 = vmatprep.subr.bf16.mxu0 0
  %4091 = vmatpush2.bf16.msra.mxu0 0
  %4092 = vmatprep.subr.bf16.mxu0 0
  %4093 = vmatpush2.bf16.msra.mxu0 0
  %4094 = vmatprep.subr.bf16.mxu0 0
  %4095 = vmatpush2.bf16.msra.mxu0 0
  %4096 = vmatprep.subr.bf16.mxu0 0
  %4097 = vmatpush2.bf16.msra.mxu0 0
  %4098 = vmatprep.subr.bf16.mxu0 0
  %4099 = vmatpush2.bf16.msra.mxu0 0
  %4100 = vmatprep.mubr.bf16.mxu0 0
  %4101 = vmatmul.mubr.bf16.gmra.mxu0 %v3958
  %v4102 = vpop.f32.mrf.mxu0
  %v4103 = vadd.f32 0.0, %v4102
  %v4104 = vpop.f32.mrf.mxu0
  %v4105 = vpop.f32.mrf.mxu0
  %v4106 = vadd.f32 0.0, %v4105
  %v4107 = vpop.f32.mrf.mxu0
  %4108 = vmatprep.mubr.bf16.mxu0 0
  %4109 = vmatmul.mubr.bf16.gmra.mxu0 %v3961
  %v4110 = vpop.f32.mrf.mxu0
  %v4111 = vadd.f32 0.0, %v4110
  %v4112 = vpop.f32.mrf.mxu0
  %v4113 = vpop.f32.mrf.mxu0
  %v4114 = vadd.f32 0.0, %v4113
  %v4115 = vpop.f32.mrf.mxu0
  %4116 = vmatprep.mubr.bf16.mxu0 0
  %4117 = vmatmul.mubr.bf16.gmra.mxu0 %v3964
  %v4118 = vpop.f32.mrf.mxu0
  %v4119 = vadd.f32 0.0, %v4118
  %v4120 = vpop.f32.mrf.mxu0
  %v4121 = vpop.f32.mrf.mxu0
  %v4122 = vadd.f32 0.0, %v4121
  %v4123 = vpop.f32.mrf.mxu0
  %4124 = vmatprep.mubr.bf16.mxu0 0
  %4125 = vmatmul.mubr.bf16.gmra.mxu0 %v3967
  %v4126 = vpop.f32.mrf.mxu0
  %v4127 = vadd.f32 0.0, %v4126
  %v4128 = vpop.f32.mrf.mxu0
  %v4129 = vpop.f32.mrf.mxu0
  %v4130 = vadd.f32 0.0, %v4129
  %v4131 = vpop.f32.mrf.mxu0
  %4132 = vmatprep.mubr.bf16.mxu0 0
  %4133 = vmatmul.mubr.bf16.gmra.mxu0 %v3970
  %v4134 = vpop.f32.mrf.mxu0
  %v4135 = vadd.f32 0.0, %v4134
  %v4136 = vpop.f32.mrf.mxu0
  %v4137 = vpop.f32.mrf.mxu0
  %v4138 = vadd.f32 0.0, %v4137
  %v4139 = vpop.f32.mrf.mxu0
  %4140 = vmatprep.mubr.bf16.mxu0 0
  %4141 = vmatmul.mubr.bf16.gmra.mxu0 %v3973
  %v4142 = vpop.f32.mrf.mxu0
  %v4143 = vadd.f32 0.0, %v4142
  %v4144 = vpop.f32.mrf.mxu0
  %v4145 = vpop.f32.mrf.mxu0
  %v4146 = vadd.f32 0.0, %v4145
  %v4147 = vpop.f32.mrf.mxu0
  %4148 = vmatprep.mubr.bf16.mxu0 0
  %4149 = vmatmul.mubr.bf16.gmra.mxu0 %v3976
  %v4150 = vpop.f32.mrf.mxu0
  %v4151 = vadd.f32 0.0, %v4150
  %v4152 = vpop.f32.mrf.mxu0
  %v4153 = vpop.f32.mrf.mxu0
  %v4154 = vadd.f32 0.0, %v4153
  %v4155 = vpop.f32.mrf.mxu0
  %4156 = vmatprep.mubr.bf16.mxu0 0
  %4157 = vmatmul.mubr.bf16.gmra.mxu0 %v3979
  %v4158 = vpop.f32.mrf.mxu0
  %v4159 = vadd.f32 0.0, %v4158
  %v4160 = vpop.f32.mrf.mxu0
  %v4161 = vpop.f32.mrf.mxu0
  %v4162 = vadd.f32 0.0, %v4161
  %v4163 = vpop.f32.mrf.mxu0
  %4164 = vmatprep.mubr.bf16.mxu0 0
  %4165 = vmatmul.mubr.bf16.gmra.mxu0 %v3982
  %v4166 = vpop.f32.mrf.mxu0
  %v4167 = vadd.f32 0.0, %v4166
  %v4168 = vpop.f32.mrf.mxu0
  %v4169 = vpop.f32.mrf.mxu0
  %v4170 = vadd.f32 0.0, %v4169
  %v4171 = vpop.f32.mrf.mxu0
  %4172 = vmatprep.mubr.bf16.mxu0 0
  %4173 = vmatmul.mubr.bf16.gmra.mxu0 %v3985
  %v4174 = vpop.f32.mrf.mxu0
  %v4175 = vadd.f32 0.0, %v4174
  %v4176 = vpop.f32.mrf.mxu0
  %v4177 = vpop.f32.mrf.mxu0
  %v4178 = vadd.f32 0.0, %v4177
  %v4179 = vpop.f32.mrf.mxu0
  %4180 = vmatprep.mubr.bf16.mxu0 0
  %4181 = vmatmul.mubr.bf16.gmra.mxu0 %v3988
  %v4182 = vpop.f32.mrf.mxu0
  %v4183 = vadd.f32 0.0, %v4182
  %v4184 = vpop.f32.mrf.mxu0
  %v4185 = vpop.f32.mrf.mxu0
  %v4186 = vadd.f32 0.0, %v4185
  %v4187 = vpop.f32.mrf.mxu0
  %4188 = vmatprep.mubr.bf16.mxu0 0
  %4189 = vmatmul.mubr.bf16.gmra.mxu0 %v3991
  %v4190 = vpop.f32.mrf.mxu0
  %v4191 = vadd.f32 0.0, %v4190
  %v4192 = vpop.f32.mrf.mxu0
  %v4193 = vpop.f32.mrf.mxu0
  %v4194 = vadd.f32 0.0, %v4193
  %v4195 = vpop.f32.mrf.mxu0
  %4196 = vmatprep.mubr.bf16.mxu0 0
  %4197 = vmatmul.mubr.bf16.gmra.mxu0 %v3994
  %v4198 = vpop.f32.mrf.mxu0
  %v4199 = vadd.f32 0.0, %v4198
  %v4200 = vpop.f32.mrf.mxu0
  %v4201 = vpop.f32.mrf.mxu0
  %v4202 = vadd.f32 0.0, %v4201
  %v4203 = vpop.f32.mrf.mxu0
  %4204 = vmatprep.mubr.bf16.mxu0 0
  %4205 = vmatmul.mubr.bf16.gmra.mxu0 %v3997
  %v4206 = vpop.f32.mrf.mxu0
  %v4207 = vadd.f32 0.0, %v4206
  %v4208 = vpop.f32.mrf.mxu0
  %v4209 = vpop.f32.mrf.mxu0
  %v4210 = vadd.f32 0.0, %v4209
  %v4211 = vpop.f32.mrf.mxu0
  %4212 = vmatprep.mubr.bf16.mxu0 0
  %4213 = vmatmul.mubr.bf16.gmra.mxu0 %v4000
  %v4214 = vpop.f32.mrf.mxu0
  %v4215 = vadd.f32 0.0, %v4214
  %v4216 = vpop.f32.mrf.mxu0
  %v4217 = vpop.f32.mrf.mxu0
  %v4218 = vadd.f32 0.0, %v4217
  %v4219 = vpop.f32.mrf.mxu0
  %4220 = vmatprep.mubr.bf16.mxu0 0
  %4221 = vmatmul.mubr.bf16.gmra.mxu0 %v4003
  %v4222 = vpop.f32.mrf.mxu0
  %v4223 = vadd.f32 0.0, %v4222
  %v4224 = vpop.f32.mrf.mxu0
  %v4225 = vpop.f32.mrf.mxu0
  %v4226 = vadd.f32 0.0, %v4225
  %v4227 = vpop.f32.mrf.mxu0
  %4228 = vmatprep.mubr.bf16.mxu0 0
  %4229 = vmatmul.mubr.bf16.gmra.mxu0 %v4006
  %v4230 = vpop.f32.mrf.mxu0
  %v4231 = vadd.f32 0.0, %v4230
  %v4232 = vpop.f32.mrf.mxu0
  %v4233 = vpop.f32.mrf.mxu0
  %v4234 = vadd.f32 0.0, %v4233
  %v4235 = vpop.f32.mrf.mxu0
  %4236 = vmatprep.mubr.bf16.mxu0 0
  %4237 = vmatmul.mubr.bf16.gmra.mxu0 %v4009
  %v4238 = vpop.f32.mrf.mxu0
  %v4239 = vadd.f32 0.0, %v4238
  %v4240 = vpop.f32.mrf.mxu0
  %v4241 = vpop.f32.mrf.mxu0
  %v4242 = vadd.f32 0.0, %v4241
  %v4243 = vpop.f32.mrf.mxu0
  %4244 = vmatprep.mubr.bf16.mxu0 0
  %4245 = vmatmul.mubr.bf16.gmra.mxu0 %v4012
  %v4246 = vpop.f32.mrf.mxu0
  %v4247 = vadd.f32 0.0, %v4246
  %v4248 = vpop.f32.mrf.mxu0
  %v4249 = vpop.f32.mrf.mxu0
  %v4250 = vadd.f32 0.0, %v4249
  %v4251 = vpop.f32.mrf.mxu0
  %4252 = vmatprep.mubr.bf16.mxu0 0
  %4253 = vmatmul.mubr.bf16.gmra.mxu0 %v4015
  %v4254 = vpop.f32.mrf.mxu0
  %v4255 = vadd.f32 0.0, %v4254
  %v4256 = vpop.f32.mrf.mxu0
  %v4257 = vpop.f32.mrf.mxu0
  %v4258 = vadd.f32 0.0, %v4257
  %v4259 = vpop.f32.mrf.mxu0
  %4260 = vmatprep.mubr.bf16.mxu0 0
  %4261 = vmatmul.mubr.bf16.gmra.mxu0 %v4018
  %v4262 = vpop.f32.mrf.mxu0
  %v4263 = vadd.f32 0.0, %v4262
  %v4264 = vpop.f32.mrf.mxu0
  %v4265 = vpop.f32.mrf.mxu0
  %v4266 = vadd.f32 0.0, %v4265
  %v4267 = vpop.f32.mrf.mxu0
  %4268 = vmatprep.mubr.bf16.mxu0 0
  %4269 = vmatmul.mubr.bf16.gmra.mxu0 %v4021
  %v4270 = vpop.f32.mrf.mxu0
  %v4271 = vadd.f32 0.0, %v4270
  %v4272 = vpop.f32.mrf.mxu0
  %v4273 = vpop.f32.mrf.mxu0
  %v4274 = vadd.f32 0.0, %v4273
  %v4275 = vpop.f32.mrf.mxu0
  %4276 = vmatprep.mubr.bf16.mxu0 0
  %4277 = vmatmul.mubr.bf16.gmra.mxu0 %v4024
  %v4278 = vpop.f32.mrf.mxu0
  %v4279 = vadd.f32 0.0, %v4278
  %v4280 = vpop.f32.mrf.mxu0
  %v4281 = vpop.f32.mrf.mxu0
  %v4282 = vadd.f32 0.0, %v4281
  %v4283 = vpop.f32.mrf.mxu0
  %4284 = vmatprep.mubr.bf16.mxu0 0
  %4285 = vmatmul.mubr.bf16.gmra.mxu0 %v4027
  %v4286 = vpop.f32.mrf.mxu0
  %v4287 = vadd.f32 0.0, %v4286
  %v4288 = vpop.f32.mrf.mxu0
  %v4289 = vpop.f32.mrf.mxu0
  %v4290 = vadd.f32 0.0, %v4289
  %v4291 = vpop.f32.mrf.mxu0
  %4292 = vmatprep.mubr.bf16.mxu0 0
  %4293 = vmatmul.mubr.bf16.gmra.mxu0 %v4030
  %v4294 = vpop.f32.mrf.mxu0
  %v4295 = vadd.f32 0.0, %v4294
  %v4296 = vpop.f32.mrf.mxu0
  %v4297 = vpop.f32.mrf.mxu0
  %v4298 = vadd.f32 0.0, %v4297
  %v4299 = vpop.f32.mrf.mxu0
  %4300 = vmatprep.mubr.bf16.mxu0 0
  %4301 = vmatmul.mubr.bf16.gmra.mxu0 %v4033
  %v4302 = vpop.f32.mrf.mxu0
  %v4303 = vadd.f32 0.0, %v4302
  %v4304 = vpop.f32.mrf.mxu0
  %v4305 = vpop.f32.mrf.mxu0
  %v4306 = vadd.f32 0.0, %v4305
  %v4307 = vpop.f32.mrf.mxu0
  %4308 = vmatprep.mubr.bf16.mxu0 0
  %4309 = vmatmul.mubr.bf16.gmra.mxu0 %v4036
  %v4310 = vpop.f32.mrf.mxu0
  %v4311 = vadd.f32 0.0, %v4310
  %v4312 = vpop.f32.mrf.mxu0
  %v4313 = vpop.f32.mrf.mxu0
  %v4314 = vadd.f32 0.0, %v4313
  %v4315 = vpop.f32.mrf.mxu0
  %4316 = vmatprep.mubr.bf16.mxu0 0
  %4317 = vmatmul.mubr.bf16.gmra.mxu0 %v4039
  %v4318 = vpop.f32.mrf.mxu0
  %v4319 = vadd.f32 0.0, %v4318
  %v4320 = vpop.f32.mrf.mxu0
  %v4321 = vpop.f32.mrf.mxu0
  %v4322 = vadd.f32 0.0, %v4321
  %v4323 = vpop.f32.mrf.mxu0
  %4324 = vmatprep.mubr.bf16.mxu0 0
  %4325 = vmatmul.mubr.bf16.gmra.mxu0 %v4042
  %v4326 = vpop.f32.mrf.mxu0
  %v4327 = vadd.f32 0.0, %v4326
  %v4328 = vpop.f32.mrf.mxu0
  %v4329 = vpop.f32.mrf.mxu0
  %v4330 = vadd.f32 0.0, %v4329
  %v4331 = vpop.f32.mrf.mxu0
  %4332 = vmatprep.mubr.bf16.mxu0 0
  %4333 = vmatmul.mubr.bf16.gmra.mxu0 %v4045
  %v4334 = vpop.f32.mrf.mxu0
  %v4335 = vadd.f32 0.0, %v4334
  %v4336 = vpop.f32.mrf.mxu0
  %v4337 = vpop.f32.mrf.mxu0
  %v4338 = vadd.f32 0.0, %v4337
  %v4339 = vpop.f32.mrf.mxu0
  %4340 = vmatprep.mubr.bf16.mxu0 0
  %4341 = vmatmul.mubr.bf16.gmra.mxu0 %v4048
  %v4342 = vpop.f32.mrf.mxu0
  %v4343 = vadd.f32 0.0, %v4342
  %v4344 = vpop.f32.mrf.mxu0
  %v4345 = vpop.f32.mrf.mxu0
  %v4346 = vadd.f32 0.0, %v4345
  %v4347 = vpop.f32.mrf.mxu0
  %4348 = vmatprep.mubr.bf16.mxu0 0
  %4349 = vmatmul.mubr.bf16.gmra.mxu0 %v4051
  %v4350 = vpop.f32.mrf.mxu0
  %v4351 = vadd.f32 0.0, %v4350
  %v4352 = vpop.f32.mrf.mxu0
  %v4353 = vpop.f32.mrf.mxu0
  %v4354 = vadd.f32 0.0, %v4353
  %v4355 = vpop.f32.mrf.mxu0
  %4356 = vmatprep.mubr.bf16.mxu0 0
  %4357 = vmatmul.mubr.bf16.gmra.mxu0 %v4054
  %v4358 = vpop.f32.mrf.mxu0
  %v4359 = vadd.f32 0.0, %v4358
  %v4360 = vpop.f32.mrf.mxu0
  %v4361 = vpop.f32.mrf.mxu0
  %v4362 = vadd.f32 0.0, %v4361
  %v4363 = vpop.f32.mrf.mxu0
  %4364 = vmatprep.mubr.bf16.mxu0 0
  %4365 = vmatmul.mubr.bf16.gmra.mxu0 %v4057
  %v4366 = vpop.f32.mrf.mxu0
  %v4367 = vadd.f32 0.0, %v4366
  %v4368 = vpop.f32.mrf.mxu0
  %v4369 = vpop.f32.mrf.mxu0
  %v4370 = vadd.f32 0.0, %v4369
  %v4371 = vpop.f32.mrf.mxu0
  %4372 = vmatprep.mubr.bf16.mxu0 0
  %4373 = vmatmul.mubr.bf16.gmra.mxu0 %v4060
  %v4374 = vpop.f32.mrf.mxu0
  %v4375 = vadd.f32 0.0, %v4374
  %v4376 = vpop.f32.mrf.mxu0
  %v4377 = vpop.f32.mrf.mxu0
  %v4378 = vadd.f32 0.0, %v4377
  %v4379 = vpop.f32.mrf.mxu0
  %4380 = vmatprep.mubr.bf16.mxu0 0
  %4381 = vmatmul.mubr.bf16.gmra.mxu0 %v4063
  %v4382 = vpop.f32.mrf.mxu0
  %v4383 = vadd.f32 0.0, %v4382
  %v4384 = vpop.f32.mrf.mxu0
  %v4385 = vpop.f32.mrf.mxu0
  %v4386 = vadd.f32 0.0, %v4385
  %v4387 = vpop.f32.mrf.mxu0
  %4388 = vdwg.mxu0
  %v4389 = vld [vmem:[#allocation2] sm:$0xff]
  %v4390 = vld [vmem:[#allocation2 + $0x8] sm:$0xff]
  %v4391 = vld [vmem:[#allocation2 + $0x10] sm:$0xff]
  %v4392 = vld [vmem:[#allocation2 + $0x18] sm:$0xff]
  %v4393 = vld [vmem:[#allocation2 + $0x20] sm:$0xff]
  %v4394 = vld [vmem:[#allocation2 + $0x28] sm:$0xff]
  %v4395 = vld [vmem:[#allocation2 + $0x30] sm:$0xff]
  %v4396 = vld [vmem:[#allocation2 + $0x38] sm:$0xff]
  %v4397 = vld [vmem:[#allocation2 + $0x40] sm:$0xff]
  %v4398 = vld [vmem:[#allocation2 + $0x48] sm:$0xff]
  %v4399 = vld [vmem:[#allocation2 + $0x50] sm:$0xff]
  %v4400 = vld [vmem:[#allocation2 + $0x58] sm:$0xff]
  %v4401 = vld [vmem:[#allocation2 + $0x60] sm:$0xff]
  %v4402 = vld [vmem:[#allocation2 + $0x68] sm:$0xff]
  %v4403 = vld [vmem:[#allocation2 + $0x70] sm:$0xff]
  %v4404 = vld [vmem:[#allocation2 + $0x78] sm:$0xff]
  %v4405 = vld [vmem:[#allocation2 + $0x80] sm:$0xff]
  %v4406 = vld [vmem:[#allocation2 + $0x88] sm:$0xff]
  %v4407 = vld [vmem:[#allocation2 + $0x90] sm:$0xff]
  %v4408 = vld [vmem:[#allocation2 + $0x98] sm:$0xff]
  %v4409 = vld [vmem:[#allocation2 + $0xa0] sm:$0xff]
  %v4410 = vld [vmem:[#allocation2 + $0xa8] sm:$0xff]
  %v4411 = vld [vmem:[#allocation2 + $0xb0] sm:$0xff]
  %v4412 = vld [vmem:[#allocation2 + $0xb8] sm:$0xff]
  %v4413 = vld [vmem:[#allocation2 + $0xc0] sm:$0xff]
  %v4414 = vld [vmem:[#allocation2 + $0xc8] sm:$0xff]
  %v4415 = vld [vmem:[#allocation2 + $0xd0] sm:$0xff]
  %v4416 = vld [vmem:[#allocation2 + $0xd8] sm:$0xff]
  %v4417 = vld [vmem:[#allocation2 + $0xe0] sm:$0xff]
  %v4418 = vld [vmem:[#allocation2 + $0xe8] sm:$0xff]
  %v4419 = vld [vmem:[#allocation2 + $0xf0] sm:$0xff]
  %v4420 = vld [vmem:[#allocation2 + $0xf8] sm:$0xff]
  %v4421 = vld [vmem:[#allocation2 + $0x100] sm:$0xff]
  %v4422 = vld [vmem:[#allocation2 + $0x108] sm:$0xff]
  %v4423 = vld [vmem:[#allocation2 + $0x110] sm:$0xff]
  %v4424 = vld [vmem:[#allocation2 + $0x118] sm:$0xff]
  %v4425 = vld [vmem:[#allocation2 + $0x120] sm:$0xff]
  %v4426 = vld [vmem:[#allocation2 + $0x128] sm:$0xff]
  %v4427 = vld [vmem:[#allocation2 + $0x130] sm:$0xff]
  %v4428 = vld [vmem:[#allocation2 + $0x138] sm:$0xff]
  %v4429 = vld [vmem:[#allocation2 + $0x140] sm:$0xff]
  %v4430 = vld [vmem:[#allocation2 + $0x148] sm:$0xff]
  %v4431 = vld [vmem:[#allocation2 + $0x150] sm:$0xff]
  %v4432 = vld [vmem:[#allocation2 + $0x158] sm:$0xff]
  %v4433 = vld [vmem:[#allocation2 + $0x160] sm:$0xff]
  %v4434 = vld [vmem:[#allocation2 + $0x168] sm:$0xff]
  %v4435 = vld [vmem:[#allocation2 + $0x170] sm:$0xff]
  %v4436 = vld [vmem:[#allocation2 + $0x178] sm:$0xff]
  %v4437 = vld [vmem:[#allocation2 + $0x180] sm:$0xff]
  %v4438 = vld [vmem:[#allocation2 + $0x188] sm:$0xff]
  %v4439 = vld [vmem:[#allocation2 + $0x190] sm:$0xff]
  %v4440 = vld [vmem:[#allocation2 + $0x198] sm:$0xff]
  %v4441 = vld [vmem:[#allocation2 + $0x1a0] sm:$0xff]
  %v4442 = vld [vmem:[#allocation2 + $0x1a8] sm:$0xff]
  %v4443 = vld [vmem:[#allocation2 + $0x1b0] sm:$0xff]
  %v4444 = vld [vmem:[#allocation2 + $0x1b8] sm:$0xff]
  %v4445 = vld [vmem:[#allocation2 + $0x1c0] sm:$0xff]
  %v4446 = vld [vmem:[#allocation2 + $0x1c8] sm:$0xff]
  %v4447 = vld [vmem:[#allocation2 + $0x1d0] sm:$0xff]
  %v4448 = vld [vmem:[#allocation2 + $0x1d8] sm:$0xff]
  %v4449 = vld [vmem:[#allocation2 + $0x1e0] sm:$0xff]
  %v4450 = vld [vmem:[#allocation2 + $0x1e8] sm:$0xff]
  %v4451 = vld [vmem:[#allocation2 + $0x1f0] sm:$0xff]
  %v4452 = vld [vmem:[#allocation2 + $0x1f8] sm:$0xff]
  %v4453 = vld [vmem:[#allocation2 + $0x200] sm:$0xff]
  %v4454 = vld [vmem:[#allocation2 + $0x208] sm:$0xff]
  %v4455 = vld [vmem:[#allocation2 + $0x210] sm:$0xff]
  %v4456 = vld [vmem:[#allocation2 + $0x218] sm:$0xff]
  %v4457 = vld [vmem:[#allocation2 + $0x220] sm:$0xff]
  %v4458 = vld [vmem:[#allocation2 + $0x228] sm:$0xff]
  %v4459 = vld [vmem:[#allocation2 + $0x230] sm:$0xff]
  %v4460 = vld [vmem:[#allocation2 + $0x238] sm:$0xff]
  %v4461 = vadd.f32 %v4389, %v4103
  %v4462 = vadd.f32 %v4390, %v4106
  %v4463 = vadd.f32 %v4391, %v4111
  %v4464 = vadd.f32 %v4392, %v4114
  %v4465 = vadd.f32 %v4393, %v4119
  %v4466 = vadd.f32 %v4394, %v4122
  %v4467 = vadd.f32 %v4395, %v4127
  %v4468 = vadd.f32 %v4396, %v4130
  %v4469 = vadd.f32 %v4397, %v4135
  %v4470 = vadd.f32 %v4398, %v4138
  %v4471 = vadd.f32 %v4399, %v4143
  %v4472 = vadd.f32 %v4400, %v4146
  %v4473 = vadd.f32 %v4401, %v4151
  %v4474 = vadd.f32 %v4402, %v4154
  %v4475 = vadd.f32 %v4403, %v4159
  %v4476 = vadd.f32 %v4404, %v4162
  %v4477 = vadd.f32 %v4405, %v4167
  %v4478 = vadd.f32 %v4406, %v4170
  %v4479 = vadd.f32 %v4407, %v4175
  %v4480 = vadd.f32 %v4408, %v4178
  %v4481 = vadd.f32 %v4409, %v4183
  %v4482 = vadd.f32 %v4410, %v4186
  %v4483 = vadd.f32 %v4411, %v4191
  %v4484 = vadd.f32 %v4412, %v4194
  %v4485 = vadd.f32 %v4413, %v4199
  %v4486 = vadd.f32 %v4414, %v4202
  %v4487 = vadd.f32 %v4415, %v4207
  %v4488 = vadd.f32 %v4416, %v4210
  %v4489 = vadd.f32 %v4417, %v4215
  %v4490 = vadd.f32 %v4418, %v4218
  %v4491 = vadd.f32 %v4419, %v4223
  %v4492 = vadd.f32 %v4420, %v4226
  %v4493 = vadd.f32 %v4421, %v4231
  %v4494 = vadd.f32 %v4422, %v4234
  %v4495 = vadd.f32 %v4423, %v4239
  %v4496 = vadd.f32 %v4424, %v4242
  %v4497 = vadd.f32 %v4425, %v4247
  %v4498 = vadd.f32 %v4426, %v4250
  %v4499 = vadd.f32 %v4427, %v4255
  %v4500 = vadd.f32 %v4428, %v4258
  %v4501 = vadd.f32 %v4429, %v4263
  %v4502 = vadd.f32 %v4430, %v4266
  %v4503 = vadd.f32 %v4431, %v4271
  %v4504 = vadd.f32 %v4432, %v4274
  %v4505 = vadd.f32 %v4433, %v4279
  %v4506 = vadd.f32 %v4434, %v4282
  %v4507 = vadd.f32 %v4435, %v4287
  %v4508 = vadd.f32 %v4436, %v4290
  %v4509 = vadd.f32 %v4437, %v4295
  %v4510 = vadd.f32 %v4438, %v4298
  %v4511 = vadd.f32 %v4439, %v4303
  %v4512 = vadd.f32 %v4440, %v4306
  %v4513 = vadd.f32 %v4441, %v4311
  %v4514 = vadd.f32 %v4442, %v4314
  %v4515 = vadd.f32 %v4443, %v4319
  %v4516 = vadd.f32 %v4444, %v4322
  %v4517 = vadd.f32 %v4445, %v4327
  %v4518 = vadd.f32 %v4446, %v4330
  %v4519 = vadd.f32 %v4447, %v4335
  %v4520 = vadd.f32 %v4448, %v4338
  %v4521 = vadd.f32 %v4449, %v4343
  %v4522 = vadd.f32 %v4450, %v4346
  %v4523 = vadd.f32 %v4451, %v4351
  %v4524 = vadd.f32 %v4452, %v4354
  %v4525 = vadd.f32 %v4453, %v4359
  %v4526 = vadd.f32 %v4454, %v4362
  %v4527 = vadd.f32 %v4455, %v4367
  %v4528 = vadd.f32 %v4456, %v4370
  %v4529 = vadd.f32 %v4457, %v4375
  %v4530 = vadd.f32 %v4458, %v4378
  %v4531 = vadd.f32 %v4459, %v4383
  %v4532 = vadd.f32 %v4460, %v4386
  %4533 = vst [vmem:[#allocation2] sm:$0xff] %v4461
  %4534 = vst [vmem:[#allocation2 + $0x8] sm:$0xff] %v4462
  %4535 = vst [vmem:[#allocation2 + $0x10] sm:$0xff] %v4463
  %4536 = vst [vmem:[#allocation2 + $0x18] sm:$0xff] %v4464
  %4537 = vst [vmem:[#allocation2 + $0x20] sm:$0xff] %v4465
  %4538 = vst [vmem:[#allocation2 + $0x28] sm:$0xff] %v4466
  %4539 = vst [vmem:[#allocation2 + $0x30] sm:$0xff] %v4467
  %4540 = vst [vmem:[#allocation2 + $0x38] sm:$0xff] %v4468
  %4541 = vst [vmem:[#allocation2 + $0x40] sm:$0xff] %v4469
  %4542 = vst [vmem:[#allocation2 + $0x48] sm:$0xff] %v4470
  %4543 = vst [vmem:[#allocation2 + $0x50] sm:$0xff] %v4471
  %4544 = vst [vmem:[#allocation2 + $0x58] sm:$0xff] %v4472
  %4545 = vst [vmem:[#allocation2 + $0x60] sm:$0xff] %v4473
  %4546 = vst [vmem:[#allocation2 + $0x68] sm:$0xff] %v4474
  %4547 = vst [vmem:[#allocation2 + $0x70] sm:$0xff] %v4475
  %4548 = vst [vmem:[#allocation2 + $0x78] sm:$0xff] %v4476
  %4549 = vst [vmem:[#allocation2 + $0x80] sm:$0xff] %v4477
  %4550 = vst [vmem:[#allocation2 + $0x88] sm:$0xff] %v4478
  %4551 = vst [vmem:[#allocation2 + $0x90] sm:$0xff] %v4479
  %4552 = vst [vmem:[#allocation2 + $0x98] sm:$0xff] %v4480
  %4553 = vst [vmem:[#allocation2 + $0xa0] sm:$0xff] %v4481
  %4554 = vst [vmem:[#allocation2 + $0xa8] sm:$0xff] %v4482
  %4555 = vst [vmem:[#allocation2 + $0xb0] sm:$0xff] %v4483
  %4556 = vst [vmem:[#allocation2 + $0xb8] sm:$0xff] %v4484
  %4557 = vst [vmem:[#allocation2 + $0xc0] sm:$0xff] %v4485
  %4558 = vst [vmem:[#allocation2 + $0xc8] sm:$0xff] %v4486
  %4559 = vst [vmem:[#allocation2 + $0xd0] sm:$0xff] %v4487
  %4560 = vst [vmem:[#allocation2 + $0xd8] sm:$0xff] %v4488
  %4561 = vst [vmem:[#allocation2 + $0xe0] sm:$0xff] %v4489
  %4562 = vst [vmem:[#allocation2 + $0xe8] sm:$0xff] %v4490
  %4563 = vst [vmem:[#allocation2 + $0xf0] sm:$0xff] %v4491
  %4564 = vst [vmem:[#allocation2 + $0xf8] sm:$0xff] %v4492
  %4565 = vst [vmem:[#allocation2 + $0x100] sm:$0xff] %v4493
  %4566 = vst [vmem:[#allocation2 + $0x108] sm:$0xff] %v4494
  %4567 = vst [vmem:[#allocation2 + $0x110] sm:$0xff] %v4495
  %4568 = vst [vmem:[#allocation2 + $0x118] sm:$0xff] %v4496
  %4569 = vst [vmem:[#allocation2 + $0x120] sm:$0xff] %v4497
  %4570 = vst [vmem:[#allocation2 + $0x128] sm:$0xff] %v4498
  %4571 = vst [vmem:[#allocation2 + $0x130] sm:$0xff] %v4499
  %4572 = vst [vmem:[#allocation2 + $0x138] sm:$0xff] %v4500
  %4573 = vst [vmem:[#allocation2 + $0x140] sm:$0xff] %v4501
  %4574 = vst [vmem:[#allocation2 + $0x148] sm:$0xff] %v4502
  %4575 = vst [vmem:[#allocation2 + $0x150] sm:$0xff] %v4503
  %4576 = vst [vmem:[#allocation2 + $0x158] sm:$0xff] %v4504
  %4577 = vst [vmem:[#allocation2 + $0x160] sm:$0xff] %v4505
  %4578 = vst [vmem:[#allocation2 + $0x168] sm:$0xff] %v4506
  %4579 = vst [vmem:[#allocation2 + $0x170] sm:$0xff] %v4507
  %4580 = vst [vmem:[#allocation2 + $0x178] sm:$0xff] %v4508
  %4581 = vst [vmem:[#allocation2 + $0x180] sm:$0xff] %v4509
  %4582 = vst [vmem:[#allocation2 + $0x188] sm:$0xff] %v4510
  %4583 = vst [vmem:[#allocation2 + $0x190] sm:$0xff] %v4511
  %4584 = vst [vmem:[#allocation2 + $0x198] sm:$0xff] %v4512
  %4585 = vst [vmem:[#allocation2 + $0x1a0] sm:$0xff] %v4513
  %4586 = vst [vmem:[#allocation2 + $0x1a8] sm:$0xff] %v4514
  %4587 = vst [vmem:[#allocation2 + $0x1b0] sm:$0xff] %v4515
  %4588 = vst [vmem:[#allocation2 + $0x1b8] sm:$0xff] %v4516
  %4589 = vst [vmem:[#allocation2 + $0x1c0] sm:$0xff] %v4517
  %4590 = vst [vmem:[#allocation2 + $0x1c8] sm:$0xff] %v4518
  %4591 = vst [vmem:[#allocation2 + $0x1d0] sm:$0xff] %v4519
  %4592 = vst [vmem:[#allocation2 + $0x1d8] sm:$0xff] %v4520
  %4593 = vst [vmem:[#allocation2 + $0x1e0] sm:$0xff] %v4521
  %4594 = vst [vmem:[#allocation2 + $0x1e8] sm:$0xff] %v4522
  %4595 = vst [vmem:[#allocation2 + $0x1f0] sm:$0xff] %v4523
  %4596 = vst [vmem:[#allocation2 + $0x1f8] sm:$0xff] %v4524
  %4597 = vst [vmem:[#allocation2 + $0x200] sm:$0xff] %v4525
  %4598 = vst [vmem:[#allocation2 + $0x208] sm:$0xff] %v4526
  %4599 = vst [vmem:[#allocation2 + $0x210] sm:$0xff] %v4527
  %4600 = vst [vmem:[#allocation2 + $0x218] sm:$0xff] %v4528
  %4601 = vst [vmem:[#allocation2 + $0x220] sm:$0xff] %v4529
  %4602 = vst [vmem:[#allocation2 + $0x228] sm:$0xff] %v4530
  %4603 = vst [vmem:[#allocation2 + $0x230] sm:$0xff] %v4531
  %4604 = vst [vmem:[#allocation2 + $0x238] sm:$0xff] %v4532
  %v4605 = vld [vmem:[%s0 + $0x8] sm:$0xe]
  %v4606 = vld [vmem:[%s0 + $0xc] sm:$0xf]
  %v4607 = vld [vmem:[%s0 + $0x10] sm:$0xf]
  %v4608 = vld [vmem:[%s0 + $0x14] sm:$0xf]
  %v4609 = vld [vmem:[%s0 + $0x18] sm:$0xf]
  %v4610 = vld [vmem:[%s0 + $0x1c] sm:$0xf]
  %v4611 = vld [vmem:[%s0 + $0x20] sm:$0xf]
  %v4612 = vld [vmem:[%s0 + $0x24] sm:$0xf]
  %v4613 = vld [vmem:[%s0 + $0x28] sm:$0xf]
  %v4614 = vld [vmem:[%s0 + $0x2c] sm:$0xf]
  %v4615 = vld [vmem:[%s0 + $0x30] sm:$0xf]
  %v4616 = vld [vmem:[%s0 + $0x34] sm:$0xf]
  %v4617 = vld [vmem:[%s0 + $0x38] sm:$0xf]
  %v4618 = vld [vmem:[%s0 + $0x3c] sm:$0xf]
  %v4619 = vld [vmem:[%s0 + $0x40] sm:$0xf]
  %v4620 = vld [vmem:[%s0 + $0x44] sm:$0xf]
  %v4621 = vld [vmem:[%s0 + $0x48] sm:$0xf]
  %v4622 = vld [vmem:[%s0 + $0x4c] sm:$0xf]
  %v4623 = vld [vmem:[%s0 + $0x50] sm:$0xf]
  %v4624 = vld [vmem:[%s0 + $0x54] sm:$0xf]
  %v4625 = vld [vmem:[%s0 + $0x58] sm:$0xf]
  %v4626 = vld [vmem:[%s0 + $0x5c] sm:$0xf]
  %v4627 = vld [vmem:[%s0 + $0x60] sm:$0xf]
  %v4628 = vld [vmem:[%s0 + $0x64] sm:$0xf]
  %v4629 = vld [vmem:[%s0 + $0x68] sm:$0xf]
  %v4630 = vld [vmem:[%s0 + $0x6c] sm:$0xf]
  %v4631 = vld [vmem:[%s0 + $0x70] sm:$0xf]
  %v4632 = vld [vmem:[%s0 + $0x74] sm:$0xf]
  %v4633 = vld [vmem:[%s0 + $0x78] sm:$0xf]
  %v4634 = vld [vmem:[%s0 + $0x7c] sm:$0xf]
  %v4635 = vld [vmem:[%s0 + $0x80] sm:$0xf]
  %v4636 = vld [vmem:[%s0 + $0x84] sm:$0xf]
  %v4637 = vld [vmem:[%s0 + $0x88] sm:$0xf]
  %v4638 = vld [vmem:[%s0 + $0x8c] sm:$0xf]
  %v4639 = vld [vmem:[%s0 + $0x90] sm:$0xf]
  %v4640 = vld [vmem:[%s0 + $0x94] sm:$0xf]
  %v4641 = vld [vmem:[%s0 + $0x98] sm:$0x3]
  %v4642 = vld [vmem:[%s0 + $0xac] sm:$0xe]
  %v4643 = vld [vmem:[%s0 + $0xb0] sm:$0xf]
  %v4644 = vld [vmem:[%s0 + $0xb4] sm:$0xf]
  %v4645 = vld [vmem:[%s0 + $0xb8] sm:$0xf]
  %v4646 = vld [vmem:[%s0 + $0xbc] sm:$0xf]
  %v4647 = vld [vmem:[%s0 + $0xc0] sm:$0xf]
  %v4648 = vld [vmem:[%s0 + $0xc4] sm:$0xf]
  %v4649 = vld [vmem:[%s0 + $0xc8] sm:$0xf]
  %v4650 = vld [vmem:[%s0 + $0xcc] sm:$0xf]
  %v4651 = vld [vmem:[%s0 + $0xd0] sm:$0xf]
  %v4652 = vld [vmem:[%s0 + $0xd4] sm:$0xf]
  %v4653 = vld [vmem:[%s0 + $0xd8] sm:$0xf]
  %v4654 = vld [vmem:[%s0 + $0xdc] sm:$0xf]
  %v4655 = vld [vmem:[%s0 + $0xe0] sm:$0xf]
  %v4656 = vld [vmem:[%s0 + $0xe4] sm:$0xf]
  %v4657 = vld [vmem:[%s0 + $0xe8] sm:$0xf]
  %v4658 = vld [vmem:[%s0 + $0xec] sm:$0xf]
  %v4659 = vld [vmem:[%s0 + $0xf0] sm:$0xf]
  %v4660 = vld [vmem:[%s0 + $0xf4] sm:$0xf]
  %v4661 = vld [vmem:[%s0 + $0xf8] sm:$0xf]
  %v4662 = vld [vmem:[%s0 + $0xfc] sm:$0xf]
  %v4663 = vld [vmem:[%s0 + $0x100] sm:$0xf]
  %v4664 = vld [vmem:[%s0 + $0x104] sm:$0xf]
  %v4665 = vld [vmem:[%s0 + $0x108] sm:$0xf]
  %v4666 = vld [vmem:[%s0 + $0x10c] sm:$0xf]
  %v4667 = vld [vmem:[%s0 + $0x110] sm:$0xf]
  %v4668 = vld [vmem:[%s0 + $0x114] sm:$0xf]
  %v4669 = vld [vmem:[%s0 + $0x118] sm:$0xf]
  %v4670 = vld [vmem:[%s0 + $0x11c] sm:$0xf]
  %v4671 = vld [vmem:[%s0 + $0x120] sm:$0xf]
  %v4672 = vld [vmem:[%s0 + $0x124] sm:$0xf]
  %v4673 = vld [vmem:[%s0 + $0x128] sm:$0xf]
  %v4674 = vld [vmem:[%s0 + $0x12c] sm:$0xf]
  %v4675 = vld [vmem:[%s0 + $0x130] sm:$0xf]
  %v4676 = vld [vmem:[%s0 + $0x134] sm:$0xf]
  %v4677 = vld [vmem:[%s0 + $0x138] sm:$0xf]
  %v4678 = vld [vmem:[%s0 + $0x13c] sm:$0x3]
  %vm4679 = vsmask.f32 2304
  %vm4680 = vsmask.f32 6416
  %vm4681 = vmor %vm4679, %vm4680
  %v4683 = vshrl.u32 %v4605, 16
  %v4685 = vrot.slane %v4683, 5
  %v4686 = vshll.u32 %v4605, 16
  %v4688 = vrot.slane %v4686, 6
  %v4689 = vor.u32 %v4685, %v4688
  %v4690 = vrot.slane %v4689, 4
  %v4692 = vshrl.u32 %v4606, 16
  %v4694 = vrot.slane %v4692, 5
  %v4695 = vshll.u32 %v4606, 16
  %v4697 = vrot.slane %v4695, 6
  %v4698 = vor.u32 %v4694, %v4697
  %v4699 = vsel %vm4681, %v4690, %v4698
  %v4700 = vrot.slane %v4698, 4
  %v4702 = vshrl.u32 %v4607, 16
  %v4704 = vrot.slane %v4702, 5
  %v4705 = vshll.u32 %v4607, 16
  %v4707 = vrot.slane %v4705, 6
  %v4708 = vor.u32 %v4704, %v4707
  %v4709 = vsel %vm4681, %v4700, %v4708
  %v4710 = vrot.slane %v4708, 4
  %v4712 = vshrl.u32 %v4608, 16
  %v4714 = vrot.slane %v4712, 5
  %v4715 = vshll.u32 %v4608, 16
  %v4717 = vrot.slane %v4715, 6
  %v4718 = vor.u32 %v4714, %v4717
  %v4719 = vsel %vm4681, %v4710, %v4718
  %v4720 = vrot.slane %v4718, 4
  %v4722 = vshrl.u32 %v4609, 16
  %v4724 = vrot.slane %v4722, 5
  %v4725 = vshll.u32 %v4609, 16
  %v4727 = vrot.slane %v4725, 6
  %v4728 = vor.u32 %v4724, %v4727
  %v4729 = vsel %vm4681, %v4720, %v4728
  %v4730 = vrot.slane %v4728, 4
  %v4732 = vshrl.u32 %v4610, 16
  %v4734 = vrot.slane %v4732, 5
  %v4735 = vshll.u32 %v4610, 16
  %v4737 = vrot.slane %v4735, 6
  %v4738 = vor.u32 %v4734, %v4737
  %v4739 = vsel %vm4681, %v4730, %v4738
  %v4740 = vrot.slane %v4738, 4
  %v4742 = vshrl.u32 %v4611, 16
  %v4744 = vrot.slane %v4742, 5
  %v4745 = vshll.u32 %v4611, 16
  %v4747 = vrot.slane %v4745, 6
  %v4748 = vor.u32 %v4744, %v4747
  %v4749 = vsel %vm4681, %v4740, %v4748
  %v4750 = vrot.slane %v4748, 4
  %v4752 = vshrl.u32 %v4612, 16
  %v4754 = vrot.slane %v4752, 5
  %v4755 = vshll.u32 %v4612, 16
  %v4757 = vrot.slane %v4755, 6
  %v4758 = vor.u32 %v4754, %v4757
  %v4759 = vsel %vm4681, %v4750, %v4758
  %v4760 = vrot.slane %v4758, 4
  %v4762 = vshrl.u32 %v4613, 16
  %v4764 = vrot.slane %v4762, 5
  %v4765 = vshll.u32 %v4613, 16
  %v4767 = vrot.slane %v4765, 6
  %v4768 = vor.u32 %v4764, %v4767
  %v4769 = vsel %vm4681, %v4760, %v4768
  %v4770 = vrot.slane %v4768, 4
  %v4772 = vshrl.u32 %v4614, 16
  %v4774 = vrot.slane %v4772, 5
  %v4775 = vshll.u32 %v4614, 16
  %v4777 = vrot.slane %v4775, 6
  %v4778 = vor.u32 %v4774, %v4777
  %v4779 = vsel %vm4681, %v4770, %v4778
  %v4780 = vrot.slane %v4778, 4
  %v4782 = vshrl.u32 %v4615, 16
  %v4784 = vrot.slane %v4782, 5
  %v4785 = vshll.u32 %v4615, 16
  %v4787 = vrot.slane %v4785, 6
  %v4788 = vor.u32 %v4784, %v4787
  %v4789 = vsel %vm4681, %v4780, %v4788
  %v4790 = vrot.slane %v4788, 4
  %v4792 = vshrl.u32 %v4616, 16
  %v4794 = vrot.slane %v4792, 5
  %v4795 = vshll.u32 %v4616, 16
  %v4797 = vrot.slane %v4795, 6
  %v4798 = vor.u32 %v4794, %v4797
  %v4799 = vsel %vm4681, %v4790, %v4798
  %v4800 = vrot.slane %v4798, 4
  %v4802 = vshrl.u32 %v4617, 16
  %v4804 = vrot.slane %v4802, 5
  %v4805 = vshll.u32 %v4617, 16
  %v4807 = vrot.slane %v4805, 6
  %v4808 = vor.u32 %v4804, %v4807
  %v4809 = vsel %vm4681, %v4800, %v4808
  %v4810 = vrot.slane %v4808, 4
  %v4812 = vshrl.u32 %v4618, 16
  %v4814 = vrot.slane %v4812, 5
  %v4815 = vshll.u32 %v4618, 16
  %v4817 = vrot.slane %v4815, 6
  %v4818 = vor.u32 %v4814, %v4817
  %v4819 = vsel %vm4681, %v4810, %v4818
  %v4820 = vrot.slane %v4818, 4
  %v4822 = vshrl.u32 %v4619, 16
  %v4824 = vrot.slane %v4822, 5
  %v4825 = vshll.u32 %v4619, 16
  %v4827 = vrot.slane %v4825, 6
  %v4828 = vor.u32 %v4824, %v4827
  %v4829 = vsel %vm4681, %v4820, %v4828
  %v4830 = vrot.slane %v4828, 4
  %v4832 = vshrl.u32 %v4620, 16
  %v4834 = vrot.slane %v4832, 5
  %v4835 = vshll.u32 %v4620, 16
  %v4837 = vrot.slane %v4835, 6
  %v4838 = vor.u32 %v4834, %v4837
  %v4839 = vsel %vm4681, %v4830, %v4838
  %v4840 = vrot.slane %v4838, 4
  %v4842 = vshrl.u32 %v4621, 16
  %v4844 = vrot.slane %v4842, 5
  %v4845 = vshll.u32 %v4621, 16
  %v4847 = vrot.slane %v4845, 6
  %v4848 = vor.u32 %v4844, %v4847
  %v4849 = vsel %vm4681, %v4840, %v4848
  %v4850 = vrot.slane %v4848, 4
  %v4852 = vshrl.u32 %v4622, 16
  %v4854 = vrot.slane %v4852, 5
  %v4855 = vshll.u32 %v4622, 16
  %v4857 = vrot.slane %v4855, 6
  %v4858 = vor.u32 %v4854, %v4857
  %v4859 = vsel %vm4681, %v4850, %v4858
  %v4860 = vrot.slane %v4858, 4
  %v4862 = vshrl.u32 %v4623, 16
  %v4864 = vrot.slane %v4862, 5
  %v4865 = vshll.u32 %v4623, 16
  %v4867 = vrot.slane %v4865, 6
  %v4868 = vor.u32 %v4864, %v4867
  %v4869 = vsel %vm4681, %v4860, %v4868
  %v4870 = vrot.slane %v4868, 4
  %v4872 = vshrl.u32 %v4624, 16
  %v4874 = vrot.slane %v4872, 5
  %v4875 = vshll.u32 %v4624, 16
  %v4877 = vrot.slane %v4875, 6
  %v4878 = vor.u32 %v4874, %v4877
  %v4879 = vsel %vm4681, %v4870, %v4878
  %v4880 = vrot.slane %v4878, 4
  %v4882 = vshrl.u32 %v4625, 16
  %v4884 = vrot.slane %v4882, 5
  %v4885 = vshll.u32 %v4625, 16
  %v4887 = vrot.slane %v4885, 6
  %v4888 = vor.u32 %v4884, %v4887
  %v4889 = vsel %vm4681, %v4880, %v4888
  %v4890 = vrot.slane %v4888, 4
  %v4892 = vshrl.u32 %v4626, 16
  %v4894 = vrot.slane %v4892, 5
  %v4895 = vshll.u32 %v4626, 16
  %v4897 = vrot.slane %v4895, 6
  %v4898 = vor.u32 %v4894, %v4897
  %v4899 = vsel %vm4681, %v4890, %v4898
  %v4900 = vrot.slane %v4898, 4
  %v4902 = vshrl.u32 %v4627, 16
  %v4904 = vrot.slane %v4902, 5
  %v4905 = vshll.u32 %v4627, 16
  %v4907 = vrot.slane %v4905, 6
  %v4908 = vor.u32 %v4904, %v4907
  %v4909 = vsel %vm4681, %v4900, %v4908
  %v4910 = vrot.slane %v4908, 4
  %v4912 = vshrl.u32 %v4628, 16
  %v4914 = vrot.slane %v4912, 5
  %v4915 = vshll.u32 %v4628, 16
  %v4917 = vrot.slane %v4915, 6
  %v4918 = vor.u32 %v4914, %v4917
  %v4919 = vsel %vm4681, %v4910, %v4918
  %v4920 = vrot.slane %v4918, 4
  %v4922 = vshrl.u32 %v4629, 16
  %v4924 = vrot.slane %v4922, 5
  %v4925 = vshll.u32 %v4629, 16
  %v4927 = vrot.slane %v4925, 6
  %v4928 = vor.u32 %v4924, %v4927
  %v4929 = vsel %vm4681, %v4920, %v4928
  %v4930 = vrot.slane %v4928, 4
  %v4932 = vshrl.u32 %v4630, 16
  %v4934 = vrot.slane %v4932, 5
  %v4935 = vshll.u32 %v4630, 16
  %v4937 = vrot.slane %v4935, 6
  %v4938 = vor.u32 %v4934, %v4937
  %v4939 = vsel %vm4681, %v4930, %v4938
  %v4940 = vrot.slane %v4938, 4
  %v4942 = vshrl.u32 %v4631, 16
  %v4944 = vrot.slane %v4942, 5
  %v4945 = vshll.u32 %v4631, 16
  %v4947 = vrot.slane %v4945, 6
  %v4948 = vor.u32 %v4944, %v4947
  %v4949 = vsel %vm4681, %v4940, %v4948
  %v4950 = vrot.slane %v4948, 4
  %v4952 = vshrl.u32 %v4632, 16
  %v4954 = vrot.slane %v4952, 5
  %v4955 = vshll.u32 %v4632, 16
  %v4957 = vrot.slane %v4955, 6
  %v4958 = vor.u32 %v4954, %v4957
  %v4959 = vsel %vm4681, %v4950, %v4958
  %v4960 = vrot.slane %v4958, 4
  %v4962 = vshrl.u32 %v4633, 16
  %v4964 = vrot.slane %v4962, 5
  %v4965 = vshll.u32 %v4633, 16
  %v4967 = vrot.slane %v4965, 6
  %v4968 = vor.u32 %v4964, %v4967
  %v4969 = vsel %vm4681, %v4960, %v4968
  %v4970 = vrot.slane %v4968, 4
  %v4972 = vshrl.u32 %v4634, 16
  %v4974 = vrot.slane %v4972, 5
  %v4975 = vshll.u32 %v4634, 16
  %v4977 = vrot.slane %v4975, 6
  %v4978 = vor.u32 %v4974, %v4977
  %v4979 = vsel %vm4681, %v4970, %v4978
  %v4980 = vrot.slane %v4978, 4
  %v4982 = vshrl.u32 %v4635, 16
  %v4984 = vrot.slane %v4982, 5
  %v4985 = vshll.u32 %v4635, 16
  %v4987 = vrot.slane %v4985, 6
  %v4988 = vor.u32 %v4984, %v4987
  %v4989 = vsel %vm4681, %v4980, %v4988
  %v4990 = vrot.slane %v4988, 4
  %v4992 = vshrl.u32 %v4636, 16
  %v4994 = vrot.slane %v4992, 5
  %v4995 = vshll.u32 %v4636, 16
  %v4997 = vrot.slane %v4995, 6
  %v4998 = vor.u32 %v4994, %v4997
  %v4999 = vsel %vm4681, %v4990, %v4998
  %v5000 = vrot.slane %v4998, 4
  %v5002 = vshrl.u32 %v4637, 16
  %v5004 = vrot.slane %v5002, 5
  %v5005 = vshll.u32 %v4637, 16
  %v5007 = vrot.slane %v5005, 6
  %v5008 = vor.u32 %v5004, %v5007
  %v5009 = vsel %vm4681, %v5000, %v5008
  %v5010 = vrot.slane %v5008, 4
  %v5012 = vshrl.u32 %v4638, 16
  %v5014 = vrot.slane %v5012, 5
  %v5015 = vshll.u32 %v4638, 16
  %v5017 = vrot.slane %v5015, 6
  %v5018 = vor.u32 %v5014, %v5017
  %v5019 = vsel %vm4681, %v5010, %v5018
  %v5020 = vrot.slane %v5018, 4
  %v5022 = vshrl.u32 %v4639, 16
  %v5024 = vrot.slane %v5022, 5
  %v5025 = vshll.u32 %v4639, 16
  %v5027 = vrot.slane %v5025, 6
  %v5028 = vor.u32 %v5024, %v5027
  %v5029 = vsel %vm4681, %v5020, %v5028
  %v5030 = vrot.slane %v5028, 4
  %v5032 = vshrl.u32 %v4640, 16
  %v5034 = vrot.slane %v5032, 5
  %v5035 = vshll.u32 %v4640, 16
  %v5037 = vrot.slane %v5035, 6
  %v5038 = vor.u32 %v5034, %v5037
  %v5039 = vsel %vm4681, %v5030, %v5038
  %v5040 = vrot.slane %v5038, 4
  %v5042 = vshrl.u32 %v4641, 16
  %v5044 = vrot.slane %v5042, 5
  %v5045 = vshll.u32 %v4641, 16
  %v5047 = vrot.slane %v5045, 6
  %v5048 = vor.u32 %v5044, %v5047
  %v5049 = vsel %vm4681, %v5040, %v5048
  %v5051 = vshrl.u32 %v4642, 16
  %v5053 = vrot.slane %v5051, 5
  %v5054 = vshll.u32 %v4642, 16
  %v5056 = vrot.slane %v5054, 6
  %v5057 = vor.u32 %v5053, %v5056
  %v5058 = vrot.slane %v5057, 4
  %v5060 = vshrl.u32 %v4643, 16
  %v5062 = vrot.slane %v5060, 5
  %v5063 = vshll.u32 %v4643, 16
  %v5065 = vrot.slane %v5063, 6
  %v5066 = vor.u32 %v5062, %v5065
  %v5067 = vsel %vm4681, %v5058, %v5066
  %v5068 = vrot.slane %v5066, 4
  %v5070 = vshrl.u32 %v4644, 16
  %v5072 = vrot.slane %v5070, 5
  %v5073 = vshll.u32 %v4644, 16
  %v5075 = vrot.slane %v5073, 6
  %v5076 = vor.u32 %v5072, %v5075
  %v5077 = vsel %vm4681, %v5068, %v5076
  %v5078 = vrot.slane %v5076, 4
  %v5080 = vshrl.u32 %v4645, 16
  %v5082 = vrot.slane %v5080, 5
  %v5083 = vshll.u32 %v4645, 16
  %v5085 = vrot.slane %v5083, 6
  %v5086 = vor.u32 %v5082, %v5085
  %v5087 = vsel %vm4681, %v5078, %v5086
  %v5088 = vrot.slane %v5086, 4
  %v5090 = vshrl.u32 %v4646, 16
  %v5092 = vrot.slane %v5090, 5
  %v5093 = vshll.u32 %v4646, 16
  %v5095 = vrot.slane %v5093, 6
  %v5096 = vor.u32 %v5092, %v5095
  %v5097 = vsel %vm4681, %v5088, %v5096
  %v5098 = vrot.slane %v5096, 4
  %v5100 = vshrl.u32 %v4647, 16
  %v5102 = vrot.slane %v5100, 5
  %v5103 = vshll.u32 %v4647, 16
  %v5105 = vrot.slane %v5103, 6
  %v5106 = vor.u32 %v5102, %v5105
  %v5107 = vsel %vm4681, %v5098, %v5106
  %v5108 = vrot.slane %v5106, 4
  %v5110 = vshrl.u32 %v4648, 16
  %v5112 = vrot.slane %v5110, 5
  %v5113 = vshll.u32 %v4648, 16
  %v5115 = vrot.slane %v5113, 6
  %v5116 = vor.u32 %v5112, %v5115
  %v5117 = vsel %vm4681, %v5108, %v5116
  %v5118 = vrot.slane %v5116, 4
  %v5120 = vshrl.u32 %v4649, 16
  %v5122 = vrot.slane %v5120, 5
  %v5123 = vshll.u32 %v4649, 16
  %v5125 = vrot.slane %v5123, 6
  %v5126 = vor.u32 %v5122, %v5125
  %v5127 = vsel %vm4681, %v5118, %v5126
  %v5128 = vrot.slane %v5126, 4
  %v5130 = vshrl.u32 %v4650, 16
  %v5132 = vrot.slane %v5130, 5
  %v5133 = vshll.u32 %v4650, 16
  %v5135 = vrot.slane %v5133, 6
  %v5136 = vor.u32 %v5132, %v5135
  %v5137 = vsel %vm4681, %v5128, %v5136
  %v5138 = vrot.slane %v5136, 4
  %v5140 = vshrl.u32 %v4651, 16
  %v5142 = vrot.slane %v5140, 5
  %v5143 = vshll.u32 %v4651, 16
  %v5145 = vrot.slane %v5143, 6
  %v5146 = vor.u32 %v5142, %v5145
  %v5147 = vsel %vm4681, %v5138, %v5146
  %v5148 = vrot.slane %v5146, 4
  %v5150 = vshrl.u32 %v4652, 16
  %v5152 = vrot.slane %v5150, 5
  %v5153 = vshll.u32 %v4652, 16
  %v5155 = vrot.slane %v5153, 6
  %v5156 = vor.u32 %v5152, %v5155
  %v5157 = vsel %vm4681, %v5148, %v5156
  %v5158 = vrot.slane %v5156, 4
  %v5160 = vshrl.u32 %v4653, 16
  %v5162 = vrot.slane %v5160, 5
  %v5163 = vshll.u32 %v4653, 16
  %v5165 = vrot.slane %v5163, 6
  %v5166 = vor.u32 %v5162, %v5165
  %v5167 = vsel %vm4681, %v5158, %v5166
  %v5168 = vrot.slane %v5166, 4
  %v5170 = vshrl.u32 %v4654, 16
  %v5172 = vrot.slane %v5170, 5
  %v5173 = vshll.u32 %v4654, 16
  %v5175 = vrot.slane %v5173, 6
  %v5176 = vor.u32 %v5172, %v5175
  %v5177 = vsel %vm4681, %v5168, %v5176
  %v5178 = vrot.slane %v5176, 4
  %v5180 = vshrl.u32 %v4655, 16
  %v5182 = vrot.slane %v5180, 5
  %v5183 = vshll.u32 %v4655, 16
  %v5185 = vrot.slane %v5183, 6
  %v5186 = vor.u32 %v5182, %v5185
  %v5187 = vsel %vm4681, %v5178, %v5186
  %v5188 = vrot.slane %v5186, 4
  %v5190 = vshrl.u32 %v4656, 16
  %v5192 = vrot.slane %v5190, 5
  %v5193 = vshll.u32 %v4656, 16
  %v5195 = vrot.slane %v5193, 6
  %v5196 = vor.u32 %v5192, %v5195
  %v5197 = vsel %vm4681, %v5188, %v5196
  %v5198 = vrot.slane %v5196, 4
  %v5200 = vshrl.u32 %v4657, 16
  %v5202 = vrot.slane %v5200, 5
  %v5203 = vshll.u32 %v4657, 16
  %v5205 = vrot.slane %v5203, 6
  %v5206 = vor.u32 %v5202, %v5205
  %v5207 = vsel %vm4681, %v5198, %v5206
  %v5208 = vrot.slane %v5206, 4
  %v5210 = vshrl.u32 %v4658, 16
  %v5212 = vrot.slane %v5210, 5
  %v5213 = vshll.u32 %v4658, 16
  %v5215 = vrot.slane %v5213, 6
  %v5216 = vor.u32 %v5212, %v5215
  %v5217 = vsel %vm4681, %v5208, %v5216
  %v5218 = vrot.slane %v5216, 4
  %v5220 = vshrl.u32 %v4659, 16
  %v5222 = vrot.slane %v5220, 5
  %v5223 = vshll.u32 %v4659, 16
  %v5225 = vrot.slane %v5223, 6
  %v5226 = vor.u32 %v5222, %v5225
  %v5227 = vsel %vm4681, %v5218, %v5226
  %v5228 = vrot.slane %v5226, 4
  %v5230 = vshrl.u32 %v4660, 16
  %v5232 = vrot.slane %v5230, 5
  %v5233 = vshll.u32 %v4660, 16
  %v5235 = vrot.slane %v5233, 6
  %v5236 = vor.u32 %v5232, %v5235
  %v5237 = vsel %vm4681, %v5228, %v5236
  %v5238 = vrot.slane %v5236, 4
  %v5240 = vshrl.u32 %v4661, 16
  %v5242 = vrot.slane %v5240, 5
  %v5243 = vshll.u32 %v4661, 16
  %v5245 = vrot.slane %v5243, 6
  %v5246 = vor.u32 %v5242, %v5245
  %v5247 = vsel %vm4681, %v5238, %v5246
  %v5248 = vrot.slane %v5246, 4
  %v5250 = vshrl.u32 %v4662, 16
  %v5252 = vrot.slane %v5250, 5
  %v5253 = vshll.u32 %v4662, 16
  %v5255 = vrot.slane %v5253, 6
  %v5256 = vor.u32 %v5252, %v5255
  %v5257 = vsel %vm4681, %v5248, %v5256
  %v5258 = vrot.slane %v5256, 4
  %v5260 = vshrl.u32 %v4663, 16
  %v5262 = vrot.slane %v5260, 5
  %v5263 = vshll.u32 %v4663, 16
  %v5265 = vrot.slane %v5263, 6
  %v5266 = vor.u32 %v5262, %v5265
  %v5267 = vsel %vm4681, %v5258, %v5266
  %v5268 = vrot.slane %v5266, 4
  %v5270 = vshrl.u32 %v4664, 16
  %v5272 = vrot.slane %v5270, 5
  %v5273 = vshll.u32 %v4664, 16
  %v5275 = vrot.slane %v5273, 6
  %v5276 = vor.u32 %v5272, %v5275
  %v5277 = vsel %vm4681, %v5268, %v5276
  %v5278 = vrot.slane %v5276, 4
  %v5280 = vshrl.u32 %v4665, 16
  %v5282 = vrot.slane %v5280, 5
  %v5283 = vshll.u32 %v4665, 16
  %v5285 = vrot.slane %v5283, 6
  %v5286 = vor.u32 %v5282, %v5285
  %v5287 = vsel %vm4681, %v5278, %v5286
  %v5288 = vrot.slane %v5286, 4
  %v5290 = vshrl.u32 %v4666, 16
  %v5292 = vrot.slane %v5290, 5
  %v5293 = vshll.u32 %v4666, 16
  %v5295 = vrot.slane %v5293, 6
  %v5296 = vor.u32 %v5292, %v5295
  %v5297 = vsel %vm4681, %v5288, %v5296
  %v5298 = vrot.slane %v5296, 4
  %v5300 = vshrl.u32 %v4667, 16
  %v5302 = vrot.slane %v5300, 5
  %v5303 = vshll.u32 %v4667, 16
  %v5305 = vrot.slane %v5303, 6
  %v5306 = vor.u32 %v5302, %v5305
  %v5307 = vsel %vm4681, %v5298, %v5306
  %v5308 = vrot.slane %v5306, 4
  %v5310 = vshrl.u32 %v4668, 16
  %v5312 = vrot.slane %v5310, 5
  %v5313 = vshll.u32 %v4668, 16
  %v5315 = vrot.slane %v5313, 6
  %v5316 = vor.u32 %v5312, %v5315
  %v5317 = vsel %vm4681, %v5308, %v5316
  %v5318 = vrot.slane %v5316, 4
  %v5320 = vshrl.u32 %v4669, 16
  %v5322 = vrot.slane %v5320, 5
  %v5323 = vshll.u32 %v4669, 16
  %v5325 = vrot.slane %v5323, 6
  %v5326 = vor.u32 %v5322, %v5325
  %v5327 = vsel %vm4681, %v5318, %v5326
  %v5328 = vrot.slane %v5326, 4
  %v5330 = vshrl.u32 %v4670, 16
  %v5332 = vrot.slane %v5330, 5
  %v5333 = vshll.u32 %v4670, 16
  %v5335 = vrot.slane %v5333, 6
  %v5336 = vor.u32 %v5332, %v5335
  %v5337 = vsel %vm4681, %v5328, %v5336
  %v5338 = vrot.slane %v5336, 4
  %v5340 = vshrl.u32 %v4671, 16
  %v5342 = vrot.slane %v5340, 5
  %v5343 = vshll.u32 %v4671, 16
  %v5345 = vrot.slane %v5343, 6
  %v5346 = vor.u32 %v5342, %v5345
  %v5347 = vsel %vm4681, %v5338, %v5346
  %v5348 = vrot.slane %v5346, 4
  %v5350 = vshrl.u32 %v4672, 16
  %v5352 = vrot.slane %v5350, 5
  %v5353 = vshll.u32 %v4672, 16
  %v5355 = vrot.slane %v5353, 6
  %v5356 = vor.u32 %v5352, %v5355
  %v5357 = vsel %vm4681, %v5348, %v5356
  %v5358 = vrot.slane %v5356, 4
  %v5360 = vshrl.u32 %v4673, 16
  %v5362 = vrot.slane %v5360, 5
  %v5363 = vshll.u32 %v4673, 16
  %v5365 = vrot.slane %v5363, 6
  %v5366 = vor.u32 %v5362, %v5365
  %v5367 = vsel %vm4681, %v5358, %v5366
  %v5368 = vrot.slane %v5366, 4
  %v5370 = vshrl.u32 %v4674, 16
  %v5372 = vrot.slane %v5370, 5
  %v5373 = vshll.u32 %v4674, 16
  %v5375 = vrot.slane %v5373, 6
  %v5376 = vor.u32 %v5372, %v5375
  %v5377 = vsel %vm4681, %v5368, %v5376
  %v5378 = vrot.slane %v5376, 4
  %v5380 = vshrl.u32 %v4675, 16
  %v5382 = vrot.slane %v5380, 5
  %v5383 = vshll.u32 %v4675, 16
  %v5385 = vrot.slane %v5383, 6
  %v5386 = vor.u32 %v5382, %v5385
  %v5387 = vsel %vm4681, %v5378, %v5386
  %v5388 = vrot.slane %v5386, 4
  %v5390 = vshrl.u32 %v4676, 16
  %v5392 = vrot.slane %v5390, 5
  %v5393 = vshll.u32 %v4676, 16
  %v5395 = vrot.slane %v5393, 6
  %v5396 = vor.u32 %v5392, %v5395
  %v5397 = vsel %vm4681, %v5388, %v5396
  %v5398 = vrot.slane %v5396, 4
  %v5400 = vshrl.u32 %v4677, 16
  %v5402 = vrot.slane %v5400, 5
  %v5403 = vshll.u32 %v4677, 16
  %v5405 = vrot.slane %v5403, 6
  %v5406 = vor.u32 %v5402, %v5405
  %v5407 = vsel %vm4681, %v5398, %v5406
  %v5408 = vrot.slane %v5406, 4
  %v5410 = vshrl.u32 %v4678, 16
  %v5412 = vrot.slane %v5410, 5
  %v5413 = vshll.u32 %v4678, 16
  %v5415 = vrot.slane %v5413, 6
  %v5416 = vor.u32 %v5412, %v5415
  %v5417 = vsel %vm4681, %v5408, %v5416
  %v5418 = vld [vmem:[%s1 + $0x8] sm:$0x3]
  %v5419 = vunpack.c.l.b16 %v4699
  %v5420 = vunpack.c.l.b16 %v4709
  %v5421 = vunpack.c.l.b16 %v4719
  %v5422 = vunpack.c.l.b16 %v4729
  %v5423 = vunpack.c.l.b16 %v4739
  %v5424 = vunpack.c.l.b16 %v4749
  %v5425 = vunpack.c.l.b16 %v4759
  %v5426 = vunpack.c.l.b16 %v4769
  %v5427 = vunpack.c.l.b16 %v4779
  %v5428 = vunpack.c.l.b16 %v4789
  %v5429 = vunpack.c.l.b16 %v4799
  %v5430 = vunpack.c.l.b16 %v4809
  %v5431 = vunpack.c.l.b16 %v4819
  %v5432 = vunpack.c.l.b16 %v4829
  %v5433 = vunpack.c.l.b16 %v4839
  %v5434 = vunpack.c.l.b16 %v4849
  %v5435 = vunpack.c.l.b16 %v4859
  %v5436 = vunpack.c.l.b16 %v4869
  %v5437 = vunpack.c.l.b16 %v4879
  %v5438 = vunpack.c.l.b16 %v4889
  %v5439 = vunpack.c.l.b16 %v4899
  %v5440 = vunpack.c.l.b16 %v4909
  %v5441 = vunpack.c.l.b16 %v4919
  %v5442 = vunpack.c.l.b16 %v4929
  %v5443 = vunpack.c.l.b16 %v4939
  %v5444 = vunpack.c.l.b16 %v4949
  %v5445 = vunpack.c.l.b16 %v4959
  %v5446 = vunpack.c.l.b16 %v4969
  %v5447 = vunpack.c.l.b16 %v4979
  %v5448 = vunpack.c.l.b16 %v4989
  %v5449 = vunpack.c.l.b16 %v4999
  %v5450 = vunpack.c.l.b16 %v5009
  %v5451 = vunpack.c.l.b16 %v5019
  %v5452 = vunpack.c.l.b16 %v5029
  %v5453 = vunpack.c.l.b16 %v5039
  %v5454 = vunpack.c.l.b16 %v5049
  %v5455 = vunpack.c.l.b16 %v5067
  %v5456 = vunpack.c.l.b16 %v5077
  %v5457 = vunpack.c.l.b16 %v5087
  %v5458 = vunpack.c.l.b16 %v5097
  %v5459 = vunpack.c.l.b16 %v5107
  %v5460 = vunpack.c.l.b16 %v5117
  %v5461 = vunpack.c.l.b16 %v5127
  %v5462 = vunpack.c.l.b16 %v5137
  %v5463 = vunpack.c.l.b16 %v5147
  %v5464 = vunpack.c.l.b16 %v5157
  %v5465 = vunpack.c.l.b16 %v5167
  %v5466 = vunpack.c.l.b16 %v5177
  %v5467 = vunpack.c.l.b16 %v5187
  %v5468 = vunpack.c.l.b16 %v5197
  %v5469 = vunpack.c.l.b16 %v5207
  %v5470 = vunpack.c.l.b16 %v5217
  %v5471 = vunpack.c.l.b16 %v5227
  %v5472 = vunpack.c.l.b16 %v5237
  %v5473 = vunpack.c.l.b16 %v5247
  %v5474 = vunpack.c.l.b16 %v5257
  %v5475 = vunpack.c.l.b16 %v5267
  %v5476 = vunpack.c.l.b16 %v5277
  %v5477 = vunpack.c.l.b16 %v5287
  %v5478 = vunpack.c.l.b16 %v5297
  %v5479 = vunpack.c.l.b16 %v5307
  %v5480 = vunpack.c.l.b16 %v5317
  %v5481 = vunpack.c.l.b16 %v5327
  %v5482 = vunpack.c.l.b16 %v5337
  %v5483 = vunpack.c.l.b16 %v5347
  %v5484 = vunpack.c.l.b16 %v5357
  %v5485 = vunpack.c.l.b16 %v5367
  %v5486 = vunpack.c.l.b16 %v5377
  %v5487 = vunpack.c.l.b16 %v5387
  %v5488 = vunpack.c.l.b16 %v5397
  %v5489 = vunpack.c.l.b16 %v5407
  %v5490 = vunpack.c.l.b16 %v5417
  %v5491 = vpack.c.b16 %v5420, %v5419
  %v5492 = vpack.c.b16 %v5422, %v5421
  %v5493 = vpack.c.b16 %v5424, %v5423
  %v5494 = vpack.c.b16 %v5426, %v5425
  %v5495 = vpack.c.b16 %v5428, %v5427
  %v5496 = vpack.c.b16 %v5430, %v5429
  %v5497 = vpack.c.b16 %v5432, %v5431
  %v5498 = vpack.c.b16 %v5434, %v5433
  %v5499 = vpack.c.b16 %v5436, %v5435
  %v5500 = vpack.c.b16 %v5438, %v5437
  %v5501 = vpack.c.b16 %v5440, %v5439
  %v5502 = vpack.c.b16 %v5442, %v5441
  %v5503 = vpack.c.b16 %v5444, %v5443
  %v5504 = vpack.c.b16 %v5446, %v5445
  %v5505 = vpack.c.b16 %v5448, %v5447
  %v5506 = vpack.c.b16 %v5450, %v5449
  %v5507 = vpack.c.b16 %v5452, %v5451
  %v5508 = vpack.c.b16 %v5454, %v5453
  %v5509 = vpack.c.b16 %v5456, %v5455
  %v5510 = vpack.c.b16 %v5458, %v5457
  %v5511 = vpack.c.b16 %v5460, %v5459
  %v5512 = vpack.c.b16 %v5462, %v5461
  %v5513 = vpack.c.b16 %v5464, %v5463
  %v5514 = vpack.c.b16 %v5466, %v5465
  %v5515 = vpack.c.b16 %v5468, %v5467
  %v5516 = vpack.c.b16 %v5470, %v5469
  %v5517 = vpack.c.b16 %v5472, %v5471
  %v5518 = vpack.c.b16 %v5474, %v5473
  %v5519 = vpack.c.b16 %v5476, %v5475
  %v5520 = vpack.c.b16 %v5478, %v5477
  %v5521 = vpack.c.b16 %v5480, %v5479
  %v5522 = vpack.c.b16 %v5482, %v5481
  %v5523 = vpack.c.b16 %v5484, %v5483
  %v5524 = vpack.c.b16 %v5486, %v5485
  %v5525 = vpack.c.b16 %v5488, %v5487
  %v5526 = vpack.c.b16 %v5490, %v5489
  %v5528 = vsel %vm280, %v5491, 0
  %v5531 = vsel %vm280, %v5492, 0
  %v5534 = vsel %vm280, %v5493, 0
  %v5537 = vsel %vm280, %v5494, 0
  %v5540 = vsel %vm280, %v5495, 0
  %v5543 = vsel %vm280, %v5496, 0
  %v5546 = vsel %vm280, %v5497, 0
  %v5549 = vsel %vm280, %v5498, 0
  %v5552 = vsel %vm280, %v5499, 0
  %v5555 = vsel %vm280, %v5500, 0
  %v5558 = vsel %vm280, %v5501, 0
  %v5561 = vsel %vm280, %v5502, 0
  %v5564 = vsel %vm280, %v5503, 0
  %v5567 = vsel %vm280, %v5504, 0
  %v5570 = vsel %vm280, %v5505, 0
  %v5573 = vsel %vm280, %v5506, 0
  %v5576 = vsel %vm280, %v5507, 0
  %v5579 = vsel %vm280, %v5508, 0
  %v5582 = vsel %vm280, %v5509, 0
  %v5585 = vsel %vm280, %v5510, 0
  %v5588 = vsel %vm280, %v5511, 0
  %v5591 = vsel %vm280, %v5512, 0
  %v5594 = vsel %vm280, %v5513, 0
  %v5597 = vsel %vm280, %v5514, 0
  %v5600 = vsel %vm280, %v5515, 0
  %v5603 = vsel %vm280, %v5516, 0
  %v5606 = vsel %vm280, %v5517, 0
  %v5609 = vsel %vm280, %v5518, 0
  %v5612 = vsel %vm280, %v5519, 0
  %v5615 = vsel %vm280, %v5520, 0
  %v5618 = vsel %vm280, %v5521, 0
  %v5621 = vsel %vm280, %v5522, 0
  %v5624 = vsel %vm280, %v5523, 0
  %v5627 = vsel %vm280, %v5524, 0
  %v5630 = vsel %vm280, %v5525, 0
  %v5633 = vsel %vm280, %v5526, 0
  %v5636 = vsel %vm389, %v5418, 0
  %5638 = vmatprep.subr.bf16.mxu0 0
  %5639 = vmatpush1.bf16.msra.mxu0 0
  %5640 = vmatprep.subr.bf16.mxu0 0
  %5641 = vmatpush1.bf16.msra.mxu0 0
  %5642 = vmatprep.subr.bf16.mxu0 0
  %5643 = vmatpush1.bf16.msra.mxu0 0
  %5644 = vmatprep.subr.bf16.mxu0 0
  %5645 = vmatpush1.bf16.msra.mxu0 0
  %5646 = vmatprep.subr.bf16.mxu0 0
  %5647 = vmatpush1.bf16.msra.mxu0 0
  %5648 = vmatprep.subr.bf16.mxu0 0
  %5649 = vmatpush1.bf16.msra.mxu0 0
  %5650 = vmatprep.subr.bf16.mxu0 0
  %5651 = vmatpush1.bf16.msra.mxu0 0
  %5652 = vmatprep.subr.bf16.mxu0 0
  %5653 = vmatpush1.bf16.msra.mxu0 %v5636
  %5654 = vmatprep.subr.bf16.mxu0 0
  %5655 = vmatpush2.bf16.msra.mxu0 0
  %5656 = vmatprep.subr.bf16.mxu0 0
  %5657 = vmatpush2.bf16.msra.mxu0 0
  %5658 = vmatprep.subr.bf16.mxu0 0
  %5659 = vmatpush2.bf16.msra.mxu0 0
  %5660 = vmatprep.subr.bf16.mxu0 0
  %5661 = vmatpush2.bf16.msra.mxu0 0
  %5662 = vmatprep.subr.bf16.mxu0 0
  %5663 = vmatpush2.bf16.msra.mxu0 0
  %5664 = vmatprep.subr.bf16.mxu0 0
  %5665 = vmatpush2.bf16.msra.mxu0 0
  %5666 = vmatprep.subr.bf16.mxu0 0
  %5667 = vmatpush2.bf16.msra.mxu0 0
  %5668 = vmatprep.subr.bf16.mxu0 0
  %5669 = vmatpush2.bf16.msra.mxu0 0
  %5670 = vmatprep.mubr.bf16.mxu0 0
  %5671 = vmatmul.mubr.bf16.gmra.mxu0 %v5528
  %v5672 = vpop.f32.mrf.mxu0
  %v5673 = vadd.f32 0.0, %v5672
  %v5674 = vpop.f32.mrf.mxu0
  %v5675 = vpop.f32.mrf.mxu0
  %v5676 = vadd.f32 0.0, %v5675
  %v5677 = vpop.f32.mrf.mxu0
  %5678 = vmatprep.mubr.bf16.mxu0 0
  %5679 = vmatmul.mubr.bf16.gmra.mxu0 %v5531
  %v5680 = vpop.f32.mrf.mxu0
  %v5681 = vadd.f32 0.0, %v5680
  %v5682 = vpop.f32.mrf.mxu0
  %v5683 = vpop.f32.mrf.mxu0
  %v5684 = vadd.f32 0.0, %v5683
  %v5685 = vpop.f32.mrf.mxu0
  %5686 = vmatprep.mubr.bf16.mxu0 0
  %5687 = vmatmul.mubr.bf16.gmra.mxu0 %v5534
  %v5688 = vpop.f32.mrf.mxu0
  %v5689 = vadd.f32 0.0, %v5688
  %v5690 = vpop.f32.mrf.mxu0
  %v5691 = vpop.f32.mrf.mxu0
  %v5692 = vadd.f32 0.0, %v5691
  %v5693 = vpop.f32.mrf.mxu0
  %5694 = vmatprep.mubr.bf16.mxu0 0
  %5695 = vmatmul.mubr.bf16.gmra.mxu0 %v5537
  %v5696 = vpop.f32.mrf.mxu0
  %v5697 = vadd.f32 0.0, %v5696
  %v5698 = vpop.f32.mrf.mxu0
  %v5699 = vpop.f32.mrf.mxu0
  %v5700 = vadd.f32 0.0, %v5699
  %v5701 = vpop.f32.mrf.mxu0
  %5702 = vmatprep.mubr.bf16.mxu0 0
  %5703 = vmatmul.mubr.bf16.gmra.mxu0 %v5540
  %v5704 = vpop.f32.mrf.mxu0
  %v5705 = vadd.f32 0.0, %v5704
  %v5706 = vpop.f32.mrf.mxu0
  %v5707 = vpop.f32.mrf.mxu0
  %v5708 = vadd.f32 0.0, %v5707
  %v5709 = vpop.f32.mrf.mxu0
  %5710 = vmatprep.mubr.bf16.mxu0 0
  %5711 = vmatmul.mubr.bf16.gmra.mxu0 %v5543
  %v5712 = vpop.f32.mrf.mxu0
  %v5713 = vadd.f32 0.0, %v5712
  %v5714 = vpop.f32.mrf.mxu0
  %v5715 = vpop.f32.mrf.mxu0
  %v5716 = vadd.f32 0.0, %v5715
  %v5717 = vpop.f32.mrf.mxu0
  %5718 = vmatprep.mubr.bf16.mxu0 0
  %5719 = vmatmul.mubr.bf16.gmra.mxu0 %v5546
  %v5720 = vpop.f32.mrf.mxu0
  %v5721 = vadd.f32 0.0, %v5720
  %v5722 = vpop.f32.mrf.mxu0
  %v5723 = vpop.f32.mrf.mxu0
  %v5724 = vadd.f32 0.0, %v5723
  %v5725 = vpop.f32.mrf.mxu0
  %5726 = vmatprep.mubr.bf16.mxu0 0
  %5727 = vmatmul.mubr.bf16.gmra.mxu0 %v5549
  %v5728 = vpop.f32.mrf.mxu0
  %v5729 = vadd.f32 0.0, %v5728
  %v5730 = vpop.f32.mrf.mxu0
  %v5731 = vpop.f32.mrf.mxu0
  %v5732 = vadd.f32 0.0, %v5731
  %v5733 = vpop.f32.mrf.mxu0
  %5734 = vmatprep.mubr.bf16.mxu0 0
  %5735 = vmatmul.mubr.bf16.gmra.mxu0 %v5552
  %v5736 = vpop.f32.mrf.mxu0
  %v5737 = vadd.f32 0.0, %v5736
  %v5738 = vpop.f32.mrf.mxu0
  %v5739 = vpop.f32.mrf.mxu0
  %v5740 = vadd.f32 0.0, %v5739
  %v5741 = vpop.f32.mrf.mxu0
  %5742 = vmatprep.mubr.bf16.mxu0 0
  %5743 = vmatmul.mubr.bf16.gmra.mxu0 %v5555
  %v5744 = vpop.f32.mrf.mxu0
  %v5745 = vadd.f32 0.0, %v5744
  %v5746 = vpop.f32.mrf.mxu0
  %v5747 = vpop.f32.mrf.mxu0
  %v5748 = vadd.f32 0.0, %v5747
  %v5749 = vpop.f32.mrf.mxu0
  %5750 = vmatprep.mubr.bf16.mxu0 0
  %5751 = vmatmul.mubr.bf16.gmra.mxu0 %v5558
  %v5752 = vpop.f32.mrf.mxu0
  %v5753 = vadd.f32 0.0, %v5752
  %v5754 = vpop.f32.mrf.mxu0
  %v5755 = vpop.f32.mrf.mxu0
  %v5756 = vadd.f32 0.0, %v5755
  %v5757 = vpop.f32.mrf.mxu0
  %5758 = vmatprep.mubr.bf16.mxu0 0
  %5759 = vmatmul.mubr.bf16.gmra.mxu0 %v5561
  %v5760 = vpop.f32.mrf.mxu0
  %v5761 = vadd.f32 0.0, %v5760
  %v5762 = vpop.f32.mrf.mxu0
  %v5763 = vpop.f32.mrf.mxu0
  %v5764 = vadd.f32 0.0, %v5763
  %v5765 = vpop.f32.mrf.mxu0
  %5766 = vmatprep.mubr.bf16.mxu0 0
  %5767 = vmatmul.mubr.bf16.gmra.mxu0 %v5564
  %v5768 = vpop.f32.mrf.mxu0
  %v5769 = vadd.f32 0.0, %v5768
  %v5770 = vpop.f32.mrf.mxu0
  %v5771 = vpop.f32.mrf.mxu0
  %v5772 = vadd.f32 0.0, %v5771
  %v5773 = vpop.f32.mrf.mxu0
  %5774 = vmatprep.mubr.bf16.mxu0 0
  %5775 = vmatmul.mubr.bf16.gmra.mxu0 %v5567
  %v5776 = vpop.f32.mrf.mxu0
  %v5777 = vadd.f32 0.0, %v5776
  %v5778 = vpop.f32.mrf.mxu0
  %v5779 = vpop.f32.mrf.mxu0
  %v5780 = vadd.f32 0.0, %v5779
  %v5781 = vpop.f32.mrf.mxu0
  %5782 = vmatprep.mubr.bf16.mxu0 0
  %5783 = vmatmul.mubr.bf16.gmra.mxu0 %v5570
  %v5784 = vpop.f32.mrf.mxu0
  %v5785 = vadd.f32 0.0, %v5784
  %v5786 = vpop.f32.mrf.mxu0
  %v5787 = vpop.f32.mrf.mxu0
  %v5788 = vadd.f32 0.0, %v5787
  %v5789 = vpop.f32.mrf.mxu0
  %5790 = vmatprep.mubr.bf16.mxu0 0
  %5791 = vmatmul.mubr.bf16.gmra.mxu0 %v5573
  %v5792 = vpop.f32.mrf.mxu0
  %v5793 = vadd.f32 0.0, %v5792
  %v5794 = vpop.f32.mrf.mxu0
  %v5795 = vpop.f32.mrf.mxu0
  %v5796 = vadd.f32 0.0, %v5795
  %v5797 = vpop.f32.mrf.mxu0
  %5798 = vmatprep.mubr.bf16.mxu0 0
  %5799 = vmatmul.mubr.bf16.gmra.mxu0 %v5576
  %v5800 = vpop.f32.mrf.mxu0
  %v5801 = vadd.f32 0.0, %v5800
  %v5802 = vpop.f32.mrf.mxu0
  %v5803 = vpop.f32.mrf.mxu0
  %v5804 = vadd.f32 0.0, %v5803
  %v5805 = vpop.f32.mrf.mxu0
  %5806 = vmatprep.mubr.bf16.mxu0 0
  %5807 = vmatmul.mubr.bf16.gmra.mxu0 %v5579
  %v5808 = vpop.f32.mrf.mxu0
  %v5809 = vadd.f32 0.0, %v5808
  %v5810 = vpop.f32.mrf.mxu0
  %v5811 = vpop.f32.mrf.mxu0
  %v5812 = vadd.f32 0.0, %v5811
  %v5813 = vpop.f32.mrf.mxu0
  %5814 = vmatprep.mubr.bf16.mxu0 0
  %5815 = vmatmul.mubr.bf16.gmra.mxu0 %v5582
  %v5816 = vpop.f32.mrf.mxu0
  %v5817 = vadd.f32 0.0, %v5816
  %v5818 = vpop.f32.mrf.mxu0
  %v5819 = vpop.f32.mrf.mxu0
  %v5820 = vadd.f32 0.0, %v5819
  %v5821 = vpop.f32.mrf.mxu0
  %5822 = vmatprep.mubr.bf16.mxu0 0
  %5823 = vmatmul.mubr.bf16.gmra.mxu0 %v5585
  %v5824 = vpop.f32.mrf.mxu0
  %v5825 = vadd.f32 0.0, %v5824
  %v5826 = vpop.f32.mrf.mxu0
  %v5827 = vpop.f32.mrf.mxu0
  %v5828 = vadd.f32 0.0, %v5827
  %v5829 = vpop.f32.mrf.mxu0
  %5830 = vmatprep.mubr.bf16.mxu0 0
  %5831 = vmatmul.mubr.bf16.gmra.mxu0 %v5588
  %v5832 = vpop.f32.mrf.mxu0
  %v5833 = vadd.f32 0.0, %v5832
  %v5834 = vpop.f32.mrf.mxu0
  %v5835 = vpop.f32.mrf.mxu0
  %v5836 = vadd.f32 0.0, %v5835
  %v5837 = vpop.f32.mrf.mxu0
  %5838 = vmatprep.mubr.bf16.mxu0 0
  %5839 = vmatmul.mubr.bf16.gmra.mxu0 %v5591
  %v5840 = vpop.f32.mrf.mxu0
  %v5841 = vadd.f32 0.0, %v5840
  %v5842 = vpop.f32.mrf.mxu0
  %v5843 = vpop.f32.mrf.mxu0
  %v5844 = vadd.f32 0.0, %v5843
  %v5845 = vpop.f32.mrf.mxu0
  %5846 = vmatprep.mubr.bf16.mxu0 0
  %5847 = vmatmul.mubr.bf16.gmra.mxu0 %v5594
  %v5848 = vpop.f32.mrf.mxu0
  %v5849 = vadd.f32 0.0, %v5848
  %v5850 = vpop.f32.mrf.mxu0
  %v5851 = vpop.f32.mrf.mxu0
  %v5852 = vadd.f32 0.0, %v5851
  %v5853 = vpop.f32.mrf.mxu0
  %5854 = vmatprep.mubr.bf16.mxu0 0
  %5855 = vmatmul.mubr.bf16.gmra.mxu0 %v5597
  %v5856 = vpop.f32.mrf.mxu0
  %v5857 = vadd.f32 0.0, %v5856
  %v5858 = vpop.f32.mrf.mxu0
  %v5859 = vpop.f32.mrf.mxu0
  %v5860 = vadd.f32 0.0, %v5859
  %v5861 = vpop.f32.mrf.mxu0
  %5862 = vmatprep.mubr.bf16.mxu0 0
  %5863 = vmatmul.mubr.bf16.gmra.mxu0 %v5600
  %v5864 = vpop.f32.mrf.mxu0
  %v5865 = vadd.f32 0.0, %v5864
  %v5866 = vpop.f32.mrf.mxu0
  %v5867 = vpop.f32.mrf.mxu0
  %v5868 = vadd.f32 0.0, %v5867
  %v5869 = vpop.f32.mrf.mxu0
  %5870 = vmatprep.mubr.bf16.mxu0 0
  %5871 = vmatmul.mubr.bf16.gmra.mxu0 %v5603
  %v5872 = vpop.f32.mrf.mxu0
  %v5873 = vadd.f32 0.0, %v5872
  %v5874 = vpop.f32.mrf.mxu0
  %v5875 = vpop.f32.mrf.mxu0
  %v5876 = vadd.f32 0.0, %v5875
  %v5877 = vpop.f32.mrf.mxu0
  %5878 = vmatprep.mubr.bf16.mxu0 0
  %5879 = vmatmul.mubr.bf16.gmra.mxu0 %v5606
  %v5880 = vpop.f32.mrf.mxu0
  %v5881 = vadd.f32 0.0, %v5880
  %v5882 = vpop.f32.mrf.mxu0
  %v5883 = vpop.f32.mrf.mxu0
  %v5884 = vadd.f32 0.0, %v5883
  %v5885 = vpop.f32.mrf.mxu0
  %5886 = vmatprep.mubr.bf16.mxu0 0
  %5887 = vmatmul.mubr.bf16.gmra.mxu0 %v5609
  %v5888 = vpop.f32.mrf.mxu0
  %v5889 = vadd.f32 0.0, %v5888
  %v5890 = vpop.f32.mrf.mxu0
  %v5891 = vpop.f32.mrf.mxu0
  %v5892 = vadd.f32 0.0, %v5891
  %v5893 = vpop.f32.mrf.mxu0
  %5894 = vmatprep.mubr.bf16.mxu0 0
  %5895 = vmatmul.mubr.bf16.gmra.mxu0 %v5612
  %v5896 = vpop.f32.mrf.mxu0
  %v5897 = vadd.f32 0.0, %v5896
  %v5898 = vpop.f32.mrf.mxu0
  %v5899 = vpop.f32.mrf.mxu0
  %v5900 = vadd.f32 0.0, %v5899
  %v5901 = vpop.f32.mrf.mxu0
  %5902 = vmatprep.mubr.bf16.mxu0 0
  %5903 = vmatmul.mubr.bf16.gmra.mxu0 %v5615
  %v5904 = vpop.f32.mrf.mxu0
  %v5905 = vadd.f32 0.0, %v5904
  %v5906 = vpop.f32.mrf.mxu0
  %v5907 = vpop.f32.mrf.mxu0
  %v5908 = vadd.f32 0.0, %v5907
  %v5909 = vpop.f32.mrf.mxu0
  %5910 = vmatprep.mubr.bf16.mxu0 0
  %5911 = vmatmul.mubr.bf16.gmra.mxu0 %v5618
  %v5912 = vpop.f32.mrf.mxu0
  %v5913 = vadd.f32 0.0, %v5912
  %v5914 = vpop.f32.mrf.mxu0
  %v5915 = vpop.f32.mrf.mxu0
  %v5916 = vadd.f32 0.0, %v5915
  %v5917 = vpop.f32.mrf.mxu0
  %5918 = vmatprep.mubr.bf16.mxu0 0
  %5919 = vmatmul.mubr.bf16.gmra.mxu0 %v5621
  %v5920 = vpop.f32.mrf.mxu0
  %v5921 = vadd.f32 0.0, %v5920
  %v5922 = vpop.f32.mrf.mxu0
  %v5923 = vpop.f32.mrf.mxu0
  %v5924 = vadd.f32 0.0, %v5923
  %v5925 = vpop.f32.mrf.mxu0
  %5926 = vmatprep.mubr.bf16.mxu0 0
  %5927 = vmatmul.mubr.bf16.gmra.mxu0 %v5624
  %v5928 = vpop.f32.mrf.mxu0
  %v5929 = vadd.f32 0.0, %v5928
  %v5930 = vpop.f32.mrf.mxu0
  %v5931 = vpop.f32.mrf.mxu0
  %v5932 = vadd.f32 0.0, %v5931
  %v5933 = vpop.f32.mrf.mxu0
  %5934 = vmatprep.mubr.bf16.mxu0 0
  %5935 = vmatmul.mubr.bf16.gmra.mxu0 %v5627
  %v5936 = vpop.f32.mrf.mxu0
  %v5937 = vadd.f32 0.0, %v5936
  %v5938 = vpop.f32.mrf.mxu0
  %v5939 = vpop.f32.mrf.mxu0
  %v5940 = vadd.f32 0.0, %v5939
  %v5941 = vpop.f32.mrf.mxu0
  %5942 = vmatprep.mubr.bf16.mxu0 0
  %5943 = vmatmul.mubr.bf16.gmra.mxu0 %v5630
  %v5944 = vpop.f32.mrf.mxu0
  %v5945 = vadd.f32 0.0, %v5944
  %v5946 = vpop.f32.mrf.mxu0
  %v5947 = vpop.f32.mrf.mxu0
  %v5948 = vadd.f32 0.0, %v5947
  %v5949 = vpop.f32.mrf.mxu0
  %5950 = vmatprep.mubr.bf16.mxu0 0
  %5951 = vmatmul.mubr.bf16.gmra.mxu0 %v5633
  %v5952 = vpop.f32.mrf.mxu0
  %v5953 = vadd.f32 0.0, %v5952
  %v5954 = vpop.f32.mrf.mxu0
  %v5955 = vpop.f32.mrf.mxu0
  %v5956 = vadd.f32 0.0, %v5955
  %v5957 = vpop.f32.mrf.mxu0
  %5958 = vdwg.mxu0
  %v5959 = vld [vmem:[#allocation2] sm:$0xff]
  %v5960 = vld [vmem:[#allocation2 + $0x8] sm:$0xff]
  %v5961 = vld [vmem:[#allocation2 + $0x10] sm:$0xff]
  %v5962 = vld [vmem:[#allocation2 + $0x18] sm:$0xff]
  %v5963 = vld [vmem:[#allocation2 + $0x20] sm:$0xff]
  %v5964 = vld [vmem:[#allocation2 + $0x28] sm:$0xff]
  %v5965 = vld [vmem:[#allocation2 + $0x30] sm:$0xff]
  %v5966 = vld [vmem:[#allocation2 + $0x38] sm:$0xff]
  %v5967 = vld [vmem:[#allocation2 + $0x40] sm:$0xff]
  %v5968 = vld [vmem:[#allocation2 + $0x48] sm:$0xff]
  %v5969 = vld [vmem:[#allocation2 + $0x50] sm:$0xff]
  %v5970 = vld [vmem:[#allocation2 + $0x58] sm:$0xff]
  %v5971 = vld [vmem:[#allocation2 + $0x60] sm:$0xff]
  %v5972 = vld [vmem:[#allocation2 + $0x68] sm:$0xff]
  %v5973 = vld [vmem:[#allocation2 + $0x70] sm:$0xff]
  %v5974 = vld [vmem:[#allocation2 + $0x78] sm:$0xff]
  %v5975 = vld [vmem:[#allocation2 + $0x80] sm:$0xff]
  %v5976 = vld [vmem:[#allocation2 + $0x88] sm:$0xff]
  %v5977 = vld [vmem:[#allocation2 + $0x90] sm:$0xff]
  %v5978 = vld [vmem:[#allocation2 + $0x98] sm:$0xff]
  %v5979 = vld [vmem:[#allocation2 + $0xa0] sm:$0xff]
  %v5980 = vld [vmem:[#allocation2 + $0xa8] sm:$0xff]
  %v5981 = vld [vmem:[#allocation2 + $0xb0] sm:$0xff]
  %v5982 = vld [vmem:[#allocation2 + $0xb8] sm:$0xff]
  %v5983 = vld [vmem:[#allocation2 + $0xc0] sm:$0xff]
  %v5984 = vld [vmem:[#allocation2 + $0xc8] sm:$0xff]
  %v5985 = vld [vmem:[#allocation2 + $0xd0] sm:$0xff]
  %v5986 = vld [vmem:[#allocation2 + $0xd8] sm:$0xff]
  %v5987 = vld [vmem:[#allocation2 + $0xe0] sm:$0xff]
  %v5988 = vld [vmem:[#allocation2 + $0xe8] sm:$0xff]
  %v5989 = vld [vmem:[#allocation2 + $0xf0] sm:$0xff]
  %v5990 = vld [vmem:[#allocation2 + $0xf8] sm:$0xff]
  %v5991 = vld [vmem:[#allocation2 + $0x100] sm:$0xff]
  %v5992 = vld [vmem:[#allocation2 + $0x108] sm:$0xff]
  %v5993 = vld [vmem:[#allocation2 + $0x110] sm:$0xff]
  %v5994 = vld [vmem:[#allocation2 + $0x118] sm:$0xff]
  %v5995 = vld [vmem:[#allocation2 + $0x120] sm:$0xff]
  %v5996 = vld [vmem:[#allocation2 + $0x128] sm:$0xff]
  %v5997 = vld [vmem:[#allocation2 + $0x130] sm:$0xff]
  %v5998 = vld [vmem:[#allocation2 + $0x138] sm:$0xff]
  %v5999 = vld [vmem:[#allocation2 + $0x140] sm:$0xff]
  %v6000 = vld [vmem:[#allocation2 + $0x148] sm:$0xff]
  %v6001 = vld [vmem:[#allocation2 + $0x150] sm:$0xff]
  %v6002 = vld [vmem:[#allocation2 + $0x158] sm:$0xff]
  %v6003 = vld [vmem:[#allocation2 + $0x160] sm:$0xff]
  %v6004 = vld [vmem:[#allocation2 + $0x168] sm:$0xff]
  %v6005 = vld [vmem:[#allocation2 + $0x170] sm:$0xff]
  %v6006 = vld [vmem:[#allocation2 + $0x178] sm:$0xff]
  %v6007 = vld [vmem:[#allocation2 + $0x180] sm:$0xff]
  %v6008 = vld [vmem:[#allocation2 + $0x188] sm:$0xff]
  %v6009 = vld [vmem:[#allocation2 + $0x190] sm:$0xff]
  %v6010 = vld [vmem:[#allocation2 + $0x198] sm:$0xff]
  %v6011 = vld [vmem:[#allocation2 + $0x1a0] sm:$0xff]
  %v6012 = vld [vmem:[#allocation2 + $0x1a8] sm:$0xff]
  %v6013 = vld [vmem:[#allocation2 + $0x1b0] sm:$0xff]
  %v6014 = vld [vmem:[#allocation2 + $0x1b8] sm:$0xff]
  %v6015 = vld [vmem:[#allocation2 + $0x1c0] sm:$0xff]
  %v6016 = vld [vmem:[#allocation2 + $0x1c8] sm:$0xff]
  %v6017 = vld [vmem:[#allocation2 + $0x1d0] sm:$0xff]
  %v6018 = vld [vmem:[#allocation2 + $0x1d8] sm:$0xff]
  %v6019 = vld [vmem:[#allocation2 + $0x1e0] sm:$0xff]
  %v6020 = vld [vmem:[#allocation2 + $0x1e8] sm:$0xff]
  %v6021 = vld [vmem:[#allocation2 + $0x1f0] sm:$0xff]
  %v6022 = vld [vmem:[#allocation2 + $0x1f8] sm:$0xff]
  %v6023 = vld [vmem:[#allocation2 + $0x200] sm:$0xff]
  %v6024 = vld [vmem:[#allocation2 + $0x208] sm:$0xff]
  %v6025 = vld [vmem:[#allocation2 + $0x210] sm:$0xff]
  %v6026 = vld [vmem:[#allocation2 + $0x218] sm:$0xff]
  %v6027 = vld [vmem:[#allocation2 + $0x220] sm:$0xff]
  %v6028 = vld [vmem:[#allocation2 + $0x228] sm:$0xff]
  %v6029 = vld [vmem:[#allocation2 + $0x230] sm:$0xff]
  %v6030 = vld [vmem:[#allocation2 + $0x238] sm:$0xff]
  %v6031 = vadd.f32 %v5959, %v5673
  %v6032 = vadd.f32 %v5960, %v5676
  %v6033 = vadd.f32 %v5961, %v5681
  %v6034 = vadd.f32 %v5962, %v5684
  %v6035 = vadd.f32 %v5963, %v5689
  %v6036 = vadd.f32 %v5964, %v5692
  %v6037 = vadd.f32 %v5965, %v5697
  %v6038 = vadd.f32 %v5966, %v5700
  %v6039 = vadd.f32 %v5967, %v5705
  %v6040 = vadd.f32 %v5968, %v5708
  %v6041 = vadd.f32 %v5969, %v5713
  %v6042 = vadd.f32 %v5970, %v5716
  %v6043 = vadd.f32 %v5971, %v5721
  %v6044 = vadd.f32 %v5972, %v5724
  %v6045 = vadd.f32 %v5973, %v5729
  %v6046 = vadd.f32 %v5974, %v5732
  %v6047 = vadd.f32 %v5975, %v5737
  %v6048 = vadd.f32 %v5976, %v5740
  %v6049 = vadd.f32 %v5977, %v5745
  %v6050 = vadd.f32 %v5978, %v5748
  %v6051 = vadd.f32 %v5979, %v5753
  %v6052 = vadd.f32 %v5980, %v5756
  %v6053 = vadd.f32 %v5981, %v5761
  %v6054 = vadd.f32 %v5982, %v5764
  %v6055 = vadd.f32 %v5983, %v5769
  %v6056 = vadd.f32 %v5984, %v5772
  %v6057 = vadd.f32 %v5985, %v5777
  %v6058 = vadd.f32 %v5986, %v5780
  %v6059 = vadd.f32 %v5987, %v5785
  %v6060 = vadd.f32 %v5988, %v5788
  %v6061 = vadd.f32 %v5989, %v5793
  %v6062 = vadd.f32 %v5990, %v5796
  %v6063 = vadd.f32 %v5991, %v5801
  %v6064 = vadd.f32 %v5992, %v5804
  %v6065 = vadd.f32 %v5993, %v5809
  %v6066 = vadd.f32 %v5994, %v5812
  %v6067 = vadd.f32 %v5995, %v5817
  %v6068 = vadd.f32 %v5996, %v5820
  %v6069 = vadd.f32 %v5997, %v5825
  %v6070 = vadd.f32 %v5998, %v5828
  %v6071 = vadd.f32 %v5999, %v5833
  %v6072 = vadd.f32 %v6000, %v5836
  %v6073 = vadd.f32 %v6001, %v5841
  %v6074 = vadd.f32 %v6002, %v5844
  %v6075 = vadd.f32 %v6003, %v5849
  %v6076 = vadd.f32 %v6004, %v5852
  %v6077 = vadd.f32 %v6005, %v5857
  %v6078 = vadd.f32 %v6006, %v5860
  %v6079 = vadd.f32 %v6007, %v5865
  %v6080 = vadd.f32 %v6008, %v5868
  %v6081 = vadd.f32 %v6009, %v5873
  %v6082 = vadd.f32 %v6010, %v5876
  %v6083 = vadd.f32 %v6011, %v5881
  %v6084 = vadd.f32 %v6012, %v5884
  %v6085 = vadd.f32 %v6013, %v5889
  %v6086 = vadd.f32 %v6014, %v5892
  %v6087 = vadd.f32 %v6015, %v5897
  %v6088 = vadd.f32 %v6016, %v5900
  %v6089 = vadd.f32 %v6017, %v5905
  %v6090 = vadd.f32 %v6018, %v5908
  %v6091 = vadd.f32 %v6019, %v5913
  %v6092 = vadd.f32 %v6020, %v5916
  %v6093 = vadd.f32 %v6021, %v5921
  %v6094 = vadd.f32 %v6022, %v5924
  %v6095 = vadd.f32 %v6023, %v5929
  %v6096 = vadd.f32 %v6024, %v5932
  %v6097 = vadd.f32 %v6025, %v5937
  %v6098 = vadd.f32 %v6026, %v5940
  %v6099 = vadd.f32 %v6027, %v5945
  %v6100 = vadd.f32 %v6028, %v5948
  %v6101 = vadd.f32 %v6029, %v5953
  %v6102 = vadd.f32 %v6030, %v5956
  %6103 = vst [vmem:[#allocation2] sm:$0xff] %v6031
  %6104 = vst [vmem:[#allocation2 + $0x8] sm:$0xff] %v6032
  %6105 = vst [vmem:[#allocation2 + $0x10] sm:$0xff] %v6033
  %6106 = vst [vmem:[#allocation2 + $0x18] sm:$0xff] %v6034
  %6107 = vst [vmem:[#allocation2 + $0x20] sm:$0xff] %v6035
  %6108 = vst [vmem:[#allocation2 + $0x28] sm:$0xff] %v6036
  %6109 = vst [vmem:[#allocation2 + $0x30] sm:$0xff] %v6037
  %6110 = vst [vmem:[#allocation2 + $0x38] sm:$0xff] %v6038
  %6111 = vst [vmem:[#allocation2 + $0x40] sm:$0xff] %v6039
  %6112 = vst [vmem:[#allocation2 + $0x48] sm:$0xff] %v6040
  %6113 = vst [vmem:[#allocation2 + $0x50] sm:$0xff] %v6041
  %6114 = vst [vmem:[#allocation2 + $0x58] sm:$0xff] %v6042
  %6115 = vst [vmem:[#allocation2 + $0x60] sm:$0xff] %v6043
  %6116 = vst [vmem:[#allocation2 + $0x68] sm:$0xff] %v6044
  %6117 = vst [vmem:[#allocation2 + $0x70] sm:$0xff] %v6045
  %6118 = vst [vmem:[#allocation2 + $0x78] sm:$0xff] %v6046
  %6119 = vst [vmem:[#allocation2 + $0x80] sm:$0xff] %v6047
  %6120 = vst [vmem:[#allocation2 + $0x88] sm:$0xff] %v6048
  %6121 = vst [vmem:[#allocation2 + $0x90] sm:$0xff] %v6049
  %6122 = vst [vmem:[#allocation2 + $0x98] sm:$0xff] %v6050
  %6123 = vst [vmem:[#allocation2 + $0xa0] sm:$0xff] %v6051
  %6124 = vst [vmem:[#allocation2 + $0xa8] sm:$0xff] %v6052
  %6125 = vst [vmem:[#allocation2 + $0xb0] sm:$0xff] %v6053
  %6126 = vst [vmem:[#allocation2 + $0xb8] sm:$0xff] %v6054
  %6127 = vst [vmem:[#allocation2 + $0xc0] sm:$0xff] %v6055
  %6128 = vst [vmem:[#allocation2 + $0xc8] sm:$0xff] %v6056
  %6129 = vst [vmem:[#allocation2 + $0xd0] sm:$0xff] %v6057
  %6130 = vst [vmem:[#allocation2 + $0xd8] sm:$0xff] %v6058
  %6131 = vst [vmem:[#allocation2 + $0xe0] sm:$0xff] %v6059
  %6132 = vst [vmem:[#allocation2 + $0xe8] sm:$0xff] %v6060
  %6133 = vst [vmem:[#allocation2 + $0xf0] sm:$0xff] %v6061
  %6134 = vst [vmem:[#allocation2 + $0xf8] sm:$0xff] %v6062
  %6135 = vst [vmem:[#allocation2 + $0x100] sm:$0xff] %v6063
  %6136 = vst [vmem:[#allocation2 + $0x108] sm:$0xff] %v6064
  %6137 = vst [vmem:[#allocation2 + $0x110] sm:$0xff] %v6065
  %6138 = vst [vmem:[#allocation2 + $0x118] sm:$0xff] %v6066
  %6139 = vst [vmem:[#allocation2 + $0x120] sm:$0xff] %v6067
  %6140 = vst [vmem:[#allocation2 + $0x128] sm:$0xff] %v6068
  %6141 = vst [vmem:[#allocation2 + $0x130] sm:$0xff] %v6069
  %6142 = vst [vmem:[#allocation2 + $0x138] sm:$0xff] %v6070
  %6143 = vst [vmem:[#allocation2 + $0x140] sm:$0xff] %v6071
  %6144 = vst [vmem:[#allocation2 + $0x148] sm:$0xff] %v6072
  %6145 = vst [vmem:[#allocation2 + $0x150] sm:$0xff] %v6073
  %6146 = vst [vmem:[#allocation2 + $0x158] sm:$0xff] %v6074
  %6147 = vst [vmem:[#allocation2 + $0x160] sm:$0xff] %v6075
  %6148 = vst [vmem:[#allocation2 + $0x168] sm:$0xff] %v6076
  %6149 = vst [vmem:[#allocation2 + $0x170] sm:$0xff] %v6077
  %6150 = vst [vmem:[#allocation2 + $0x178] sm:$0xff] %v6078
  %6151 = vst [vmem:[#allocation2 + $0x180] sm:$0xff] %v6079
  %6152 = vst [vmem:[#allocation2 + $0x188] sm:$0xff] %v6080
  %6153 = vst [vmem:[#allocation2 + $0x190] sm:$0xff] %v6081
  %6154 = vst [vmem:[#allocation2 + $0x198] sm:$0xff] %v6082
  %6155 = vst [vmem:[#allocation2 + $0x1a0] sm:$0xff] %v6083
  %6156 = vst [vmem:[#allocation2 + $0x1a8] sm:$0xff] %v6084
  %6157 = vst [vmem:[#allocation2 + $0x1b0] sm:$0xff] %v6085
  %6158 = vst [vmem:[#allocation2 + $0x1b8] sm:$0xff] %v6086
  %6159 = vst [vmem:[#allocation2 + $0x1c0] sm:$0xff] %v6087
  %6160 = vst [vmem:[#allocation2 + $0x1c8] sm:$0xff] %v6088
  %6161 = vst [vmem:[#allocation2 + $0x1d0] sm:$0xff] %v6089
  %6162 = vst [vmem:[#allocation2 + $0x1d8] sm:$0xff] %v6090
  %6163 = vst [vmem:[#allocation2 + $0x1e0] sm:$0xff] %v6091
  %6164 = vst [vmem:[#allocation2 + $0x1e8] sm:$0xff] %v6092
  %6165 = vst [vmem:[#allocation2 + $0x1f0] sm:$0xff] %v6093
  %6166 = vst [vmem:[#allocation2 + $0x1f8] sm:$0xff] %v6094
  %6167 = vst [vmem:[#allocation2 + $0x200] sm:$0xff] %v6095
  %6168 = vst [vmem:[#allocation2 + $0x208] sm:$0xff] %v6096
  %6169 = vst [vmem:[#allocation2 + $0x210] sm:$0xff] %v6097
  %6170 = vst [vmem:[#allocation2 + $0x218] sm:$0xff] %v6098
  %6171 = vst [vmem:[#allocation2 + $0x220] sm:$0xff] %v6099
  %6172 = vst [vmem:[#allocation2 + $0x228] sm:$0xff] %v6100
  %6173 = vst [vmem:[#allocation2 + $0x230] sm:$0xff] %v6101
  %6174 = vst [vmem:[#allocation2 + $0x238] sm:$0xff] %v6102
  %v6175 = vld [vmem:[%s0 + $0x8] sm:$0xc]
  %v6176 = vld [vmem:[%s0 + $0xc] sm:$0xf]
  %v6177 = vld [vmem:[%s0 + $0x10] sm:$0xf]
  %v6178 = vld [vmem:[%s0 + $0x14] sm:$0xf]
  %v6179 = vld [vmem:[%s0 + $0x18] sm:$0xf]
  %v6180 = vld [vmem:[%s0 + $0x1c] sm:$0xf]
  %v6181 = vld [vmem:[%s0 + $0x20] sm:$0xf]
  %v6182 = vld [vmem:[%s0 + $0x24] sm:$0xf]
  %v6183 = vld [vmem:[%s0 + $0x28] sm:$0xf]
  %v6184 = vld [vmem:[%s0 + $0x2c] sm:$0xf]
  %v6185 = vld [vmem:[%s0 + $0x30] sm:$0xf]
  %v6186 = vld [vmem:[%s0 + $0x34] sm:$0xf]
  %v6187 = vld [vmem:[%s0 + $0x38] sm:$0xf]
  %v6188 = vld [vmem:[%s0 + $0x3c] sm:$0xf]
  %v6189 = vld [vmem:[%s0 + $0x40] sm:$0xf]
  %v6190 = vld [vmem:[%s0 + $0x44] sm:$0xf]
  %v6191 = vld [vmem:[%s0 + $0x48] sm:$0xf]
  %v6192 = vld [vmem:[%s0 + $0x4c] sm:$0xf]
  %v6193 = vld [vmem:[%s0 + $0x50] sm:$0xf]
  %v6194 = vld [vmem:[%s0 + $0x54] sm:$0xf]
  %v6195 = vld [vmem:[%s0 + $0x58] sm:$0xf]
  %v6196 = vld [vmem:[%s0 + $0x5c] sm:$0xf]
  %v6197 = vld [vmem:[%s0 + $0x60] sm:$0xf]
  %v6198 = vld [vmem:[%s0 + $0x64] sm:$0xf]
  %v6199 = vld [vmem:[%s0 + $0x68] sm:$0xf]
  %v6200 = vld [vmem:[%s0 + $0x6c] sm:$0xf]
  %v6201 = vld [vmem:[%s0 + $0x70] sm:$0xf]
  %v6202 = vld [vmem:[%s0 + $0x74] sm:$0xf]
  %v6203 = vld [vmem:[%s0 + $0x78] sm:$0xf]
  %v6204 = vld [vmem:[%s0 + $0x7c] sm:$0xf]
  %v6205 = vld [vmem:[%s0 + $0x80] sm:$0xf]
  %v6206 = vld [vmem:[%s0 + $0x84] sm:$0xf]
  %v6207 = vld [vmem:[%s0 + $0x88] sm:$0xf]
  %v6208 = vld [vmem:[%s0 + $0x8c] sm:$0xf]
  %v6209 = vld [vmem:[%s0 + $0x90] sm:$0xf]
  %v6210 = vld [vmem:[%s0 + $0x94] sm:$0xf]
  %v6211 = vld [vmem:[%s0 + $0x98] sm:$0x3]
  %v6212 = vld [vmem:[%s0 + $0xac] sm:$0xc]
  %v6213 = vld [vmem:[%s0 + $0xb0] sm:$0xf]
  %v6214 = vld [vmem:[%s0 + $0xb4] sm:$0xf]
  %v6215 = vld [vmem:[%s0 + $0xb8] sm:$0xf]
  %v6216 = vld [vmem:[%s0 + $0xbc] sm:$0xf]
  %v6217 = vld [vmem:[%s0 + $0xc0] sm:$0xf]
  %v6218 = vld [vmem:[%s0 + $0xc4] sm:$0xf]
  %v6219 = vld [vmem:[%s0 + $0xc8] sm:$0xf]
  %v6220 = vld [vmem:[%s0 + $0xcc] sm:$0xf]
  %v6221 = vld [vmem:[%s0 + $0xd0] sm:$0xf]
  %v6222 = vld [vmem:[%s0 + $0xd4] sm:$0xf]
  %v6223 = vld [vmem:[%s0 + $0xd8] sm:$0xf]
  %v6224 = vld [vmem:[%s0 + $0xdc] sm:$0xf]
  %v6225 = vld [vmem:[%s0 + $0xe0] sm:$0xf]
  %v6226 = vld [vmem:[%s0 + $0xe4] sm:$0xf]
  %v6227 = vld [vmem:[%s0 + $0xe8] sm:$0xf]
  %v6228 = vld [vmem:[%s0 + $0xec] sm:$0xf]
  %v6229 = vld [vmem:[%s0 + $0xf0] sm:$0xf]
  %v6230 = vld [vmem:[%s0 + $0xf4] sm:$0xf]
  %v6231 = vld [vmem:[%s0 + $0xf8] sm:$0xf]
  %v6232 = vld [vmem:[%s0 + $0xfc] sm:$0xf]
  %v6233 = vld [vmem:[%s0 + $0x100] sm:$0xf]
  %v6234 = vld [vmem:[%s0 + $0x104] sm:$0xf]
  %v6235 = vld [vmem:[%s0 + $0x108] sm:$0xf]
  %v6236 = vld [vmem:[%s0 + $0x10c] sm:$0xf]
  %v6237 = vld [vmem:[%s0 + $0x110] sm:$0xf]
  %v6238 = vld [vmem:[%s0 + $0x114] sm:$0xf]
  %v6239 = vld [vmem:[%s0 + $0x118] sm:$0xf]
  %v6240 = vld [vmem:[%s0 + $0x11c] sm:$0xf]
  %v6241 = vld [vmem:[%s0 + $0x120] sm:$0xf]
  %v6242 = vld [vmem:[%s0 + $0x124] sm:$0xf]
  %v6243 = vld [vmem:[%s0 + $0x128] sm:$0xf]
  %v6244 = vld [vmem:[%s0 + $0x12c] sm:$0xf]
  %v6245 = vld [vmem:[%s0 + $0x130] sm:$0xf]
  %v6246 = vld [vmem:[%s0 + $0x134] sm:$0xf]
  %v6247 = vld [vmem:[%s0 + $0x138] sm:$0xf]
  %v6248 = vld [vmem:[%s0 + $0x13c] sm:$0x3]
  %vm6323 = vcmask 1041408
  %vm6324 = vcmask 1045508
  %vm6325 = vmor %vm6323, %vm6324
  %v6326 = vrot.slane %v6175, 6
  %v6327 = vrot.slane %v6326, 4
  %v6328 = vrot.slane %v6176, 6
  %v6329 = vsel %vm6325, %v6327, %v6328
  %v6330 = vrot.slane %v6328, 4
  %v6331 = vrot.slane %v6177, 6
  %v6332 = vsel %vm6325, %v6330, %v6331
  %v6333 = vrot.slane %v6331, 4
  %v6334 = vrot.slane %v6178, 6
  %v6335 = vsel %vm6325, %v6333, %v6334
  %v6336 = vrot.slane %v6334, 4
  %v6337 = vrot.slane %v6179, 6
  %v6338 = vsel %vm6325, %v6336, %v6337
  %v6339 = vrot.slane %v6337, 4
  %v6340 = vrot.slane %v6180, 6
  %v6341 = vsel %vm6325, %v6339, %v6340
  %v6342 = vrot.slane %v6340, 4
  %v6343 = vrot.slane %v6181, 6
  %v6344 = vsel %vm6325, %v6342, %v6343
  %v6345 = vrot.slane %v6343, 4
  %v6346 = vrot.slane %v6182, 6
  %v6347 = vsel %vm6325, %v6345, %v6346
  %v6348 = vrot.slane %v6346, 4
  %v6349 = vrot.slane %v6183, 6
  %v6350 = vsel %vm6325, %v6348, %v6349
  %v6351 = vrot.slane %v6349, 4
  %v6352 = vrot.slane %v6184, 6
  %v6353 = vsel %vm6325, %v6351, %v6352
  %v6354 = vrot.slane %v6352, 4
  %v6355 = vrot.slane %v6185, 6
  %v6356 = vsel %vm6325, %v6354, %v6355
  %v6357 = vrot.slane %v6355, 4
  %v6358 = vrot.slane %v6186, 6
  %v6359 = vsel %vm6325, %v6357, %v6358
  %v6360 = vrot.slane %v6358, 4
  %v6361 = vrot.slane %v6187, 6
  %v6362 = vsel %vm6325, %v6360, %v6361
  %v6363 = vrot.slane %v6361, 4
  %v6364 = vrot.slane %v6188, 6
  %v6365 = vsel %vm6325, %v6363, %v6364
  %v6366 = vrot.slane %v6364, 4
  %v6367 = vrot.slane %v6189, 6
  %v6368 = vsel %vm6325, %v6366, %v6367
  %v6369 = vrot.slane %v6367, 4
  %v6370 = vrot.slane %v6190, 6
  %v6371 = vsel %vm6325, %v6369, %v6370
  %v6372 = vrot.slane %v6370, 4
  %v6373 = vrot.slane %v6191, 6
  %v6374 = vsel %vm6325, %v6372, %v6373
  %v6375 = vrot.slane %v6373, 4
  %v6376 = vrot.slane %v6192, 6
  %v6377 = vsel %vm6325, %v6375, %v6376
  %v6378 = vrot.slane %v6376, 4
  %v6379 = vrot.slane %v6193, 6
  %v6380 = vsel %vm6325, %v6378, %v6379
  %v6381 = vrot.slane %v6379, 4
  %v6382 = vrot.slane %v6194, 6
  %v6383 = vsel %vm6325, %v6381, %v6382
  %v6384 = vrot.slane %v6382, 4
  %v6385 = vrot.slane %v6195, 6
  %v6386 = vsel %vm6325, %v6384, %v6385
  %v6387 = vrot.slane %v6385, 4
  %v6388 = vrot.slane %v6196, 6
  %v6389 = vsel %vm6325, %v6387, %v6388
  %v6390 = vrot.slane %v6388, 4
  %v6391 = vrot.slane %v6197, 6
  %v6392 = vsel %vm6325, %v6390, %v6391
  %v6393 = vrot.slane %v6391, 4
  %v6394 = vrot.slane %v6198, 6
  %v6395 = vsel %vm6325, %v6393, %v6394
  %v6396 = vrot.slane %v6394, 4
  %v6397 = vrot.slane %v6199, 6
  %v6398 = vsel %vm6325, %v6396, %v6397
  %v6399 = vrot.slane %v6397, 4
  %v6400 = vrot.slane %v6200, 6
  %v6401 = vsel %vm6325, %v6399, %v6400
  %v6402 = vrot.slane %v6400, 4
  %v6403 = vrot.slane %v6201, 6
  %v6404 = vsel %vm6325, %v6402, %v6403
  %v6405 = vrot.slane %v6403, 4
  %v6406 = vrot.slane %v6202, 6
  %v6407 = vsel %vm6325, %v6405, %v6406
  %v6408 = vrot.slane %v6406, 4
  %v6409 = vrot.slane %v6203, 6
  %v6410 = vsel %vm6325, %v6408, %v6409
  %v6411 = vrot.slane %v6409, 4
  %v6412 = vrot.slane %v6204, 6
  %v6413 = vsel %vm6325, %v6411, %v6412
  %v6414 = vrot.slane %v6412, 4
  %v6415 = vrot.slane %v6205, 6
  %v6416 = vsel %vm6325, %v6414, %v6415
  %v6417 = vrot.slane %v6415, 4
  %v6418 = vrot.slane %v6206, 6
  %v6419 = vsel %vm6325, %v6417, %v6418
  %v6420 = vrot.slane %v6418, 4
  %v6421 = vrot.slane %v6207, 6
  %v6422 = vsel %vm6325, %v6420, %v6421
  %v6423 = vrot.slane %v6421, 4
  %v6424 = vrot.slane %v6208, 6
  %v6425 = vsel %vm6325, %v6423, %v6424
  %v6426 = vrot.slane %v6424, 4
  %v6427 = vrot.slane %v6209, 6
  %v6428 = vsel %vm6325, %v6426, %v6427
  %v6429 = vrot.slane %v6427, 4
  %v6430 = vrot.slane %v6210, 6
  %v6431 = vsel %vm6325, %v6429, %v6430
  %v6432 = vrot.slane %v6430, 4
  %v6433 = vrot.slane %v6211, 6
  %v6434 = vsel %vm6325, %v6432, %v6433
  %v6435 = vrot.slane %v6212, 6
  %v6436 = vrot.slane %v6435, 4
  %v6437 = vrot.slane %v6213, 6
  %v6438 = vsel %vm6325, %v6436, %v6437
  %v6439 = vrot.slane %v6437, 4
  %v6440 = vrot.slane %v6214, 6
  %v6441 = vsel %vm6325, %v6439, %v6440
  %v6442 = vrot.slane %v6440, 4
  %v6443 = vrot.slane %v6215, 6
  %v6444 = vsel %vm6325, %v6442, %v6443
  %v6445 = vrot.slane %v6443, 4
  %v6446 = vrot.slane %v6216, 6
  %v6447 = vsel %vm6325, %v6445, %v6446
  %v6448 = vrot.slane %v6446, 4
  %v6449 = vrot.slane %v6217, 6
  %v6450 = vsel %vm6325, %v6448, %v6449
  %v6451 = vrot.slane %v6449, 4
  %v6452 = vrot.slane %v6218, 6
  %v6453 = vsel %vm6325, %v6451, %v6452
  %v6454 = vrot.slane %v6452, 4
  %v6455 = vrot.slane %v6219, 6
  %v6456 = vsel %vm6325, %v6454, %v6455
  %v6457 = vrot.slane %v6455, 4
  %v6458 = vrot.slane %v6220, 6
  %v6459 = vsel %vm6325, %v6457, %v6458
  %v6460 = vrot.slane %v6458, 4
  %v6461 = vrot.slane %v6221, 6
  %v6462 = vsel %vm6325, %v6460, %v6461
  %v6463 = vrot.slane %v6461, 4
  %v6464 = vrot.slane %v6222, 6
  %v6465 = vsel %vm6325, %v6463, %v6464
  %v6466 = vrot.slane %v6464, 4
  %v6467 = vrot.slane %v6223, 6
  %v6468 = vsel %vm6325, %v6466, %v6467
  %v6469 = vrot.slane %v6467, 4
  %v6470 = vrot.slane %v6224, 6
  %v6471 = vsel %vm6325, %v6469, %v6470
  %v6472 = vrot.slane %v6470, 4
  %v6473 = vrot.slane %v6225, 6
  %v6474 = vsel %vm6325, %v6472, %v6473
  %v6475 = vrot.slane %v6473, 4
  %v6476 = vrot.slane %v6226, 6
  %v6477 = vsel %vm6325, %v6475, %v6476
  %v6478 = vrot.slane %v6476, 4
  %v6479 = vrot.slane %v6227, 6
  %v6480 = vsel %vm6325, %v6478, %v6479
  %v6481 = vrot.slane %v6479, 4
  %v6482 = vrot.slane %v6228, 6
  %v6483 = vsel %vm6325, %v6481, %v6482
  %v6484 = vrot.slane %v6482, 4
  %v6485 = vrot.slane %v6229, 6
  %v6486 = vsel %vm6325, %v6484, %v6485
  %v6487 = vrot.slane %v6485, 4
  %v6488 = vrot.slane %v6230, 6
  %v6489 = vsel %vm6325, %v6487, %v6488
  %v6490 = vrot.slane %v6488, 4
  %v6491 = vrot.slane %v6231, 6
  %v6492 = vsel %vm6325, %v6490, %v6491
  %v6493 = vrot.slane %v6491, 4
  %v6494 = vrot.slane %v6232, 6
  %v6495 = vsel %vm6325, %v6493, %v6494
  %v6496 = vrot.slane %v6494, 4
  %v6497 = vrot.slane %v6233, 6
  %v6498 = vsel %vm6325, %v6496, %v6497
  %v6499 = vrot.slane %v6497, 4
  %v6500 = vrot.slane %v6234, 6
  %v6501 = vsel %vm6325, %v6499, %v6500
  %v6502 = vrot.slane %v6500, 4
  %v6503 = vrot.slane %v6235, 6
  %v6504 = vsel %vm6325, %v6502, %v6503
  %v6505 = vrot.slane %v6503, 4
  %v6506 = vrot.slane %v6236, 6
  %v6507 = vsel %vm6325, %v6505, %v6506
  %v6508 = vrot.slane %v6506, 4
  %v6509 = vrot.slane %v6237, 6
  %v6510 = vsel %vm6325, %v6508, %v6509
  %v6511 = vrot.slane %v6509, 4
  %v6512 = vrot.slane %v6238, 6
  %v6513 = vsel %vm6325, %v6511, %v6512
  %v6514 = vrot.slane %v6512, 4
  %v6515 = vrot.slane %v6239, 6
  %v6516 = vsel %vm6325, %v6514, %v6515
  %v6517 = vrot.slane %v6515, 4
  %v6518 = vrot.slane %v6240, 6
  %v6519 = vsel %vm6325, %v6517, %v6518
  %v6520 = vrot.slane %v6518, 4
  %v6521 = vrot.slane %v6241, 6
  %v6522 = vsel %vm6325, %v6520, %v6521
  %v6523 = vrot.slane %v6521, 4
  %v6524 = vrot.slane %v6242, 6
  %v6525 = vsel %vm6325, %v6523, %v6524
  %v6526 = vrot.slane %v6524, 4
  %v6527 = vrot.slane %v6243, 6
  %v6528 = vsel %vm6325, %v6526, %v6527
  %v6529 = vrot.slane %v6527, 4
  %v6530 = vrot.slane %v6244, 6
  %v6531 = vsel %vm6325, %v6529, %v6530
  %v6532 = vrot.slane %v6530, 4
  %v6533 = vrot.slane %v6245, 6
  %v6534 = vsel %vm6325, %v6532, %v6533
  %v6535 = vrot.slane %v6533, 4
  %v6536 = vrot.slane %v6246, 6
  %v6537 = vsel %vm6325, %v6535, %v6536
  %v6538 = vrot.slane %v6536, 4
  %v6539 = vrot.slane %v6247, 6
  %v6540 = vsel %vm6325, %v6538, %v6539
  %v6541 = vrot.slane %v6539, 4
  %v6542 = vrot.slane %v6248, 6
  %v6543 = vsel %vm6325, %v6541, %v6542
  %v6544 = vld [vmem:[%s1 + $0x8] sm:$0xc]
  %v6545 = vunpack.c.l.b16 %v6329
  %v6546 = vunpack.c.l.b16 %v6332
  %v6547 = vunpack.c.l.b16 %v6335
  %v6548 = vunpack.c.l.b16 %v6338
  %v6549 = vunpack.c.l.b16 %v6341
  %v6550 = vunpack.c.l.b16 %v6344
  %v6551 = vunpack.c.l.b16 %v6347
  %v6552 = vunpack.c.l.b16 %v6350
  %v6553 = vunpack.c.l.b16 %v6353
  %v6554 = vunpack.c.l.b16 %v6356
  %v6555 = vunpack.c.l.b16 %v6359
  %v6556 = vunpack.c.l.b16 %v6362
  %v6557 = vunpack.c.l.b16 %v6365
  %v6558 = vunpack.c.l.b16 %v6368
  %v6559 = vunpack.c.l.b16 %v6371
  %v6560 = vunpack.c.l.b16 %v6374
  %v6561 = vunpack.c.l.b16 %v6377
  %v6562 = vunpack.c.l.b16 %v6380
  %v6563 = vunpack.c.l.b16 %v6383
  %v6564 = vunpack.c.l.b16 %v6386
  %v6565 = vunpack.c.l.b16 %v6389
  %v6566 = vunpack.c.l.b16 %v6392
  %v6567 = vunpack.c.l.b16 %v6395
  %v6568 = vunpack.c.l.b16 %v6398
  %v6569 = vunpack.c.l.b16 %v6401
  %v6570 = vunpack.c.l.b16 %v6404
  %v6571 = vunpack.c.l.b16 %v6407
  %v6572 = vunpack.c.l.b16 %v6410
  %v6573 = vunpack.c.l.b16 %v6413
  %v6574 = vunpack.c.l.b16 %v6416
  %v6575 = vunpack.c.l.b16 %v6419
  %v6576 = vunpack.c.l.b16 %v6422
  %v6577 = vunpack.c.l.b16 %v6425
  %v6578 = vunpack.c.l.b16 %v6428
  %v6579 = vunpack.c.l.b16 %v6431
  %v6580 = vunpack.c.l.b16 %v6434
  %v6581 = vunpack.c.l.b16 %v6438
  %v6582 = vunpack.c.l.b16 %v6441
  %v6583 = vunpack.c.l.b16 %v6444
  %v6584 = vunpack.c.l.b16 %v6447
  %v6585 = vunpack.c.l.b16 %v6450
  %v6586 = vunpack.c.l.b16 %v6453
  %v6587 = vunpack.c.l.b16 %v6456
  %v6588 = vunpack.c.l.b16 %v6459
  %v6589 = vunpack.c.l.b16 %v6462
  %v6590 = vunpack.c.l.b16 %v6465
  %v6591 = vunpack.c.l.b16 %v6468
  %v6592 = vunpack.c.l.b16 %v6471
  %v6593 = vunpack.c.l.b16 %v6474
  %v6594 = vunpack.c.l.b16 %v6477
  %v6595 = vunpack.c.l.b16 %v6480
  %v6596 = vunpack.c.l.b16 %v6483
  %v6597 = vunpack.c.l.b16 %v6486
  %v6598 = vunpack.c.l.b16 %v6489
  %v6599 = vunpack.c.l.b16 %v6492
  %v6600 = vunpack.c.l.b16 %v6495
  %v6601 = vunpack.c.l.b16 %v6498
  %v6602 = vunpack.c.l.b16 %v6501
  %v6603 = vunpack.c.l.b16 %v6504
  %v6604 = vunpack.c.l.b16 %v6507
  %v6605 = vunpack.c.l.b16 %v6510
  %v6606 = vunpack.c.l.b16 %v6513
  %v6607 = vunpack.c.l.b16 %v6516
  %v6608 = vunpack.c.l.b16 %v6519
  %v6609 = vunpack.c.l.b16 %v6522
  %v6610 = vunpack.c.l.b16 %v6525
  %v6611 = vunpack.c.l.b16 %v6528
  %v6612 = vunpack.c.l.b16 %v6531
  %v6613 = vunpack.c.l.b16 %v6534
  %v6614 = vunpack.c.l.b16 %v6537
  %v6615 = vunpack.c.l.b16 %v6540
  %v6616 = vunpack.c.l.b16 %v6543
  %v6617 = vpack.c.b16 %v6546, %v6545
  %v6618 = vpack.c.b16 %v6548, %v6547
  %v6619 = vpack.c.b16 %v6550, %v6549
  %v6620 = vpack.c.b16 %v6552, %v6551
  %v6621 = vpack.c.b16 %v6554, %v6553
  %v6622 = vpack.c.b16 %v6556, %v6555
  %v6623 = vpack.c.b16 %v6558, %v6557
  %v6624 = vpack.c.b16 %v6560, %v6559
  %v6625 = vpack.c.b16 %v6562, %v6561
  %v6626 = vpack.c.b16 %v6564, %v6563
  %v6627 = vpack.c.b16 %v6566, %v6565
  %v6628 = vpack.c.b16 %v6568, %v6567
  %v6629 = vpack.c.b16 %v6570, %v6569
  %v6630 = vpack.c.b16 %v6572, %v6571
  %v6631 = vpack.c.b16 %v6574, %v6573
  %v6632 = vpack.c.b16 %v6576, %v6575
  %v6633 = vpack.c.b16 %v6578, %v6577
  %v6634 = vpack.c.b16 %v6580, %v6579
  %v6635 = vpack.c.b16 %v6582, %v6581
  %v6636 = vpack.c.b16 %v6584, %v6583
  %v6637 = vpack.c.b16 %v6586, %v6585
  %v6638 = vpack.c.b16 %v6588, %v6587
  %v6639 = vpack.c.b16 %v6590, %v6589
  %v6640 = vpack.c.b16 %v6592, %v6591
  %v6641 = vpack.c.b16 %v6594, %v6593
  %v6642 = vpack.c.b16 %v6596, %v6595
  %v6643 = vpack.c.b16 %v6598, %v6597
  %v6644 = vpack.c.b16 %v6600, %v6599
  %v6645 = vpack.c.b16 %v6602, %v6601
  %v6646 = vpack.c.b16 %v6604, %v6603
  %v6647 = vpack.c.b16 %v6606, %v6605
  %v6648 = vpack.c.b16 %v6608, %v6607
  %v6649 = vpack.c.b16 %v6610, %v6609
  %v6650 = vpack.c.b16 %v6612, %v6611
  %v6651 = vpack.c.b16 %v6614, %v6613
  %v6652 = vpack.c.b16 %v6616, %v6615
  %v6654 = vunpack.c.l.b16 %v6544
  %v6655 = vpack.c.b16 %v6654, %v6654
  %v6656 = vrot.slane %v6655, 2
  %v6658 = vsel %vm280, %v6617, 0
  %v6661 = vsel %vm280, %v6618, 0
  %v6664 = vsel %vm280, %v6619, 0
  %v6667 = vsel %vm280, %v6620, 0
  %v6670 = vsel %vm280, %v6621, 0
  %v6673 = vsel %vm280, %v6622, 0
  %v6676 = vsel %vm280, %v6623, 0
  %v6679 = vsel %vm280, %v6624, 0
  %v6682 = vsel %vm280, %v6625, 0
  %v6685 = vsel %vm280, %v6626, 0
  %v6688 = vsel %vm280, %v6627, 0
  %v6691 = vsel %vm280, %v6628, 0
  %v6694 = vsel %vm280, %v6629, 0
  %v6697 = vsel %vm280, %v6630, 0
  %v6700 = vsel %vm280, %v6631, 0
  %v6703 = vsel %vm280, %v6632, 0
  %v6706 = vsel %vm280, %v6633, 0
  %v6709 = vsel %vm280, %v6634, 0
  %v6712 = vsel %vm280, %v6635, 0
  %v6715 = vsel %vm280, %v6636, 0
  %v6718 = vsel %vm280, %v6637, 0
  %v6721 = vsel %vm280, %v6638, 0
  %v6724 = vsel %vm280, %v6639, 0
  %v6727 = vsel %vm280, %v6640, 0
  %v6730 = vsel %vm280, %v6641, 0
  %v6733 = vsel %vm280, %v6642, 0
  %v6736 = vsel %vm280, %v6643, 0
  %v6739 = vsel %vm280, %v6644, 0
  %v6742 = vsel %vm280, %v6645, 0
  %v6745 = vsel %vm280, %v6646, 0
  %v6748 = vsel %vm280, %v6647, 0
  %v6751 = vsel %vm280, %v6648, 0
  %v6754 = vsel %vm280, %v6649, 0
  %v6757 = vsel %vm280, %v6650, 0
  %v6760 = vsel %vm280, %v6651, 0
  %v6763 = vsel %vm280, %v6652, 0
  %v6766 = vsel %vm389, %v6656, 0
  %6768 = vmatprep.subr.bf16.mxu0 0
  %6769 = vmatpush1.bf16.msra.mxu0 0
  %6770 = vmatprep.subr.bf16.mxu0 0
  %6771 = vmatpush1.bf16.msra.mxu0 0
  %6772 = vmatprep.subr.bf16.mxu0 0
  %6773 = vmatpush1.bf16.msra.mxu0 0
  %6774 = vmatprep.subr.bf16.mxu0 0
  %6775 = vmatpush1.bf16.msra.mxu0 0
  %6776 = vmatprep.subr.bf16.mxu0 0
  %6777 = vmatpush1.bf16.msra.mxu0 0
  %6778 = vmatprep.subr.bf16.mxu0 0
  %6779 = vmatpush1.bf16.msra.mxu0 0
  %6780 = vmatprep.subr.bf16.mxu0 0
  %6781 = vmatpush1.bf16.msra.mxu0 0
  %6782 = vmatprep.subr.bf16.mxu0 0
  %6783 = vmatpush1.bf16.msra.mxu0 %v6766
  %6784 = vmatprep.subr.bf16.mxu0 0
  %6785 = vmatpush2.bf16.msra.mxu0 0
  %6786 = vmatprep.subr.bf16.mxu0 0
  %6787 = vmatpush2.bf16.msra.mxu0 0
  %6788 = vmatprep.subr.bf16.mxu0 0
  %6789 = vmatpush2.bf16.msra.mxu0 0
  %6790 = vmatprep.subr.bf16.mxu0 0
  %6791 = vmatpush2.bf16.msra.mxu0 0
  %6792 = vmatprep.subr.bf16.mxu0 0
  %6793 = vmatpush2.bf16.msra.mxu0 0
  %6794 = vmatprep.subr.bf16.mxu0 0
  %6795 = vmatpush2.bf16.msra.mxu0 0
  %6796 = vmatprep.subr.bf16.mxu0 0
  %6797 = vmatpush2.bf16.msra.mxu0 0
  %6798 = vmatprep.subr.bf16.mxu0 0
  %6799 = vmatpush2.bf16.msra.mxu0 0
  %6800 = vmatprep.mubr.bf16.mxu0 0
  %6801 = vmatmul.mubr.bf16.gmra.mxu0 %v6658
  %v6802 = vpop.f32.mrf.mxu0
  %v6803 = vadd.f32 0.0, %v6802
  %v6804 = vpop.f32.mrf.mxu0
  %v6805 = vpop.f32.mrf.mxu0
  %v6806 = vadd.f32 0.0, %v6805
  %v6807 = vpop.f32.mrf.mxu0
  %6808 = vmatprep.mubr.bf16.mxu0 0
  %6809 = vmatmul.mubr.bf16.gmra.mxu0 %v6661
  %v6810 = vpop.f32.mrf.mxu0
  %v6811 = vadd.f32 0.0, %v6810
  %v6812 = vpop.f32.mrf.mxu0
  %v6813 = vpop.f32.mrf.mxu0
  %v6814 = vadd.f32 0.0, %v6813
  %v6815 = vpop.f32.mrf.mxu0
  %6816 = vmatprep.mubr.bf16.mxu0 0
  %6817 = vmatmul.mubr.bf16.gmra.mxu0 %v6664
  %v6818 = vpop.f32.mrf.mxu0
  %v6819 = vadd.f32 0.0, %v6818
  %v6820 = vpop.f32.mrf.mxu0
  %v6821 = vpop.f32.mrf.mxu0
  %v6822 = vadd.f32 0.0, %v6821
  %v6823 = vpop.f32.mrf.mxu0
  %6824 = vmatprep.mubr.bf16.mxu0 0
  %6825 = vmatmul.mubr.bf16.gmra.mxu0 %v6667
  %v6826 = vpop.f32.mrf.mxu0
  %v6827 = vadd.f32 0.0, %v6826
  %v6828 = vpop.f32.mrf.mxu0
  %v6829 = vpop.f32.mrf.mxu0
  %v6830 = vadd.f32 0.0, %v6829
  %v6831 = vpop.f32.mrf.mxu0
  %6832 = vmatprep.mubr.bf16.mxu0 0
  %6833 = vmatmul.mubr.bf16.gmra.mxu0 %v6670
  %v6834 = vpop.f32.mrf.mxu0
  %v6835 = vadd.f32 0.0, %v6834
  %v6836 = vpop.f32.mrf.mxu0
  %v6837 = vpop.f32.mrf.mxu0
  %v6838 = vadd.f32 0.0, %v6837
  %v6839 = vpop.f32.mrf.mxu0
  %6840 = vmatprep.mubr.bf16.mxu0 0
  %6841 = vmatmul.mubr.bf16.gmra.mxu0 %v6673
  %v6842 = vpop.f32.mrf.mxu0
  %v6843 = vadd.f32 0.0, %v6842
  %v6844 = vpop.f32.mrf.mxu0
  %v6845 = vpop.f32.mrf.mxu0
  %v6846 = vadd.f32 0.0, %v6845
  %v6847 = vpop.f32.mrf.mxu0
  %6848 = vmatprep.mubr.bf16.mxu0 0
  %6849 = vmatmul.mubr.bf16.gmra.mxu0 %v6676
  %v6850 = vpop.f32.mrf.mxu0
  %v6851 = vadd.f32 0.0, %v6850
  %v6852 = vpop.f32.mrf.mxu0
  %v6853 = vpop.f32.mrf.mxu0
  %v6854 = vadd.f32 0.0, %v6853
  %v6855 = vpop.f32.mrf.mxu0
  %6856 = vmatprep.mubr.bf16.mxu0 0
  %6857 = vmatmul.mubr.bf16.gmra.mxu0 %v6679
  %v6858 = vpop.f32.mrf.mxu0
  %v6859 = vadd.f32 0.0, %v6858
  %v6860 = vpop.f32.mrf.mxu0
  %v6861 = vpop.f32.mrf.mxu0
  %v6862 = vadd.f32 0.0, %v6861
  %v6863 = vpop.f32.mrf.mxu0
  %6864 = vmatprep.mubr.bf16.mxu0 0
  %6865 = vmatmul.mubr.bf16.gmra.mxu0 %v6682
  %v6866 = vpop.f32.mrf.mxu0
  %v6867 = vadd.f32 0.0, %v6866
  %v6868 = vpop.f32.mrf.mxu0
  %v6869 = vpop.f32.mrf.mxu0
  %v6870 = vadd.f32 0.0, %v6869
  %v6871 = vpop.f32.mrf.mxu0
  %6872 = vmatprep.mubr.bf16.mxu0 0
  %6873 = vmatmul.mubr.bf16.gmra.mxu0 %v6685
  %v6874 = vpop.f32.mrf.mxu0
  %v6875 = vadd.f32 0.0, %v6874
  %v6876 = vpop.f32.mrf.mxu0
  %v6877 = vpop.f32.mrf.mxu0
  %v6878 = vadd.f32 0.0, %v6877
  %v6879 = vpop.f32.mrf.mxu0
  %6880 = vmatprep.mubr.bf16.mxu0 0
  %6881 = vmatmul.mubr.bf16.gmra.mxu0 %v6688
  %v6882 = vpop.f32.mrf.mxu0
  %v6883 = vadd.f32 0.0, %v6882
  %v6884 = vpop.f32.mrf.mxu0
  %v6885 = vpop.f32.mrf.mxu0
  %v6886 = vadd.f32 0.0, %v6885
  %v6887 = vpop.f32.mrf.mxu0
  %6888 = vmatprep.mubr.bf16.mxu0 0
  %6889 = vmatmul.mubr.bf16.gmra.mxu0 %v6691
  %v6890 = vpop.f32.mrf.mxu0
  %v6891 = vadd.f32 0.0, %v6890
  %v6892 = vpop.f32.mrf.mxu0
  %v6893 = vpop.f32.mrf.mxu0
  %v6894 = vadd.f32 0.0, %v6893
  %v6895 = vpop.f32.mrf.mxu0
  %6896 = vmatprep.mubr.bf16.mxu0 0
  %6897 = vmatmul.mubr.bf16.gmra.mxu0 %v6694
  %v6898 = vpop.f32.mrf.mxu0
  %v6899 = vadd.f32 0.0, %v6898
  %v6900 = vpop.f32.mrf.mxu0
  %v6901 = vpop.f32.mrf.mxu0
  %v6902 = vadd.f32 0.0, %v6901
  %v6903 = vpop.f32.mrf.mxu0
  %6904 = vmatprep.mubr.bf16.mxu0 0
  %6905 = vmatmul.mubr.bf16.gmra.mxu0 %v6697
  %v6906 = vpop.f32.mrf.mxu0
  %v6907 = vadd.f32 0.0, %v6906
  %v6908 = vpop.f32.mrf.mxu0
  %v6909 = vpop.f32.mrf.mxu0
  %v6910 = vadd.f32 0.0, %v6909
  %v6911 = vpop.f32.mrf.mxu0
  %6912 = vmatprep.mubr.bf16.mxu0 0
  %6913 = vmatmul.mubr.bf16.gmra.mxu0 %v6700
  %v6914 = vpop.f32.mrf.mxu0
  %v6915 = vadd.f32 0.0, %v6914
  %v6916 = vpop.f32.mrf.mxu0
  %v6917 = vpop.f32.mrf.mxu0
  %v6918 = vadd.f32 0.0, %v6917
  %v6919 = vpop.f32.mrf.mxu0
  %6920 = vmatprep.mubr.bf16.mxu0 0
  %6921 = vmatmul.mubr.bf16.gmra.mxu0 %v6703
  %v6922 = vpop.f32.mrf.mxu0
  %v6923 = vadd.f32 0.0, %v6922
  %v6924 = vpop.f32.mrf.mxu0
  %v6925 = vpop.f32.mrf.mxu0
  %v6926 = vadd.f32 0.0, %v6925
  %v6927 = vpop.f32.mrf.mxu0
  %6928 = vmatprep.mubr.bf16.mxu0 0
  %6929 = vmatmul.mubr.bf16.gmra.mxu0 %v6706
  %v6930 = vpop.f32.mrf.mxu0
  %v6931 = vadd.f32 0.0, %v6930
  %v6932 = vpop.f32.mrf.mxu0
  %v6933 = vpop.f32.mrf.mxu0
  %v6934 = vadd.f32 0.0, %v6933
  %v6935 = vpop.f32.mrf.mxu0
  %6936 = vmatprep.mubr.bf16.mxu0 0
  %6937 = vmatmul.mubr.bf16.gmra.mxu0 %v6709
  %v6938 = vpop.f32.mrf.mxu0
  %v6939 = vadd.f32 0.0, %v6938
  %v6940 = vpop.f32.mrf.mxu0
  %v6941 = vpop.f32.mrf.mxu0
  %v6942 = vadd.f32 0.0, %v6941
  %v6943 = vpop.f32.mrf.mxu0
  %6944 = vmatprep.mubr.bf16.mxu0 0
  %6945 = vmatmul.mubr.bf16.gmra.mxu0 %v6712
  %v6946 = vpop.f32.mrf.mxu0
  %v6947 = vadd.f32 0.0, %v6946
  %v6948 = vpop.f32.mrf.mxu0
  %v6949 = vpop.f32.mrf.mxu0
  %v6950 = vadd.f32 0.0, %v6949
  %v6951 = vpop.f32.mrf.mxu0
  %6952 = vmatprep.mubr.bf16.mxu0 0
  %6953 = vmatmul.mubr.bf16.gmra.mxu0 %v6715
  %v6954 = vpop.f32.mrf.mxu0
  %v6955 = vadd.f32 0.0, %v6954
  %v6956 = vpop.f32.mrf.mxu0
  %v6957 = vpop.f32.mrf.mxu0
  %v6958 = vadd.f32 0.0, %v6957
  %v6959 = vpop.f32.mrf.mxu0
  %6960 = vmatprep.mubr.bf16.mxu0 0
  %6961 = vmatmul.mubr.bf16.gmra.mxu0 %v6718
  %v6962 = vpop.f32.mrf.mxu0
  %v6963 = vadd.f32 0.0, %v6962
  %v6964 = vpop.f32.mrf.mxu0
  %v6965 = vpop.f32.mrf.mxu0
  %v6966 = vadd.f32 0.0, %v6965
  %v6967 = vpop.f32.mrf.mxu0
  %6968 = vmatprep.mubr.bf16.mxu0 0
  %6969 = vmatmul.mubr.bf16.gmra.mxu0 %v6721
  %v6970 = vpop.f32.mrf.mxu0
  %v6971 = vadd.f32 0.0, %v6970
  %v6972 = vpop.f32.mrf.mxu0
  %v6973 = vpop.f32.mrf.mxu0
  %v6974 = vadd.f32 0.0, %v6973
  %v6975 = vpop.f32.mrf.mxu0
  %6976 = vmatprep.mubr.bf16.mxu0 0
  %6977 = vmatmul.mubr.bf16.gmra.mxu0 %v6724
  %v6978 = vpop.f32.mrf.mxu0
  %v6979 = vadd.f32 0.0, %v6978
  %v6980 = vpop.f32.mrf.mxu0
  %v6981 = vpop.f32.mrf.mxu0
  %v6982 = vadd.f32 0.0, %v6981
  %v6983 = vpop.f32.mrf.mxu0
  %6984 = vmatprep.mubr.bf16.mxu0 0
  %6985 = vmatmul.mubr.bf16.gmra.mxu0 %v6727
  %v6986 = vpop.f32.mrf.mxu0
  %v6987 = vadd.f32 0.0, %v6986
  %v6988 = vpop.f32.mrf.mxu0
  %v6989 = vpop.f32.mrf.mxu0
  %v6990 = vadd.f32 0.0, %v6989
  %v6991 = vpop.f32.mrf.mxu0
  %6992 = vmatprep.mubr.bf16.mxu0 0
  %6993 = vmatmul.mubr.bf16.gmra.mxu0 %v6730
  %v6994 = vpop.f32.mrf.mxu0
  %v6995 = vadd.f32 0.0, %v6994
  %v6996 = vpop.f32.mrf.mxu0
  %v6997 = vpop.f32.mrf.mxu0
  %v6998 = vadd.f32 0.0, %v6997
  %v6999 = vpop.f32.mrf.mxu0
  %7000 = vmatprep.mubr.bf16.mxu0 0
  %7001 = vmatmul.mubr.bf16.gmra.mxu0 %v6733
  %v7002 = vpop.f32.mrf.mxu0
  %v7003 = vadd.f32 0.0, %v7002
  %v7004 = vpop.f32.mrf.mxu0
  %v7005 = vpop.f32.mrf.mxu0
  %v7006 = vadd.f32 0.0, %v7005
  %v7007 = vpop.f32.mrf.mxu0
  %7008 = vmatprep.mubr.bf16.mxu0 0
  %7009 = vmatmul.mubr.bf16.gmra.mxu0 %v6736
  %v7010 = vpop.f32.mrf.mxu0
  %v7011 = vadd.f32 0.0, %v7010
  %v7012 = vpop.f32.mrf.mxu0
  %v7013 = vpop.f32.mrf.mxu0
  %v7014 = vadd.f32 0.0, %v7013
  %v7015 = vpop.f32.mrf.mxu0
  %7016 = vmatprep.mubr.bf16.mxu0 0
  %7017 = vmatmul.mubr.bf16.gmra.mxu0 %v6739
  %v7018 = vpop.f32.mrf.mxu0
  %v7019 = vadd.f32 0.0, %v7018
  %v7020 = vpop.f32.mrf.mxu0
  %v7021 = vpop.f32.mrf.mxu0
  %v7022 = vadd.f32 0.0, %v7021
  %v7023 = vpop.f32.mrf.mxu0
  %7024 = vmatprep.mubr.bf16.mxu0 0
  %7025 = vmatmul.mubr.bf16.gmra.mxu0 %v6742
  %v7026 = vpop.f32.mrf.mxu0
  %v7027 = vadd.f32 0.0, %v7026
  %v7028 = vpop.f32.mrf.mxu0
  %v7029 = vpop.f32.mrf.mxu0
  %v7030 = vadd.f32 0.0, %v7029
  %v7031 = vpop.f32.mrf.mxu0
  %7032 = vmatprep.mubr.bf16.mxu0 0
  %7033 = vmatmul.mubr.bf16.gmra.mxu0 %v6745
  %v7034 = vpop.f32.mrf.mxu0
  %v7035 = vadd.f32 0.0, %v7034
  %v7036 = vpop.f32.mrf.mxu0
  %v7037 = vpop.f32.mrf.mxu0
  %v7038 = vadd.f32 0.0, %v7037
  %v7039 = vpop.f32.mrf.mxu0
  %7040 = vmatprep.mubr.bf16.mxu0 0
  %7041 = vmatmul.mubr.bf16.gmra.mxu0 %v6748
  %v7042 = vpop.f32.mrf.mxu0
  %v7043 = vadd.f32 0.0, %v7042
  %v7044 = vpop.f32.mrf.mxu0
  %v7045 = vpop.f32.mrf.mxu0
  %v7046 = vadd.f32 0.0, %v7045
  %v7047 = vpop.f32.mrf.mxu0
  %7048 = vmatprep.mubr.bf16.mxu0 0
  %7049 = vmatmul.mubr.bf16.gmra.mxu0 %v6751
  %v7050 = vpop.f32.mrf.mxu0
  %v7051 = vadd.f32 0.0, %v7050
  %v7052 = vpop.f32.mrf.mxu0
  %v7053 = vpop.f32.mrf.mxu0
  %v7054 = vadd.f32 0.0, %v7053
  %v7055 = vpop.f32.mrf.mxu0
  %7056 = vmatprep.mubr.bf16.mxu0 0
  %7057 = vmatmul.mubr.bf16.gmra.mxu0 %v6754
  %v7058 = vpop.f32.mrf.mxu0
  %v7059 = vadd.f32 0.0, %v7058
  %v7060 = vpop.f32.mrf.mxu0
  %v7061 = vpop.f32.mrf.mxu0
  %v7062 = vadd.f32 0.0, %v7061
  %v7063 = vpop.f32.mrf.mxu0
  %7064 = vmatprep.mubr.bf16.mxu0 0
  %7065 = vmatmul.mubr.bf16.gmra.mxu0 %v6757
  %v7066 = vpop.f32.mrf.mxu0
  %v7067 = vadd.f32 0.0, %v7066
  %v7068 = vpop.f32.mrf.mxu0
  %v7069 = vpop.f32.mrf.mxu0
  %v7070 = vadd.f32 0.0, %v7069
  %v7071 = vpop.f32.mrf.mxu0
  %7072 = vmatprep.mubr.bf16.mxu0 0
  %7073 = vmatmul.mubr.bf16.gmra.mxu0 %v6760
  %v7074 = vpop.f32.mrf.mxu0
  %v7075 = vadd.f32 0.0, %v7074
  %v7076 = vpop.f32.mrf.mxu0
  %v7077 = vpop.f32.mrf.mxu0
  %v7078 = vadd.f32 0.0, %v7077
  %v7079 = vpop.f32.mrf.mxu0
  %7080 = vmatprep.mubr.bf16.mxu0 0
  %7081 = vmatmul.mubr.bf16.gmra.mxu0 %v6763
  %v7082 = vpop.f32.mrf.mxu0
  %v7083 = vadd.f32 0.0, %v7082
  %v7084 = vpop.f32.mrf.mxu0
  %v7085 = vpop.f32.mrf.mxu0
  %v7086 = vadd.f32 0.0, %v7085
  %v7087 = vpop.f32.mrf.mxu0
  %7088 = vdwg.mxu0
  %v7089 = vld [vmem:[#allocation2] sm:$0xff]
  %v7090 = vld [vmem:[#allocation2 + $0x8] sm:$0xff]
  %v7091 = vld [vmem:[#allocation2 + $0x10] sm:$0xff]
  %v7092 = vld [vmem:[#allocation2 + $0x18] sm:$0xff]
  %v7093 = vld [vmem:[#allocation2 + $0x20] sm:$0xff]
  %v7094 = vld [vmem:[#allocation2 + $0x28] sm:$0xff]
  %v7095 = vld [vmem:[#allocation2 + $0x30] sm:$0xff]
  %v7096 = vld [vmem:[#allocation2 + $0x38] sm:$0xff]
  %v7097 = vld [vmem:[#allocation2 + $0x40] sm:$0xff]
  %v7098 = vld [vmem:[#allocation2 + $0x48] sm:$0xff]
  %v7099 = vld [vmem:[#allocation2 + $0x50] sm:$0xff]
  %v7100 = vld [vmem:[#allocation2 + $0x58] sm:$0xff]
  %v7101 = vld [vmem:[#allocation2 + $0x60] sm:$0xff]
  %v7102 = vld [vmem:[#allocation2 + $0x68] sm:$0xff]
  %v7103 = vld [vmem:[#allocation2 + $0x70] sm:$0xff]
  %v7104 = vld [vmem:[#allocation2 + $0x78] sm:$0xff]
  %v7105 = vld [vmem:[#allocation2 + $0x80] sm:$0xff]
  %v7106 = vld [vmem:[#allocation2 + $0x88] sm:$0xff]
  %v7107 = vld [vmem:[#allocation2 + $0x90] sm:$0xff]
  %v7108 = vld [vmem:[#allocation2 + $0x98] sm:$0xff]
  %v7109 = vld [vmem:[#allocation2 + $0xa0] sm:$0xff]
  %v7110 = vld [vmem:[#allocation2 + $0xa8] sm:$0xff]
  %v7111 = vld [vmem:[#allocation2 + $0xb0] sm:$0xff]
  %v7112 = vld [vmem:[#allocation2 + $0xb8] sm:$0xff]
  %v7113 = vld [vmem:[#allocation2 + $0xc0] sm:$0xff]
  %v7114 = vld [vmem:[#allocation2 + $0xc8] sm:$0xff]
  %v7115 = vld [vmem:[#allocation2 + $0xd0] sm:$0xff]
  %v7116 = vld [vmem:[#allocation2 + $0xd8] sm:$0xff]
  %v7117 = vld [vmem:[#allocation2 + $0xe0] sm:$0xff]
  %v7118 = vld [vmem:[#allocation2 + $0xe8] sm:$0xff]
  %v7119 = vld [vmem:[#allocation2 + $0xf0] sm:$0xff]
  %v7120 = vld [vmem:[#allocation2 + $0xf8] sm:$0xff]
  %v7121 = vld [vmem:[#allocation2 + $0x100] sm:$0xff]
  %v7122 = vld [vmem:[#allocation2 + $0x108] sm:$0xff]
  %v7123 = vld [vmem:[#allocation2 + $0x110] sm:$0xff]
  %v7124 = vld [vmem:[#allocation2 + $0x118] sm:$0xff]
  %v7125 = vld [vmem:[#allocation2 + $0x120] sm:$0xff]
  %v7126 = vld [vmem:[#allocation2 + $0x128] sm:$0xff]
  %v7127 = vld [vmem:[#allocation2 + $0x130] sm:$0xff]
  %v7128 = vld [vmem:[#allocation2 + $0x138] sm:$0xff]
  %v7129 = vld [vmem:[#allocation2 + $0x140] sm:$0xff]
  %v7130 = vld [vmem:[#allocation2 + $0x148] sm:$0xff]
  %v7131 = vld [vmem:[#allocation2 + $0x150] sm:$0xff]
  %v7132 = vld [vmem:[#allocation2 + $0x158] sm:$0xff]
  %v7133 = vld [vmem:[#allocation2 + $0x160] sm:$0xff]
  %v7134 = vld [vmem:[#allocation2 + $0x168] sm:$0xff]
  %v7135 = vld [vmem:[#allocation2 + $0x170] sm:$0xff]
  %v7136 = vld [vmem:[#allocation2 + $0x178] sm:$0xff]
  %v7137 = vld [vmem:[#allocation2 + $0x180] sm:$0xff]
  %v7138 = vld [vmem:[#allocation2 + $0x188] sm:$0xff]
  %v7139 = vld [vmem:[#allocation2 + $0x190] sm:$0xff]
  %v7140 = vld [vmem:[#allocation2 + $0x198] sm:$0xff]
  %v7141 = vld [vmem:[#allocation2 + $0x1a0] sm:$0xff]
  %v7142 = vld [vmem:[#allocation2 + $0x1a8] sm:$0xff]
  %v7143 = vld [vmem:[#allocation2 + $0x1b0] sm:$0xff]
  %v7144 = vld [vmem:[#allocation2 + $0x1b8] sm:$0xff]
  %v7145 = vld [vmem:[#allocation2 + $0x1c0] sm:$0xff]
  %v7146 = vld [vmem:[#allocation2 + $0x1c8] sm:$0xff]
  %v7147 = vld [vmem:[#allocation2 + $0x1d0] sm:$0xff]
  %v7148 = vld [vmem:[#allocation2 + $0x1d8] sm:$0xff]
  %v7149 = vld [vmem:[#allocation2 + $0x1e0] sm:$0xff]
  %v7150 = vld [vmem:[#allocation2 + $0x1e8] sm:$0xff]
  %v7151 = vld [vmem:[#allocation2 + $0x1f0] sm:$0xff]
  %v7152 = vld [vmem:[#allocation2 + $0x1f8] sm:$0xff]
  %v7153 = vld [vmem:[#allocation2 + $0x200] sm:$0xff]
  %v7154 = vld [vmem:[#allocation2 + $0x208] sm:$0xff]
  %v7155 = vld [vmem:[#allocation2 + $0x210] sm:$0xff]
  %v7156 = vld [vmem:[#allocation2 + $0x218] sm:$0xff]
  %v7157 = vld [vmem:[#allocation2 + $0x220] sm:$0xff]
  %v7158 = vld [vmem:[#allocation2 + $0x228] sm:$0xff]
  %v7159 = vld [vmem:[#allocation2 + $0x230] sm:$0xff]
  %v7160 = vld [vmem:[#allocation2 + $0x238] sm:$0xff]
  %v7161 = vadd.f32 %v7089, %v6803
  %v7162 = vadd.f32 %v7090, %v6806
  %v7163 = vadd.f32 %v7091, %v6811
  %v7164 = vadd.f32 %v7092, %v6814
  %v7165 = vadd.f32 %v7093, %v6819
  %v7166 = vadd.f32 %v7094, %v6822
  %v7167 = vadd.f32 %v7095, %v6827
  %v7168 = vadd.f32 %v7096, %v6830
  %v7169 = vadd.f32 %v7097, %v6835
  %v7170 = vadd.f32 %v7098, %v6838
  %v7171 = vadd.f32 %v7099, %v6843
  %v7172 = vadd.f32 %v7100, %v6846
  %v7173 = vadd.f32 %v7101, %v6851
  %v7174 = vadd.f32 %v7102, %v6854
  %v7175 = vadd.f32 %v7103, %v6859
  %v7176 = vadd.f32 %v7104, %v6862
  %v7177 = vadd.f32 %v7105, %v6867
  %v7178 = vadd.f32 %v7106, %v6870
  %v7179 = vadd.f32 %v7107, %v6875
  %v7180 = vadd.f32 %v7108, %v6878
  %v7181 = vadd.f32 %v7109, %v6883
  %v7182 = vadd.f32 %v7110, %v6886
  %v7183 = vadd.f32 %v7111, %v6891
  %v7184 = vadd.f32 %v7112, %v6894
  %v7185 = vadd.f32 %v7113, %v6899
  %v7186 = vadd.f32 %v7114, %v6902
  %v7187 = vadd.f32 %v7115, %v6907
  %v7188 = vadd.f32 %v7116, %v6910
  %v7189 = vadd.f32 %v7117, %v6915
  %v7190 = vadd.f32 %v7118, %v6918
  %v7191 = vadd.f32 %v7119, %v6923
  %v7192 = vadd.f32 %v7120, %v6926
  %v7193 = vadd.f32 %v7121, %v6931
  %v7194 = vadd.f32 %v7122, %v6934
  %v7195 = vadd.f32 %v7123, %v6939
  %v7196 = vadd.f32 %v7124, %v6942
  %v7197 = vadd.f32 %v7125, %v6947
  %v7198 = vadd.f32 %v7126, %v6950
  %v7199 = vadd.f32 %v7127, %v6955
  %v7200 = vadd.f32 %v7128, %v6958
  %v7201 = vadd.f32 %v7129, %v6963
  %v7202 = vadd.f32 %v7130, %v6966
  %v7203 = vadd.f32 %v7131, %v6971
  %v7204 = vadd.f32 %v7132, %v6974
  %v7205 = vadd.f32 %v7133, %v6979
  %v7206 = vadd.f32 %v7134, %v6982
  %v7207 = vadd.f32 %v7135, %v6987
  %v7208 = vadd.f32 %v7136, %v6990
  %v7209 = vadd.f32 %v7137, %v6995
  %v7210 = vadd.f32 %v7138, %v6998
  %v7211 = vadd.f32 %v7139, %v7003
  %v7212 = vadd.f32 %v7140, %v7006
  %v7213 = vadd.f32 %v7141, %v7011
  %v7214 = vadd.f32 %v7142, %v7014
  %v7215 = vadd.f32 %v7143, %v7019
  %v7216 = vadd.f32 %v7144, %v7022
  %v7217 = vadd.f32 %v7145, %v7027
  %v7218 = vadd.f32 %v7146, %v7030
  %v7219 = vadd.f32 %v7147, %v7035
  %v7220 = vadd.f32 %v7148, %v7038
  %v7221 = vadd.f32 %v7149, %v7043
  %v7222 = vadd.f32 %v7150, %v7046
  %v7223 = vadd.f32 %v7151, %v7051
  %v7224 = vadd.f32 %v7152, %v7054
  %v7225 = vadd.f32 %v7153, %v7059
  %v7226 = vadd.f32 %v7154, %v7062
  %v7227 = vadd.f32 %v7155, %v7067
  %v7228 = vadd.f32 %v7156, %v7070
  %v7229 = vadd.f32 %v7157, %v7075
  %v7230 = vadd.f32 %v7158, %v7078
  %v7231 = vadd.f32 %v7159, %v7083
  %v7232 = vadd.f32 %v7160, %v7086
  %7233 = vst [vmem:[#allocation2] sm:$0xff] %v7161
  %7234 = vst [vmem:[#allocation2 + $0x8] sm:$0xff] %v7162
  %7235 = vst [vmem:[#allocation2 + $0x10] sm:$0xff] %v7163
  %7236 = vst [vmem:[#allocation2 + $0x18] sm:$0xff] %v7164
  %7237 = vst [vmem:[#allocation2 + $0x20] sm:$0xff] %v7165
  %7238 = vst [vmem:[#allocation2 + $0x28] sm:$0xff] %v7166
  %7239 = vst [vmem:[#allocation2 + $0x30] sm:$0xff] %v7167
  %7240 = vst [vmem:[#allocation2 + $0x38] sm:$0xff] %v7168
  %7241 = vst [vmem:[#allocation2 + $0x40] sm:$0xff] %v7169
  %7242 = vst [vmem:[#allocation2 + $0x48] sm:$0xff] %v7170
  %7243 = vst [vmem:[#allocation2 + $0x50] sm:$0xff] %v7171
  %7244 = vst [vmem:[#allocation2 + $0x58] sm:$0xff] %v7172
  %7245 = vst [vmem:[#allocation2 + $0x60] sm:$0xff] %v7173
  %7246 = vst [vmem:[#allocation2 + $0x68] sm:$0xff] %v7174
  %7247 = vst [vmem:[#allocation2 + $0x70] sm:$0xff] %v7175
  %7248 = vst [vmem:[#allocation2 + $0x78] sm:$0xff] %v7176
  %7249 = vst [vmem:[#allocation2 + $0x80] sm:$0xff] %v7177
  %7250 = vst [vmem:[#allocation2 + $0x88] sm:$0xff] %v7178
  %7251 = vst [vmem:[#allocation2 + $0x90] sm:$0xff] %v7179
  %7252 = vst [vmem:[#allocation2 + $0x98] sm:$0xff] %v7180
  %7253 = vst [vmem:[#allocation2 + $0xa0] sm:$0xff] %v7181
  %7254 = vst [vmem:[#allocation2 + $0xa8] sm:$0xff] %v7182
  %7255 = vst [vmem:[#allocation2 + $0xb0] sm:$0xff] %v7183
  %7256 = vst [vmem:[#allocation2 + $0xb8] sm:$0xff] %v7184
  %7257 = vst [vmem:[#allocation2 + $0xc0] sm:$0xff] %v7185
  %7258 = vst [vmem:[#allocation2 + $0xc8] sm:$0xff] %v7186
  %7259 = vst [vmem:[#allocation2 + $0xd0] sm:$0xff] %v7187
  %7260 = vst [vmem:[#allocation2 + $0xd8] sm:$0xff] %v7188
  %7261 = vst [vmem:[#allocation2 + $0xe0] sm:$0xff] %v7189
  %7262 = vst [vmem:[#allocation2 + $0xe8] sm:$0xff] %v7190
  %7263 = vst [vmem:[#allocation2 + $0xf0] sm:$0xff] %v7191
  %7264 = vst [vmem:[#allocation2 + $0xf8] sm:$0xff] %v7192
  %7265 = vst [vmem:[#allocation2 + $0x100] sm:$0xff] %v7193
  %7266 = vst [vmem:[#allocation2 + $0x108] sm:$0xff] %v7194
  %7267 = vst [vmem:[#allocation2 + $0x110] sm:$0xff] %v7195
  %7268 = vst [vmem:[#allocation2 + $0x118] sm:$0xff] %v7196
  %7269 = vst [vmem:[#allocation2 + $0x120] sm:$0xff] %v7197
  %7270 = vst [vmem:[#allocation2 + $0x128] sm:$0xff] %v7198
  %7271 = vst [vmem:[#allocation2 + $0x130] sm:$0xff] %v7199
  %7272 = vst [vmem:[#allocation2 + $0x138] sm:$0xff] %v7200
  %7273 = vst [vmem:[#allocation2 + $0x140] sm:$0xff] %v7201
  %7274 = vst [vmem:[#allocation2 + $0x148] sm:$0xff] %v7202
  %7275 = vst [vmem:[#allocation2 + $0x150] sm:$0xff] %v7203
  %7276 = vst [vmem:[#allocation2 + $0x158] sm:$0xff] %v7204
  %7277 = vst [vmem:[#allocation2 + $0x160] sm:$0xff] %v7205
  %7278 = vst [vmem:[#allocation2 + $0x168] sm:$0xff] %v7206
  %7279 = vst [vmem:[#allocation2 + $0x170] sm:$0xff] %v7207
  %7280 = vst [vmem:[#allocation2 + $0x178] sm:$0xff] %v7208
  %7281 = vst [vmem:[#allocation2 + $0x180] sm:$0xff] %v7209
  %7282 = vst [vmem:[#allocation2 + $0x188] sm:$0xff] %v7210
  %7283 = vst [vmem:[#allocation2 + $0x190] sm:$0xff] %v7211
  %7284 = vst [vmem:[#allocation2 + $0x198] sm:$0xff] %v7212
  %7285 = vst [vmem:[#allocation2 + $0x1a0] sm:$0xff] %v7213
  %7286 = vst [vmem:[#allocation2 + $0x1a8] sm:$0xff] %v7214
  %7287 = vst [vmem:[#allocation2 + $0x1b0] sm:$0xff] %v7215
  %7288 = vst [vmem:[#allocation2 + $0x1b8] sm:$0xff] %v7216
  %7289 = vst [vmem:[#allocation2 + $0x1c0] sm:$0xff] %v7217
  %7290 = vst [vmem:[#allocation2 + $0x1c8] sm:$0xff] %v7218
  %7291 = vst [vmem:[#allocation2 + $0x1d0] sm:$0xff] %v7219
  %7292 = vst [vmem:[#allocation2 + $0x1d8] sm:$0xff] %v7220
  %7293 = vst [vmem:[#allocation2 + $0x1e0] sm:$0xff] %v7221
  %7294 = vst [vmem:[#allocation2 + $0x1e8] sm:$0xff] %v7222
  %7295 = vst [vmem:[#allocation2 + $0x1f0] sm:$0xff] %v7223
  %7296 = vst [vmem:[#allocation2 + $0x1f8] sm:$0xff] %v7224
  %7297 = vst [vmem:[#allocation2 + $0x200] sm:$0xff] %v7225
  %7298 = vst [vmem:[#allocation2 + $0x208] sm:$0xff] %v7226
  %7299 = vst [vmem:[#allocation2 + $0x210] sm:$0xff] %v7227
  %7300 = vst [vmem:[#allocation2 + $0x218] sm:$0xff] %v7228
  %7301 = vst [vmem:[#allocation2 + $0x220] sm:$0xff] %v7229
  %7302 = vst [vmem:[#allocation2 + $0x228] sm:$0xff] %v7230
  %7303 = vst [vmem:[#allocation2 + $0x230] sm:$0xff] %v7231
  %7304 = vst [vmem:[#allocation2 + $0x238] sm:$0xff] %v7232
  %v7305 = vld [vmem:[%s0 + $0x10] sm:$0xc]
  %v7306 = vld [vmem:[%s0 + $0x14] sm:$0xf]
  %v7307 = vld [vmem:[%s0 + $0x18] sm:$0xf]
  %v7308 = vld [vmem:[%s0 + $0x1c] sm:$0xf]
  %v7309 = vld [vmem:[%s0 + $0x20] sm:$0xf]
  %v7310 = vld [vmem:[%s0 + $0x24] sm:$0xf]
  %v7311 = vld [vmem:[%s0 + $0x28] sm:$0xf]
  %v7312 = vld [vmem:[%s0 + $0x2c] sm:$0xf]
  %v7313 = vld [vmem:[%s0 + $0x30] sm:$0xf]
  %v7314 = vld [vmem:[%s0 + $0x34] sm:$0xf]
  %v7315 = vld [vmem:[%s0 + $0x38] sm:$0xf]
  %v7316 = vld [vmem:[%s0 + $0x3c] sm:$0xf]
  %v7317 = vld [vmem:[%s0 + $0x40] sm:$0xf]
  %v7318 = vld [vmem:[%s0 + $0x44] sm:$0xf]
  %v7319 = vld [vmem:[%s0 + $0x48] sm:$0xf]
  %v7320 = vld [vmem:[%s0 + $0x4c] sm:$0xf]
  %v7321 = vld [vmem:[%s0 + $0x50] sm:$0xf]
  %v7322 = vld [vmem:[%s0 + $0x54] sm:$0xf]
  %v7323 = vld [vmem:[%s0 + $0x58] sm:$0xf]
  %v7324 = vld [vmem:[%s0 + $0x5c] sm:$0xf]
  %v7325 = vld [vmem:[%s0 + $0x60] sm:$0xf]
  %v7326 = vld [vmem:[%s0 + $0x64] sm:$0xf]
  %v7327 = vld [vmem:[%s0 + $0x68] sm:$0xf]
  %v7328 = vld [vmem:[%s0 + $0x6c] sm:$0xf]
  %v7329 = vld [vmem:[%s0 + $0x70] sm:$0xf]
  %v7330 = vld [vmem:[%s0 + $0x74] sm:$0xf]
  %v7331 = vld [vmem:[%s0 + $0x78] sm:$0xf]
  %v7332 = vld [vmem:[%s0 + $0x7c] sm:$0xf]
  %v7333 = vld [vmem:[%s0 + $0x80] sm:$0xf]
  %v7334 = vld [vmem:[%s0 + $0x84] sm:$0xf]
  %v7335 = vld [vmem:[%s0 + $0x88] sm:$0xf]
  %v7336 = vld [vmem:[%s0 + $0x8c] sm:$0xf]
  %v7337 = vld [vmem:[%s0 + $0x90] sm:$0xf]
  %v7338 = vld [vmem:[%s0 + $0x94] sm:$0xf]
  %v7339 = vld [vmem:[%s0 + $0x98] sm:$0xf]
  %v7340 = vld [vmem:[%s0 + $0x9c] sm:$0xf]
  %v7341 = vld [vmem:[%s0 + $0xa0] sm:$0x3]
  %v7342 = vld [vmem:[%s0 + $0xb4] sm:$0xc]
  %v7343 = vld [vmem:[%s0 + $0xb8] sm:$0xf]
  %v7344 = vld [vmem:[%s0 + $0xbc] sm:$0xf]
  %v7345 = vld [vmem:[%s0 + $0xc0] sm:$0xf]
  %v7346 = vld [vmem:[%s0 + $0xc4] sm:$0xf]
  %v7347 = vld [vmem:[%s0 + $0xc8] sm:$0xf]
  %v7348 = vld [vmem:[%s0 + $0xcc] sm:$0xf]
  %v7349 = vld [vmem:[%s0 + $0xd0] sm:$0xf]
  %v7350 = vld [vmem:[%s0 + $0xd4] sm:$0xf]
  %v7351 = vld [vmem:[%s0 + $0xd8] sm:$0xf]
  %v7352 = vld [vmem:[%s0 + $0xdc] sm:$0xf]
  %v7353 = vld [vmem:[%s0 + $0xe0] sm:$0xf]
  %v7354 = vld [vmem:[%s0 + $0xe4] sm:$0xf]
  %v7355 = vld [vmem:[%s0 + $0xe8] sm:$0xf]
  %v7356 = vld [vmem:[%s0 + $0xec] sm:$0xf]
  %v7357 = vld [vmem:[%s0 + $0xf0] sm:$0xf]
  %v7358 = vld [vmem:[%s0 + $0xf4] sm:$0xf]
  %v7359 = vld [vmem:[%s0 + $0xf8] sm:$0xf]
  %v7360 = vld [vmem:[%s0 + $0xfc] sm:$0xf]
  %v7361 = vld [vmem:[%s0 + $0x100] sm:$0xf]
  %v7362 = vld [vmem:[%s0 + $0x104] sm:$0xf]
  %v7363 = vld [vmem:[%s0 + $0x108] sm:$0xf]
  %v7364 = vld [vmem:[%s0 + $0x10c] sm:$0xf]
  %v7365 = vld [vmem:[%s0 + $0x110] sm:$0xf]
  %v7366 = vld [vmem:[%s0 + $0x114] sm:$0xf]
  %v7367 = vld [vmem:[%s0 + $0x118] sm:$0xf]
  %v7368 = vld [vmem:[%s0 + $0x11c] sm:$0xf]
  %v7369 = vld [vmem:[%s0 + $0x120] sm:$0xf]
  %v7370 = vld [vmem:[%s0 + $0x124] sm:$0xf]
  %v7371 = vld [vmem:[%s0 + $0x128] sm:$0xf]
  %v7372 = vld [vmem:[%s0 + $0x12c] sm:$0xf]
  %v7373 = vld [vmem:[%s0 + $0x130] sm:$0xf]
  %v7374 = vld [vmem:[%s0 + $0x134] sm:$0xf]
  %v7375 = vld [vmem:[%s0 + $0x138] sm:$0xf]
  %v7376 = vld [vmem:[%s0 + $0x13c] sm:$0xf]
  %v7377 = vld [vmem:[%s0 + $0x140] sm:$0xf]
  %v7378 = vld [vmem:[%s0 + $0x144] sm:$0x3]
  %v7453 = vrot.slane %v7305, 6
  %v7454 = vrot.slane %v7453, 4
  %v7455 = vrot.slane %v7306, 6
  %v7456 = vsel %vm6325, %v7454, %v7455
  %v7457 = vrot.slane %v7455, 4
  %v7458 = vrot.slane %v7307, 6
  %v7459 = vsel %vm6325, %v7457, %v7458
  %v7460 = vrot.slane %v7458, 4
  %v7461 = vrot.slane %v7308, 6
  %v7462 = vsel %vm6325, %v7460, %v7461
  %v7463 = vrot.slane %v7461, 4
  %v7464 = vrot.slane %v7309, 6
  %v7465 = vsel %vm6325, %v7463, %v7464
  %v7466 = vrot.slane %v7464, 4
  %v7467 = vrot.slane %v7310, 6
  %v7468 = vsel %vm6325, %v7466, %v7467
  %v7469 = vrot.slane %v7467, 4
  %v7470 = vrot.slane %v7311, 6
  %v7471 = vsel %vm6325, %v7469, %v7470
  %v7472 = vrot.slane %v7470, 4
  %v7473 = vrot.slane %v7312, 6
  %v7474 = vsel %vm6325, %v7472, %v7473
  %v7475 = vrot.slane %v7473, 4
  %v7476 = vrot.slane %v7313, 6
  %v7477 = vsel %vm6325, %v7475, %v7476
  %v7478 = vrot.slane %v7476, 4
  %v7479 = vrot.slane %v7314, 6
  %v7480 = vsel %vm6325, %v7478, %v7479
  %v7481 = vrot.slane %v7479, 4
  %v7482 = vrot.slane %v7315, 6
  %v7483 = vsel %vm6325, %v7481, %v7482
  %v7484 = vrot.slane %v7482, 4
  %v7485 = vrot.slane %v7316, 6
  %v7486 = vsel %vm6325, %v7484, %v7485
  %v7487 = vrot.slane %v7485, 4
  %v7488 = vrot.slane %v7317, 6
  %v7489 = vsel %vm6325, %v7487, %v7488
  %v7490 = vrot.slane %v7488, 4
  %v7491 = vrot.slane %v7318, 6
  %v7492 = vsel %vm6325, %v7490, %v7491
  %v7493 = vrot.slane %v7491, 4
  %v7494 = vrot.slane %v7319, 6
  %v7495 = vsel %vm6325, %v7493, %v7494
  %v7496 = vrot.slane %v7494, 4
  %v7497 = vrot.slane %v7320, 6
  %v7498 = vsel %vm6325, %v7496, %v7497
  %v7499 = vrot.slane %v7497, 4
  %v7500 = vrot.slane %v7321, 6
  %v7501 = vsel %vm6325, %v7499, %v7500
  %v7502 = vrot.slane %v7500, 4
  %v7503 = vrot.slane %v7322, 6
  %v7504 = vsel %vm6325, %v7502, %v7503
  %v7505 = vrot.slane %v7503, 4
  %v7506 = vrot.slane %v7323, 6
  %v7507 = vsel %vm6325, %v7505, %v7506
  %v7508 = vrot.slane %v7506, 4
  %v7509 = vrot.slane %v7324, 6
  %v7510 = vsel %vm6325, %v7508, %v7509
  %v7511 = vrot.slane %v7509, 4
  %v7512 = vrot.slane %v7325, 6
  %v7513 = vsel %vm6325, %v7511, %v7512
  %v7514 = vrot.slane %v7512, 4
  %v7515 = vrot.slane %v7326, 6
  %v7516 = vsel %vm6325, %v7514, %v7515
  %v7517 = vrot.slane %v7515, 4
  %v7518 = vrot.slane %v7327, 6
  %v7519 = vsel %vm6325, %v7517, %v7518
  %v7520 = vrot.slane %v7518, 4
  %v7521 = vrot.slane %v7328, 6
  %v7522 = vsel %vm6325, %v7520, %v7521
  %v7523 = vrot.slane %v7521, 4
  %v7524 = vrot.slane %v7329, 6
  %v7525 = vsel %vm6325, %v7523, %v7524
  %v7526 = vrot.slane %v7524, 4
  %v7527 = vrot.slane %v7330, 6
  %v7528 = vsel %vm6325, %v7526, %v7527
  %v7529 = vrot.slane %v7527, 4
  %v7530 = vrot.slane %v7331, 6
  %v7531 = vsel %vm6325, %v7529, %v7530
  %v7532 = vrot.slane %v7530, 4
  %v7533 = vrot.slane %v7332, 6
  %v7534 = vsel %vm6325, %v7532, %v7533
  %v7535 = vrot.slane %v7533, 4
  %v7536 = vrot.slane %v7333, 6
  %v7537 = vsel %vm6325, %v7535, %v7536
  %v7538 = vrot.slane %v7536, 4
  %v7539 = vrot.slane %v7334, 6
  %v7540 = vsel %vm6325, %v7538, %v7539
  %v7541 = vrot.slane %v7539, 4
  %v7542 = vrot.slane %v7335, 6
  %v7543 = vsel %vm6325, %v7541, %v7542
  %v7544 = vrot.slane %v7542, 4
  %v7545 = vrot.slane %v7336, 6
  %v7546 = vsel %vm6325, %v7544, %v7545
  %v7547 = vrot.slane %v7545, 4
  %v7548 = vrot.slane %v7337, 6
  %v7549 = vsel %vm6325, %v7547, %v7548
  %v7550 = vrot.slane %v7548, 4
  %v7551 = vrot.slane %v7338, 6
  %v7552 = vsel %vm6325, %v7550, %v7551
  %v7553 = vrot.slane %v7551, 4
  %v7554 = vrot.slane %v7339, 6
  %v7555 = vsel %vm6325, %v7553, %v7554
  %v7556 = vrot.slane %v7554, 4
  %v7557 = vrot.slane %v7340, 6
  %v7558 = vsel %vm6325, %v7556, %v7557
  %v7559 = vrot.slane %v7557, 4
  %v7560 = vrot.slane %v7341, 6
  %v7561 = vsel %vm6325, %v7559, %v7560
  %v7562 = vrot.slane %v7342, 6
  %v7563 = vrot.slane %v7562, 4
  %v7564 = vrot.slane %v7343, 6
  %v7565 = vsel %vm6325, %v7563, %v7564
  %v7566 = vrot.slane %v7564, 4
  %v7567 = vrot.slane %v7344, 6
  %v7568 = vsel %vm6325, %v7566, %v7567
  %v7569 = vrot.slane %v7567, 4
  %v7570 = vrot.slane %v7345, 6
  %v7571 = vsel %vm6325, %v7569, %v7570
  %v7572 = vrot.slane %v7570, 4
  %v7573 = vrot.slane %v7346, 6
  %v7574 = vsel %vm6325, %v7572, %v7573
  %v7575 = vrot.slane %v7573, 4
  %v7576 = vrot.slane %v7347, 6
  %v7577 = vsel %vm6325, %v7575, %v7576
  %v7578 = vrot.slane %v7576, 4
  %v7579 = vrot.slane %v7348, 6
  %v7580 = vsel %vm6325, %v7578, %v7579
  %v7581 = vrot.slane %v7579, 4
  %v7582 = vrot.slane %v7349, 6
  %v7583 = vsel %vm6325, %v7581, %v7582
  %v7584 = vrot.slane %v7582, 4
  %v7585 = vrot.slane %v7350, 6
  %v7586 = vsel %vm6325, %v7584, %v7585
  %v7587 = vrot.slane %v7585, 4
  %v7588 = vrot.slane %v7351, 6
  %v7589 = vsel %vm6325, %v7587, %v7588
  %v7590 = vrot.slane %v7588, 4
  %v7591 = vrot.slane %v7352, 6
  %v7592 = vsel %vm6325, %v7590, %v7591
  %v7593 = vrot.slane %v7591, 4
  %v7594 = vrot.slane %v7353, 6
  %v7595 = vsel %vm6325, %v7593, %v7594
  %v7596 = vrot.slane %v7594, 4
  %v7597 = vrot.slane %v7354, 6
  %v7598 = vsel %vm6325, %v7596, %v7597
  %v7599 = vrot.slane %v7597, 4
  %v7600 = vrot.slane %v7355, 6
  %v7601 = vsel %vm6325, %v7599, %v7600
  %v7602 = vrot.slane %v7600, 4
  %v7603 = vrot.slane %v7356, 6
  %v7604 = vsel %vm6325, %v7602, %v7603
  %v7605 = vrot.slane %v7603, 4
  %v7606 = vrot.slane %v7357, 6
  %v7607 = vsel %vm6325, %v7605, %v7606
  %v7608 = vrot.slane %v7606, 4
  %v7609 = vrot.slane %v7358, 6
  %v7610 = vsel %vm6325, %v7608, %v7609
  %v7611 = vrot.slane %v7609, 4
  %v7612 = vrot.slane %v7359, 6
  %v7613 = vsel %vm6325, %v7611, %v7612
  %v7614 = vrot.slane %v7612, 4
  %v7615 = vrot.slane %v7360, 6
  %v7616 = vsel %vm6325, %v7614, %v7615
  %v7617 = vrot.slane %v7615, 4
  %v7618 = vrot.slane %v7361, 6
  %v7619 = vsel %vm6325, %v7617, %v7618
  %v7620 = vrot.slane %v7618, 4
  %v7621 = vrot.slane %v7362, 6
  %v7622 = vsel %vm6325, %v7620, %v7621
  %v7623 = vrot.slane %v7621, 4
  %v7624 = vrot.slane %v7363, 6
  %v7625 = vsel %vm6325, %v7623, %v7624
  %v7626 = vrot.slane %v7624, 4
  %v7627 = vrot.slane %v7364, 6
  %v7628 = vsel %vm6325, %v7626, %v7627
  %v7629 = vrot.slane %v7627, 4
  %v7630 = vrot.slane %v7365, 6
  %v7631 = vsel %vm6325, %v7629, %v7630
  %v7632 = vrot.slane %v7630, 4
  %v7633 = vrot.slane %v7366, 6
  %v7634 = vsel %vm6325, %v7632, %v7633
  %v7635 = vrot.slane %v7633, 4
  %v7636 = vrot.slane %v7367, 6
  %v7637 = vsel %vm6325, %v7635, %v7636
  %v7638 = vrot.slane %v7636, 4
  %v7639 = vrot.slane %v7368, 6
  %v7640 = vsel %vm6325, %v7638, %v7639
  %v7641 = vrot.slane %v7639, 4
  %v7642 = vrot.slane %v7369, 6
  %v7643 = vsel %vm6325, %v7641, %v7642
  %v7644 = vrot.slane %v7642, 4
  %v7645 = vrot.slane %v7370, 6
  %v7646 = vsel %vm6325, %v7644, %v7645
  %v7647 = vrot.slane %v7645, 4
  %v7648 = vrot.slane %v7371, 6
  %v7649 = vsel %vm6325, %v7647, %v7648
  %v7650 = vrot.slane %v7648, 4
  %v7651 = vrot.slane %v7372, 6
  %v7652 = vsel %vm6325, %v7650, %v7651
  %v7653 = vrot.slane %v7651, 4
  %v7654 = vrot.slane %v7373, 6
  %v7655 = vsel %vm6325, %v7653, %v7654
  %v7656 = vrot.slane %v7654, 4
  %v7657 = vrot.slane %v7374, 6
  %v7658 = vsel %vm6325, %v7656, %v7657
  %v7659 = vrot.slane %v7657, 4
  %v7660 = vrot.slane %v7375, 6
  %v7661 = vsel %vm6325, %v7659, %v7660
  %v7662 = vrot.slane %v7660, 4
  %v7663 = vrot.slane %v7376, 6
  %v7664 = vsel %vm6325, %v7662, %v7663
  %v7665 = vrot.slane %v7663, 4
  %v7666 = vrot.slane %v7377, 6
  %v7667 = vsel %vm6325, %v7665, %v7666
  %v7668 = vrot.slane %v7666, 4
  %v7669 = vrot.slane %v7378, 6
  %v7670 = vsel %vm6325, %v7668, %v7669
  %v7671 = vld [vmem:[%s1 + $0xc] sm:$0x3]
  %v7672 = vunpack.c.l.b16 %v7456
  %v7673 = vunpack.c.l.b16 %v7459
  %v7674 = vunpack.c.l.b16 %v7462
  %v7675 = vunpack.c.l.b16 %v7465
  %v7676 = vunpack.c.l.b16 %v7468
  %v7677 = vunpack.c.l.b16 %v7471
  %v7678 = vunpack.c.l.b16 %v7474
  %v7679 = vunpack.c.l.b16 %v7477
  %v7680 = vunpack.c.l.b16 %v7480
  %v7681 = vunpack.c.l.b16 %v7483
  %v7682 = vunpack.c.l.b16 %v7486
  %v7683 = vunpack.c.l.b16 %v7489
  %v7684 = vunpack.c.l.b16 %v7492
  %v7685 = vunpack.c.l.b16 %v7495
  %v7686 = vunpack.c.l.b16 %v7498
  %v7687 = vunpack.c.l.b16 %v7501
  %v7688 = vunpack.c.l.b16 %v7504
  %v7689 = vunpack.c.l.b16 %v7507
  %v7690 = vunpack.c.l.b16 %v7510
  %v7691 = vunpack.c.l.b16 %v7513
  %v7692 = vunpack.c.l.b16 %v7516
  %v7693 = vunpack.c.l.b16 %v7519
  %v7694 = vunpack.c.l.b16 %v7522
  %v7695 = vunpack.c.l.b16 %v7525
  %v7696 = vunpack.c.l.b16 %v7528
  %v7697 = vunpack.c.l.b16 %v7531
  %v7698 = vunpack.c.l.b16 %v7534
  %v7699 = vunpack.c.l.b16 %v7537
  %v7700 = vunpack.c.l.b16 %v7540
  %v7701 = vunpack.c.l.b16 %v7543
  %v7702 = vunpack.c.l.b16 %v7546
  %v7703 = vunpack.c.l.b16 %v7549
  %v7704 = vunpack.c.l.b16 %v7552
  %v7705 = vunpack.c.l.b16 %v7555
  %v7706 = vunpack.c.l.b16 %v7558
  %v7707 = vunpack.c.l.b16 %v7561
  %v7708 = vunpack.c.l.b16 %v7565
  %v7709 = vunpack.c.l.b16 %v7568
  %v7710 = vunpack.c.l.b16 %v7571
  %v7711 = vunpack.c.l.b16 %v7574
  %v7712 = vunpack.c.l.b16 %v7577
  %v7713 = vunpack.c.l.b16 %v7580
  %v7714 = vunpack.c.l.b16 %v7583
  %v7715 = vunpack.c.l.b16 %v7586
  %v7716 = vunpack.c.l.b16 %v7589
  %v7717 = vunpack.c.l.b16 %v7592
  %v7718 = vunpack.c.l.b16 %v7595
  %v7719 = vunpack.c.l.b16 %v7598
  %v7720 = vunpack.c.l.b16 %v7601
  %v7721 = vunpack.c.l.b16 %v7604
  %v7722 = vunpack.c.l.b16 %v7607
  %v7723 = vunpack.c.l.b16 %v7610
  %v7724 = vunpack.c.l.b16 %v7613
  %v7725 = vunpack.c.l.b16 %v7616
  %v7726 = vunpack.c.l.b16 %v7619
  %v7727 = vunpack.c.l.b16 %v7622
  %v7728 = vunpack.c.l.b16 %v7625
  %v7729 = vunpack.c.l.b16 %v7628
  %v7730 = vunpack.c.l.b16 %v7631
  %v7731 = vunpack.c.l.b16 %v7634
  %v7732 = vunpack.c.l.b16 %v7637
  %v7733 = vunpack.c.l.b16 %v7640
  %v7734 = vunpack.c.l.b16 %v7643
  %v7735 = vunpack.c.l.b16 %v7646
  %v7736 = vunpack.c.l.b16 %v7649
  %v7737 = vunpack.c.l.b16 %v7652
  %v7738 = vunpack.c.l.b16 %v7655
  %v7739 = vunpack.c.l.b16 %v7658
  %v7740 = vunpack.c.l.b16 %v7661
  %v7741 = vunpack.c.l.b16 %v7664
  %v7742 = vunpack.c.l.b16 %v7667
  %v7743 = vunpack.c.l.b16 %v7670
  %v7744 = vpack.c.b16 %v7673, %v7672
  %v7745 = vpack.c.b16 %v7675, %v7674
  %v7746 = vpack.c.b16 %v7677, %v7676
  %v7747 = vpack.c.b16 %v7679, %v7678
  %v7748 = vpack.c.b16 %v7681, %v7680
  %v7749 = vpack.c.b16 %v7683, %v7682
  %v7750 = vpack.c.b16 %v7685, %v7684
  %v7751 = vpack.c.b16 %v7687, %v7686
  %v7752 = vpack.c.b16 %v7689, %v7688
  %v7753 = vpack.c.b16 %v7691, %v7690
  %v7754 = vpack.c.b16 %v7693, %v7692
  %v7755 = vpack.c.b16 %v7695, %v7694
  %v7756 = vpack.c.b16 %v7697, %v7696
  %v7757 = vpack.c.b16 %v7699, %v7698
  %v7758 = vpack.c.b16 %v7701, %v7700
  %v7759 = vpack.c.b16 %v7703, %v7702
  %v7760 = vpack.c.b16 %v7705, %v7704
  %v7761 = vpack.c.b16 %v7707, %v7706
  %v7762 = vpack.c.b16 %v7709, %v7708
  %v7763 = vpack.c.b16 %v7711, %v7710
  %v7764 = vpack.c.b16 %v7713, %v7712
  %v7765 = vpack.c.b16 %v7715, %v7714
  %v7766 = vpack.c.b16 %v7717, %v7716
  %v7767 = vpack.c.b16 %v7719, %v7718
  %v7768 = vpack.c.b16 %v7721, %v7720
  %v7769 = vpack.c.b16 %v7723, %v7722
  %v7770 = vpack.c.b16 %v7725, %v7724
  %v7771 = vpack.c.b16 %v7727, %v7726
  %v7772 = vpack.c.b16 %v7729, %v7728
  %v7773 = vpack.c.b16 %v7731, %v7730
  %v7774 = vpack.c.b16 %v7733, %v7732
  %v7775 = vpack.c.b16 %v7735, %v7734
  %v7776 = vpack.c.b16 %v7737, %v7736
  %v7777 = vpack.c.b16 %v7739, %v7738
  %v7778 = vpack.c.b16 %v7741, %v7740
  %v7779 = vpack.c.b16 %v7743, %v7742
  %v7781 = vsel %vm280, %v7744, 0
  %v7784 = vsel %vm280, %v7745, 0
  %v7787 = vsel %vm280, %v7746, 0
  %v7790 = vsel %vm280, %v7747, 0
  %v7793 = vsel %vm280, %v7748, 0
  %v7796 = vsel %vm280, %v7749, 0
  %v7799 = vsel %vm280, %v7750, 0
  %v7802 = vsel %vm280, %v7751, 0
  %v7805 = vsel %vm280, %v7752, 0
  %v7808 = vsel %vm280, %v7753, 0
  %v7811 = vsel %vm280, %v7754, 0
  %v7814 = vsel %vm280, %v7755, 0
  %v7817 = vsel %vm280, %v7756, 0
  %v7820 = vsel %vm280, %v7757, 0
  %v7823 = vsel %vm280, %v7758, 0
  %v7826 = vsel %vm280, %v7759, 0
  %v7829 = vsel %vm280, %v7760, 0
  %v7832 = vsel %vm280, %v7761, 0
  %v7835 = vsel %vm280, %v7762, 0
  %v7838 = vsel %vm280, %v7763, 0
  %v7841 = vsel %vm280, %v7764, 0
  %v7844 = vsel %vm280, %v7765, 0
  %v7847 = vsel %vm280, %v7766, 0
  %v7850 = vsel %vm280, %v7767, 0
  %v7853 = vsel %vm280, %v7768, 0
  %v7856 = vsel %vm280, %v7769, 0
  %v7859 = vsel %vm280, %v7770, 0
  %v7862 = vsel %vm280, %v7771, 0
  %v7865 = vsel %vm280, %v7772, 0
  %v7868 = vsel %vm280, %v7773, 0
  %v7871 = vsel %vm280, %v7774, 0
  %v7874 = vsel %vm280, %v7775, 0
  %v7877 = vsel %vm280, %v7776, 0
  %v7880 = vsel %vm280, %v7777, 0
  %v7883 = vsel %vm280, %v7778, 0
  %v7886 = vsel %vm280, %v7779, 0
  %v7889 = vsel %vm389, %v7671, 0
  %7891 = vmatprep.subr.bf16.mxu0 0
  %7892 = vmatpush1.bf16.msra.mxu0 0
  %7893 = vmatprep.subr.bf16.mxu0 0
  %7894 = vmatpush1.bf16.msra.mxu0 0
  %7895 = vmatprep.subr.bf16.mxu0 0
  %7896 = vmatpush1.bf16.msra.mxu0 0
  %7897 = vmatprep.subr.bf16.mxu0 0
  %7898 = vmatpush1.bf16.msra.mxu0 0
  %7899 = vmatprep.subr.bf16.mxu0 0
  %7900 = vmatpush1.bf16.msra.mxu0 0
  %7901 = vmatprep.subr.bf16.mxu0 0
  %7902 = vmatpush1.bf16.msra.mxu0 0
  %7903 = vmatprep.subr.bf16.mxu0 0
  %7904 = vmatpush1.bf16.msra.mxu0 0
  %7905 = vmatprep.subr.bf16.mxu0 0
  %7906 = vmatpush1.bf16.msra.mxu0 %v7889
  %7907 = vmatprep.subr.bf16.mxu0 0
  %7908 = vmatpush2.bf16.msra.mxu0 0
  %7909 = vmatprep.subr.bf16.mxu0 0
  %7910 = vmatpush2.bf16.msra.mxu0 0
  %7911 = vmatprep.subr.bf16.mxu0 0
  %7912 = vmatpush2.bf16.msra.mxu0 0
  %7913 = vmatprep.subr.bf16.mxu0 0
  %7914 = vmatpush2.bf16.msra.mxu0 0
  %7915 = vmatprep.subr.bf16.mxu0 0
  %7916 = vmatpush2.bf16.msra.mxu0 0
  %7917 = vmatprep.subr.bf16.mxu0 0
  %7918 = vmatpush2.bf16.msra.mxu0 0
  %7919 = vmatprep.subr.bf16.mxu0 0
  %7920 = vmatpush2.bf16.msra.mxu0 0
  %7921 = vmatprep.subr.bf16.mxu0 0
  %7922 = vmatpush2.bf16.msra.mxu0 0
  %7923 = vmatprep.mubr.bf16.mxu0 0
  %7924 = vmatmul.mubr.bf16.gmra.mxu0 %v7781
  %v7925 = vpop.f32.mrf.mxu0
  %v7926 = vadd.f32 0.0, %v7925
  %v7927 = vpop.f32.mrf.mxu0
  %v7928 = vpop.f32.mrf.mxu0
  %v7929 = vadd.f32 0.0, %v7928
  %v7930 = vpop.f32.mrf.mxu0
  %7931 = vmatprep.mubr.bf16.mxu0 0
  %7932 = vmatmul.mubr.bf16.gmra.mxu0 %v7784
  %v7933 = vpop.f32.mrf.mxu0
  %v7934 = vadd.f32 0.0, %v7933
  %v7935 = vpop.f32.mrf.mxu0
  %v7936 = vpop.f32.mrf.mxu0
  %v7937 = vadd.f32 0.0, %v7936
  %v7938 = vpop.f32.mrf.mxu0
  %7939 = vmatprep.mubr.bf16.mxu0 0
  %7940 = vmatmul.mubr.bf16.gmra.mxu0 %v7787
  %v7941 = vpop.f32.mrf.mxu0
  %v7942 = vadd.f32 0.0, %v7941
  %v7943 = vpop.f32.mrf.mxu0
  %v7944 = vpop.f32.mrf.mxu0
  %v7945 = vadd.f32 0.0, %v7944
  %v7946 = vpop.f32.mrf.mxu0
  %7947 = vmatprep.mubr.bf16.mxu0 0
  %7948 = vmatmul.mubr.bf16.gmra.mxu0 %v7790
  %v7949 = vpop.f32.mrf.mxu0
  %v7950 = vadd.f32 0.0, %v7949
  %v7951 = vpop.f32.mrf.mxu0
  %v7952 = vpop.f32.mrf.mxu0
  %v7953 = vadd.f32 0.0, %v7952
  %v7954 = vpop.f32.mrf.mxu0
  %7955 = vmatprep.mubr.bf16.mxu0 0
  %7956 = vmatmul.mubr.bf16.gmra.mxu0 %v7793
  %v7957 = vpop.f32.mrf.mxu0
  %v7958 = vadd.f32 0.0, %v7957
  %v7959 = vpop.f32.mrf.mxu0
  %v7960 = vpop.f32.mrf.mxu0
  %v7961 = vadd.f32 0.0, %v7960
  %v7962 = vpop.f32.mrf.mxu0
  %7963 = vmatprep.mubr.bf16.mxu0 0
  %7964 = vmatmul.mubr.bf16.gmra.mxu0 %v7796
  %v7965 = vpop.f32.mrf.mxu0
  %v7966 = vadd.f32 0.0, %v7965
  %v7967 = vpop.f32.mrf.mxu0
  %v7968 = vpop.f32.mrf.mxu0
  %v7969 = vadd.f32 0.0, %v7968
  %v7970 = vpop.f32.mrf.mxu0
  %7971 = vmatprep.mubr.bf16.mxu0 0
  %7972 = vmatmul.mubr.bf16.gmra.mxu0 %v7799
  %v7973 = vpop.f32.mrf.mxu0
  %v7974 = vadd.f32 0.0, %v7973
  %v7975 = vpop.f32.mrf.mxu0
  %v7976 = vpop.f32.mrf.mxu0
  %v7977 = vadd.f32 0.0, %v7976
  %v7978 = vpop.f32.mrf.mxu0
  %7979 = vmatprep.mubr.bf16.mxu0 0
  %7980 = vmatmul.mubr.bf16.gmra.mxu0 %v7802
  %v7981 = vpop.f32.mrf.mxu0
  %v7982 = vadd.f32 0.0, %v7981
  %v7983 = vpop.f32.mrf.mxu0
  %v7984 = vpop.f32.mrf.mxu0
  %v7985 = vadd.f32 0.0, %v7984
  %v7986 = vpop.f32.mrf.mxu0
  %7987 = vmatprep.mubr.bf16.mxu0 0
  %7988 = vmatmul.mubr.bf16.gmra.mxu0 %v7805
  %v7989 = vpop.f32.mrf.mxu0
  %v7990 = vadd.f32 0.0, %v7989
  %v7991 = vpop.f32.mrf.mxu0
  %v7992 = vpop.f32.mrf.mxu0
  %v7993 = vadd.f32 0.0, %v7992
  %v7994 = vpop.f32.mrf.mxu0
  %7995 = vmatprep.mubr.bf16.mxu0 0
  %7996 = vmatmul.mubr.bf16.gmra.mxu0 %v7808
  %v7997 = vpop.f32.mrf.mxu0
  %v7998 = vadd.f32 0.0, %v7997
  %v7999 = vpop.f32.mrf.mxu0
  %v8000 = vpop.f32.mrf.mxu0
  %v8001 = vadd.f32 0.0, %v8000
  %v8002 = vpop.f32.mrf.mxu0
  %8003 = vmatprep.mubr.bf16.mxu0 0
  %8004 = vmatmul.mubr.bf16.gmra.mxu0 %v7811
  %v8005 = vpop.f32.mrf.mxu0
  %v8006 = vadd.f32 0.0, %v8005
  %v8007 = vpop.f32.mrf.mxu0
  %v8008 = vpop.f32.mrf.mxu0
  %v8009 = vadd.f32 0.0, %v8008
  %v8010 = vpop.f32.mrf.mxu0
  %8011 = vmatprep.mubr.bf16.mxu0 0
  %8012 = vmatmul.mubr.bf16.gmra.mxu0 %v7814
  %v8013 = vpop.f32.mrf.mxu0
  %v8014 = vadd.f32 0.0, %v8013
  %v8015 = vpop.f32.mrf.mxu0
  %v8016 = vpop.f32.mrf.mxu0
  %v8017 = vadd.f32 0.0, %v8016
  %v8018 = vpop.f32.mrf.mxu0
  %8019 = vmatprep.mubr.bf16.mxu0 0
  %8020 = vmatmul.mubr.bf16.gmra.mxu0 %v7817
  %v8021 = vpop.f32.mrf.mxu0
  %v8022 = vadd.f32 0.0, %v8021
  %v8023 = vpop.f32.mrf.mxu0
  %v8024 = vpop.f32.mrf.mxu0
  %v8025 = vadd.f32 0.0, %v8024
  %v8026 = vpop.f32.mrf.mxu0
  %8027 = vmatprep.mubr.bf16.mxu0 0
  %8028 = vmatmul.mubr.bf16.gmra.mxu0 %v7820
  %v8029 = vpop.f32.mrf.mxu0
  %v8030 = vadd.f32 0.0, %v8029
  %v8031 = vpop.f32.mrf.mxu0
  %v8032 = vpop.f32.mrf.mxu0
  %v8033 = vadd.f32 0.0, %v8032
  %v8034 = vpop.f32.mrf.mxu0
  %8035 = vmatprep.mubr.bf16.mxu0 0
  %8036 = vmatmul.mubr.bf16.gmra.mxu0 %v7823
  %v8037 = vpop.f32.mrf.mxu0
  %v8038 = vadd.f32 0.0, %v8037
  %v8039 = vpop.f32.mrf.mxu0
  %v8040 = vpop.f32.mrf.mxu0
  %v8041 = vadd.f32 0.0, %v8040
  %v8042 = vpop.f32.mrf.mxu0
  %8043 = vmatprep.mubr.bf16.mxu0 0
  %8044 = vmatmul.mubr.bf16.gmra.mxu0 %v7826
  %v8045 = vpop.f32.mrf.mxu0
  %v8046 = vadd.f32 0.0, %v8045
  %v8047 = vpop.f32.mrf.mxu0
  %v8048 = vpop.f32.mrf.mxu0
  %v8049 = vadd.f32 0.0, %v8048
  %v8050 = vpop.f32.mrf.mxu0
  %8051 = vmatprep.mubr.bf16.mxu0 0
  %8052 = vmatmul.mubr.bf16.gmra.mxu0 %v7829
  %v8053 = vpop.f32.mrf.mxu0
  %v8054 = vadd.f32 0.0, %v8053
  %v8055 = vpop.f32.mrf.mxu0
  %v8056 = vpop.f32.mrf.mxu0
  %v8057 = vadd.f32 0.0, %v8056
  %v8058 = vpop.f32.mrf.mxu0
  %8059 = vmatprep.mubr.bf16.mxu0 0
  %8060 = vmatmul.mubr.bf16.gmra.mxu0 %v7832
  %v8061 = vpop.f32.mrf.mxu0
  %v8062 = vadd.f32 0.0, %v8061
  %v8063 = vpop.f32.mrf.mxu0
  %v8064 = vpop.f32.mrf.mxu0
  %v8065 = vadd.f32 0.0, %v8064
  %v8066 = vpop.f32.mrf.mxu0
  %8067 = vmatprep.mubr.bf16.mxu0 0
  %8068 = vmatmul.mubr.bf16.gmra.mxu0 %v7835
  %v8069 = vpop.f32.mrf.mxu0
  %v8070 = vadd.f32 0.0, %v8069
  %v8071 = vpop.f32.mrf.mxu0
  %v8072 = vpop.f32.mrf.mxu0
  %v8073 = vadd.f32 0.0, %v8072
  %v8074 = vpop.f32.mrf.mxu0
  %8075 = vmatprep.mubr.bf16.mxu0 0
  %8076 = vmatmul.mubr.bf16.gmra.mxu0 %v7838
  %v8077 = vpop.f32.mrf.mxu0
  %v8078 = vadd.f32 0.0, %v8077
  %v8079 = vpop.f32.mrf.mxu0
  %v8080 = vpop.f32.mrf.mxu0
  %v8081 = vadd.f32 0.0, %v8080
  %v8082 = vpop.f32.mrf.mxu0
  %8083 = vmatprep.mubr.bf16.mxu0 0
  %8084 = vmatmul.mubr.bf16.gmra.mxu0 %v7841
  %v8085 = vpop.f32.mrf.mxu0
  %v8086 = vadd.f32 0.0, %v8085
  %v8087 = vpop.f32.mrf.mxu0
  %v8088 = vpop.f32.mrf.mxu0
  %v8089 = vadd.f32 0.0, %v8088
  %v8090 = vpop.f32.mrf.mxu0
  %8091 = vmatprep.mubr.bf16.mxu0 0
  %8092 = vmatmul.mubr.bf16.gmra.mxu0 %v7844
  %v8093 = vpop.f32.mrf.mxu0
  %v8094 = vadd.f32 0.0, %v8093
  %v8095 = vpop.f32.mrf.mxu0
  %v8096 = vpop.f32.mrf.mxu0
  %v8097 = vadd.f32 0.0, %v8096
  %v8098 = vpop.f32.mrf.mxu0
  %8099 = vmatprep.mubr.bf16.mxu0 0
  %8100 = vmatmul.mubr.bf16.gmra.mxu0 %v7847
  %v8101 = vpop.f32.mrf.mxu0
  %v8102 = vadd.f32 0.0, %v8101
  %v8103 = vpop.f32.mrf.mxu0
  %v8104 = vpop.f32.mrf.mxu0
  %v8105 = vadd.f32 0.0, %v8104
  %v8106 = vpop.f32.mrf.mxu0
  %8107 = vmatprep.mubr.bf16.mxu0 0
  %8108 = vmatmul.mubr.bf16.gmra.mxu0 %v7850
  %v8109 = vpop.f32.mrf.mxu0
  %v8110 = vadd.f32 0.0, %v8109
  %v8111 = vpop.f32.mrf.mxu0
  %v8112 = vpop.f32.mrf.mxu0
  %v8113 = vadd.f32 0.0, %v8112
  %v8114 = vpop.f32.mrf.mxu0
  %8115 = vmatprep.mubr.bf16.mxu0 0
  %8116 = vmatmul.mubr.bf16.gmra.mxu0 %v7853
  %v8117 = vpop.f32.mrf.mxu0
  %v8118 = vadd.f32 0.0, %v8117
  %v8119 = vpop.f32.mrf.mxu0
  %v8120 = vpop.f32.mrf.mxu0
  %v8121 = vadd.f32 0.0, %v8120
  %v8122 = vpop.f32.mrf.mxu0
  %8123 = vmatprep.mubr.bf16.mxu0 0
  %8124 = vmatmul.mubr.bf16.gmra.mxu0 %v7856
  %v8125 = vpop.f32.mrf.mxu0
  %v8126 = vadd.f32 0.0, %v8125
  %v8127 = vpop.f32.mrf.mxu0
  %v8128 = vpop.f32.mrf.mxu0
  %v8129 = vadd.f32 0.0, %v8128
  %v8130 = vpop.f32.mrf.mxu0
  %8131 = vmatprep.mubr.bf16.mxu0 0
  %8132 = vmatmul.mubr.bf16.gmra.mxu0 %v7859
  %v8133 = vpop.f32.mrf.mxu0
  %v8134 = vadd.f32 0.0, %v8133
  %v8135 = vpop.f32.mrf.mxu0
  %v8136 = vpop.f32.mrf.mxu0
  %v8137 = vadd.f32 0.0, %v8136
  %v8138 = vpop.f32.mrf.mxu0
  %8139 = vmatprep.mubr.bf16.mxu0 0
  %8140 = vmatmul.mubr.bf16.gmra.mxu0 %v7862
  %v8141 = vpop.f32.mrf.mxu0
  %v8142 = vadd.f32 0.0, %v8141
  %v8143 = vpop.f32.mrf.mxu0
  %v8144 = vpop.f32.mrf.mxu0
  %v8145 = vadd.f32 0.0, %v8144
  %v8146 = vpop.f32.mrf.mxu0
  %8147 = vmatprep.mubr.bf16.mxu0 0
  %8148 = vmatmul.mubr.bf16.gmra.mxu0 %v7865
  %v8149 = vpop.f32.mrf.mxu0
  %v8150 = vadd.f32 0.0, %v8149
  %v8151 = vpop.f32.mrf.mxu0
  %v8152 = vpop.f32.mrf.mxu0
  %v8153 = vadd.f32 0.0, %v8152
  %v8154 = vpop.f32.mrf.mxu0
  %8155 = vmatprep.mubr.bf16.mxu0 0
  %8156 = vmatmul.mubr.bf16.gmra.mxu0 %v7868
  %v8157 = vpop.f32.mrf.mxu0
  %v8158 = vadd.f32 0.0, %v8157
  %v8159 = vpop.f32.mrf.mxu0
  %v8160 = vpop.f32.mrf.mxu0
  %v8161 = vadd.f32 0.0, %v8160
  %v8162 = vpop.f32.mrf.mxu0
  %8163 = vmatprep.mubr.bf16.mxu0 0
  %8164 = vmatmul.mubr.bf16.gmra.mxu0 %v7871
  %v8165 = vpop.f32.mrf.mxu0
  %v8166 = vadd.f32 0.0, %v8165
  %v8167 = vpop.f32.mrf.mxu0
  %v8168 = vpop.f32.mrf.mxu0
  %v8169 = vadd.f32 0.0, %v8168
  %v8170 = vpop.f32.mrf.mxu0
  %8171 = vmatprep.mubr.bf16.mxu0 0
  %8172 = vmatmul.mubr.bf16.gmra.mxu0 %v7874
  %v8173 = vpop.f32.mrf.mxu0
  %v8174 = vadd.f32 0.0, %v8173
  %v8175 = vpop.f32.mrf.mxu0
  %v8176 = vpop.f32.mrf.mxu0
  %v8177 = vadd.f32 0.0, %v8176
  %v8178 = vpop.f32.mrf.mxu0
  %8179 = vmatprep.mubr.bf16.mxu0 0
  %8180 = vmatmul.mubr.bf16.gmra.mxu0 %v7877
  %v8181 = vpop.f32.mrf.mxu0
  %v8182 = vadd.f32 0.0, %v8181
  %v8183 = vpop.f32.mrf.mxu0
  %v8184 = vpop.f32.mrf.mxu0
  %v8185 = vadd.f32 0.0, %v8184
  %v8186 = vpop.f32.mrf.mxu0
  %8187 = vmatprep.mubr.bf16.mxu0 0
  %8188 = vmatmul.mubr.bf16.gmra.mxu0 %v7880
  %v8189 = vpop.f32.mrf.mxu0
  %v8190 = vadd.f32 0.0, %v8189
  %v8191 = vpop.f32.mrf.mxu0
  %v8192 = vpop.f32.mrf.mxu0
  %v8193 = vadd.f32 0.0, %v8192
  %v8194 = vpop.f32.mrf.mxu0
  %8195 = vmatprep.mubr.bf16.mxu0 0
  %8196 = vmatmul.mubr.bf16.gmra.mxu0 %v7883
  %v8197 = vpop.f32.mrf.mxu0
  %v8198 = vadd.f32 0.0, %v8197
  %v8199 = vpop.f32.mrf.mxu0
  %v8200 = vpop.f32.mrf.mxu0
  %v8201 = vadd.f32 0.0, %v8200
  %v8202 = vpop.f32.mrf.mxu0
  %8203 = vmatprep.mubr.bf16.mxu0 0
  %8204 = vmatmul.mubr.bf16.gmra.mxu0 %v7886
  %v8205 = vpop.f32.mrf.mxu0
  %v8206 = vadd.f32 0.0, %v8205
  %v8207 = vpop.f32.mrf.mxu0
  %v8208 = vpop.f32.mrf.mxu0
  %v8209 = vadd.f32 0.0, %v8208
  %v8210 = vpop.f32.mrf.mxu0
  %8211 = vdwg.mxu0
  %v8212 = vld [vmem:[#allocation2] sm:$0xff]
  %v8213 = vld [vmem:[#allocation2 + $0x8] sm:$0xff]
  %v8214 = vld [vmem:[#allocation2 + $0x10] sm:$0xff]
  %v8215 = vld [vmem:[#allocation2 + $0x18] sm:$0xff]
  %v8216 = vld [vmem:[#allocation2 + $0x20] sm:$0xff]
  %v8217 = vld [vmem:[#allocation2 + $0x28] sm:$0xff]
  %v8218 = vld [vmem:[#allocation2 + $0x30] sm:$0xff]
  %v8219 = vld [vmem:[#allocation2 + $0x38] sm:$0xff]
  %v8220 = vld [vmem:[#allocation2 + $0x40] sm:$0xff]
  %v8221 = vld [vmem:[#allocation2 + $0x48] sm:$0xff]
  %v8222 = vld [vmem:[#allocation2 + $0x50] sm:$0xff]
  %v8223 = vld [vmem:[#allocation2 + $0x58] sm:$0xff]
  %v8224 = vld [vmem:[#allocation2 + $0x60] sm:$0xff]
  %v8225 = vld [vmem:[#allocation2 + $0x68] sm:$0xff]
  %v8226 = vld [vmem:[#allocation2 + $0x70] sm:$0xff]
  %v8227 = vld [vmem:[#allocation2 + $0x78] sm:$0xff]
  %v8228 = vld [vmem:[#allocation2 + $0x80] sm:$0xff]
  %v8229 = vld [vmem:[#allocation2 + $0x88] sm:$0xff]
  %v8230 = vld [vmem:[#allocation2 + $0x90] sm:$0xff]
  %v8231 = vld [vmem:[#allocation2 + $0x98] sm:$0xff]
  %v8232 = vld [vmem:[#allocation2 + $0xa0] sm:$0xff]
  %v8233 = vld [vmem:[#allocation2 + $0xa8] sm:$0xff]
  %v8234 = vld [vmem:[#allocation2 + $0xb0] sm:$0xff]
  %v8235 = vld [vmem:[#allocation2 + $0xb8] sm:$0xff]
  %v8236 = vld [vmem:[#allocation2 + $0xc0] sm:$0xff]
  %v8237 = vld [vmem:[#allocation2 + $0xc8] sm:$0xff]
  %v8238 = vld [vmem:[#allocation2 + $0xd0] sm:$0xff]
  %v8239 = vld [vmem:[#allocation2 + $0xd8] sm:$0xff]
  %v8240 = vld [vmem:[#allocation2 + $0xe0] sm:$0xff]
  %v8241 = vld [vmem:[#allocation2 + $0xe8] sm:$0xff]
  %v8242 = vld [vmem:[#allocation2 + $0xf0] sm:$0xff]
  %v8243 = vld [vmem:[#allocation2 + $0xf8] sm:$0xff]
  %v8244 = vld [vmem:[#allocation2 + $0x100] sm:$0xff]
  %v8245 = vld [vmem:[#allocation2 + $0x108] sm:$0xff]
  %v8246 = vld [vmem:[#allocation2 + $0x110] sm:$0xff]
  %v8247 = vld [vmem:[#allocation2 + $0x118] sm:$0xff]
  %v8248 = vld [vmem:[#allocation2 + $0x120] sm:$0xff]
  %v8249 = vld [vmem:[#allocation2 + $0x128] sm:$0xff]
  %v8250 = vld [vmem:[#allocation2 + $0x130] sm:$0xff]
  %v8251 = vld [vmem:[#allocation2 + $0x138] sm:$0xff]
  %v8252 = vld [vmem:[#allocation2 + $0x140] sm:$0xff]
  %v8253 = vld [vmem:[#allocation2 + $0x148] sm:$0xff]
  %v8254 = vld [vmem:[#allocation2 + $0x150] sm:$0xff]
  %v8255 = vld [vmem:[#allocation2 + $0x158] sm:$0xff]
  %v8256 = vld [vmem:[#allocation2 + $0x160] sm:$0xff]
  %v8257 = vld [vmem:[#allocation2 + $0x168] sm:$0xff]
  %v8258 = vld [vmem:[#allocation2 + $0x170] sm:$0xff]
  %v8259 = vld [vmem:[#allocation2 + $0x178] sm:$0xff]
  %v8260 = vld [vmem:[#allocation2 + $0x180] sm:$0xff]
  %v8261 = vld [vmem:[#allocation2 + $0x188] sm:$0xff]
  %v8262 = vld [vmem:[#allocation2 + $0x190] sm:$0xff]
  %v8263 = vld [vmem:[#allocation2 + $0x198] sm:$0xff]
  %v8264 = vld [vmem:[#allocation2 + $0x1a0] sm:$0xff]
  %v8265 = vld [vmem:[#allocation2 + $0x1a8] sm:$0xff]
  %v8266 = vld [vmem:[#allocation2 + $0x1b0] sm:$0xff]
  %v8267 = vld [vmem:[#allocation2 + $0x1b8] sm:$0xff]
  %v8268 = vld [vmem:[#allocation2 + $0x1c0] sm:$0xff]
  %v8269 = vld [vmem:[#allocation2 + $0x1c8] sm:$0xff]
  %v8270 = vld [vmem:[#allocation2 + $0x1d0] sm:$0xff]
  %v8271 = vld [vmem:[#allocation2 + $0x1d8] sm:$0xff]
  %v8272 = vld [vmem:[#allocation2 + $0x1e0] sm:$0xff]
  %v8273 = vld [vmem:[#allocation2 + $0x1e8] sm:$0xff]
  %v8274 = vld [vmem:[#allocation2 + $0x1f0] sm:$0xff]
  %v8275 = vld [vmem:[#allocation2 + $0x1f8] sm:$0xff]
  %v8276 = vld [vmem:[#allocation2 + $0x200] sm:$0xff]
  %v8277 = vld [vmem:[#allocation2 + $0x208] sm:$0xff]
  %v8278 = vld [vmem:[#allocation2 + $0x210] sm:$0xff]
  %v8279 = vld [vmem:[#allocation2 + $0x218] sm:$0xff]
  %v8280 = vld [vmem:[#allocation2 + $0x220] sm:$0xff]
  %v8281 = vld [vmem:[#allocation2 + $0x228] sm:$0xff]
  %v8282 = vld [vmem:[#allocation2 + $0x230] sm:$0xff]
  %v8283 = vld [vmem:[#allocation2 + $0x238] sm:$0xff]
  %v8284 = vadd.f32 %v8212, %v7926
  %v8285 = vadd.f32 %v8213, %v7929
  %v8286 = vadd.f32 %v8214, %v7934
  %v8287 = vadd.f32 %v8215, %v7937
  %v8288 = vadd.f32 %v8216, %v7942
  %v8289 = vadd.f32 %v8217, %v7945
  %v8290 = vadd.f32 %v8218, %v7950
  %v8291 = vadd.f32 %v8219, %v7953
  %v8292 = vadd.f32 %v8220, %v7958
  %v8293 = vadd.f32 %v8221, %v7961
  %v8294 = vadd.f32 %v8222, %v7966
  %v8295 = vadd.f32 %v8223, %v7969
  %v8296 = vadd.f32 %v8224, %v7974
  %v8297 = vadd.f32 %v8225, %v7977
  %v8298 = vadd.f32 %v8226, %v7982
  %v8299 = vadd.f32 %v8227, %v7985
  %v8300 = vadd.f32 %v8228, %v7990
  %v8301 = vadd.f32 %v8229, %v7993
  %v8302 = vadd.f32 %v8230, %v7998
  %v8303 = vadd.f32 %v8231, %v8001
  %v8304 = vadd.f32 %v8232, %v8006
  %v8305 = vadd.f32 %v8233, %v8009
  %v8306 = vadd.f32 %v8234, %v8014
  %v8307 = vadd.f32 %v8235, %v8017
  %v8308 = vadd.f32 %v8236, %v8022
  %v8309 = vadd.f32 %v8237, %v8025
  %v8310 = vadd.f32 %v8238, %v8030
  %v8311 = vadd.f32 %v8239, %v8033
  %v8312 = vadd.f32 %v8240, %v8038
  %v8313 = vadd.f32 %v8241, %v8041
  %v8314 = vadd.f32 %v8242, %v8046
  %v8315 = vadd.f32 %v8243, %v8049
  %v8316 = vadd.f32 %v8244, %v8054
  %v8317 = vadd.f32 %v8245, %v8057
  %v8318 = vadd.f32 %v8246, %v8062
  %v8319 = vadd.f32 %v8247, %v8065
  %v8320 = vadd.f32 %v8248, %v8070
  %v8321 = vadd.f32 %v8249, %v8073
  %v8322 = vadd.f32 %v8250, %v8078
  %v8323 = vadd.f32 %v8251, %v8081
  %v8324 = vadd.f32 %v8252, %v8086
  %v8325 = vadd.f32 %v8253, %v8089
  %v8326 = vadd.f32 %v8254, %v8094
  %v8327 = vadd.f32 %v8255, %v8097
  %v8328 = vadd.f32 %v8256, %v8102
  %v8329 = vadd.f32 %v8257, %v8105
  %v8330 = vadd.f32 %v8258, %v8110
  %v8331 = vadd.f32 %v8259, %v8113
  %v8332 = vadd.f32 %v8260, %v8118
  %v8333 = vadd.f32 %v8261, %v8121
  %v8334 = vadd.f32 %v8262, %v8126
  %v8335 = vadd.f32 %v8263, %v8129
  %v8336 = vadd.f32 %v8264, %v8134
  %v8337 = vadd.f32 %v8265, %v8137
  %v8338 = vadd.f32 %v8266, %v8142
  %v8339 = vadd.f32 %v8267, %v8145
  %v8340 = vadd.f32 %v8268, %v8150
  %v8341 = vadd.f32 %v8269, %v8153
  %v8342 = vadd.f32 %v8270, %v8158
  %v8343 = vadd.f32 %v8271, %v8161
  %v8344 = vadd.f32 %v8272, %v8166
  %v8345 = vadd.f32 %v8273, %v8169
  %v8346 = vadd.f32 %v8274, %v8174
  %v8347 = vadd.f32 %v8275, %v8177
  %v8348 = vadd.f32 %v8276, %v8182
  %v8349 = vadd.f32 %v8277, %v8185
  %v8350 = vadd.f32 %v8278, %v8190
  %v8351 = vadd.f32 %v8279, %v8193
  %v8352 = vadd.f32 %v8280, %v8198
  %v8353 = vadd.f32 %v8281, %v8201
  %v8354 = vadd.f32 %v8282, %v8206
  %v8355 = vadd.f32 %v8283, %v8209
  %8356 = vst [vmem:[#allocation2] sm:$0xff] %v8284
  %8357 = vst [vmem:[#allocation2 + $0x8] sm:$0xff] %v8285
  %8358 = vst [vmem:[#allocation2 + $0x10] sm:$0xff] %v8286
  %8359 = vst [vmem:[#allocation2 + $0x18] sm:$0xff] %v8287
  %8360 = vst [vmem:[#allocation2 + $0x20] sm:$0xff] %v8288
  %8361 = vst [vmem:[#allocation2 + $0x28] sm:$0xff] %v8289
  %8362 = vst [vmem:[#allocation2 + $0x30] sm:$0xff] %v8290
  %8363 = vst [vmem:[#allocation2 + $0x38] sm:$0xff] %v8291
  %8364 = vst [vmem:[#allocation2 + $0x40] sm:$0xff] %v8292
  %8365 = vst [vmem:[#allocation2 + $0x48] sm:$0xff] %v8293
  %8366 = vst [vmem:[#allocation2 + $0x50] sm:$0xff] %v8294
  %8367 = vst [vmem:[#allocation2 + $0x58] sm:$0xff] %v8295
  %8368 = vst [vmem:[#allocation2 + $0x60] sm:$0xff] %v8296
  %8369 = vst [vmem:[#allocation2 + $0x68] sm:$0xff] %v8297
  %8370 = vst [vmem:[#allocation2 + $0x70] sm:$0xff] %v8298
  %8371 = vst [vmem:[#allocation2 + $0x78] sm:$0xff] %v8299
  %8372 = vst [vmem:[#allocation2 + $0x80] sm:$0xff] %v8300
  %8373 = vst [vmem:[#allocation2 + $0x88] sm:$0xff] %v8301
  %8374 = vst [vmem:[#allocation2 + $0x90] sm:$0xff] %v8302
  %8375 = vst [vmem:[#allocation2 + $0x98] sm:$0xff] %v8303
  %8376 = vst [vmem:[#allocation2 + $0xa0] sm:$0xff] %v8304
  %8377 = vst [vmem:[#allocation2 + $0xa8] sm:$0xff] %v8305
  %8378 = vst [vmem:[#allocation2 + $0xb0] sm:$0xff] %v8306
  %8379 = vst [vmem:[#allocation2 + $0xb8] sm:$0xff] %v8307
  %8380 = vst [vmem:[#allocation2 + $0xc0] sm:$0xff] %v8308
  %8381 = vst [vmem:[#allocation2 + $0xc8] sm:$0xff] %v8309
  %8382 = vst [vmem:[#allocation2 + $0xd0] sm:$0xff] %v8310
  %8383 = vst [vmem:[#allocation2 + $0xd8] sm:$0xff] %v8311
  %8384 = vst [vmem:[#allocation2 + $0xe0] sm:$0xff] %v8312
  %8385 = vst [vmem:[#allocation2 + $0xe8] sm:$0xff] %v8313
  %8386 = vst [vmem:[#allocation2 + $0xf0] sm:$0xff] %v8314
  %8387 = vst [vmem:[#allocation2 + $0xf8] sm:$0xff] %v8315
  %8388 = vst [vmem:[#allocation2 + $0x100] sm:$0xff] %v8316
  %8389 = vst [vmem:[#allocation2 + $0x108] sm:$0xff] %v8317
  %8390 = vst [vmem:[#allocation2 + $0x110] sm:$0xff] %v8318
  %8391 = vst [vmem:[#allocation2 + $0x118] sm:$0xff] %v8319
  %8392 = vst [vmem:[#allocation2 + $0x120] sm:$0xff] %v8320
  %8393 = vst [vmem:[#allocation2 + $0x128] sm:$0xff] %v8321
  %8394 = vst [vmem:[#allocation2 + $0x130] sm:$0xff] %v8322
  %8395 = vst [vmem:[#allocation2 + $0x138] sm:$0xff] %v8323
  %8396 = vst [vmem:[#allocation2 + $0x140] sm:$0xff] %v8324
  %8397 = vst [vmem:[#allocation2 + $0x148] sm:$0xff] %v8325
  %8398 = vst [vmem:[#allocation2 + $0x150] sm:$0xff] %v8326
  %8399 = vst [vmem:[#allocation2 + $0x158] sm:$0xff] %v8327
  %8400 = vst [vmem:[#allocation2 + $0x160] sm:$0xff] %v8328
  %8401 = vst [vmem:[#allocation2 + $0x168] sm:$0xff] %v8329
  %8402 = vst [vmem:[#allocation2 + $0x170] sm:$0xff] %v8330
  %8403 = vst [vmem:[#allocation2 + $0x178] sm:$0xff] %v8331
  %8404 = vst [vmem:[#allocation2 + $0x180] sm:$0xff] %v8332
  %8405 = vst [vmem:[#allocation2 + $0x188] sm:$0xff] %v8333
  %8406 = vst [vmem:[#allocation2 + $0x190] sm:$0xff] %v8334
  %8407 = vst [vmem:[#allocation2 + $0x198] sm:$0xff] %v8335
  %8408 = vst [vmem:[#allocation2 + $0x1a0] sm:$0xff] %v8336
  %8409 = vst [vmem:[#allocation2 + $0x1a8] sm:$0xff] %v8337
  %8410 = vst [vmem:[#allocation2 + $0x1b0] sm:$0xff] %v8338
  %8411 = vst [vmem:[#allocation2 + $0x1b8] sm:$0xff] %v8339
  %8412 = vst [vmem:[#allocation2 + $0x1c0] sm:$0xff] %v8340
  %8413 = vst [vmem:[#allocation2 + $0x1c8] sm:$0xff] %v8341
  %8414 = vst [vmem:[#allocation2 + $0x1d0] sm:$0xff] %v8342
  %8415 = vst [vmem:[#allocation2 + $0x1d8] sm:$0xff] %v8343
  %8416 = vst [vmem:[#allocation2 + $0x1e0] sm:$0xff] %v8344
  %8417 = vst [vmem:[#allocation2 + $0x1e8] sm:$0xff] %v8345
  %8418 = vst [vmem:[#allocation2 + $0x1f0] sm:$0xff] %v8346
  %8419 = vst [vmem:[#allocation2 + $0x1f8] sm:$0xff] %v8347
  %8420 = vst [vmem:[#allocation2 + $0x200] sm:$0xff] %v8348
  %8421 = vst [vmem:[#allocation2 + $0x208] sm:$0xff] %v8349
  %8422 = vst [vmem:[#allocation2 + $0x210] sm:$0xff] %v8350
  %8423 = vst [vmem:[#allocation2 + $0x218] sm:$0xff] %v8351
  %8424 = vst [vmem:[#allocation2 + $0x220] sm:$0xff] %v8352
  %8425 = vst [vmem:[#allocation2 + $0x228] sm:$0xff] %v8353
  %8426 = vst [vmem:[#allocation2 + $0x230] sm:$0xff] %v8354
  %8427 = vst [vmem:[#allocation2 + $0x238] sm:$0xff] %v8355
  %v8428 = vld [vmem:[%s0 + $0x10] sm:$0xc]
  %v8429 = vld [vmem:[%s0 + $0x14] sm:$0xf]
  %v8430 = vld [vmem:[%s0 + $0x18] sm:$0xf]
  %v8431 = vld [vmem:[%s0 + $0x1c] sm:$0xf]
  %v8432 = vld [vmem:[%s0 + $0x20] sm:$0xf]
  %v8433 = vld [vmem:[%s0 + $0x24] sm:$0xf]
  %v8434 = vld [vmem:[%s0 + $0x28] sm:$0xf]
  %v8435 = vld [vmem:[%s0 + $0x2c] sm:$0xf]
  %v8436 = vld [vmem:[%s0 + $0x30] sm:$0xf]
  %v8437 = vld [vmem:[%s0 + $0x34] sm:$0xf]
  %v8438 = vld [vmem:[%s0 + $0x38] sm:$0xf]
  %v8439 = vld [vmem:[%s0 + $0x3c] sm:$0xf]
  %v8440 = vld [vmem:[%s0 + $0x40] sm:$0xf]
  %v8441 = vld [vmem:[%s0 + $0x44] sm:$0xf]
  %v8442 = vld [vmem:[%s0 + $0x48] sm:$0xf]
  %v8443 = vld [vmem:[%s0 + $0x4c] sm:$0xf]
  %v8444 = vld [vmem:[%s0 + $0x50] sm:$0xf]
  %v8445 = vld [vmem:[%s0 + $0x54] sm:$0xf]
  %v8446 = vld [vmem:[%s0 + $0x58] sm:$0xf]
  %v8447 = vld [vmem:[%s0 + $0x5c] sm:$0xf]
  %v8448 = vld [vmem:[%s0 + $0x60] sm:$0xf]
  %v8449 = vld [vmem:[%s0 + $0x64] sm:$0xf]
  %v8450 = vld [vmem:[%s0 + $0x68] sm:$0xf]
  %v8451 = vld [vmem:[%s0 + $0x6c] sm:$0xf]
  %v8452 = vld [vmem:[%s0 + $0x70] sm:$0xf]
  %v8453 = vld [vmem:[%s0 + $0x74] sm:$0xf]
  %v8454 = vld [vmem:[%s0 + $0x78] sm:$0xf]
  %v8455 = vld [vmem:[%s0 + $0x7c] sm:$0xf]
  %v8456 = vld [vmem:[%s0 + $0x80] sm:$0xf]
  %v8457 = vld [vmem:[%s0 + $0x84] sm:$0xf]
  %v8458 = vld [vmem:[%s0 + $0x88] sm:$0xf]
  %v8459 = vld [vmem:[%s0 + $0x8c] sm:$0xf]
  %v8460 = vld [vmem:[%s0 + $0x90] sm:$0xf]
  %v8461 = vld [vmem:[%s0 + $0x94] sm:$0xf]
  %v8462 = vld [vmem:[%s0 + $0x98] sm:$0xf]
  %v8463 = vld [vmem:[%s0 + $0x9c] sm:$0xf]
  %v8464 = vld [vmem:[%s0 + $0xa0] sm:$0x7]
  %v8465 = vld [vmem:[%s0 + $0xb4] sm:$0xc]
  %v8466 = vld [vmem:[%s0 + $0xb8] sm:$0xf]
  %v8467 = vld [vmem:[%s0 + $0xbc] sm:$0xf]
  %v8468 = vld [vmem:[%s0 + $0xc0] sm:$0xf]
  %v8469 = vld [vmem:[%s0 + $0xc4] sm:$0xf]
  %v8470 = vld [vmem:[%s0 + $0xc8] sm:$0xf]
  %v8471 = vld [vmem:[%s0 + $0xcc] sm:$0xf]
  %v8472 = vld [vmem:[%s0 + $0xd0] sm:$0xf]
  %v8473 = vld [vmem:[%s0 + $0xd4] sm:$0xf]
  %v8474 = vld [vmem:[%s0 + $0xd8] sm:$0xf]
  %v8475 = vld [vmem:[%s0 + $0xdc] sm:$0xf]
  %v8476 = vld [vmem:[%s0 + $0xe0] sm:$0xf]
  %v8477 = vld [vmem:[%s0 + $0xe4] sm:$0xf]
  %v8478 = vld [vmem:[%s0 + $0xe8] sm:$0xf]
  %v8479 = vld [vmem:[%s0 + $0xec] sm:$0xf]
  %v8480 = vld [vmem:[%s0 + $0xf0] sm:$0xf]
  %v8481 = vld [vmem:[%s0 + $0xf4] sm:$0xf]
  %v8482 = vld [vmem:[%s0 + $0xf8] sm:$0xf]
  %v8483 = vld [vmem:[%s0 + $0xfc] sm:$0xf]
  %v8484 = vld [vmem:[%s0 + $0x100] sm:$0xf]
  %v8485 = vld [vmem:[%s0 + $0x104] sm:$0xf]
  %v8486 = vld [vmem:[%s0 + $0x108] sm:$0xf]
  %v8487 = vld [vmem:[%s0 + $0x10c] sm:$0xf]
  %v8488 = vld [vmem:[%s0 + $0x110] sm:$0xf]
  %v8489 = vld [vmem:[%s0 + $0x114] sm:$0xf]
  %v8490 = vld [vmem:[%s0 + $0x118] sm:$0xf]
  %v8491 = vld [vmem:[%s0 + $0x11c] sm:$0xf]
  %v8492 = vld [vmem:[%s0 + $0x120] sm:$0xf]
  %v8493 = vld [vmem:[%s0 + $0x124] sm:$0xf]
  %v8494 = vld [vmem:[%s0 + $0x128] sm:$0xf]
  %v8495 = vld [vmem:[%s0 + $0x12c] sm:$0xf]
  %v8496 = vld [vmem:[%s0 + $0x130] sm:$0xf]
  %v8497 = vld [vmem:[%s0 + $0x134] sm:$0xf]
  %v8498 = vld [vmem:[%s0 + $0x138] sm:$0xf]
  %v8499 = vld [vmem:[%s0 + $0x13c] sm:$0xf]
  %v8500 = vld [vmem:[%s0 + $0x140] sm:$0xf]
  %v8501 = vld [vmem:[%s0 + $0x144] sm:$0x7]
  %vm8502 = vsmask.f32 1280
  %vm8503 = vsmask.f32 5392
  %vm8504 = vmor %vm8502, %vm8503
  %v8506 = vshrl.u32 %v8428, 16
  %v8508 = vrot.slane %v8506, 6
  %v8509 = vshll.u32 %v8428, 16
  %v8511 = vrot.slane %v8509, 7
  %v8512 = vor.u32 %v8508, %v8511
  %v8513 = vrot.slane %v8512, 4
  %v8515 = vshrl.u32 %v8429, 16
  %v8517 = vrot.slane %v8515, 6
  %v8518 = vshll.u32 %v8429, 16
  %v8520 = vrot.slane %v8518, 7
  %v8521 = vor.u32 %v8517, %v8520
  %v8522 = vsel %vm8504, %v8513, %v8521
  %v8523 = vrot.slane %v8521, 4
  %v8525 = vshrl.u32 %v8430, 16
  %v8527 = vrot.slane %v8525, 6
  %v8528 = vshll.u32 %v8430, 16
  %v8530 = vrot.slane %v8528, 7
  %v8531 = vor.u32 %v8527, %v8530
  %v8532 = vsel %vm8504, %v8523, %v8531
  %v8533 = vrot.slane %v8531, 4
  %v8535 = vshrl.u32 %v8431, 16
  %v8537 = vrot.slane %v8535, 6
  %v8538 = vshll.u32 %v8431, 16
  %v8540 = vrot.slane %v8538, 7
  %v8541 = vor.u32 %v8537, %v8540
  %v8542 = vsel %vm8504, %v8533, %v8541
  %v8543 = vrot.slane %v8541, 4
  %v8545 = vshrl.u32 %v8432, 16
  %v8547 = vrot.slane %v8545, 6
  %v8548 = vshll.u32 %v8432, 16
  %v8550 = vrot.slane %v8548, 7
  %v8551 = vor.u32 %v8547, %v8550
  %v8552 = vsel %vm8504, %v8543, %v8551
  %v8553 = vrot.slane %v8551, 4
  %v8555 = vshrl.u32 %v8433, 16
  %v8557 = vrot.slane %v8555, 6
  %v8558 = vshll.u32 %v8433, 16
  %v8560 = vrot.slane %v8558, 7
  %v8561 = vor.u32 %v8557, %v8560
  %v8562 = vsel %vm8504, %v8553, %v8561
  %v8563 = vrot.slane %v8561, 4
  %v8565 = vshrl.u32 %v8434, 16
  %v8567 = vrot.slane %v8565, 6
  %v8568 = vshll.u32 %v8434, 16
  %v8570 = vrot.slane %v8568, 7
  %v8571 = vor.u32 %v8567, %v8570
  %v8572 = vsel %vm8504, %v8563, %v8571
  %v8573 = vrot.slane %v8571, 4
  %v8575 = vshrl.u32 %v8435, 16
  %v8577 = vrot.slane %v8575, 6
  %v8578 = vshll.u32 %v8435, 16
  %v8580 = vrot.slane %v8578, 7
  %v8581 = vor.u32 %v8577, %v8580
  %v8582 = vsel %vm8504, %v8573, %v8581
  %v8583 = vrot.slane %v8581, 4
  %v8585 = vshrl.u32 %v8436, 16
  %v8587 = vrot.slane %v8585, 6
  %v8588 = vshll.u32 %v8436, 16
  %v8590 = vrot.slane %v8588, 7
  %v8591 = vor.u32 %v8587, %v8590
  %v8592 = vsel %vm8504, %v8583, %v8591
  %v8593 = vrot.slane %v8591, 4
  %v8595 = vshrl.u32 %v8437, 16
  %v8597 = vrot.slane %v8595, 6
  %v8598 = vshll.u32 %v8437, 16
  %v8600 = vrot.slane %v8598, 7
  %v8601 = vor.u32 %v8597, %v8600
  %v8602 = vsel %vm8504, %v8593, %v8601
  %v8603 = vrot.slane %v8601, 4
  %v8605 = vshrl.u32 %v8438, 16
  %v8607 = vrot.slane %v8605, 6
  %v8608 = vshll.u32 %v8438, 16
  %v8610 = vrot.slane %v8608, 7
  %v8611 = vor.u32 %v8607, %v8610
  %v8612 = vsel %vm8504, %v8603, %v8611
  %v8613 = vrot.slane %v8611, 4
  %v8615 = vshrl.u32 %v8439, 16
  %v8617 = vrot.slane %v8615, 6
  %v8618 = vshll.u32 %v8439, 16
  %v8620 = vrot.slane %v8618, 7
  %v8621 = vor.u32 %v8617, %v8620
  %v8622 = vsel %vm8504, %v8613, %v8621
  %v8623 = vrot.slane %v8621, 4
  %v8625 = vshrl.u32 %v8440, 16
  %v8627 = vrot.slane %v8625, 6
  %v8628 = vshll.u32 %v8440, 16
  %v8630 = vrot.slane %v8628, 7
  %v8631 = vor.u32 %v8627, %v8630
  %v8632 = vsel %vm8504, %v8623, %v8631
  %v8633 = vrot.slane %v8631, 4
  %v8635 = vshrl.u32 %v8441, 16
  %v8637 = vrot.slane %v8635, 6
  %v8638 = vshll.u32 %v8441, 16
  %v8640 = vrot.slane %v8638, 7
  %v8641 = vor.u32 %v8637, %v8640
  %v8642 = vsel %vm8504, %v8633, %v8641
  %v8643 = vrot.slane %v8641, 4
  %v8645 = vshrl.u32 %v8442, 16
  %v8647 = vrot.slane %v8645, 6
  %v8648 = vshll.u32 %v8442, 16
  %v8650 = vrot.slane %v8648, 7
  %v8651 = vor.u32 %v8647, %v8650
  %v8652 = vsel %vm8504, %v8643, %v8651
  %v8653 = vrot.slane %v8651, 4
  %v8655 = vshrl.u32 %v8443, 16
  %v8657 = vrot.slane %v8655, 6
  %v8658 = vshll.u32 %v8443, 16
  %v8660 = vrot.slane %v8658, 7
  %v8661 = vor.u32 %v8657, %v8660
  %v8662 = vsel %vm8504, %v8653, %v8661
  %v8663 = vrot.slane %v8661, 4
  %v8665 = vshrl.u32 %v8444, 16
  %v8667 = vrot.slane %v8665, 6
  %v8668 = vshll.u32 %v8444, 16
  %v8670 = vrot.slane %v8668, 7
  %v8671 = vor.u32 %v8667, %v8670
  %v8672 = vsel %vm8504, %v8663, %v8671
  %v8673 = vrot.slane %v8671, 4
  %v8675 = vshrl.u32 %v8445, 16
  %v8677 = vrot.slane %v8675, 6
  %v8678 = vshll.u32 %v8445, 16
  %v8680 = vrot.slane %v8678, 7
  %v8681 = vor.u32 %v8677, %v8680
  %v8682 = vsel %vm8504, %v8673, %v8681
  %v8683 = vrot.slane %v8681, 4
  %v8685 = vshrl.u32 %v8446, 16
  %v8687 = vrot.slane %v8685, 6
  %v8688 = vshll.u32 %v8446, 16
  %v8690 = vrot.slane %v8688, 7
  %v8691 = vor.u32 %v8687, %v8690
  %v8692 = vsel %vm8504, %v8683, %v8691
  %v8693 = vrot.slane %v8691, 4
  %v8695 = vshrl.u32 %v8447, 16
  %v8697 = vrot.slane %v8695, 6
  %v8698 = vshll.u32 %v8447, 16
  %v8700 = vrot.slane %v8698, 7
  %v8701 = vor.u32 %v8697, %v8700
  %v8702 = vsel %vm8504, %v8693, %v8701
  %v8703 = vrot.slane %v8701, 4
  %v8705 = vshrl.u32 %v8448, 16
  %v8707 = vrot.slane %v8705, 6
  %v8708 = vshll.u32 %v8448, 16
  %v8710 = vrot.slane %v8708, 7
  %v8711 = vor.u32 %v8707, %v8710
  %v8712 = vsel %vm8504, %v8703, %v8711
  %v8713 = vrot.slane %v8711, 4
  %v8715 = vshrl.u32 %v8449, 16
  %v8717 = vrot.slane %v8715, 6
  %v8718 = vshll.u32 %v8449, 16
  %v8720 = vrot.slane %v8718, 7
  %v8721 = vor.u32 %v8717, %v8720
  %v8722 = vsel %vm8504, %v8713, %v8721
  %v8723 = vrot.slane %v8721, 4
  %v8725 = vshrl.u32 %v8450, 16
  %v8727 = vrot.slane %v8725, 6
  %v8728 = vshll.u32 %v8450, 16
  %v8730 = vrot.slane %v8728, 7
  %v8731 = vor.u32 %v8727, %v8730
  %v8732 = vsel %vm8504, %v8723, %v8731
  %v8733 = vrot.slane %v8731, 4
  %v8735 = vshrl.u32 %v8451, 16
  %v8737 = vrot.slane %v8735, 6
  %v8738 = vshll.u32 %v8451, 16
  %v8740 = vrot.slane %v8738, 7
  %v8741 = vor.u32 %v8737, %v8740
  %v8742 = vsel %vm8504, %v8733, %v8741
  %v8743 = vrot.slane %v8741, 4
  %v8745 = vshrl.u32 %v8452, 16
  %v8747 = vrot.slane %v8745, 6
  %v8748 = vshll.u32 %v8452, 16
  %v8750 = vrot.slane %v8748, 7
  %v8751 = vor.u32 %v8747, %v8750
  %v8752 = vsel %vm8504, %v8743, %v8751
  %v8753 = vrot.slane %v8751, 4
  %v8755 = vshrl.u32 %v8453, 16
  %v8757 = vrot.slane %v8755, 6
  %v8758 = vshll.u32 %v8453, 16
  %v8760 = vrot.slane %v8758, 7
  %v8761 = vor.u32 %v8757, %v8760
  %v8762 = vsel %vm8504, %v8753, %v8761
  %v8763 = vrot.slane %v8761, 4
  %v8765 = vshrl.u32 %v8454, 16
  %v8767 = vrot.slane %v8765, 6
  %v8768 = vshll.u32 %v8454, 16
  %v8770 = vrot.slane %v8768, 7
  %v8771 = vor.u32 %v8767, %v8770
  %v8772 = vsel %vm8504, %v8763, %v8771
  %v8773 = vrot.slane %v8771, 4
  %v8775 = vshrl.u32 %v8455, 16
  %v8777 = vrot.slane %v8775, 6
  %v8778 = vshll.u32 %v8455, 16
  %v8780 = vrot.slane %v8778, 7
  %v8781 = vor.u32 %v8777, %v8780
  %v8782 = vsel %vm8504, %v8773, %v8781
  %v8783 = vrot.slane %v8781, 4
  %v8785 = vshrl.u32 %v8456, 16
  %v8787 = vrot.slane %v8785, 6
  %v8788 = vshll.u32 %v8456, 16
  %v8790 = vrot.slane %v8788, 7
  %v8791 = vor.u32 %v8787, %v8790
  %v8792 = vsel %vm8504, %v8783, %v8791
  %v8793 = vrot.slane %v8791, 4
  %v8795 = vshrl.u32 %v8457, 16
  %v8797 = vrot.slane %v8795, 6
  %v8798 = vshll.u32 %v8457, 16
  %v8800 = vrot.slane %v8798, 7
  %v8801 = vor.u32 %v8797, %v8800
  %v8802 = vsel %vm8504, %v8793, %v8801
  %v8803 = vrot.slane %v8801, 4
  %v8805 = vshrl.u32 %v8458, 16
  %v8807 = vrot.slane %v8805, 6
  %v8808 = vshll.u32 %v8458, 16
  %v8810 = vrot.slane %v8808, 7
  %v8811 = vor.u32 %v8807, %v8810
  %v8812 = vsel %vm8504, %v8803, %v8811
  %v8813 = vrot.slane %v8811, 4
  %v8815 = vshrl.u32 %v8459, 16
  %v8817 = vrot.slane %v8815, 6
  %v8818 = vshll.u32 %v8459, 16
  %v8820 = vrot.slane %v8818, 7
  %v8821 = vor.u32 %v8817, %v8820
  %v8822 = vsel %vm8504, %v8813, %v8821
  %v8823 = vrot.slane %v8821, 4
  %v8825 = vshrl.u32 %v8460, 16
  %v8827 = vrot.slane %v8825, 6
  %v8828 = vshll.u32 %v8460, 16
  %v8830 = vrot.slane %v8828, 7
  %v8831 = vor.u32 %v8827, %v8830
  %v8832 = vsel %vm8504, %v8823, %v8831
  %v8833 = vrot.slane %v8831, 4
  %v8835 = vshrl.u32 %v8461, 16
  %v8837 = vrot.slane %v8835, 6
  %v8838 = vshll.u32 %v8461, 16
  %v8840 = vrot.slane %v8838, 7
  %v8841 = vor.u32 %v8837, %v8840
  %v8842 = vsel %vm8504, %v8833, %v8841
  %v8843 = vrot.slane %v8841, 4
  %v8845 = vshrl.u32 %v8462, 16
  %v8847 = vrot.slane %v8845, 6
  %v8848 = vshll.u32 %v8462, 16
  %v8850 = vrot.slane %v8848, 7
  %v8851 = vor.u32 %v8847, %v8850
  %v8852 = vsel %vm8504, %v8843, %v8851
  %v8853 = vrot.slane %v8851, 4
  %v8855 = vshrl.u32 %v8463, 16
  %v8857 = vrot.slane %v8855, 6
  %v8858 = vshll.u32 %v8463, 16
  %v8860 = vrot.slane %v8858, 7
  %v8861 = vor.u32 %v8857, %v8860
  %v8862 = vsel %vm8504, %v8853, %v8861
  %v8863 = vrot.slane %v8861, 4
  %v8865 = vshrl.u32 %v8464, 16
  %v8867 = vrot.slane %v8865, 6
  %v8868 = vshll.u32 %v8464, 16
  %v8870 = vrot.slane %v8868, 7
  %v8871 = vor.u32 %v8867, %v8870
  %v8872 = vsel %vm8504, %v8863, %v8871
  %v8874 = vshrl.u32 %v8465, 16
  %v8876 = vrot.slane %v8874, 6
  %v8877 = vshll.u32 %v8465, 16
  %v8879 = vrot.slane %v8877, 7
  %v8880 = vor.u32 %v8876, %v8879
  %v8881 = vrot.slane %v8880, 4
  %v8883 = vshrl.u32 %v8466, 16
  %v8885 = vrot.slane %v8883, 6
  %v8886 = vshll.u32 %v8466, 16
  %v8888 = vrot.slane %v8886, 7
  %v8889 = vor.u32 %v8885, %v8888
  %v8890 = vsel %vm8504, %v8881, %v8889
  %v8891 = vrot.slane %v8889, 4
  %v8893 = vshrl.u32 %v8467, 16
  %v8895 = vrot.slane %v8893, 6
  %v8896 = vshll.u32 %v8467, 16
  %v8898 = vrot.slane %v8896, 7
  %v8899 = vor.u32 %v8895, %v8898
  %v8900 = vsel %vm8504, %v8891, %v8899
  %v8901 = vrot.slane %v8899, 4
  %v8903 = vshrl.u32 %v8468, 16
  %v8905 = vrot.slane %v8903, 6
  %v8906 = vshll.u32 %v8468, 16
  %v8908 = vrot.slane %v8906, 7
  %v8909 = vor.u32 %v8905, %v8908
  %v8910 = vsel %vm8504, %v8901, %v8909
  %v8911 = vrot.slane %v8909, 4
  %v8913 = vshrl.u32 %v8469, 16
  %v8915 = vrot.slane %v8913, 6
  %v8916 = vshll.u32 %v8469, 16
  %v8918 = vrot.slane %v8916, 7
  %v8919 = vor.u32 %v8915, %v8918
  %v8920 = vsel %vm8504, %v8911, %v8919
  %v8921 = vrot.slane %v8919, 4
  %v8923 = vshrl.u32 %v8470, 16
  %v8925 = vrot.slane %v8923, 6
  %v8926 = vshll.u32 %v8470, 16
  %v8928 = vrot.slane %v8926, 7
  %v8929 = vor.u32 %v8925, %v8928
  %v8930 = vsel %vm8504, %v8921, %v8929
  %v8931 = vrot.slane %v8929, 4
  %v8933 = vshrl.u32 %v8471, 16
  %v8935 = vrot.slane %v8933, 6
  %v8936 = vshll.u32 %v8471, 16
  %v8938 = vrot.slane %v8936, 7
  %v8939 = vor.u32 %v8935, %v8938
  %v8940 = vsel %vm8504, %v8931, %v8939
  %v8941 = vrot.slane %v8939, 4
  %v8943 = vshrl.u32 %v8472, 16
  %v8945 = vrot.slane %v8943, 6
  %v8946 = vshll.u32 %v8472, 16
  %v8948 = vrot.slane %v8946, 7
  %v8949 = vor.u32 %v8945, %v8948
  %v8950 = vsel %vm8504, %v8941, %v8949
  %v8951 = vrot.slane %v8949, 4
  %v8953 = vshrl.u32 %v8473, 16
  %v8955 = vrot.slane %v8953, 6
  %v8956 = vshll.u32 %v8473, 16
  %v8958 = vrot.slane %v8956, 7
  %v8959 = vor.u32 %v8955, %v8958
  %v8960 = vsel %vm8504, %v8951, %v8959
  %v8961 = vrot.slane %v8959, 4
  %v8963 = vshrl.u32 %v8474, 16
  %v8965 = vrot.slane %v8963, 6
  %v8966 = vshll.u32 %v8474, 16
  %v8968 = vrot.slane %v8966, 7
  %v8969 = vor.u32 %v8965, %v8968
  %v8970 = vsel %vm8504, %v8961, %v8969
  %v8971 = vrot.slane %v8969, 4
  %v8973 = vshrl.u32 %v8475, 16
  %v8975 = vrot.slane %v8973, 6
  %v8976 = vshll.u32 %v8475, 16
  %v8978 = vrot.slane %v8976, 7
  %v8979 = vor.u32 %v8975, %v8978
  %v8980 = vsel %vm8504, %v8971, %v8979
  %v8981 = vrot.slane %v8979, 4
  %v8983 = vshrl.u32 %v8476, 16
  %v8985 = vrot.slane %v8983, 6
  %v8986 = vshll.u32 %v8476, 16
  %v8988 = vrot.slane %v8986, 7
  %v8989 = vor.u32 %v8985, %v8988
  %v8990 = vsel %vm8504, %v8981, %v8989
  %v8991 = vrot.slane %v8989, 4
  %v8993 = vshrl.u32 %v8477, 16
  %v8995 = vrot.slane %v8993, 6
  %v8996 = vshll.u32 %v8477, 16
  %v8998 = vrot.slane %v8996, 7
  %v8999 = vor.u32 %v8995, %v8998
  %v9000 = vsel %vm8504, %v8991, %v8999
  %v9001 = vrot.slane %v8999, 4
  %v9003 = vshrl.u32 %v8478, 16
  %v9005 = vrot.slane %v9003, 6
  %v9006 = vshll.u32 %v8478, 16
  %v9008 = vrot.slane %v9006, 7
  %v9009 = vor.u32 %v9005, %v9008
  %v9010 = vsel %vm8504, %v9001, %v9009
  %v9011 = vrot.slane %v9009, 4
  %v9013 = vshrl.u32 %v8479, 16
  %v9015 = vrot.slane %v9013, 6
  %v9016 = vshll.u32 %v8479, 16
  %v9018 = vrot.slane %v9016, 7
  %v9019 = vor.u32 %v9015, %v9018
  %v9020 = vsel %vm8504, %v9011, %v9019
  %v9021 = vrot.slane %v9019, 4
  %v9023 = vshrl.u32 %v8480, 16
  %v9025 = vrot.slane %v9023, 6
  %v9026 = vshll.u32 %v8480, 16
  %v9028 = vrot.slane %v9026, 7
  %v9029 = vor.u32 %v9025, %v9028
  %v9030 = vsel %vm8504, %v9021, %v9029
  %v9031 = vrot.slane %v9029, 4
  %v9033 = vshrl.u32 %v8481, 16
  %v9035 = vrot.slane %v9033, 6
  %v9036 = vshll.u32 %v8481, 16
  %v9038 = vrot.slane %v9036, 7
  %v9039 = vor.u32 %v9035, %v9038
  %v9040 = vsel %vm8504, %v9031, %v9039
  %v9041 = vrot.slane %v9039, 4
  %v9043 = vshrl.u32 %v8482, 16
  %v9045 = vrot.slane %v9043, 6
  %v9046 = vshll.u32 %v8482, 16
  %v9048 = vrot.slane %v9046, 7
  %v9049 = vor.u32 %v9045, %v9048
  %v9050 = vsel %vm8504, %v9041, %v9049
  %v9051 = vrot.slane %v9049, 4
  %v9053 = vshrl.u32 %v8483, 16
  %v9055 = vrot.slane %v9053, 6
  %v9056 = vshll.u32 %v8483, 16
  %v9058 = vrot.slane %v9056, 7
  %v9059 = vor.u32 %v9055, %v9058
  %v9060 = vsel %vm8504, %v9051, %v9059
  %v9061 = vrot.slane %v9059, 4
  %v9063 = vshrl.u32 %v8484, 16
  %v9065 = vrot.slane %v9063, 6
  %v9066 = vshll.u32 %v8484, 16
  %v9068 = vrot.slane %v9066, 7
  %v9069 = vor.u32 %v9065, %v9068
  %v9070 = vsel %vm8504, %v9061, %v9069
  %v9071 = vrot.slane %v9069, 4
  %v9073 = vshrl.u32 %v8485, 16
  %v9075 = vrot.slane %v9073, 6
  %v9076 = vshll.u32 %v8485, 16
  %v9078 = vrot.slane %v9076, 7
  %v9079 = vor.u32 %v9075, %v9078
  %v9080 = vsel %vm8504, %v9071, %v9079
  %v9081 = vrot.slane %v9079, 4
  %v9083 = vshrl.u32 %v8486, 16
  %v9085 = vrot.slane %v9083, 6
  %v9086 = vshll.u32 %v8486, 16
  %v9088 = vrot.slane %v9086, 7
  %v9089 = vor.u32 %v9085, %v9088
  %v9090 = vsel %vm8504, %v9081, %v9089
  %v9091 = vrot.slane %v9089, 4
  %v9093 = vshrl.u32 %v8487, 16
  %v9095 = vrot.slane %v9093, 6
  %v9096 = vshll.u32 %v8487, 16
  %v9098 = vrot.slane %v9096, 7
  %v9099 = vor.u32 %v9095, %v9098
  %v9100 = vsel %vm8504, %v9091, %v9099
  %v9101 = vrot.slane %v9099, 4
  %v9103 = vshrl.u32 %v8488, 16
  %v9105 = vrot.slane %v9103, 6
  %v9106 = vshll.u32 %v8488, 16
  %v9108 = vrot.slane %v9106, 7
  %v9109 = vor.u32 %v9105, %v9108
  %v9110 = vsel %vm8504, %v9101, %v9109
  %v9111 = vrot.slane %v9109, 4
  %v9113 = vshrl.u32 %v8489, 16
  %v9115 = vrot.slane %v9113, 6
  %v9116 = vshll.u32 %v8489, 16
  %v9118 = vrot.slane %v9116, 7
  %v9119 = vor.u32 %v9115, %v9118
  %v9120 = vsel %vm8504, %v9111, %v9119
  %v9121 = vrot.slane %v9119, 4
  %v9123 = vshrl.u32 %v8490, 16
  %v9125 = vrot.slane %v9123, 6
  %v9126 = vshll.u32 %v8490, 16
  %v9128 = vrot.slane %v9126, 7
  %v9129 = vor.u32 %v9125, %v9128
  %v9130 = vsel %vm8504, %v9121, %v9129
  %v9131 = vrot.slane %v9129, 4
  %v9133 = vshrl.u32 %v8491, 16
  %v9135 = vrot.slane %v9133, 6
  %v9136 = vshll.u32 %v8491, 16
  %v9138 = vrot.slane %v9136, 7
  %v9139 = vor.u32 %v9135, %v9138
  %v9140 = vsel %vm8504, %v9131, %v9139
  %v9141 = vrot.slane %v9139, 4
  %v9143 = vshrl.u32 %v8492, 16
  %v9145 = vrot.slane %v9143, 6
  %v9146 = vshll.u32 %v8492, 16
  %v9148 = vrot.slane %v9146, 7
  %v9149 = vor.u32 %v9145, %v9148
  %v9150 = vsel %vm8504, %v9141, %v9149
  %v9151 = vrot.slane %v9149, 4
  %v9153 = vshrl.u32 %v8493, 16
  %v9155 = vrot.slane %v9153, 6
  %v9156 = vshll.u32 %v8493, 16
  %v9158 = vrot.slane %v9156, 7
  %v9159 = vor.u32 %v9155, %v9158
  %v9160 = vsel %vm8504, %v9151, %v9159
  %v9161 = vrot.slane %v9159, 4
  %v9163 = vshrl.u32 %v8494, 16
  %v9165 = vrot.slane %v9163, 6
  %v9166 = vshll.u32 %v8494, 16
  %v9168 = vrot.slane %v9166, 7
  %v9169 = vor.u32 %v9165, %v9168
  %v9170 = vsel %vm8504, %v9161, %v9169
  %v9171 = vrot.slane %v9169, 4
  %v9173 = vshrl.u32 %v8495, 16
  %v9175 = vrot.slane %v9173, 6
  %v9176 = vshll.u32 %v8495, 16
  %v9178 = vrot.slane %v9176, 7
  %v9179 = vor.u32 %v9175, %v9178
  %v9180 = vsel %vm8504, %v9171, %v9179
  %v9181 = vrot.slane %v9179, 4
  %v9183 = vshrl.u32 %v8496, 16
  %v9185 = vrot.slane %v9183, 6
  %v9186 = vshll.u32 %v8496, 16
  %v9188 = vrot.slane %v9186, 7
  %v9189 = vor.u32 %v9185, %v9188
  %v9190 = vsel %vm8504, %v9181, %v9189
  %v9191 = vrot.slane %v9189, 4
  %v9193 = vshrl.u32 %v8497, 16
  %v9195 = vrot.slane %v9193, 6
  %v9196 = vshll.u32 %v8497, 16
  %v9198 = vrot.slane %v9196, 7
  %v9199 = vor.u32 %v9195, %v9198
  %v9200 = vsel %vm8504, %v9191, %v9199
  %v9201 = vrot.slane %v9199, 4
  %v9203 = vshrl.u32 %v8498, 16
  %v9205 = vrot.slane %v9203, 6
  %v9206 = vshll.u32 %v8498, 16
  %v9208 = vrot.slane %v9206, 7
  %v9209 = vor.u32 %v9205, %v9208
  %v9210 = vsel %vm8504, %v9201, %v9209
  %v9211 = vrot.slane %v9209, 4
  %v9213 = vshrl.u32 %v8499, 16
  %v9215 = vrot.slane %v9213, 6
  %v9216 = vshll.u32 %v8499, 16
  %v9218 = vrot.slane %v9216, 7
  %v9219 = vor.u32 %v9215, %v9218
  %v9220 = vsel %vm8504, %v9211, %v9219
  %v9221 = vrot.slane %v9219, 4
  %v9223 = vshrl.u32 %v8500, 16
  %v9225 = vrot.slane %v9223, 6
  %v9226 = vshll.u32 %v8500, 16
  %v9228 = vrot.slane %v9226, 7
  %v9229 = vor.u32 %v9225, %v9228
  %v9230 = vsel %vm8504, %v9221, %v9229
  %v9231 = vrot.slane %v9229, 4
  %v9233 = vshrl.u32 %v8501, 16
  %v9235 = vrot.slane %v9233, 6
  %v9236 = vshll.u32 %v8501, 16
  %v9238 = vrot.slane %v9236, 7
  %v9239 = vor.u32 %v9235, %v9238
  %v9240 = vsel %vm8504, %v9231, %v9239
  %v9241 = vld [vmem:[%s1 + $0xc] sm:$0xc]
  %v9242 = vunpack.c.l.b16 %v8522
  %v9243 = vunpack.c.l.b16 %v8532
  %v9244 = vunpack.c.l.b16 %v8542
  %v9245 = vunpack.c.l.b16 %v8552
  %v9246 = vunpack.c.l.b16 %v8562
  %v9247 = vunpack.c.l.b16 %v8572
  %v9248 = vunpack.c.l.b16 %v8582
  %v9249 = vunpack.c.l.b16 %v8592
  %v9250 = vunpack.c.l.b16 %v8602
  %v9251 = vunpack.c.l.b16 %v8612
  %v9252 = vunpack.c.l.b16 %v8622
  %v9253 = vunpack.c.l.b16 %v8632
  %v9254 = vunpack.c.l.b16 %v8642
  %v9255 = vunpack.c.l.b16 %v8652
  %v9256 = vunpack.c.l.b16 %v8662
  %v9257 = vunpack.c.l.b16 %v8672
  %v9258 = vunpack.c.l.b16 %v8682
  %v9259 = vunpack.c.l.b16 %v8692
  %v9260 = vunpack.c.l.b16 %v8702
  %v9261 = vunpack.c.l.b16 %v8712
  %v9262 = vunpack.c.l.b16 %v8722
  %v9263 = vunpack.c.l.b16 %v8732
  %v9264 = vunpack.c.l.b16 %v8742
  %v9265 = vunpack.c.l.b16 %v8752
  %v9266 = vunpack.c.l.b16 %v8762
  %v9267 = vunpack.c.l.b16 %v8772
  %v9268 = vunpack.c.l.b16 %v8782
  %v9269 = vunpack.c.l.b16 %v8792
  %v9270 = vunpack.c.l.b16 %v8802
  %v9271 = vunpack.c.l.b16 %v8812
  %v9272 = vunpack.c.l.b16 %v8822
  %v9273 = vunpack.c.l.b16 %v8832
  %v9274 = vunpack.c.l.b16 %v8842
  %v9275 = vunpack.c.l.b16 %v8852
  %v9276 = vunpack.c.l.b16 %v8862
  %v9277 = vunpack.c.l.b16 %v8872
  %v9278 = vunpack.c.l.b16 %v8890
  %v9279 = vunpack.c.l.b16 %v8900
  %v9280 = vunpack.c.l.b16 %v8910
  %v9281 = vunpack.c.l.b16 %v8920
  %v9282 = vunpack.c.l.b16 %v8930
  %v9283 = vunpack.c.l.b16 %v8940
  %v9284 = vunpack.c.l.b16 %v8950
  %v9285 = vunpack.c.l.b16 %v8960
  %v9286 = vunpack.c.l.b16 %v8970
  %v9287 = vunpack.c.l.b16 %v8980
  %v9288 = vunpack.c.l.b16 %v8990
  %v9289 = vunpack.c.l.b16 %v9000
  %v9290 = vunpack.c.l.b16 %v9010
  %v9291 = vunpack.c.l.b16 %v9020
  %v9292 = vunpack.c.l.b16 %v9030
  %v9293 = vunpack.c.l.b16 %v9040
  %v9294 = vunpack.c.l.b16 %v9050
  %v9295 = vunpack.c.l.b16 %v9060
  %v9296 = vunpack.c.l.b16 %v9070
  %v9297 = vunpack.c.l.b16 %v9080
  %v9298 = vunpack.c.l.b16 %v9090
  %v9299 = vunpack.c.l.b16 %v9100
  %v9300 = vunpack.c.l.b16 %v9110
  %v9301 = vunpack.c.l.b16 %v9120
  %v9302 = vunpack.c.l.b16 %v9130
  %v9303 = vunpack.c.l.b16 %v9140
  %v9304 = vunpack.c.l.b16 %v9150
  %v9305 = vunpack.c.l.b16 %v9160
  %v9306 = vunpack.c.l.b16 %v9170
  %v9307 = vunpack.c.l.b16 %v9180
  %v9308 = vunpack.c.l.b16 %v9190
  %v9309 = vunpack.c.l.b16 %v9200
  %v9310 = vunpack.c.l.b16 %v9210
  %v9311 = vunpack.c.l.b16 %v9220
  %v9312 = vunpack.c.l.b16 %v9230
  %v9313 = vunpack.c.l.b16 %v9240
  %v9314 = vpack.c.b16 %v9243, %v9242
  %v9315 = vpack.c.b16 %v9245, %v9244
  %v9316 = vpack.c.b16 %v9247, %v9246
  %v9317 = vpack.c.b16 %v9249, %v9248
  %v9318 = vpack.c.b16 %v9251, %v9250
  %v9319 = vpack.c.b16 %v9253, %v9252
  %v9320 = vpack.c.b16 %v9255, %v9254
  %v9321 = vpack.c.b16 %v9257, %v9256
  %v9322 = vpack.c.b16 %v9259, %v9258
  %v9323 = vpack.c.b16 %v9261, %v9260
  %v9324 = vpack.c.b16 %v9263, %v9262
  %v9325 = vpack.c.b16 %v9265, %v9264
  %v9326 = vpack.c.b16 %v9267, %v9266
  %v9327 = vpack.c.b16 %v9269, %v9268
  %v9328 = vpack.c.b16 %v9271, %v9270
  %v9329 = vpack.c.b16 %v9273, %v9272
  %v9330 = vpack.c.b16 %v9275, %v9274
  %v9331 = vpack.c.b16 %v9277, %v9276
  %v9332 = vpack.c.b16 %v9279, %v9278
  %v9333 = vpack.c.b16 %v9281, %v9280
  %v9334 = vpack.c.b16 %v9283, %v9282
  %v9335 = vpack.c.b16 %v9285, %v9284
  %v9336 = vpack.c.b16 %v9287, %v9286
  %v9337 = vpack.c.b16 %v9289, %v9288
  %v9338 = vpack.c.b16 %v9291, %v9290
  %v9339 = vpack.c.b16 %v9293, %v9292
  %v9340 = vpack.c.b16 %v9295, %v9294
  %v9341 = vpack.c.b16 %v9297, %v9296
  %v9342 = vpack.c.b16 %v9299, %v9298
  %v9343 = vpack.c.b16 %v9301, %v9300
  %v9344 = vpack.c.b16 %v9303, %v9302
  %v9345 = vpack.c.b16 %v9305, %v9304
  %v9346 = vpack.c.b16 %v9307, %v9306
  %v9347 = vpack.c.b16 %v9309, %v9308
  %v9348 = vpack.c.b16 %v9311, %v9310
  %v9349 = vpack.c.b16 %v9313, %v9312
  %v9351 = vunpack.c.l.b16 %v9241
  %v9352 = vpack.c.b16 %v9351, %v9351
  %v9353 = vrot.slane %v9352, 2
  %v9355 = vsel %vm280, %v9314, 0
  %v9358 = vsel %vm280, %v9315, 0
  %v9361 = vsel %vm280, %v9316, 0
  %v9364 = vsel %vm280, %v9317, 0
  %v9367 = vsel %vm280, %v9318, 0
  %v9370 = vsel %vm280, %v9319, 0
  %v9373 = vsel %vm280, %v9320, 0
  %v9376 = vsel %vm280, %v9321, 0
  %v9379 = vsel %vm280, %v9322, 0
  %v9382 = vsel %vm280, %v9323, 0
  %v9385 = vsel %vm280, %v9324, 0
  %v9388 = vsel %vm280, %v9325, 0
  %v9391 = vsel %vm280, %v9326, 0
  %v9394 = vsel %vm280, %v9327, 0
  %v9397 = vsel %vm280, %v9328, 0
  %v9400 = vsel %vm280, %v9329, 0
  %v9403 = vsel %vm280, %v9330, 0
  %v9406 = vsel %vm280, %v9331, 0
  %v9409 = vsel %vm280, %v9332, 0
  %v9412 = vsel %vm280, %v9333, 0
  %v9415 = vsel %vm280, %v9334, 0
  %v9418 = vsel %vm280, %v9335, 0
  %v9421 = vsel %vm280, %v9336, 0
  %v9424 = vsel %vm280, %v9337, 0
  %v9427 = vsel %vm280, %v9338, 0
  %v9430 = vsel %vm280, %v9339, 0
  %v9433 = vsel %vm280, %v9340, 0
  %v9436 = vsel %vm280, %v9341, 0
  %v9439 = vsel %vm280, %v9342, 0
  %v9442 = vsel %vm280, %v9343, 0
  %v9445 = vsel %vm280, %v9344, 0
  %v9448 = vsel %vm280, %v9345, 0
  %v9451 = vsel %vm280, %v9346, 0
  %v9454 = vsel %vm280, %v9347, 0
  %v9457 = vsel %vm280, %v9348, 0
  %v9460 = vsel %vm280, %v9349, 0
  %v9463 = vsel %vm389, %v9353, 0
  %9465 = vmatprep.subr.bf16.mxu0 0
  %9466 = vmatpush1.bf16.msra.mxu0 0
  %9467 = vmatprep.subr.bf16.mxu0 0
  %9468 = vmatpush1.bf16.msra.mxu0 0
  %9469 = vmatprep.subr.bf16.mxu0 0
  %9470 = vmatpush1.bf16.msra.mxu0 0
  %9471 = vmatprep.subr.bf16.mxu0 0
  %9472 = vmatpush1.bf16.msra.mxu0 0
  %9473 = vmatprep.subr.bf16.mxu0 0
  %9474 = vmatpush1.bf16.msra.mxu0 0
  %9475 = vmatprep.subr.bf16.mxu0 0
  %9476 = vmatpush1.bf16.msra.mxu0 0
  %9477 = vmatprep.subr.bf16.mxu0 0
  %9478 = vmatpush1.bf16.msra.mxu0 0
  %9479 = vmatprep.subr.bf16.mxu0 0
  %9480 = vmatpush1.bf16.msra.mxu0 %v9463
  %9481 = vmatprep.subr.bf16.mxu0 0
  %9482 = vmatpush2.bf16.msra.mxu0 0
  %9483 = vmatprep.subr.bf16.mxu0 0
  %9484 = vmatpush2.bf16.msra.mxu0 0
  %9485 = vmatprep.subr.bf16.mxu0 0
  %9486 = vmatpush2.bf16.msra.mxu0 0
  %9487 = vmatprep.subr.bf16.mxu0 0
  %9488 = vmatpush2.bf16.msra.mxu0 0
  %9489 = vmatprep.subr.bf16.mxu0 0
  %9490 = vmatpush2.bf16.msra.mxu0 0
  %9491 = vmatprep.subr.bf16.mxu0 0
  %9492 = vmatpush2.bf16.msra.mxu0 0
  %9493 = vmatprep.subr.bf16.mxu0 0
  %9494 = vmatpush2.bf16.msra.mxu0 0
  %9495 = vmatprep.subr.bf16.mxu0 0
  %9496 = vmatpush2.bf16.msra.mxu0 0
  %9497 = vmatprep.mubr.bf16.mxu0 0
  %9498 = vmatmul.mubr.bf16.gmra.mxu0 %v9355
  %v9499 = vpop.f32.mrf.mxu0
  %v9500 = vadd.f32 0.0, %v9499
  %v9501 = vpop.f32.mrf.mxu0
  %v9502 = vpop.f32.mrf.mxu0
  %v9503 = vadd.f32 0.0, %v9502
  %v9504 = vpop.f32.mrf.mxu0
  %9505 = vmatprep.mubr.bf16.mxu0 0
  %9506 = vmatmul.mubr.bf16.gmra.mxu0 %v9358
  %v9507 = vpop.f32.mrf.mxu0
  %v9508 = vadd.f32 0.0, %v9507
  %v9509 = vpop.f32.mrf.mxu0
  %v9510 = vpop.f32.mrf.mxu0
  %v9511 = vadd.f32 0.0, %v9510
  %v9512 = vpop.f32.mrf.mxu0
  %9513 = vmatprep.mubr.bf16.mxu0 0
  %9514 = vmatmul.mubr.bf16.gmra.mxu0 %v9361
  %v9515 = vpop.f32.mrf.mxu0
  %v9516 = vadd.f32 0.0, %v9515
  %v9517 = vpop.f32.mrf.mxu0
  %v9518 = vpop.f32.mrf.mxu0
  %v9519 = vadd.f32 0.0, %v9518
  %v9520 = vpop.f32.mrf.mxu0
  %9521 = vmatprep.mubr.bf16.mxu0 0
  %9522 = vmatmul.mubr.bf16.gmra.mxu0 %v9364
  %v9523 = vpop.f32.mrf.mxu0
  %v9524 = vadd.f32 0.0, %v9523
  %v9525 = vpop.f32.mrf.mxu0
  %v9526 = vpop.f32.mrf.mxu0
  %v9527 = vadd.f32 0.0, %v9526
  %v9528 = vpop.f32.mrf.mxu0
  %9529 = vmatprep.mubr.bf16.mxu0 0
  %9530 = vmatmul.mubr.bf16.gmra.mxu0 %v9367
  %v9531 = vpop.f32.mrf.mxu0
  %v9532 = vadd.f32 0.0, %v9531
  %v9533 = vpop.f32.mrf.mxu0
  %v9534 = vpop.f32.mrf.mxu0
  %v9535 = vadd.f32 0.0, %v9534
  %v9536 = vpop.f32.mrf.mxu0
  %9537 = vmatprep.mubr.bf16.mxu0 0
  %9538 = vmatmul.mubr.bf16.gmra.mxu0 %v9370
  %v9539 = vpop.f32.mrf.mxu0
  %v9540 = vadd.f32 0.0, %v9539
  %v9541 = vpop.f32.mrf.mxu0
  %v9542 = vpop.f32.mrf.mxu0
  %v9543 = vadd.f32 0.0, %v9542
  %v9544 = vpop.f32.mrf.mxu0
  %9545 = vmatprep.mubr.bf16.mxu0 0
  %9546 = vmatmul.mubr.bf16.gmra.mxu0 %v9373
  %v9547 = vpop.f32.mrf.mxu0
  %v9548 = vadd.f32 0.0, %v9547
  %v9549 = vpop.f32.mrf.mxu0
  %v9550 = vpop.f32.mrf.mxu0
  %v9551 = vadd.f32 0.0, %v9550
  %v9552 = vpop.f32.mrf.mxu0
  %9553 = vmatprep.mubr.bf16.mxu0 0
  %9554 = vmatmul.mubr.bf16.gmra.mxu0 %v9376
  %v9555 = vpop.f32.mrf.mxu0
  %v9556 = vadd.f32 0.0, %v9555
  %v9557 = vpop.f32.mrf.mxu0
  %v9558 = vpop.f32.mrf.mxu0
  %v9559 = vadd.f32 0.0, %v9558
  %v9560 = vpop.f32.mrf.mxu0
  %9561 = vmatprep.mubr.bf16.mxu0 0
  %9562 = vmatmul.mubr.bf16.gmra.mxu0 %v9379
  %v9563 = vpop.f32.mrf.mxu0
  %v9564 = vadd.f32 0.0, %v9563
  %v9565 = vpop.f32.mrf.mxu0
  %v9566 = vpop.f32.mrf.mxu0
  %v9567 = vadd.f32 0.0, %v9566
  %v9568 = vpop.f32.mrf.mxu0
  %9569 = vmatprep.mubr.bf16.mxu0 0
  %9570 = vmatmul.mubr.bf16.gmra.mxu0 %v9382
  %v9571 = vpop.f32.mrf.mxu0
  %v9572 = vadd.f32 0.0, %v9571
  %v9573 = vpop.f32.mrf.mxu0
  %v9574 = vpop.f32.mrf.mxu0
  %v9575 = vadd.f32 0.0, %v9574
  %v9576 = vpop.f32.mrf.mxu0
  %9577 = vmatprep.mubr.bf16.mxu0 0
  %9578 = vmatmul.mubr.bf16.gmra.mxu0 %v9385
  %v9579 = vpop.f32.mrf.mxu0
  %v9580 = vadd.f32 0.0, %v9579
  %v9581 = vpop.f32.mrf.mxu0
  %v9582 = vpop.f32.mrf.mxu0
  %v9583 = vadd.f32 0.0, %v9582
  %v9584 = vpop.f32.mrf.mxu0
  %9585 = vmatprep.mubr.bf16.mxu0 0
  %9586 = vmatmul.mubr.bf16.gmra.mxu0 %v9388
  %v9587 = vpop.f32.mrf.mxu0
  %v9588 = vadd.f32 0.0, %v9587
  %v9589 = vpop.f32.mrf.mxu0
  %v9590 = vpop.f32.mrf.mxu0
  %v9591 = vadd.f32 0.0, %v9590
  %v9592 = vpop.f32.mrf.mxu0
  %9593 = vmatprep.mubr.bf16.mxu0 0
  %9594 = vmatmul.mubr.bf16.gmra.mxu0 %v9391
  %v9595 = vpop.f32.mrf.mxu0
  %v9596 = vadd.f32 0.0, %v9595
  %v9597 = vpop.f32.mrf.mxu0
  %v9598 = vpop.f32.mrf.mxu0
  %v9599 = vadd.f32 0.0, %v9598
  %v9600 = vpop.f32.mrf.mxu0
  %9601 = vmatprep.mubr.bf16.mxu0 0
  %9602 = vmatmul.mubr.bf16.gmra.mxu0 %v9394
  %v9603 = vpop.f32.mrf.mxu0
  %v9604 = vadd.f32 0.0, %v9603
  %v9605 = vpop.f32.mrf.mxu0
  %v9606 = vpop.f32.mrf.mxu0
  %v9607 = vadd.f32 0.0, %v9606
  %v9608 = vpop.f32.mrf.mxu0
  %9609 = vmatprep.mubr.bf16.mxu0 0
  %9610 = vmatmul.mubr.bf16.gmra.mxu0 %v9397
  %v9611 = vpop.f32.mrf.mxu0
  %v9612 = vadd.f32 0.0, %v9611
  %v9613 = vpop.f32.mrf.mxu0
  %v9614 = vpop.f32.mrf.mxu0
  %v9615 = vadd.f32 0.0, %v9614
  %v9616 = vpop.f32.mrf.mxu0
  %9617 = vmatprep.mubr.bf16.mxu0 0
  %9618 = vmatmul.mubr.bf16.gmra.mxu0 %v9400
  %v9619 = vpop.f32.mrf.mxu0
  %v9620 = vadd.f32 0.0, %v9619
  %v9621 = vpop.f32.mrf.mxu0
  %v9622 = vpop.f32.mrf.mxu0
  %v9623 = vadd.f32 0.0, %v9622
  %v9624 = vpop.f32.mrf.mxu0
  %9625 = vmatprep.mubr.bf16.mxu0 0
  %9626 = vmatmul.mubr.bf16.gmra.mxu0 %v9403
  %v9627 = vpop.f32.mrf.mxu0
  %v9628 = vadd.f32 0.0, %v9627
  %v9629 = vpop.f32.mrf.mxu0
  %v9630 = vpop.f32.mrf.mxu0
  %v9631 = vadd.f32 0.0, %v9630
  %v9632 = vpop.f32.mrf.mxu0
  %9633 = vmatprep.mubr.bf16.mxu0 0
  %9634 = vmatmul.mubr.bf16.gmra.mxu0 %v9406
  %v9635 = vpop.f32.mrf.mxu0
  %v9636 = vadd.f32 0.0, %v9635
  %v9637 = vpop.f32.mrf.mxu0
  %v9638 = vpop.f32.mrf.mxu0
  %v9639 = vadd.f32 0.0, %v9638
  %v9640 = vpop.f32.mrf.mxu0
  %9641 = vmatprep.mubr.bf16.mxu0 0
  %9642 = vmatmul.mubr.bf16.gmra.mxu0 %v9409
  %v9643 = vpop.f32.mrf.mxu0
  %v9644 = vadd.f32 0.0, %v9643
  %v9645 = vpop.f32.mrf.mxu0
  %v9646 = vpop.f32.mrf.mxu0
  %v9647 = vadd.f32 0.0, %v9646
  %v9648 = vpop.f32.mrf.mxu0
  %9649 = vmatprep.mubr.bf16.mxu0 0
  %9650 = vmatmul.mubr.bf16.gmra.mxu0 %v9412
  %v9651 = vpop.f32.mrf.mxu0
  %v9652 = vadd.f32 0.0, %v9651
  %v9653 = vpop.f32.mrf.mxu0
  %v9654 = vpop.f32.mrf.mxu0
  %v9655 = vadd.f32 0.0, %v9654
  %v9656 = vpop.f32.mrf.mxu0
  %9657 = vmatprep.mubr.bf16.mxu0 0
  %9658 = vmatmul.mubr.bf16.gmra.mxu0 %v9415
  %v9659 = vpop.f32.mrf.mxu0
  %v9660 = vadd.f32 0.0, %v9659
  %v9661 = vpop.f32.mrf.mxu0
  %v9662 = vpop.f32.mrf.mxu0
  %v9663 = vadd.f32 0.0, %v9662
  %v9664 = vpop.f32.mrf.mxu0
  %9665 = vmatprep.mubr.bf16.mxu0 0
  %9666 = vmatmul.mubr.bf16.gmra.mxu0 %v9418
  %v9667 = vpop.f32.mrf.mxu0
  %v9668 = vadd.f32 0.0, %v9667
  %v9669 = vpop.f32.mrf.mxu0
  %v9670 = vpop.f32.mrf.mxu0
  %v9671 = vadd.f32 0.0, %v9670
  %v9672 = vpop.f32.mrf.mxu0
  %9673 = vmatprep.mubr.bf16.mxu0 0
  %9674 = vmatmul.mubr.bf16.gmra.mxu0 %v9421
  %v9675 = vpop.f32.mrf.mxu0
  %v9676 = vadd.f32 0.0, %v9675
  %v9677 = vpop.f32.mrf.mxu0
  %v9678 = vpop.f32.mrf.mxu0
  %v9679 = vadd.f32 0.0, %v9678
  %v9680 = vpop.f32.mrf.mxu0
  %9681 = vmatprep.mubr.bf16.mxu0 0
  %9682 = vmatmul.mubr.bf16.gmra.mxu0 %v9424
  %v9683 = vpop.f32.mrf.mxu0
  %v9684 = vadd.f32 0.0, %v9683
  %v9685 = vpop.f32.mrf.mxu0
  %v9686 = vpop.f32.mrf.mxu0
  %v9687 = vadd.f32 0.0, %v9686
  %v9688 = vpop.f32.mrf.mxu0
  %9689 = vmatprep.mubr.bf16.mxu0 0
  %9690 = vmatmul.mubr.bf16.gmra.mxu0 %v9427
  %v9691 = vpop.f32.mrf.mxu0
  %v9692 = vadd.f32 0.0, %v9691
  %v9693 = vpop.f32.mrf.mxu0
  %v9694 = vpop.f32.mrf.mxu0
  %v9695 = vadd.f32 0.0, %v9694
  %v9696 = vpop.f32.mrf.mxu0
  %9697 = vmatprep.mubr.bf16.mxu0 0
  %9698 = vmatmul.mubr.bf16.gmra.mxu0 %v9430
  %v9699 = vpop.f32.mrf.mxu0
  %v9700 = vadd.f32 0.0, %v9699
  %v9701 = vpop.f32.mrf.mxu0
  %v9702 = vpop.f32.mrf.mxu0
  %v9703 = vadd.f32 0.0, %v9702
  %v9704 = vpop.f32.mrf.mxu0
  %9705 = vmatprep.mubr.bf16.mxu0 0
  %9706 = vmatmul.mubr.bf16.gmra.mxu0 %v9433
  %v9707 = vpop.f32.mrf.mxu0
  %v9708 = vadd.f32 0.0, %v9707
  %v9709 = vpop.f32.mrf.mxu0
  %v9710 = vpop.f32.mrf.mxu0
  %v9711 = vadd.f32 0.0, %v9710
  %v9712 = vpop.f32.mrf.mxu0
  %9713 = vmatprep.mubr.bf16.mxu0 0
  %9714 = vmatmul.mubr.bf16.gmra.mxu0 %v9436
  %v9715 = vpop.f32.mrf.mxu0
  %v9716 = vadd.f32 0.0, %v9715
  %v9717 = vpop.f32.mrf.mxu0
  %v9718 = vpop.f32.mrf.mxu0
  %v9719 = vadd.f32 0.0, %v9718
  %v9720 = vpop.f32.mrf.mxu0
  %9721 = vmatprep.mubr.bf16.mxu0 0
  %9722 = vmatmul.mubr.bf16.gmra.mxu0 %v9439
  %v9723 = vpop.f32.mrf.mxu0
  %v9724 = vadd.f32 0.0, %v9723
  %v9725 = vpop.f32.mrf.mxu0
  %v9726 = vpop.f32.mrf.mxu0
  %v9727 = vadd.f32 0.0, %v9726
  %v9728 = vpop.f32.mrf.mxu0
  %9729 = vmatprep.mubr.bf16.mxu0 0
  %9730 = vmatmul.mubr.bf16.gmra.mxu0 %v9442
  %v9731 = vpop.f32.mrf.mxu0
  %v9732 = vadd.f32 0.0, %v9731
  %v9733 = vpop.f32.mrf.mxu0
  %v9734 = vpop.f32.mrf.mxu0
  %v9735 = vadd.f32 0.0, %v9734
  %v9736 = vpop.f32.mrf.mxu0
  %9737 = vmatprep.mubr.bf16.mxu0 0
  %9738 = vmatmul.mubr.bf16.gmra.mxu0 %v9445
  %v9739 = vpop.f32.mrf.mxu0
  %v9740 = vadd.f32 0.0, %v9739
  %v9741 = vpop.f32.mrf.mxu0
  %v9742 = vpop.f32.mrf.mxu0
  %v9743 = vadd.f32 0.0, %v9742
  %v9744 = vpop.f32.mrf.mxu0
  %9745 = vmatprep.mubr.bf16.mxu0 0
  %9746 = vmatmul.mubr.bf16.gmra.mxu0 %v9448
  %v9747 = vpop.f32.mrf.mxu0
  %v9748 = vadd.f32 0.0, %v9747
  %v9749 = vpop.f32.mrf.mxu0
  %v9750 = vpop.f32.mrf.mxu0
  %v9751 = vadd.f32 0.0, %v9750
  %v9752 = vpop.f32.mrf.mxu0
  %9753 = vmatprep.mubr.bf16.mxu0 0
  %9754 = vmatmul.mubr.bf16.gmra.mxu0 %v9451
  %v9755 = vpop.f32.mrf.mxu0
  %v9756 = vadd.f32 0.0, %v9755
  %v9757 = vpop.f32.mrf.mxu0
  %v9758 = vpop.f32.mrf.mxu0
  %v9759 = vadd.f32 0.0, %v9758
  %v9760 = vpop.f32.mrf.mxu0
  %9761 = vmatprep.mubr.bf16.mxu0 0
  %9762 = vmatmul.mubr.bf16.gmra.mxu0 %v9454
  %v9763 = vpop.f32.mrf.mxu0
  %v9764 = vadd.f32 0.0, %v9763
  %v9765 = vpop.f32.mrf.mxu0
  %v9766 = vpop.f32.mrf.mxu0
  %v9767 = vadd.f32 0.0, %v9766
  %v9768 = vpop.f32.mrf.mxu0
  %9769 = vmatprep.mubr.bf16.mxu0 0
  %9770 = vmatmul.mubr.bf16.gmra.mxu0 %v9457
  %v9771 = vpop.f32.mrf.mxu0
  %v9772 = vadd.f32 0.0, %v9771
  %v9773 = vpop.f32.mrf.mxu0
  %v9774 = vpop.f32.mrf.mxu0
  %v9775 = vadd.f32 0.0, %v9774
  %v9776 = vpop.f32.mrf.mxu0
  %9777 = vmatprep.mubr.bf16.mxu0 0
  %9778 = vmatmul.mubr.bf16.gmra.mxu0 %v9460
  %v9779 = vpop.f32.mrf.mxu0
  %v9780 = vadd.f32 0.0, %v9779
  %v9781 = vpop.f32.mrf.mxu0
  %v9782 = vpop.f32.mrf.mxu0
  %v9783 = vadd.f32 0.0, %v9782
  %v9784 = vpop.f32.mrf.mxu0
  %9785 = vdwg.mxu0
  %v9786 = vld [vmem:[#allocation2] sm:$0xff]
  %v9787 = vld [vmem:[#allocation2 + $0x8] sm:$0xff]
  %v9788 = vld [vmem:[#allocation2 + $0x10] sm:$0xff]
  %v9789 = vld [vmem:[#allocation2 + $0x18] sm:$0xff]
  %v9790 = vld [vmem:[#allocation2 + $0x20] sm:$0xff]
  %v9791 = vld [vmem:[#allocation2 + $0x28] sm:$0xff]
  %v9792 = vld [vmem:[#allocation2 + $0x30] sm:$0xff]
  %v9793 = vld [vmem:[#allocation2 + $0x38] sm:$0xff]
  %v9794 = vld [vmem:[#allocation2 + $0x40] sm:$0xff]
  %v9795 = vld [vmem:[#allocation2 + $0x48] sm:$0xff]
  %v9796 = vld [vmem:[#allocation2 + $0x50] sm:$0xff]
  %v9797 = vld [vmem:[#allocation2 + $0x58] sm:$0xff]
  %v9798 = vld [vmem:[#allocation2 + $0x60] sm:$0xff]
  %v9799 = vld [vmem:[#allocation2 + $0x68] sm:$0xff]
  %v9800 = vld [vmem:[#allocation2 + $0x70] sm:$0xff]
  %v9801 = vld [vmem:[#allocation2 + $0x78] sm:$0xff]
  %v9802 = vld [vmem:[#allocation2 + $0x80] sm:$0xff]
  %v9803 = vld [vmem:[#allocation2 + $0x88] sm:$0xff]
  %v9804 = vld [vmem:[#allocation2 + $0x90] sm:$0xff]
  %v9805 = vld [vmem:[#allocation2 + $0x98] sm:$0xff]
  %v9806 = vld [vmem:[#allocation2 + $0xa0] sm:$0xff]
  %v9807 = vld [vmem:[#allocation2 + $0xa8] sm:$0xff]
  %v9808 = vld [vmem:[#allocation2 + $0xb0] sm:$0xff]
  %v9809 = vld [vmem:[#allocation2 + $0xb8] sm:$0xff]
  %v9810 = vld [vmem:[#allocation2 + $0xc0] sm:$0xff]
  %v9811 = vld [vmem:[#allocation2 + $0xc8] sm:$0xff]
  %v9812 = vld [vmem:[#allocation2 + $0xd0] sm:$0xff]
  %v9813 = vld [vmem:[#allocation2 + $0xd8] sm:$0xff]
  %v9814 = vld [vmem:[#allocation2 + $0xe0] sm:$0xff]
  %v9815 = vld [vmem:[#allocation2 + $0xe8] sm:$0xff]
  %v9816 = vld [vmem:[#allocation2 + $0xf0] sm:$0xff]
  %v9817 = vld [vmem:[#allocation2 + $0xf8] sm:$0xff]
  %v9818 = vld [vmem:[#allocation2 + $0x100] sm:$0xff]
  %v9819 = vld [vmem:[#allocation2 + $0x108] sm:$0xff]
  %v9820 = vld [vmem:[#allocation2 + $0x110] sm:$0xff]
  %v9821 = vld [vmem:[#allocation2 + $0x118] sm:$0xff]
  %v9822 = vld [vmem:[#allocation2 + $0x120] sm:$0xff]
  %v9823 = vld [vmem:[#allocation2 + $0x128] sm:$0xff]
  %v9824 = vld [vmem:[#allocation2 + $0x130] sm:$0xff]
  %v9825 = vld [vmem:[#allocation2 + $0x138] sm:$0xff]
  %v9826 = vld [vmem:[#allocation2 + $0x140] sm:$0xff]
  %v9827 = vld [vmem:[#allocation2 + $0x148] sm:$0xff]
  %v9828 = vld [vmem:[#allocation2 + $0x150] sm:$0xff]
  %v9829 = vld [vmem:[#allocation2 + $0x158] sm:$0xff]
  %v9830 = vld [vmem:[#allocation2 + $0x160] sm:$0xff]
  %v9831 = vld [vmem:[#allocation2 + $0x168] sm:$0xff]
  %v9832 = vld [vmem:[#allocation2 + $0x170] sm:$0xff]
  %v9833 = vld [vmem:[#allocation2 + $0x178] sm:$0xff]
  %v9834 = vld [vmem:[#allocation2 + $0x180] sm:$0xff]
  %v9835 = vld [vmem:[#allocation2 + $0x188] sm:$0xff]
  %v9836 = vld [vmem:[#allocation2 + $0x190] sm:$0xff]
  %v9837 = vld [vmem:[#allocation2 + $0x198] sm:$0xff]
  %v9838 = vld [vmem:[#allocation2 + $0x1a0] sm:$0xff]
  %v9839 = vld [vmem:[#allocation2 + $0x1a8] sm:$0xff]
  %v9840 = vld [vmem:[#allocation2 + $0x1b0] sm:$0xff]
  %v9841 = vld [vmem:[#allocation2 + $0x1b8] sm:$0xff]
  %v9842 = vld [vmem:[#allocation2 + $0x1c0] sm:$0xff]
  %v9843 = vld [vmem:[#allocation2 + $0x1c8] sm:$0xff]
  %v9844 = vld [vmem:[#allocation2 + $0x1d0] sm:$0xff]
  %v9845 = vld [vmem:[#allocation2 + $0x1d8] sm:$0xff]
  %v9846 = vld [vmem:[#allocation2 + $0x1e0] sm:$0xff]
  %v9847 = vld [vmem:[#allocation2 + $0x1e8] sm:$0xff]
  %v9848 = vld [vmem:[#allocation2 + $0x1f0] sm:$0xff]
  %v9849 = vld [vmem:[#allocation2 + $0x1f8] sm:$0xff]
  %v9850 = vld [vmem:[#allocation2 + $0x200] sm:$0xff]
  %v9851 = vld [vmem:[#allocation2 + $0x208] sm:$0xff]
  %v9852 = vld [vmem:[#allocation2 + $0x210] sm:$0xff]
  %v9853 = vld [vmem:[#allocation2 + $0x218] sm:$0xff]
  %v9854 = vld [vmem:[#allocation2 + $0x220] sm:$0xff]
  %v9855 = vld [vmem:[#allocation2 + $0x228] sm:$0xff]
  %v9856 = vld [vmem:[#allocation2 + $0x230] sm:$0xff]
  %v9857 = vld [vmem:[#allocation2 + $0x238] sm:$0xff]
  %v9858 = vadd.f32 %v9786, %v9500
  %v9859 = vadd.f32 %v9787, %v9503
  %v9860 = vadd.f32 %v9788, %v9508
  %v9861 = vadd.f32 %v9789, %v9511
  %v9862 = vadd.f32 %v9790, %v9516
  %v9863 = vadd.f32 %v9791, %v9519
  %v9864 = vadd.f32 %v9792, %v9524
  %v9865 = vadd.f32 %v9793, %v9527
  %v9866 = vadd.f32 %v9794, %v9532
  %v9867 = vadd.f32 %v9795, %v9535
  %v9868 = vadd.f32 %v9796, %v9540
  %v9869 = vadd.f32 %v9797, %v9543
  %v9870 = vadd.f32 %v9798, %v9548
  %v9871 = vadd.f32 %v9799, %v9551
  %v9872 = vadd.f32 %v9800, %v9556
  %v9873 = vadd.f32 %v9801, %v9559
  %v9874 = vadd.f32 %v9802, %v9564
  %v9875 = vadd.f32 %v9803, %v9567
  %v9876 = vadd.f32 %v9804, %v9572
  %v9877 = vadd.f32 %v9805, %v9575
  %v9878 = vadd.f32 %v9806, %v9580
  %v9879 = vadd.f32 %v9807, %v9583
  %v9880 = vadd.f32 %v9808, %v9588
  %v9881 = vadd.f32 %v9809, %v9591
  %v9882 = vadd.f32 %v9810, %v9596
  %v9883 = vadd.f32 %v9811, %v9599
  %v9884 = vadd.f32 %v9812, %v9604
  %v9885 = vadd.f32 %v9813, %v9607
  %v9886 = vadd.f32 %v9814, %v9612
  %v9887 = vadd.f32 %v9815, %v9615
  %v9888 = vadd.f32 %v9816, %v9620
  %v9889 = vadd.f32 %v9817, %v9623
  %v9890 = vadd.f32 %v9818, %v9628
  %v9891 = vadd.f32 %v9819, %v9631
  %v9892 = vadd.f32 %v9820, %v9636
  %v9893 = vadd.f32 %v9821, %v9639
  %v9894 = vadd.f32 %v9822, %v9644
  %v9895 = vadd.f32 %v9823, %v9647
  %v9896 = vadd.f32 %v9824, %v9652
  %v9897 = vadd.f32 %v9825, %v9655
  %v9898 = vadd.f32 %v9826, %v9660
  %v9899 = vadd.f32 %v9827, %v9663
  %v9900 = vadd.f32 %v9828, %v9668
  %v9901 = vadd.f32 %v9829, %v9671
  %v9902 = vadd.f32 %v9830, %v9676
  %v9903 = vadd.f32 %v9831, %v9679
  %v9904 = vadd.f32 %v9832, %v9684
  %v9905 = vadd.f32 %v9833, %v9687
  %v9906 = vadd.f32 %v9834, %v9692
  %v9907 = vadd.f32 %v9835, %v9695
  %v9908 = vadd.f32 %v9836, %v9700
  %v9909 = vadd.f32 %v9837, %v9703
  %v9910 = vadd.f32 %v9838, %v9708
  %v9911 = vadd.f32 %v9839, %v9711
  %v9912 = vadd.f32 %v9840, %v9716
  %v9913 = vadd.f32 %v9841, %v9719
  %v9914 = vadd.f32 %v9842, %v9724
  %v9915 = vadd.f32 %v9843, %v9727
  %v9916 = vadd.f32 %v9844, %v9732
  %v9917 = vadd.f32 %v9845, %v9735
  %v9918 = vadd.f32 %v9846, %v9740
  %v9919 = vadd.f32 %v9847, %v9743
  %v9920 = vadd.f32 %v9848, %v9748
  %v9921 = vadd.f32 %v9849, %v9751
  %v9922 = vadd.f32 %v9850, %v9756
  %v9923 = vadd.f32 %v9851, %v9759
  %v9924 = vadd.f32 %v9852, %v9764
  %v9925 = vadd.f32 %v9853, %v9767
  %v9926 = vadd.f32 %v9854, %v9772
  %v9927 = vadd.f32 %v9855, %v9775
  %v9928 = vadd.f32 %v9856, %v9780
  %v9929 = vadd.f32 %v9857, %v9783
  %9930 = vst [vmem:[#allocation2] sm:$0xff] %v9858
  %9931 = vst [vmem:[#allocation2 + $0x8] sm:$0xff] %v9859
  %9932 = vst [vmem:[#allocation2 + $0x10] sm:$0xff] %v9860
  %9933 = vst [vmem:[#allocation2 + $0x18] sm:$0xff] %v9861
  %9934 = vst [vmem:[#allocation2 + $0x20] sm:$0xff] %v9862
  %9935 = vst [vmem:[#allocation2 + $0x28] sm:$0xff] %v9863
  %9936 = vst [vmem:[#allocation2 + $0x30] sm:$0xff] %v9864
  %9937 = vst [vmem:[#allocation2 + $0x38] sm:$0xff] %v9865
  %9938 = vst [vmem:[#allocation2 + $0x40] sm:$0xff] %v9866
  %9939 = vst [vmem:[#allocation2 + $0x48] sm:$0xff] %v9867
  %9940 = vst [vmem:[#allocation2 + $0x50] sm:$0xff] %v9868
  %9941 = vst [vmem:[#allocation2 + $0x58] sm:$0xff] %v9869
  %9942 = vst [vmem:[#allocation2 + $0x60] sm:$0xff] %v9870
  %9943 = vst [vmem:[#allocation2 + $0x68] sm:$0xff] %v9871
  %9944 = vst [vmem:[#allocation2 + $0x70] sm:$0xff] %v9872
  %9945 = vst [vmem:[#allocation2 + $0x78] sm:$0xff] %v9873
  %9946 = vst [vmem:[#allocation2 + $0x80] sm:$0xff] %v9874
  %9947 = vst [vmem:[#allocation2 + $0x88] sm:$0xff] %v9875
  %9948 = vst [vmem:[#allocation2 + $0x90] sm:$0xff] %v9876
  %9949 = vst [vmem:[#allocation2 + $0x98] sm:$0xff] %v9877
  %9950 = vst [vmem:[#allocation2 + $0xa0] sm:$0xff] %v9878
  %9951 = vst [vmem:[#allocation2 + $0xa8] sm:$0xff] %v9879
  %9952 = vst [vmem:[#allocation2 + $0xb0] sm:$0xff] %v9880
  %9953 = vst [vmem:[#allocation2 + $0xb8] sm:$0xff] %v9881
  %9954 = vst [vmem:[#allocation2 + $0xc0] sm:$0xff] %v9882
  %9955 = vst [vmem:[#allocation2 + $0xc8] sm:$0xff] %v9883
  %9956 = vst [vmem:[#allocation2 + $0xd0] sm:$0xff] %v9884
  %9957 = vst [vmem:[#allocation2 + $0xd8] sm:$0xff] %v9885
  %9958 = vst [vmem:[#allocation2 + $0xe0] sm:$0xff] %v9886
  %9959 = vst [vmem:[#allocation2 + $0xe8] sm:$0xff] %v9887
  %9960 = vst [vmem:[#allocation2 + $0xf0] sm:$0xff] %v9888
  %9961 = vst [vmem:[#allocation2 + $0xf8] sm:$0xff] %v9889
  %9962 = vst [vmem:[#allocation2 + $0x100] sm:$0xff] %v9890
  %9963 = vst [vmem:[#allocation2 + $0x108] sm:$0xff] %v9891
  %9964 = vst [vmem:[#allocation2 + $0x110] sm:$0xff] %v9892
  %9965 = vst [vmem:[#allocation2 + $0x118] sm:$0xff] %v9893
  %9966 = vst [vmem:[#allocation2 + $0x120] sm:$0xff] %v9894
  %9967 = vst [vmem:[#allocation2 + $0x128] sm:$0xff] %v9895
  %9968 = vst [vmem:[#allocation2 + $0x130] sm:$0xff] %v9896
  %9969 = vst [vmem:[#allocation2 + $0x138] sm:$0xff] %v9897
  %9970 = vst [vmem:[#allocation2 + $0x140] sm:$0xff] %v9898
  %9971 = vst [vmem:[#allocation2 + $0x148] sm:$0xff] %v9899
  %9972 = vst [vmem:[#allocation2 + $0x150] sm:$0xff] %v9900
  %9973 = vst [vmem:[#allocation2 + $0x158] sm:$0xff] %v9901
  %9974 = vst [vmem:[#allocation2 + $0x160] sm:$0xff] %v9902
  %9975 = vst [vmem:[#allocation2 + $0x168] sm:$0xff] %v9903
  %9976 = vst [vmem:[#allocation2 + $0x170] sm:$0xff] %v9904
  %9977 = vst [vmem:[#allocation2 + $0x178] sm:$0xff] %v9905
  %9978 = vst [vmem:[#allocation2 + $0x180] sm:$0xff] %v9906
  %9979 = vst [vmem:[#allocation2 + $0x188] sm:$0xff] %v9907
  %9980 = vst [vmem:[#allocation2 + $0x190] sm:$0xff] %v9908
  %9981 = vst [vmem:[#allocation2 + $0x198] sm:$0xff] %v9909
  %9982 = vst [vmem:[#allocation2 + $0x1a0] sm:$0xff] %v9910
  %9983 = vst [vmem:[#allocation2 + $0x1a8] sm:$0xff] %v9911
  %9984 = vst [vmem:[#allocation2 + $0x1b0] sm:$0xff] %v9912
  %9985 = vst [vmem:[#allocation2 + $0x1b8] sm:$0xff] %v9913
  %9986 = vst [vmem:[#allocation2 + $0x1c0] sm:$0xff] %v9914
  %9987 = vst [vmem:[#allocation2 + $0x1c8] sm:$0xff] %v9915
  %9988 = vst [vmem:[#allocation2 + $0x1d0] sm:$0xff] %v9916
  %9989 = vst [vmem:[#allocation2 + $0x1d8] sm:$0xff] %v9917
  %9990 = vst [vmem:[#allocation2 + $0x1e0] sm:$0xff] %v9918
  %9991 = vst [vmem:[#allocation2 + $0x1e8] sm:$0xff] %v9919
  %9992 = vst [vmem:[#allocation2 + $0x1f0] sm:$0xff] %v9920
  %9993 = vst [vmem:[#allocation2 + $0x1f8] sm:$0xff] %v9921
  %9994 = vst [vmem:[#allocation2 + $0x200] sm:$0xff] %v9922
  %9995 = vst [vmem:[#allocation2 + $0x208] sm:$0xff] %v9923
  %9996 = vst [vmem:[#allocation2 + $0x210] sm:$0xff] %v9924
  %9997 = vst [vmem:[#allocation2 + $0x218] sm:$0xff] %v9925
  %9998 = vst [vmem:[#allocation2 + $0x220] sm:$0xff] %v9926
  %9999 = vst [vmem:[#allocation2 + $0x228] sm:$0xff] %v9927
  %10000 = vst [vmem:[#allocation2 + $0x230] sm:$0xff] %v9928
  %10001 = vst [vmem:[#allocation2 + $0x238] sm:$0xff] %v9929
  %v10002 = vld [vmem:[%s0 + $0x10] sm:$0x8]
  %v10003 = vld [vmem:[%s0 + $0x14] sm:$0xf]
  %v10004 = vld [vmem:[%s0 + $0x18] sm:$0xf]
  %v10005 = vld [vmem:[%s0 + $0x1c] sm:$0xf]
  %v10006 = vld [vmem:[%s0 + $0x20] sm:$0xf]
  %v10007 = vld [vmem:[%s0 + $0x24] sm:$0xf]
  %v10008 = vld [vmem:[%s0 + $0x28] sm:$0xf]
  %v10009 = vld [vmem:[%s0 + $0x2c] sm:$0xf]
  %v10010 = vld [vmem:[%s0 + $0x30] sm:$0xf]
  %v10011 = vld [vmem:[%s0 + $0x34] sm:$0xf]
  %v10012 = vld [vmem:[%s0 + $0x38] sm:$0xf]
  %v10013 = vld [vmem:[%s0 + $0x3c] sm:$0xf]
  %v10014 = vld [vmem:[%s0 + $0x40] sm:$0xf]
  %v10015 = vld [vmem:[%s0 + $0x44] sm:$0xf]
  %v10016 = vld [vmem:[%s0 + $0x48] sm:$0xf]
  %v10017 = vld [vmem:[%s0 + $0x4c] sm:$0xf]
  %v10018 = vld [vmem:[%s0 + $0x50] sm:$0xf]
  %v10019 = vld [vmem:[%s0 + $0x54] sm:$0xf]
  %v10020 = vld [vmem:[%s0 + $0x58] sm:$0xf]
  %v10021 = vld [vmem:[%s0 + $0x5c] sm:$0xf]
  %v10022 = vld [vmem:[%s0 + $0x60] sm:$0xf]
  %v10023 = vld [vmem:[%s0 + $0x64] sm:$0xf]
  %v10024 = vld [vmem:[%s0 + $0x68] sm:$0xf]
  %v10025 = vld [vmem:[%s0 + $0x6c] sm:$0xf]
  %v10026 = vld [vmem:[%s0 + $0x70] sm:$0xf]
  %v10027 = vld [vmem:[%s0 + $0x74] sm:$0xf]
  %v10028 = vld [vmem:[%s0 + $0x78] sm:$0xf]
  %v10029 = vld [vmem:[%s0 + $0x7c] sm:$0xf]
  %v10030 = vld [vmem:[%s0 + $0x80] sm:$0xf]
  %v10031 = vld [vmem:[%s0 + $0x84] sm:$0xf]
  %v10032 = vld [vmem:[%s0 + $0x88] sm:$0xf]
  %v10033 = vld [vmem:[%s0 + $0x8c] sm:$0xf]
  %v10034 = vld [vmem:[%s0 + $0x90] sm:$0xf]
  %v10035 = vld [vmem:[%s0 + $0x94] sm:$0xf]
  %v10036 = vld [vmem:[%s0 + $0x98] sm:$0xf]
  %v10037 = vld [vmem:[%s0 + $0x9c] sm:$0xf]
  %v10038 = vld [vmem:[%s0 + $0xa0] sm:$0x7]
  %v10039 = vld [vmem:[%s0 + $0xb4] sm:$0x8]
  %v10040 = vld [vmem:[%s0 + $0xb8] sm:$0xf]
  %v10041 = vld [vmem:[%s0 + $0xbc] sm:$0xf]
  %v10042 = vld [vmem:[%s0 + $0xc0] sm:$0xf]
  %v10043 = vld [vmem:[%s0 + $0xc4] sm:$0xf]
  %v10044 = vld [vmem:[%s0 + $0xc8] sm:$0xf]
  %v10045 = vld [vmem:[%s0 + $0xcc] sm:$0xf]
  %v10046 = vld [vmem:[%s0 + $0xd0] sm:$0xf]
  %v10047 = vld [vmem:[%s0 + $0xd4] sm:$0xf]
  %v10048 = vld [vmem:[%s0 + $0xd8] sm:$0xf]
  %v10049 = vld [vmem:[%s0 + $0xdc] sm:$0xf]
  %v10050 = vld [vmem:[%s0 + $0xe0] sm:$0xf]
  %v10051 = vld [vmem:[%s0 + $0xe4] sm:$0xf]
  %v10052 = vld [vmem:[%s0 + $0xe8] sm:$0xf]
  %v10053 = vld [vmem:[%s0 + $0xec] sm:$0xf]
  %v10054 = vld [vmem:[%s0 + $0xf0] sm:$0xf]
  %v10055 = vld [vmem:[%s0 + $0xf4] sm:$0xf]
  %v10056 = vld [vmem:[%s0 + $0xf8] sm:$0xf]
  %v10057 = vld [vmem:[%s0 + $0xfc] sm:$0xf]
  %v10058 = vld [vmem:[%s0 + $0x100] sm:$0xf]
  %v10059 = vld [vmem:[%s0 + $0x104] sm:$0xf]
  %v10060 = vld [vmem:[%s0 + $0x108] sm:$0xf]
  %v10061 = vld [vmem:[%s0 + $0x10c] sm:$0xf]
  %v10062 = vld [vmem:[%s0 + $0x110] sm:$0xf]
  %v10063 = vld [vmem:[%s0 + $0x114] sm:$0xf]
  %v10064 = vld [vmem:[%s0 + $0x118] sm:$0xf]
  %v10065 = vld [vmem:[%s0 + $0x11c] sm:$0xf]
  %v10066 = vld [vmem:[%s0 + $0x120] sm:$0xf]
  %v10067 = vld [vmem:[%s0 + $0x124] sm:$0xf]
  %v10068 = vld [vmem:[%s0 + $0x128] sm:$0xf]
  %v10069 = vld [vmem:[%s0 + $0x12c] sm:$0xf]
  %v10070 = vld [vmem:[%s0 + $0x130] sm:$0xf]
  %v10071 = vld [vmem:[%s0 + $0x134] sm:$0xf]
  %v10072 = vld [vmem:[%s0 + $0x138] sm:$0xf]
  %v10073 = vld [vmem:[%s0 + $0x13c] sm:$0xf]
  %v10074 = vld [vmem:[%s0 + $0x140] sm:$0xf]
  %v10075 = vld [vmem:[%s0 + $0x144] sm:$0x7]
  %vm10150 = vcmask 1040384
  %vm10151 = vcmask 1044484
  %vm10152 = vmor %vm10150, %vm10151
  %v10153 = vrot.slane %v10002, 7
  %v10154 = vrot.slane %v10153, 4
  %v10155 = vrot.slane %v10003, 7
  %v10156 = vsel %vm10152, %v10154, %v10155
  %v10157 = vrot.slane %v10155, 4
  %v10158 = vrot.slane %v10004, 7
  %v10159 = vsel %vm10152, %v10157, %v10158
  %v10160 = vrot.slane %v10158, 4
  %v10161 = vrot.slane %v10005, 7
  %v10162 = vsel %vm10152, %v10160, %v10161
  %v10163 = vrot.slane %v10161, 4
  %v10164 = vrot.slane %v10006, 7
  %v10165 = vsel %vm10152, %v10163, %v10164
  %v10166 = vrot.slane %v10164, 4
  %v10167 = vrot.slane %v10007, 7
  %v10168 = vsel %vm10152, %v10166, %v10167
  %v10169 = vrot.slane %v10167, 4
  %v10170 = vrot.slane %v10008, 7
  %v10171 = vsel %vm10152, %v10169, %v10170
  %v10172 = vrot.slane %v10170, 4
  %v10173 = vrot.slane %v10009, 7
  %v10174 = vsel %vm10152, %v10172, %v10173
  %v10175 = vrot.slane %v10173, 4
  %v10176 = vrot.slane %v10010, 7
  %v10177 = vsel %vm10152, %v10175, %v10176
  %v10178 = vrot.slane %v10176, 4
  %v10179 = vrot.slane %v10011, 7
  %v10180 = vsel %vm10152, %v10178, %v10179
  %v10181 = vrot.slane %v10179, 4
  %v10182 = vrot.slane %v10012, 7
  %v10183 = vsel %vm10152, %v10181, %v10182
  %v10184 = vrot.slane %v10182, 4
  %v10185 = vrot.slane %v10013, 7
  %v10186 = vsel %vm10152, %v10184, %v10185
  %v10187 = vrot.slane %v10185, 4
  %v10188 = vrot.slane %v10014, 7
  %v10189 = vsel %vm10152, %v10187, %v10188
  %v10190 = vrot.slane %v10188, 4
  %v10191 = vrot.slane %v10015, 7
  %v10192 = vsel %vm10152, %v10190, %v10191
  %v10193 = vrot.slane %v10191, 4
  %v10194 = vrot.slane %v10016, 7
  %v10195 = vsel %vm10152, %v10193, %v10194
  %v10196 = vrot.slane %v10194, 4
  %v10197 = vrot.slane %v10017, 7
  %v10198 = vsel %vm10152, %v10196, %v10197
  %v10199 = vrot.slane %v10197, 4
  %v10200 = vrot.slane %v10018, 7
  %v10201 = vsel %vm10152, %v10199, %v10200
  %v10202 = vrot.slane %v10200, 4
  %v10203 = vrot.slane %v10019, 7
  %v10204 = vsel %vm10152, %v10202, %v10203
  %v10205 = vrot.slane %v10203, 4
  %v10206 = vrot.slane %v10020, 7
  %v10207 = vsel %vm10152, %v10205, %v10206
  %v10208 = vrot.slane %v10206, 4
  %v10209 = vrot.slane %v10021, 7
  %v10210 = vsel %vm10152, %v10208, %v10209
  %v10211 = vrot.slane %v10209, 4
  %v10212 = vrot.slane %v10022, 7
  %v10213 = vsel %vm10152, %v10211, %v10212
  %v10214 = vrot.slane %v10212, 4
  %v10215 = vrot.slane %v10023, 7
  %v10216 = vsel %vm10152, %v10214, %v10215
  %v10217 = vrot.slane %v10215, 4
  %v10218 = vrot.slane %v10024, 7
  %v10219 = vsel %vm10152, %v10217, %v10218
  %v10220 = vrot.slane %v10218, 4
  %v10221 = vrot.slane %v10025, 7
  %v10222 = vsel %vm10152, %v10220, %v10221
  %v10223 = vrot.slane %v10221, 4
  %v10224 = vrot.slane %v10026, 7
  %v10225 = vsel %vm10152, %v10223, %v10224
  %v10226 = vrot.slane %v10224, 4
  %v10227 = vrot.slane %v10027, 7
  %v10228 = vsel %vm10152, %v10226, %v10227
  %v10229 = vrot.slane %v10227, 4
  %v10230 = vrot.slane %v10028, 7
  %v10231 = vsel %vm10152, %v10229, %v10230
  %v10232 = vrot.slane %v10230, 4
  %v10233 = vrot.slane %v10029, 7
  %v10234 = vsel %vm10152, %v10232, %v10233
  %v10235 = vrot.slane %v10233, 4
  %v10236 = vrot.slane %v10030, 7
  %v10237 = vsel %vm10152, %v10235, %v10236
  %v10238 = vrot.slane %v10236, 4
  %v10239 = vrot.slane %v10031, 7
  %v10240 = vsel %vm10152, %v10238, %v10239
  %v10241 = vrot.slane %v10239, 4
  %v10242 = vrot.slane %v10032, 7
  %v10243 = vsel %vm10152, %v10241, %v10242
  %v10244 = vrot.slane %v10242, 4
  %v10245 = vrot.slane %v10033, 7
  %v10246 = vsel %vm10152, %v10244, %v10245
  %v10247 = vrot.slane %v10245, 4
  %v10248 = vrot.slane %v10034, 7
  %v10249 = vsel %vm10152, %v10247, %v10248
  %v10250 = vrot.slane %v10248, 4
  %v10251 = vrot.slane %v10035, 7
  %v10252 = vsel %vm10152, %v10250, %v10251
  %v10253 = vrot.slane %v10251, 4
  %v10254 = vrot.slane %v10036, 7
  %v10255 = vsel %vm10152, %v10253, %v10254
  %v10256 = vrot.slane %v10254, 4
  %v10257 = vrot.slane %v10037, 7
  %v10258 = vsel %vm10152, %v10256, %v10257
  %v10259 = vrot.slane %v10257, 4
  %v10260 = vrot.slane %v10038, 7
  %v10261 = vsel %vm10152, %v10259, %v10260
  %v10262 = vrot.slane %v10039, 7
  %v10263 = vrot.slane %v10262, 4
  %v10264 = vrot.slane %v10040, 7
  %v10265 = vsel %vm10152, %v10263, %v10264
  %v10266 = vrot.slane %v10264, 4
  %v10267 = vrot.slane %v10041, 7
  %v10268 = vsel %vm10152, %v10266, %v10267
  %v10269 = vrot.slane %v10267, 4
  %v10270 = vrot.slane %v10042, 7
  %v10271 = vsel %vm10152, %v10269, %v10270
  %v10272 = vrot.slane %v10270, 4
  %v10273 = vrot.slane %v10043, 7
  %v10274 = vsel %vm10152, %v10272, %v10273
  %v10275 = vrot.slane %v10273, 4
  %v10276 = vrot.slane %v10044, 7
  %v10277 = vsel %vm10152, %v10275, %v10276
  %v10278 = vrot.slane %v10276, 4
  %v10279 = vrot.slane %v10045, 7
  %v10280 = vsel %vm10152, %v10278, %v10279
  %v10281 = vrot.slane %v10279, 4
  %v10282 = vrot.slane %v10046, 7
  %v10283 = vsel %vm10152, %v10281, %v10282
  %v10284 = vrot.slane %v10282, 4
  %v10285 = vrot.slane %v10047, 7
  %v10286 = vsel %vm10152, %v10284, %v10285
  %v10287 = vrot.slane %v10285, 4
  %v10288 = vrot.slane %v10048, 7
  %v10289 = vsel %vm10152, %v10287, %v10288
  %v10290 = vrot.slane %v10288, 4
  %v10291 = vrot.slane %v10049, 7
  %v10292 = vsel %vm10152, %v10290, %v10291
  %v10293 = vrot.slane %v10291, 4
  %v10294 = vrot.slane %v10050, 7
  %v10295 = vsel %vm10152, %v10293, %v10294
  %v10296 = vrot.slane %v10294, 4
  %v10297 = vrot.slane %v10051, 7
  %v10298 = vsel %vm10152, %v10296, %v10297
  %v10299 = vrot.slane %v10297, 4
  %v10300 = vrot.slane %v10052, 7
  %v10301 = vsel %vm10152, %v10299, %v10300
  %v10302 = vrot.slane %v10300, 4
  %v10303 = vrot.slane %v10053, 7
  %v10304 = vsel %vm10152, %v10302, %v10303
  %v10305 = vrot.slane %v10303, 4
  %v10306 = vrot.slane %v10054, 7
  %v10307 = vsel %vm10152, %v10305, %v10306
  %v10308 = vrot.slane %v10306, 4
  %v10309 = vrot.slane %v10055, 7
  %v10310 = vsel %vm10152, %v10308, %v10309
  %v10311 = vrot.slane %v10309, 4
  %v10312 = vrot.slane %v10056, 7
  %v10313 = vsel %vm10152, %v10311, %v10312
  %v10314 = vrot.slane %v10312, 4
  %v10315 = vrot.slane %v10057, 7
  %v10316 = vsel %vm10152, %v10314, %v10315
  %v10317 = vrot.slane %v10315, 4
  %v10318 = vrot.slane %v10058, 7
  %v10319 = vsel %vm10152, %v10317, %v10318
  %v10320 = vrot.slane %v10318, 4
  %v10321 = vrot.slane %v10059, 7
  %v10322 = vsel %vm10152, %v10320, %v10321
  %v10323 = vrot.slane %v10321, 4
  %v10324 = vrot.slane %v10060, 7
  %v10325 = vsel %vm10152, %v10323, %v10324
  %v10326 = vrot.slane %v10324, 4
  %v10327 = vrot.slane %v10061, 7
  %v10328 = vsel %vm10152, %v10326, %v10327
  %v10329 = vrot.slane %v10327, 4
  %v10330 = vrot.slane %v10062, 7
  %v10331 = vsel %vm10152, %v10329, %v10330
  %v10332 = vrot.slane %v10330, 4
  %v10333 = vrot.slane %v10063, 7
  %v10334 = vsel %vm10152, %v10332, %v10333
  %v10335 = vrot.slane %v10333, 4
  %v10336 = vrot.slane %v10064, 7
  %v10337 = vsel %vm10152, %v10335, %v10336
  %v10338 = vrot.slane %v10336, 4
  %v10339 = vrot.slane %v10065, 7
  %v10340 = vsel %vm10152, %v10338, %v10339
  %v10341 = vrot.slane %v10339, 4
  %v10342 = vrot.slane %v10066, 7
  %v10343 = vsel %vm10152, %v10341, %v10342
  %v10344 = vrot.slane %v10342, 4
  %v10345 = vrot.slane %v10067, 7
  %v10346 = vsel %vm10152, %v10344, %v10345
  %v10347 = vrot.slane %v10345, 4
  %v10348 = vrot.slane %v10068, 7
  %v10349 = vsel %vm10152, %v10347, %v10348
  %v10350 = vrot.slane %v10348, 4
  %v10351 = vrot.slane %v10069, 7
  %v10352 = vsel %vm10152, %v10350, %v10351
  %v10353 = vrot.slane %v10351, 4
  %v10354 = vrot.slane %v10070, 7
  %v10355 = vsel %vm10152, %v10353, %v10354
  %v10356 = vrot.slane %v10354, 4
  %v10357 = vrot.slane %v10071, 7
  %v10358 = vsel %vm10152, %v10356, %v10357
  %v10359 = vrot.slane %v10357, 4
  %v10360 = vrot.slane %v10072, 7
  %v10361 = vsel %vm10152, %v10359, %v10360
  %v10362 = vrot.slane %v10360, 4
  %v10363 = vrot.slane %v10073, 7
  %v10364 = vsel %vm10152, %v10362, %v10363
  %v10365 = vrot.slane %v10363, 4
  %v10366 = vrot.slane %v10074, 7
  %v10367 = vsel %vm10152, %v10365, %v10366
  %v10368 = vrot.slane %v10366, 4
  %v10369 = vrot.slane %v10075, 7
  %v10370 = vsel %vm10152, %v10368, %v10369
  %v10371 = vld [vmem:[%s1 + $0x10] sm:$0x3]
  %v10372 = vunpack.c.l.b16 %v10156
  %v10373 = vunpack.c.l.b16 %v10159
  %v10374 = vunpack.c.l.b16 %v10162
  %v10375 = vunpack.c.l.b16 %v10165
  %v10376 = vunpack.c.l.b16 %v10168
  %v10377 = vunpack.c.l.b16 %v10171
  %v10378 = vunpack.c.l.b16 %v10174
  %v10379 = vunpack.c.l.b16 %v10177
  %v10380 = vunpack.c.l.b16 %v10180
  %v10381 = vunpack.c.l.b16 %v10183
  %v10382 = vunpack.c.l.b16 %v10186
  %v10383 = vunpack.c.l.b16 %v10189
  %v10384 = vunpack.c.l.b16 %v10192
  %v10385 = vunpack.c.l.b16 %v10195
  %v10386 = vunpack.c.l.b16 %v10198
  %v10387 = vunpack.c.l.b16 %v10201
  %v10388 = vunpack.c.l.b16 %v10204
  %v10389 = vunpack.c.l.b16 %v10207
  %v10390 = vunpack.c.l.b16 %v10210
  %v10391 = vunpack.c.l.b16 %v10213
  %v10392 = vunpack.c.l.b16 %v10216
  %v10393 = vunpack.c.l.b16 %v10219
  %v10394 = vunpack.c.l.b16 %v10222
  %v10395 = vunpack.c.l.b16 %v10225
  %v10396 = vunpack.c.l.b16 %v10228
  %v10397 = vunpack.c.l.b16 %v10231
  %v10398 = vunpack.c.l.b16 %v10234
  %v10399 = vunpack.c.l.b16 %v10237
  %v10400 = vunpack.c.l.b16 %v10240
  %v10401 = vunpack.c.l.b16 %v10243
  %v10402 = vunpack.c.l.b16 %v10246
  %v10403 = vunpack.c.l.b16 %v10249
  %v10404 = vunpack.c.l.b16 %v10252
  %v10405 = vunpack.c.l.b16 %v10255
  %v10406 = vunpack.c.l.b16 %v10258
  %v10407 = vunpack.c.l.b16 %v10261
  %v10408 = vunpack.c.l.b16 %v10265
  %v10409 = vunpack.c.l.b16 %v10268
  %v10410 = vunpack.c.l.b16 %v10271
  %v10411 = vunpack.c.l.b16 %v10274
  %v10412 = vunpack.c.l.b16 %v10277
  %v10413 = vunpack.c.l.b16 %v10280
  %v10414 = vunpack.c.l.b16 %v10283
  %v10415 = vunpack.c.l.b16 %v10286
  %v10416 = vunpack.c.l.b16 %v10289
  %v10417 = vunpack.c.l.b16 %v10292
  %v10418 = vunpack.c.l.b16 %v10295
  %v10419 = vunpack.c.l.b16 %v10298
  %v10420 = vunpack.c.l.b16 %v10301
  %v10421 = vunpack.c.l.b16 %v10304
  %v10422 = vunpack.c.l.b16 %v10307
  %v10423 = vunpack.c.l.b16 %v10310
  %v10424 = vunpack.c.l.b16 %v10313
  %v10425 = vunpack.c.l.b16 %v10316
  %v10426 = vunpack.c.l.b16 %v10319
  %v10427 = vunpack.c.l.b16 %v10322
  %v10428 = vunpack.c.l.b16 %v10325
  %v10429 = vunpack.c.l.b16 %v10328
  %v10430 = vunpack.c.l.b16 %v10331
  %v10431 = vunpack.c.l.b16 %v10334
  %v10432 = vunpack.c.l.b16 %v10337
  %v10433 = vunpack.c.l.b16 %v10340
  %v10434 = vunpack.c.l.b16 %v10343
  %v10435 = vunpack.c.l.b16 %v10346
  %v10436 = vunpack.c.l.b16 %v10349
  %v10437 = vunpack.c.l.b16 %v10352
  %v10438 = vunpack.c.l.b16 %v10355
  %v10439 = vunpack.c.l.b16 %v10358
  %v10440 = vunpack.c.l.b16 %v10361
  %v10441 = vunpack.c.l.b16 %v10364
  %v10442 = vunpack.c.l.b16 %v10367
  %v10443 = vunpack.c.l.b16 %v10370
  %v10444 = vpack.c.b16 %v10373, %v10372
  %v10445 = vpack.c.b16 %v10375, %v10374
  %v10446 = vpack.c.b16 %v10377, %v10376
  %v10447 = vpack.c.b16 %v10379, %v10378
  %v10448 = vpack.c.b16 %v10381, %v10380
  %v10449 = vpack.c.b16 %v10383, %v10382
  %v10450 = vpack.c.b16 %v10385, %v10384
  %v10451 = vpack.c.b16 %v10387, %v10386
  %v10452 = vpack.c.b16 %v10389, %v10388
  %v10453 = vpack.c.b16 %v10391, %v10390
  %v10454 = vpack.c.b16 %v10393, %v10392
  %v10455 = vpack.c.b16 %v10395, %v10394
  %v10456 = vpack.c.b16 %v10397, %v10396
  %v10457 = vpack.c.b16 %v10399, %v10398
  %v10458 = vpack.c.b16 %v10401, %v10400
  %v10459 = vpack.c.b16 %v10403, %v10402
  %v10460 = vpack.c.b16 %v10405, %v10404
  %v10461 = vpack.c.b16 %v10407, %v10406
  %v10462 = vpack.c.b16 %v10409, %v10408
  %v10463 = vpack.c.b16 %v10411, %v10410
  %v10464 = vpack.c.b16 %v10413, %v10412
  %v10465 = vpack.c.b16 %v10415, %v10414
  %v10466 = vpack.c.b16 %v10417, %v10416
  %v10467 = vpack.c.b16 %v10419, %v10418
  %v10468 = vpack.c.b16 %v10421, %v10420
  %v10469 = vpack.c.b16 %v10423, %v10422
  %v10470 = vpack.c.b16 %v10425, %v10424
  %v10471 = vpack.c.b16 %v10427, %v10426
  %v10472 = vpack.c.b16 %v10429, %v10428
  %v10473 = vpack.c.b16 %v10431, %v10430
  %v10474 = vpack.c.b16 %v10433, %v10432
  %v10475 = vpack.c.b16 %v10435, %v10434
  %v10476 = vpack.c.b16 %v10437, %v10436
  %v10477 = vpack.c.b16 %v10439, %v10438
  %v10478 = vpack.c.b16 %v10441, %v10440
  %v10479 = vpack.c.b16 %v10443, %v10442
  %v10481 = vsel %vm280, %v10444, 0
  %v10484 = vsel %vm280, %v10445, 0
  %v10487 = vsel %vm280, %v10446, 0
  %v10490 = vsel %vm280, %v10447, 0
  %v10493 = vsel %vm280, %v10448, 0
  %v10496 = vsel %vm280, %v10449, 0
  %v10499 = vsel %vm280, %v10450, 0
  %v10502 = vsel %vm280, %v10451, 0
  %v10505 = vsel %vm280, %v10452, 0
  %v10508 = vsel %vm280, %v10453, 0
  %v10511 = vsel %vm280, %v10454, 0
  %v10514 = vsel %vm280, %v10455, 0
  %v10517 = vsel %vm280, %v10456, 0
  %v10520 = vsel %vm280, %v10457, 0
  %v10523 = vsel %vm280, %v10458, 0
  %v10526 = vsel %vm280, %v10459, 0
  %v10529 = vsel %vm280, %v10460, 0
  %v10532 = vsel %vm280, %v10461, 0
  %v10535 = vsel %vm280, %v10462, 0
  %v10538 = vsel %vm280, %v10463, 0
  %v10541 = vsel %vm280, %v10464, 0
  %v10544 = vsel %vm280, %v10465, 0
  %v10547 = vsel %vm280, %v10466, 0
  %v10550 = vsel %vm280, %v10467, 0
  %v10553 = vsel %vm280, %v10468, 0
  %v10556 = vsel %vm280, %v10469, 0
  %v10559 = vsel %vm280, %v10470, 0
  %v10562 = vsel %vm280, %v10471, 0
  %v10565 = vsel %vm280, %v10472, 0
  %v10568 = vsel %vm280, %v10473, 0
  %v10571 = vsel %vm280, %v10474, 0
  %v10574 = vsel %vm280, %v10475, 0
  %v10577 = vsel %vm280, %v10476, 0
  %v10580 = vsel %vm280, %v10477, 0
  %v10583 = vsel %vm280, %v10478, 0
  %v10586 = vsel %vm280, %v10479, 0
  %v10589 = vsel %vm389, %v10371, 0
  %10591 = vmatprep.subr.bf16.mxu0 0
  %10592 = vmatpush1.bf16.msra.mxu0 0
  %10593 = vmatprep.subr.bf16.mxu0 0
  %10594 = vmatpush1.bf16.msra.mxu0 0
  %10595 = vmatprep.subr.bf16.mxu0 0
  %10596 = vmatpush1.bf16.msra.mxu0 0
  %10597 = vmatprep.subr.bf16.mxu0 0
  %10598 = vmatpush1.bf16.msra.mxu0 0
  %10599 = vmatprep.subr.bf16.mxu0 0
  %10600 = vmatpush1.bf16.msra.mxu0 0
  %10601 = vmatprep.subr.bf16.mxu0 0
  %10602 = vmatpush1.bf16.msra.mxu0 0
  %10603 = vmatprep.subr.bf16.mxu0 0
  %10604 = vmatpush1.bf16.msra.mxu0 0
  %10605 = vmatprep.subr.bf16.mxu0 0
  %10606 = vmatpush1.bf16.msra.mxu0 %v10589
  %10607 = vmatprep.subr.bf16.mxu0 0
  %10608 = vmatpush2.bf16.msra.mxu0 0
  %10609 = vmatprep.subr.bf16.mxu0 0
  %10610 = vmatpush2.bf16.msra.mxu0 0
  %10611 = vmatprep.subr.bf16.mxu0 0
  %10612 = vmatpush2.bf16.msra.mxu0 0
  %10613 = vmatprep.subr.bf16.mxu0 0
  %10614 = vmatpush2.bf16.msra.mxu0 0
  %10615 = vmatprep.subr.bf16.mxu0 0
  %10616 = vmatpush2.bf16.msra.mxu0 0
  %10617 = vmatprep.subr.bf16.mxu0 0
  %10618 = vmatpush2.bf16.msra.mxu0 0
  %10619 = vmatprep.subr.bf16.mxu0 0
  %10620 = vmatpush2.bf16.msra.mxu0 0
  %10621 = vmatprep.subr.bf16.mxu0 0
  %10622 = vmatpush2.bf16.msra.mxu0 0
  %10623 = vmatprep.mubr.bf16.mxu0 0
  %10624 = vmatmul.mubr.bf16.gmra.mxu0 %v10481
  %v10625 = vpop.f32.mrf.mxu0
  %v10626 = vadd.f32 0.0, %v10625
  %v10627 = vpop.f32.mrf.mxu0
  %v10628 = vpop.f32.mrf.mxu0
  %v10629 = vadd.f32 0.0, %v10628
  %v10630 = vpop.f32.mrf.mxu0
  %10631 = vmatprep.mubr.bf16.mxu0 0
  %10632 = vmatmul.mubr.bf16.gmra.mxu0 %v10484
  %v10633 = vpop.f32.mrf.mxu0
  %v10634 = vadd.f32 0.0, %v10633
  %v10635 = vpop.f32.mrf.mxu0
  %v10636 = vpop.f32.mrf.mxu0
  %v10637 = vadd.f32 0.0, %v10636
  %v10638 = vpop.f32.mrf.mxu0
  %10639 = vmatprep.mubr.bf16.mxu0 0
  %10640 = vmatmul.mubr.bf16.gmra.mxu0 %v10487
  %v10641 = vpop.f32.mrf.mxu0
  %v10642 = vadd.f32 0.0, %v10641
  %v10643 = vpop.f32.mrf.mxu0
  %v10644 = vpop.f32.mrf.mxu0
  %v10645 = vadd.f32 0.0, %v10644
  %v10646 = vpop.f32.mrf.mxu0
  %10647 = vmatprep.mubr.bf16.mxu0 0
  %10648 = vmatmul.mubr.bf16.gmra.mxu0 %v10490
  %v10649 = vpop.f32.mrf.mxu0
  %v10650 = vadd.f32 0.0, %v10649
  %v10651 = vpop.f32.mrf.mxu0
  %v10652 = vpop.f32.mrf.mxu0
  %v10653 = vadd.f32 0.0, %v10652
  %v10654 = vpop.f32.mrf.mxu0
  %10655 = vmatprep.mubr.bf16.mxu0 0
  %10656 = vmatmul.mubr.bf16.gmra.mxu0 %v10493
  %v10657 = vpop.f32.mrf.mxu0
  %v10658 = vadd.f32 0.0, %v10657
  %v10659 = vpop.f32.mrf.mxu0
  %v10660 = vpop.f32.mrf.mxu0
  %v10661 = vadd.f32 0.0, %v10660
  %v10662 = vpop.f32.mrf.mxu0
  %10663 = vmatprep.mubr.bf16.mxu0 0
  %10664 = vmatmul.mubr.bf16.gmra.mxu0 %v10496
  %v10665 = vpop.f32.mrf.mxu0
  %v10666 = vadd.f32 0.0, %v10665
  %v10667 = vpop.f32.mrf.mxu0
  %v10668 = vpop.f32.mrf.mxu0
  %v10669 = vadd.f32 0.0, %v10668
  %v10670 = vpop.f32.mrf.mxu0
  %10671 = vmatprep.mubr.bf16.mxu0 0
  %10672 = vmatmul.mubr.bf16.gmra.mxu0 %v10499
  %v10673 = vpop.f32.mrf.mxu0
  %v10674 = vadd.f32 0.0, %v10673
  %v10675 = vpop.f32.mrf.mxu0
  %v10676 = vpop.f32.mrf.mxu0
  %v10677 = vadd.f32 0.0, %v10676
  %v10678 = vpop.f32.mrf.mxu0
  %10679 = vmatprep.mubr.bf16.mxu0 0
  %10680 = vmatmul.mubr.bf16.gmra.mxu0 %v10502
  %v10681 = vpop.f32.mrf.mxu0
  %v10682 = vadd.f32 0.0, %v10681
  %v10683 = vpop.f32.mrf.mxu0
  %v10684 = vpop.f32.mrf.mxu0
  %v10685 = vadd.f32 0.0, %v10684
  %v10686 = vpop.f32.mrf.mxu0
  %10687 = vmatprep.mubr.bf16.mxu0 0
  %10688 = vmatmul.mubr.bf16.gmra.mxu0 %v10505
  %v10689 = vpop.f32.mrf.mxu0
  %v10690 = vadd.f32 0.0, %v10689
  %v10691 = vpop.f32.mrf.mxu0
  %v10692 = vpop.f32.mrf.mxu0
  %v10693 = vadd.f32 0.0, %v10692
  %v10694 = vpop.f32.mrf.mxu0
  %10695 = vmatprep.mubr.bf16.mxu0 0
  %10696 = vmatmul.mubr.bf16.gmra.mxu0 %v10508
  %v10697 = vpop.f32.mrf.mxu0
  %v10698 = vadd.f32 0.0, %v10697
  %v10699 = vpop.f32.mrf.mxu0
  %v10700 = vpop.f32.mrf.mxu0
  %v10701 = vadd.f32 0.0, %v10700
  %v10702 = vpop.f32.mrf.mxu0
  %10703 = vmatprep.mubr.bf16.mxu0 0
  %10704 = vmatmul.mubr.bf16.gmra.mxu0 %v10511
  %v10705 = vpop.f32.mrf.mxu0
  %v10706 = vadd.f32 0.0, %v10705
  %v10707 = vpop.f32.mrf.mxu0
  %v10708 = vpop.f32.mrf.mxu0
  %v10709 = vadd.f32 0.0, %v10708
  %v10710 = vpop.f32.mrf.mxu0
  %10711 = vmatprep.mubr.bf16.mxu0 0
  %10712 = vmatmul.mubr.bf16.gmra.mxu0 %v10514
  %v10713 = vpop.f32.mrf.mxu0
  %v10714 = vadd.f32 0.0, %v10713
  %v10715 = vpop.f32.mrf.mxu0
  %v10716 = vpop.f32.mrf.mxu0
  %v10717 = vadd.f32 0.0, %v10716
  %v10718 = vpop.f32.mrf.mxu0
  %10719 = vmatprep.mubr.bf16.mxu0 0
  %10720 = vmatmul.mubr.bf16.gmra.mxu0 %v10517
  %v10721 = vpop.f32.mrf.mxu0
  %v10722 = vadd.f32 0.0, %v10721
  %v10723 = vpop.f32.mrf.mxu0
  %v10724 = vpop.f32.mrf.mxu0
  %v10725 = vadd.f32 0.0, %v10724
  %v10726 = vpop.f32.mrf.mxu0
  %10727 = vmatprep.mubr.bf16.mxu0 0
  %10728 = vmatmul.mubr.bf16.gmra.mxu0 %v10520
  %v10729 = vpop.f32.mrf.mxu0
  %v10730 = vadd.f32 0.0, %v10729
  %v10731 = vpop.f32.mrf.mxu0
  %v10732 = vpop.f32.mrf.mxu0
  %v10733 = vadd.f32 0.0, %v10732
  %v10734 = vpop.f32.mrf.mxu0
  %10735 = vmatprep.mubr.bf16.mxu0 0
  %10736 = vmatmul.mubr.bf16.gmra.mxu0 %v10523
  %v10737 = vpop.f32.mrf.mxu0
  %v10738 = vadd.f32 0.0, %v10737
  %v10739 = vpop.f32.mrf.mxu0
  %v10740 = vpop.f32.mrf.mxu0
  %v10741 = vadd.f32 0.0, %v10740
  %v10742 = vpop.f32.mrf.mxu0
  %10743 = vmatprep.mubr.bf16.mxu0 0
  %10744 = vmatmul.mubr.bf16.gmra.mxu0 %v10526
  %v10745 = vpop.f32.mrf.mxu0
  %v10746 = vadd.f32 0.0, %v10745
  %v10747 = vpop.f32.mrf.mxu0
  %v10748 = vpop.f32.mrf.mxu0
  %v10749 = vadd.f32 0.0, %v10748
  %v10750 = vpop.f32.mrf.mxu0
  %10751 = vmatprep.mubr.bf16.mxu0 0
  %10752 = vmatmul.mubr.bf16.gmra.mxu0 %v10529
  %v10753 = vpop.f32.mrf.mxu0
  %v10754 = vadd.f32 0.0, %v10753
  %v10755 = vpop.f32.mrf.mxu0
  %v10756 = vpop.f32.mrf.mxu0
  %v10757 = vadd.f32 0.0, %v10756
  %v10758 = vpop.f32.mrf.mxu0
  %10759 = vmatprep.mubr.bf16.mxu0 0
  %10760 = vmatmul.mubr.bf16.gmra.mxu0 %v10532
  %v10761 = vpop.f32.mrf.mxu0
  %v10762 = vadd.f32 0.0, %v10761
  %v10763 = vpop.f32.mrf.mxu0
  %v10764 = vpop.f32.mrf.mxu0
  %v10765 = vadd.f32 0.0, %v10764
  %v10766 = vpop.f32.mrf.mxu0
  %10767 = vmatprep.mubr.bf16.mxu0 0
  %10768 = vmatmul.mubr.bf16.gmra.mxu0 %v10535
  %v10769 = vpop.f32.mrf.mxu0
  %v10770 = vadd.f32 0.0, %v10769
  %v10771 = vpop.f32.mrf.mxu0
  %v10772 = vpop.f32.mrf.mxu0
  %v10773 = vadd.f32 0.0, %v10772
  %v10774 = vpop.f32.mrf.mxu0
  %10775 = vmatprep.mubr.bf16.mxu0 0
  %10776 = vmatmul.mubr.bf16.gmra.mxu0 %v10538
  %v10777 = vpop.f32.mrf.mxu0
  %v10778 = vadd.f32 0.0, %v10777
  %v10779 = vpop.f32.mrf.mxu0
  %v10780 = vpop.f32.mrf.mxu0
  %v10781 = vadd.f32 0.0, %v10780
  %v10782 = vpop.f32.mrf.mxu0
  %10783 = vmatprep.mubr.bf16.mxu0 0
  %10784 = vmatmul.mubr.bf16.gmra.mxu0 %v10541
  %v10785 = vpop.f32.mrf.mxu0
  %v10786 = vadd.f32 0.0, %v10785
  %v10787 = vpop.f32.mrf.mxu0
  %v10788 = vpop.f32.mrf.mxu0
  %v10789 = vadd.f32 0.0, %v10788
  %v10790 = vpop.f32.mrf.mxu0
  %10791 = vmatprep.mubr.bf16.mxu0 0
  %10792 = vmatmul.mubr.bf16.gmra.mxu0 %v10544
  %v10793 = vpop.f32.mrf.mxu0
  %v10794 = vadd.f32 0.0, %v10793
  %v10795 = vpop.f32.mrf.mxu0
  %v10796 = vpop.f32.mrf.mxu0
  %v10797 = vadd.f32 0.0, %v10796
  %v10798 = vpop.f32.mrf.mxu0
  %10799 = vmatprep.mubr.bf16.mxu0 0
  %10800 = vmatmul.mubr.bf16.gmra.mxu0 %v10547
  %v10801 = vpop.f32.mrf.mxu0
  %v10802 = vadd.f32 0.0, %v10801
  %v10803 = vpop.f32.mrf.mxu0
  %v10804 = vpop.f32.mrf.mxu0
  %v10805 = vadd.f32 0.0, %v10804
  %v10806 = vpop.f32.mrf.mxu0
  %10807 = vmatprep.mubr.bf16.mxu0 0
  %10808 = vmatmul.mubr.bf16.gmra.mxu0 %v10550
  %v10809 = vpop.f32.mrf.mxu0
  %v10810 = vadd.f32 0.0, %v10809
  %v10811 = vpop.f32.mrf.mxu0
  %v10812 = vpop.f32.mrf.mxu0
  %v10813 = vadd.f32 0.0, %v10812
  %v10814 = vpop.f32.mrf.mxu0
  %10815 = vmatprep.mubr.bf16.mxu0 0
  %10816 = vmatmul.mubr.bf16.gmra.mxu0 %v10553
  %v10817 = vpop.f32.mrf.mxu0
  %v10818 = vadd.f32 0.0, %v10817
  %v10819 = vpop.f32.mrf.mxu0
  %v10820 = vpop.f32.mrf.mxu0
  %v10821 = vadd.f32 0.0, %v10820
  %v10822 = vpop.f32.mrf.mxu0
  %10823 = vmatprep.mubr.bf16.mxu0 0
  %10824 = vmatmul.mubr.bf16.gmra.mxu0 %v10556
  %v10825 = vpop.f32.mrf.mxu0
  %v10826 = vadd.f32 0.0, %v10825
  %v10827 = vpop.f32.mrf.mxu0
  %v10828 = vpop.f32.mrf.mxu0
  %v10829 = vadd.f32 0.0, %v10828
  %v10830 = vpop.f32.mrf.mxu0
  %10831 = vmatprep.mubr.bf16.mxu0 0
  %10832 = vmatmul.mubr.bf16.gmra.mxu0 %v10559
  %v10833 = vpop.f32.mrf.mxu0
  %v10834 = vadd.f32 0.0, %v10833
  %v10835 = vpop.f32.mrf.mxu0
  %v10836 = vpop.f32.mrf.mxu0
  %v10837 = vadd.f32 0.0, %v10836
  %v10838 = vpop.f32.mrf.mxu0
  %10839 = vmatprep.mubr.bf16.mxu0 0
  %10840 = vmatmul.mubr.bf16.gmra.mxu0 %v10562
  %v10841 = vpop.f32.mrf.mxu0
  %v10842 = vadd.f32 0.0, %v10841
  %v10843 = vpop.f32.mrf.mxu0
  %v10844 = vpop.f32.mrf.mxu0
  %v10845 = vadd.f32 0.0, %v10844
  %v10846 = vpop.f32.mrf.mxu0
  %10847 = vmatprep.mubr.bf16.mxu0 0
  %10848 = vmatmul.mubr.bf16.gmra.mxu0 %v10565
  %v10849 = vpop.f32.mrf.mxu0
  %v10850 = vadd.f32 0.0, %v10849
  %v10851 = vpop.f32.mrf.mxu0
  %v10852 = vpop.f32.mrf.mxu0
  %v10853 = vadd.f32 0.0, %v10852
  %v10854 = vpop.f32.mrf.mxu0
  %10855 = vmatprep.mubr.bf16.mxu0 0
  %10856 = vmatmul.mubr.bf16.gmra.mxu0 %v10568
  %v10857 = vpop.f32.mrf.mxu0
  %v10858 = vadd.f32 0.0, %v10857
  %v10859 = vpop.f32.mrf.mxu0
  %v10860 = vpop.f32.mrf.mxu0
  %v10861 = vadd.f32 0.0, %v10860
  %v10862 = vpop.f32.mrf.mxu0
  %10863 = vmatprep.mubr.bf16.mxu0 0
  %10864 = vmatmul.mubr.bf16.gmra.mxu0 %v10571
  %v10865 = vpop.f32.mrf.mxu0
  %v10866 = vadd.f32 0.0, %v10865
  %v10867 = vpop.f32.mrf.mxu0
  %v10868 = vpop.f32.mrf.mxu0
  %v10869 = vadd.f32 0.0, %v10868
  %v10870 = vpop.f32.mrf.mxu0
  %10871 = vmatprep.mubr.bf16.mxu0 0
  %10872 = vmatmul.mubr.bf16.gmra.mxu0 %v10574
  %v10873 = vpop.f32.mrf.mxu0
  %v10874 = vadd.f32 0.0, %v10873
  %v10875 = vpop.f32.mrf.mxu0
  %v10876 = vpop.f32.mrf.mxu0
  %v10877 = vadd.f32 0.0, %v10876
  %v10878 = vpop.f32.mrf.mxu0
  %10879 = vmatprep.mubr.bf16.mxu0 0
  %10880 = vmatmul.mubr.bf16.gmra.mxu0 %v10577
  %v10881 = vpop.f32.mrf.mxu0
  %v10882 = vadd.f32 0.0, %v10881
  %v10883 = vpop.f32.mrf.mxu0
  %v10884 = vpop.f32.mrf.mxu0
  %v10885 = vadd.f32 0.0, %v10884
  %v10886 = vpop.f32.mrf.mxu0
  %10887 = vmatprep.mubr.bf16.mxu0 0
  %10888 = vmatmul.mubr.bf16.gmra.mxu0 %v10580
  %v10889 = vpop.f32.mrf.mxu0
  %v10890 = vadd.f32 0.0, %v10889
  %v10891 = vpop.f32.mrf.mxu0
  %v10892 = vpop.f32.mrf.mxu0
  %v10893 = vadd.f32 0.0, %v10892
  %v10894 = vpop.f32.mrf.mxu0
  %10895 = vmatprep.mubr.bf16.mxu0 0
  %10896 = vmatmul.mubr.bf16.gmra.mxu0 %v10583
  %v10897 = vpop.f32.mrf.mxu0
  %v10898 = vadd.f32 0.0, %v10897
  %v10899 = vpop.f32.mrf.mxu0
  %v10900 = vpop.f32.mrf.mxu0
  %v10901 = vadd.f32 0.0, %v10900
  %v10902 = vpop.f32.mrf.mxu0
  %10903 = vmatprep.mubr.bf16.mxu0 0
  %10904 = vmatmul.mubr.bf16.gmra.mxu0 %v10586
  %v10905 = vpop.f32.mrf.mxu0
  %v10906 = vadd.f32 0.0, %v10905
  %v10907 = vpop.f32.mrf.mxu0
  %v10908 = vpop.f32.mrf.mxu0
  %v10909 = vadd.f32 0.0, %v10908
  %v10910 = vpop.f32.mrf.mxu0
  %10911 = vdwg.mxu0
  %v10912 = vld [vmem:[#allocation2] sm:$0xff]
  %v10913 = vld [vmem:[#allocation2 + $0x8] sm:$0xff]
  %v10914 = vld [vmem:[#allocation2 + $0x10] sm:$0xff]
  %v10915 = vld [vmem:[#allocation2 + $0x18] sm:$0xff]
  %v10916 = vld [vmem:[#allocation2 + $0x20] sm:$0xff]
  %v10917 = vld [vmem:[#allocation2 + $0x28] sm:$0xff]
  %v10918 = vld [vmem:[#allocation2 + $0x30] sm:$0xff]
  %v10919 = vld [vmem:[#allocation2 + $0x38] sm:$0xff]
  %v10920 = vld [vmem:[#allocation2 + $0x40] sm:$0xff]
  %v10921 = vld [vmem:[#allocation2 + $0x48] sm:$0xff]
  %v10922 = vld [vmem:[#allocation2 + $0x50] sm:$0xff]
  %v10923 = vld [vmem:[#allocation2 + $0x58] sm:$0xff]
  %v10924 = vld [vmem:[#allocation2 + $0x60] sm:$0xff]
  %v10925 = vld [vmem:[#allocation2 + $0x68] sm:$0xff]
  %v10926 = vld [vmem:[#allocation2 + $0x70] sm:$0xff]
  %v10927 = vld [vmem:[#allocation2 + $0x78] sm:$0xff]
  %v10928 = vld [vmem:[#allocation2 + $0x80] sm:$0xff]
  %v10929 = vld [vmem:[#allocation2 + $0x88] sm:$0xff]
  %v10930 = vld [vmem:[#allocation2 + $0x90] sm:$0xff]
  %v10931 = vld [vmem:[#allocation2 + $0x98] sm:$0xff]
  %v10932 = vld [vmem:[#allocation2 + $0xa0] sm:$0xff]
  %v10933 = vld [vmem:[#allocation2 + $0xa8] sm:$0xff]
  %v10934 = vld [vmem:[#allocation2 + $0xb0] sm:$0xff]
  %v10935 = vld [vmem:[#allocation2 + $0xb8] sm:$0xff]
  %v10936 = vld [vmem:[#allocation2 + $0xc0] sm:$0xff]
  %v10937 = vld [vmem:[#allocation2 + $0xc8] sm:$0xff]
  %v10938 = vld [vmem:[#allocation2 + $0xd0] sm:$0xff]
  %v10939 = vld [vmem:[#allocation2 + $0xd8] sm:$0xff]
  %v10940 = vld [vmem:[#allocation2 + $0xe0] sm:$0xff]
  %v10941 = vld [vmem:[#allocation2 + $0xe8] sm:$0xff]
  %v10942 = vld [vmem:[#allocation2 + $0xf0] sm:$0xff]
  %v10943 = vld [vmem:[#allocation2 + $0xf8] sm:$0xff]
  %v10944 = vld [vmem:[#allocation2 + $0x100] sm:$0xff]
  %v10945 = vld [vmem:[#allocation2 + $0x108] sm:$0xff]
  %v10946 = vld [vmem:[#allocation2 + $0x110] sm:$0xff]
  %v10947 = vld [vmem:[#allocation2 + $0x118] sm:$0xff]
  %v10948 = vld [vmem:[#allocation2 + $0x120] sm:$0xff]
  %v10949 = vld [vmem:[#allocation2 + $0x128] sm:$0xff]
  %v10950 = vld [vmem:[#allocation2 + $0x130] sm:$0xff]
  %v10951 = vld [vmem:[#allocation2 + $0x138] sm:$0xff]
  %v10952 = vld [vmem:[#allocation2 + $0x140] sm:$0xff]
  %v10953 = vld [vmem:[#allocation2 + $0x148] sm:$0xff]
  %v10954 = vld [vmem:[#allocation2 + $0x150] sm:$0xff]
  %v10955 = vld [vmem:[#allocation2 + $0x158] sm:$0xff]
  %v10956 = vld [vmem:[#allocation2 + $0x160] sm:$0xff]
  %v10957 = vld [vmem:[#allocation2 + $0x168] sm:$0xff]
  %v10958 = vld [vmem:[#allocation2 + $0x170] sm:$0xff]
  %v10959 = vld [vmem:[#allocation2 + $0x178] sm:$0xff]
  %v10960 = vld [vmem:[#allocation2 + $0x180] sm:$0xff]
  %v10961 = vld [vmem:[#allocation2 + $0x188] sm:$0xff]
  %v10962 = vld [vmem:[#allocation2 + $0x190] sm:$0xff]
  %v10963 = vld [vmem:[#allocation2 + $0x198] sm:$0xff]
  %v10964 = vld [vmem:[#allocation2 + $0x1a0] sm:$0xff]
  %v10965 = vld [vmem:[#allocation2 + $0x1a8] sm:$0xff]
  %v10966 = vld [vmem:[#allocation2 + $0x1b0] sm:$0xff]
  %v10967 = vld [vmem:[#allocation2 + $0x1b8] sm:$0xff]
  %v10968 = vld [vmem:[#allocation2 + $0x1c0] sm:$0xff]
  %v10969 = vld [vmem:[#allocation2 + $0x1c8] sm:$0xff]
  %v10970 = vld [vmem:[#allocation2 + $0x1d0] sm:$0xff]
  %v10971 = vld [vmem:[#allocation2 + $0x1d8] sm:$0xff]
  %v10972 = vld [vmem:[#allocation2 + $0x1e0] sm:$0xff]
  %v10973 = vld [vmem:[#allocation2 + $0x1e8] sm:$0xff]
  %v10974 = vld [vmem:[#allocation2 + $0x1f0] sm:$0xff]
  %v10975 = vld [vmem:[#allocation2 + $0x1f8] sm:$0xff]
  %v10976 = vld [vmem:[#allocation2 + $0x200] sm:$0xff]
  %v10977 = vld [vmem:[#allocation2 + $0x208] sm:$0xff]
  %v10978 = vld [vmem:[#allocation2 + $0x210] sm:$0xff]
  %v10979 = vld [vmem:[#allocation2 + $0x218] sm:$0xff]
  %v10980 = vld [vmem:[#allocation2 + $0x220] sm:$0xff]
  %v10981 = vld [vmem:[#allocation2 + $0x228] sm:$0xff]
  %v10982 = vld [vmem:[#allocation2 + $0x230] sm:$0xff]
  %v10983 = vld [vmem:[#allocation2 + $0x238] sm:$0xff]
  %v10984 = vadd.f32 %v10912, %v10626
  %v10985 = vadd.f32 %v10913, %v10629
  %v10986 = vadd.f32 %v10914, %v10634
  %v10987 = vadd.f32 %v10915, %v10637
  %v10988 = vadd.f32 %v10916, %v10642
  %v10989 = vadd.f32 %v10917, %v10645
  %v10990 = vadd.f32 %v10918, %v10650
  %v10991 = vadd.f32 %v10919, %v10653
  %v10992 = vadd.f32 %v10920, %v10658
  %v10993 = vadd.f32 %v10921, %v10661
  %v10994 = vadd.f32 %v10922, %v10666
  %v10995 = vadd.f32 %v10923, %v10669
  %v10996 = vadd.f32 %v10924, %v10674
  %v10997 = vadd.f32 %v10925, %v10677
  %v10998 = vadd.f32 %v10926, %v10682
  %v10999 = vadd.f32 %v10927, %v10685
  %v11000 = vadd.f32 %v10928, %v10690
  %v11001 = vadd.f32 %v10929, %v10693
  %v11002 = vadd.f32 %v10930, %v10698
  %v11003 = vadd.f32 %v10931, %v10701
  %v11004 = vadd.f32 %v10932, %v10706
  %v11005 = vadd.f32 %v10933, %v10709
  %v11006 = vadd.f32 %v10934, %v10714
  %v11007 = vadd.f32 %v10935, %v10717
  %v11008 = vadd.f32 %v10936, %v10722
  %v11009 = vadd.f32 %v10937, %v10725
  %v11010 = vadd.f32 %v10938, %v10730
  %v11011 = vadd.f32 %v10939, %v10733
  %v11012 = vadd.f32 %v10940, %v10738
  %v11013 = vadd.f32 %v10941, %v10741
  %v11014 = vadd.f32 %v10942, %v10746
  %v11015 = vadd.f32 %v10943, %v10749
  %v11016 = vadd.f32 %v10944, %v10754
  %v11017 = vadd.f32 %v10945, %v10757
  %v11018 = vadd.f32 %v10946, %v10762
  %v11019 = vadd.f32 %v10947, %v10765
  %v11020 = vadd.f32 %v10948, %v10770
  %v11021 = vadd.f32 %v10949, %v10773
  %v11022 = vadd.f32 %v10950, %v10778
  %v11023 = vadd.f32 %v10951, %v10781
  %v11024 = vadd.f32 %v10952, %v10786
  %v11025 = vadd.f32 %v10953, %v10789
  %v11026 = vadd.f32 %v10954, %v10794
  %v11027 = vadd.f32 %v10955, %v10797
  %v11028 = vadd.f32 %v10956, %v10802
  %v11029 = vadd.f32 %v10957, %v10805
  %v11030 = vadd.f32 %v10958, %v10810
  %v11031 = vadd.f32 %v10959, %v10813
  %v11032 = vadd.f32 %v10960, %v10818
  %v11033 = vadd.f32 %v10961, %v10821
  %v11034 = vadd.f32 %v10962, %v10826
  %v11035 = vadd.f32 %v10963, %v10829
  %v11036 = vadd.f32 %v10964, %v10834
  %v11037 = vadd.f32 %v10965, %v10837
  %v11038 = vadd.f32 %v10966, %v10842
  %v11039 = vadd.f32 %v10967, %v10845
  %v11040 = vadd.f32 %v10968, %v10850
  %v11041 = vadd.f32 %v10969, %v10853
  %v11042 = vadd.f32 %v10970, %v10858
  %v11043 = vadd.f32 %v10971, %v10861
  %v11044 = vadd.f32 %v10972, %v10866
  %v11045 = vadd.f32 %v10973, %v10869
  %v11046 = vadd.f32 %v10974, %v10874
  %v11047 = vadd.f32 %v10975, %v10877
  %v11048 = vadd.f32 %v10976, %v10882
  %v11049 = vadd.f32 %v10977, %v10885
  %v11050 = vadd.f32 %v10978, %v10890
  %v11051 = vadd.f32 %v10979, %v10893
  %v11052 = vadd.f32 %v10980, %v10898
  %v11053 = vadd.f32 %v10981, %v10901
  %v11054 = vadd.f32 %v10982, %v10906
  %v11055 = vadd.f32 %v10983, %v10909
  %11056 = vst [vmem:[#allocation2] sm:$0xff] %v10984
  %11057 = vst [vmem:[#allocation2 + $0x8] sm:$0xff] %v10985
  %11058 = vst [vmem:[#allocation2 + $0x10] sm:$0xff] %v10986
  %11059 = vst [vmem:[#allocation2 + $0x18] sm:$0xff] %v10987
  %11060 = vst [vmem:[#allocation2 + $0x20] sm:$0xff] %v10988
  %11061 = vst [vmem:[#allocation2 + $0x28] sm:$0xff] %v10989
  %11062 = vst [vmem:[#allocation2 + $0x30] sm:$0xff] %v10990
  %11063 = vst [vmem:[#allocation2 + $0x38] sm:$0xff] %v10991
  %11064 = vst [vmem:[#allocation2 + $0x40] sm:$0xff] %v10992
  %11065 = vst [vmem:[#allocation2 + $0x48] sm:$0xff] %v10993
  %11066 = vst [vmem:[#allocation2 + $0x50] sm:$0xff] %v10994
  %11067 = vst [vmem:[#allocation2 + $0x58] sm:$0xff] %v10995
  %11068 = vst [vmem:[#allocation2 + $0x60] sm:$0xff] %v10996
  %11069 = vst [vmem:[#allocation2 + $0x68] sm:$0xff] %v10997
  %11070 = vst [vmem:[#allocation2 + $0x70] sm:$0xff] %v10998
  %11071 = vst [vmem:[#allocation2 + $0x78] sm:$0xff] %v10999
  %11072 = vst [vmem:[#allocation2 + $0x80] sm:$0xff] %v11000
  %11073 = vst [vmem:[#allocation2 + $0x88] sm:$0xff] %v11001
  %11074 = vst [vmem:[#allocation2 + $0x90] sm:$0xff] %v11002
  %11075 = vst [vmem:[#allocation2 + $0x98] sm:$0xff] %v11003
  %11076 = vst [vmem:[#allocation2 + $0xa0] sm:$0xff] %v11004
  %11077 = vst [vmem:[#allocation2 + $0xa8] sm:$0xff] %v11005
  %11078 = vst [vmem:[#allocation2 + $0xb0] sm:$0xff] %v11006
  %11079 = vst [vmem:[#allocation2 + $0xb8] sm:$0xff] %v11007
  %11080 = vst [vmem:[#allocation2 + $0xc0] sm:$0xff] %v11008
  %11081 = vst [vmem:[#allocation2 + $0xc8] sm:$0xff] %v11009
  %11082 = vst [vmem:[#allocation2 + $0xd0] sm:$0xff] %v11010
  %11083 = vst [vmem:[#allocation2 + $0xd8] sm:$0xff] %v11011
  %11084 = vst [vmem:[#allocation2 + $0xe0] sm:$0xff] %v11012
  %11085 = vst [vmem:[#allocation2 + $0xe8] sm:$0xff] %v11013
  %11086 = vst [vmem:[#allocation2 + $0xf0] sm:$0xff] %v11014
  %11087 = vst [vmem:[#allocation2 + $0xf8] sm:$0xff] %v11015
  %11088 = vst [vmem:[#allocation2 + $0x100] sm:$0xff] %v11016
  %11089 = vst [vmem:[#allocation2 + $0x108] sm:$0xff] %v11017
  %11090 = vst [vmem:[#allocation2 + $0x110] sm:$0xff] %v11018
  %11091 = vst [vmem:[#allocation2 + $0x118] sm:$0xff] %v11019
  %11092 = vst [vmem:[#allocation2 + $0x120] sm:$0xff] %v11020
  %11093 = vst [vmem:[#allocation2 + $0x128] sm:$0xff] %v11021
  %11094 = vst [vmem:[#allocation2 + $0x130] sm:$0xff] %v11022
  %11095 = vst [vmem:[#allocation2 + $0x138] sm:$0xff] %v11023
  %11096 = vst [vmem:[#allocation2 + $0x140] sm:$0xff] %v11024
  %11097 = vst [vmem:[#allocation2 + $0x148] sm:$0xff] %v11025
  %11098 = vst [vmem:[#allocation2 + $0x150] sm:$0xff] %v11026
  %11099 = vst [vmem:[#allocation2 + $0x158] sm:$0xff] %v11027
  %11100 = vst [vmem:[#allocation2 + $0x160] sm:$0xff] %v11028
  %11101 = vst [vmem:[#allocation2 + $0x168] sm:$0xff] %v11029
  %11102 = vst [vmem:[#allocation2 + $0x170] sm:$0xff] %v11030
  %11103 = vst [vmem:[#allocation2 + $0x178] sm:$0xff] %v11031
  %11104 = vst [vmem:[#allocation2 + $0x180] sm:$0xff] %v11032
  %11105 = vst [vmem:[#allocation2 + $0x188] sm:$0xff] %v11033
  %11106 = vst [vmem:[#allocation2 + $0x190] sm:$0xff] %v11034
  %11107 = vst [vmem:[#allocation2 + $0x198] sm:$0xff] %v11035
  %11108 = vst [vmem:[#allocation2 + $0x1a0] sm:$0xff] %v11036
  %11109 = vst [vmem:[#allocation2 + $0x1a8] sm:$0xff] %v11037
  %11110 = vst [vmem:[#allocation2 + $0x1b0] sm:$0xff] %v11038
  %11111 = vst [vmem:[#allocation2 + $0x1b8] sm:$0xff] %v11039
  %11112 = vst [vmem:[#allocation2 + $0x1c0] sm:$0xff] %v11040
  %11113 = vst [vmem:[#allocation2 + $0x1c8] sm:$0xff] %v11041
  %11114 = vst [vmem:[#allocation2 + $0x1d0] sm:$0xff] %v11042
  %11115 = vst [vmem:[#allocation2 + $0x1d8] sm:$0xff] %v11043
  %11116 = vst [vmem:[#allocation2 + $0x1e0] sm:$0xff] %v11044
  %11117 = vst [vmem:[#allocation2 + $0x1e8] sm:$0xff] %v11045
  %11118 = vst [vmem:[#allocation2 + $0x1f0] sm:$0xff] %v11046
  %11119 = vst [vmem:[#allocation2 + $0x1f8] sm:$0xff] %v11047
  %11120 = vst [vmem:[#allocation2 + $0x200] sm:$0xff] %v11048
  %11121 = vst [vmem:[#allocation2 + $0x208] sm:$0xff] %v11049
  %11122 = vst [vmem:[#allocation2 + $0x210] sm:$0xff] %v11050
  %11123 = vst [vmem:[#allocation2 + $0x218] sm:$0xff] %v11051
  %11124 = vst [vmem:[#allocation2 + $0x220] sm:$0xff] %v11052
  %11125 = vst [vmem:[#allocation2 + $0x228] sm:$0xff] %v11053
  %11126 = vst [vmem:[#allocation2 + $0x230] sm:$0xff] %v11054
  %11127 = vst [vmem:[#allocation2 + $0x238] sm:$0xff] %v11055
  %v11128 = vld [vmem:[#allocation2] sm:$0xff]
  %v11129 = vld [vmem:[#allocation2 + $0x8] sm:$0xff]
  %v11130 = vld [vmem:[#allocation2 + $0x10] sm:$0xff]
  %v11131 = vld [vmem:[#allocation2 + $0x18] sm:$0xff]
  %v11132 = vld [vmem:[#allocation2 + $0x20] sm:$0xff]
  %v11133 = vld [vmem:[#allocation2 + $0x28] sm:$0xff]
  %v11134 = vld [vmem:[#allocation2 + $0x30] sm:$0xff]
  %v11135 = vld [vmem:[#allocation2 + $0x38] sm:$0xff]
  %v11136 = vld [vmem:[#allocation2 + $0x40] sm:$0xff]
  %v11137 = vld [vmem:[#allocation2 + $0x48] sm:$0xff]
  %v11138 = vld [vmem:[#allocation2 + $0x50] sm:$0xff]
  %v11139 = vld [vmem:[#allocation2 + $0x58] sm:$0xff]
  %v11140 = vld [vmem:[#allocation2 + $0x60] sm:$0xff]
  %v11141 = vld [vmem:[#allocation2 + $0x68] sm:$0xff]
  %v11142 = vld [vmem:[#allocation2 + $0x70] sm:$0xff]
  %v11143 = vld [vmem:[#allocation2 + $0x78] sm:$0xff]
  %v11144 = vld [vmem:[#allocation2 + $0x80] sm:$0xff]
  %v11145 = vld [vmem:[#allocation2 + $0x88] sm:$0xff]
  %v11146 = vld [vmem:[#allocation2 + $0x90] sm:$0xff]
  %v11147 = vld [vmem:[#allocation2 + $0x98] sm:$0xff]
  %v11148 = vld [vmem:[#allocation2 + $0xa0] sm:$0xff]
  %v11149 = vld [vmem:[#allocation2 + $0xa8] sm:$0xff]
  %v11150 = vld [vmem:[#allocation2 + $0xb0] sm:$0xff]
  %v11151 = vld [vmem:[#allocation2 + $0xb8] sm:$0xff]
  %v11152 = vld [vmem:[#allocation2 + $0xc0] sm:$0xff]
  %v11153 = vld [vmem:[#allocation2 + $0xc8] sm:$0xff]
  %v11154 = vld [vmem:[#allocation2 + $0xd0] sm:$0xff]
  %v11155 = vld [vmem:[#allocation2 + $0xd8] sm:$0xff]
  %v11156 = vld [vmem:[#allocation2 + $0xe0] sm:$0xff]
  %v11157 = vld [vmem:[#allocation2 + $0xe8] sm:$0xff]
  %v11158 = vld [vmem:[#allocation2 + $0xf0] sm:$0xff]
  %v11159 = vld [vmem:[#allocation2 + $0xf8] sm:$0xff]
  %v11160 = vld [vmem:[#allocation2 + $0x100] sm:$0xff]
  %v11161 = vld [vmem:[#allocation2 + $0x108] sm:$0xff]
  %v11162 = vld [vmem:[#allocation2 + $0x110] sm:$0xff]
  %v11163 = vld [vmem:[#allocation2 + $0x118] sm:$0xff]
  %v11164 = vld [vmem:[#allocation2 + $0x120] sm:$0xff]
  %v11165 = vld [vmem:[#allocation2 + $0x128] sm:$0xff]
  %v11166 = vld [vmem:[#allocation2 + $0x130] sm:$0xff]
  %v11167 = vld [vmem:[#allocation2 + $0x138] sm:$0xff]
  %v11168 = vld [vmem:[#allocation2 + $0x140] sm:$0xff]
  %v11169 = vld [vmem:[#allocation2 + $0x148] sm:$0xff]
  %v11170 = vld [vmem:[#allocation2 + $0x150] sm:$0xff]
  %v11171 = vld [vmem:[#allocation2 + $0x158] sm:$0xff]
  %v11172 = vld [vmem:[#allocation2 + $0x160] sm:$0xff]
  %v11173 = vld [vmem:[#allocation2 + $0x168] sm:$0xff]
  %v11174 = vld [vmem:[#allocation2 + $0x170] sm:$0xff]
  %v11175 = vld [vmem:[#allocation2 + $0x178] sm:$0xff]
  %v11176 = vld [vmem:[#allocation2 + $0x180] sm:$0xff]
  %v11177 = vld [vmem:[#allocation2 + $0x188] sm:$0xff]
  %v11178 = vld [vmem:[#allocation2 + $0x190] sm:$0xff]
  %v11179 = vld [vmem:[#allocation2 + $0x198] sm:$0xff]
  %v11180 = vld [vmem:[#allocation2 + $0x1a0] sm:$0xff]
  %v11181 = vld [vmem:[#allocation2 + $0x1a8] sm:$0xff]
  %v11182 = vld [vmem:[#allocation2 + $0x1b0] sm:$0xff]
  %v11183 = vld [vmem:[#allocation2 + $0x1b8] sm:$0xff]
  %v11184 = vld [vmem:[#allocation2 + $0x1c0] sm:$0xff]
  %v11185 = vld [vmem:[#allocation2 + $0x1c8] sm:$0xff]
  %v11186 = vld [vmem:[#allocation2 + $0x1d0] sm:$0xff]
  %v11187 = vld [vmem:[#allocation2 + $0x1d8] sm:$0xff]
  %v11188 = vld [vmem:[#allocation2 + $0x1e0] sm:$0xff]
  %v11189 = vld [vmem:[#allocation2 + $0x1e8] sm:$0xff]
  %v11190 = vld [vmem:[#allocation2 + $0x1f0] sm:$0xff]
  %v11191 = vld [vmem:[#allocation2 + $0x1f8] sm:$0xff]
  %v11192 = vld [vmem:[#allocation2 + $0x200] sm:$0xff]
  %v11193 = vld [vmem:[#allocation2 + $0x208] sm:$0xff]
  %v11194 = vld [vmem:[#allocation2 + $0x210] sm:$0xff]
  %v11195 = vld [vmem:[#allocation2 + $0x218] sm:$0xff]
  %v11196 = vld [vmem:[#allocation2 + $0x220] sm:$0xff]
  %v11197 = vld [vmem:[#allocation2 + $0x228] sm:$0xff]
  %v11198 = vld [vmem:[#allocation2 + $0x230] sm:$0xff]
  %v11199 = vld [vmem:[#allocation2 + $0x238] sm:$0xff]
  %v11200 = vld [vmem:[%s2] sm:$0x1]
  %v11202 = vlaneseq
  %v11203 = vshrl.u32 %v11202, 7
  %v11204 = vsub.s32 0, %v11203
  %v11205 = vrot.slane %v11200, %v11204
  %v11207 = vadd.f32 %v11128, %v11205
  %v11208 = vadd.f32 %v11129, %v11205
  %v11209 = vadd.f32 %v11130, %v11205
  %v11210 = vadd.f32 %v11131, %v11205
  %v11211 = vadd.f32 %v11132, %v11205
  %v11212 = vadd.f32 %v11133, %v11205
  %v11213 = vadd.f32 %v11134, %v11205
  %v11214 = vadd.f32 %v11135, %v11205
  %v11215 = vadd.f32 %v11136, %v11205
  %v11216 = vadd.f32 %v11137, %v11205
  %v11217 = vadd.f32 %v11138, %v11205
  %v11218 = vadd.f32 %v11139, %v11205
  %v11219 = vadd.f32 %v11140, %v11205
  %v11220 = vadd.f32 %v11141, %v11205
  %v11221 = vadd.f32 %v11142, %v11205
  %v11222 = vadd.f32 %v11143, %v11205
  %v11223 = vadd.f32 %v11144, %v11205
  %v11224 = vadd.f32 %v11145, %v11205
  %v11225 = vadd.f32 %v11146, %v11205
  %v11226 = vadd.f32 %v11147, %v11205
  %v11227 = vadd.f32 %v11148, %v11205
  %v11228 = vadd.f32 %v11149, %v11205
  %v11229 = vadd.f32 %v11150, %v11205
  %v11230 = vadd.f32 %v11151, %v11205
  %v11231 = vadd.f32 %v11152, %v11205
  %v11232 = vadd.f32 %v11153, %v11205
  %v11233 = vadd.f32 %v11154, %v11205
  %v11234 = vadd.f32 %v11155, %v11205
  %v11235 = vadd.f32 %v11156, %v11205
  %v11236 = vadd.f32 %v11157, %v11205
  %v11237 = vadd.f32 %v11158, %v11205
  %v11238 = vadd.f32 %v11159, %v11205
  %v11239 = vadd.f32 %v11160, %v11205
  %v11240 = vadd.f32 %v11161, %v11205
  %v11241 = vadd.f32 %v11162, %v11205
  %v11242 = vadd.f32 %v11163, %v11205
  %v11243 = vadd.f32 %v11164, %v11205
  %v11244 = vadd.f32 %v11165, %v11205
  %v11245 = vadd.f32 %v11166, %v11205
  %v11246 = vadd.f32 %v11167, %v11205
  %v11247 = vadd.f32 %v11168, %v11205
  %v11248 = vadd.f32 %v11169, %v11205
  %v11249 = vadd.f32 %v11170, %v11205
  %v11250 = vadd.f32 %v11171, %v11205
  %v11251 = vadd.f32 %v11172, %v11205
  %v11252 = vadd.f32 %v11173, %v11205
  %v11253 = vadd.f32 %v11174, %v11205
  %v11254 = vadd.f32 %v11175, %v11205
  %v11255 = vadd.f32 %v11176, %v11205
  %v11256 = vadd.f32 %v11177, %v11205
  %v11257 = vadd.f32 %v11178, %v11205
  %v11258 = vadd.f32 %v11179, %v11205
  %v11259 = vadd.f32 %v11180, %v11205
  %v11260 = vadd.f32 %v11181, %v11205
  %v11261 = vadd.f32 %v11182, %v11205
  %v11262 = vadd.f32 %v11183, %v11205
  %v11263 = vadd.f32 %v11184, %v11205
  %v11264 = vadd.f32 %v11185, %v11205
  %v11265 = vadd.f32 %v11186, %v11205
  %v11266 = vadd.f32 %v11187, %v11205
  %v11267 = vadd.f32 %v11188, %v11205
  %v11268 = vadd.f32 %v11189, %v11205
  %v11269 = vadd.f32 %v11190, %v11205
  %v11270 = vadd.f32 %v11191, %v11205
  %v11271 = vadd.f32 %v11192, %v11205
  %v11272 = vadd.f32 %v11193, %v11205
  %v11273 = vadd.f32 %v11194, %v11205
  %v11274 = vadd.f32 %v11195, %v11205
  %v11275 = vadd.f32 %v11196, %v11205
  %v11276 = vadd.f32 %v11197, %v11205
  %v11277 = vadd.f32 %v11198, %v11205
  %v11278 = vadd.f32 %v11199, %v11205
  %v11279 = vmax.f32 %v11207, 0.0
  %v11280 = vmax.f32 %v11208, 0.0
  %v11281 = vmax.f32 %v11209, 0.0
  %v11282 = vmax.f32 %v11210, 0.0
  %v11283 = vmax.f32 %v11211, 0.0
  %v11284 = vmax.f32 %v11212, 0.0
  %v11285 = vmax.f32 %v11213, 0.0
  %v11286 = vmax.f32 %v11214, 0.0
  %v11287 = vmax.f32 %v11215, 0.0
  %v11288 = vmax.f32 %v11216, 0.0
  %v11289 = vmax.f32 %v11217, 0.0
  %v11290 = vmax.f32 %v11218, 0.0
  %v11291 = vmax.f32 %v11219, 0.0
  %v11292 = vmax.f32 %v11220, 0.0
  %v11293 = vmax.f32 %v11221, 0.0
  %v11294 = vmax.f32 %v11222, 0.0
  %v11295 = vmax.f32 %v11223, 0.0
  %v11296 = vmax.f32 %v11224, 0.0
  %v11297 = vmax.f32 %v11225, 0.0
  %v11298 = vmax.f32 %v11226, 0.0
  %v11299 = vmax.f32 %v11227, 0.0
  %v11300 = vmax.f32 %v11228, 0.0
  %v11301 = vmax.f32 %v11229, 0.0
  %v11302 = vmax.f32 %v11230, 0.0
  %v11303 = vmax.f32 %v11231, 0.0
  %v11304 = vmax.f32 %v11232, 0.0
  %v11305 = vmax.f32 %v11233, 0.0
  %v11306 = vmax.f32 %v11234, 0.0
  %v11307 = vmax.f32 %v11235, 0.0
  %v11308 = vmax.f32 %v11236, 0.0
  %v11309 = vmax.f32 %v11237, 0.0
  %v11310 = vmax.f32 %v11238, 0.0
  %v11311 = vmax.f32 %v11239, 0.0
  %v11312 = vmax.f32 %v11240, 0.0
  %v11313 = vmax.f32 %v11241, 0.0
  %v11314 = vmax.f32 %v11242, 0.0
  %v11315 = vmax.f32 %v11243, 0.0
  %v11316 = vmax.f32 %v11244, 0.0
  %v11317 = vmax.f32 %v11245, 0.0
  %v11318 = vmax.f32 %v11246, 0.0
  %v11319 = vmax.f32 %v11247, 0.0
  %v11320 = vmax.f32 %v11248, 0.0
  %v11321 = vmax.f32 %v11249, 0.0
  %v11322 = vmax.f32 %v11250, 0.0
  %v11323 = vmax.f32 %v11251, 0.0
  %v11324 = vmax.f32 %v11252, 0.0
  %v11325 = vmax.f32 %v11253, 0.0
  %v11326 = vmax.f32 %v11254, 0.0
  %v11327 = vmax.f32 %v11255, 0.0
  %v11328 = vmax.f32 %v11256, 0.0
  %v11329 = vmax.f32 %v11257, 0.0
  %v11330 = vmax.f32 %v11258, 0.0
  %v11331 = vmax.f32 %v11259, 0.0
  %v11332 = vmax.f32 %v11260, 0.0
  %v11333 = vmax.f32 %v11261, 0.0
  %v11334 = vmax.f32 %v11262, 0.0
  %v11335 = vmax.f32 %v11263, 0.0
  %v11336 = vmax.f32 %v11264, 0.0
  %v11337 = vmax.f32 %v11265, 0.0
  %v11338 = vmax.f32 %v11266, 0.0
  %v11339 = vmax.f32 %v11267, 0.0
  %v11340 = vmax.f32 %v11268, 0.0
  %v11341 = vmax.f32 %v11269, 0.0
  %v11342 = vmax.f32 %v11270, 0.0
  %v11343 = vmax.f32 %v11271, 0.0
  %v11344 = vmax.f32 %v11272, 0.0
  %v11345 = vmax.f32 %v11273, 0.0
  %v11346 = vmax.f32 %v11274, 0.0
  %v11347 = vmax.f32 %v11275, 0.0
  %v11348 = vmax.f32 %v11276, 0.0
  %v11349 = vmax.f32 %v11277, 0.0
  %v11350 = vmax.f32 %v11278, 0.0
  %v11351 = vlaneseq
  %v11352 = vshrl.u32 %v11351, 7
  %v11353 = vadd.s32 %v11352, 8
  %v11354 = vadd.s32 %v11352, 16
  %v11355 = vadd.s32 %v11352, 24
  %v11356 = vadd.s32 %v11352, 32
  %v11357 = vadd.s32 %v11352, 40
  %v11358 = vadd.s32 %v11352, 48
  %v11359 = vadd.s32 %v11352, 56
  %v11360 = vadd.s32 %v11352, 64
  %v11361 = vadd.s32 %v11352, 72
  %v11362 = vadd.s32 %v11352, 80
  %v11363 = vadd.s32 %v11352, 88
  %v11364 = vadd.s32 %v11352, 96
  %v11365 = vadd.s32 %v11352, 104
  %v11366 = vadd.s32 %v11352, 112
  %v11367 = vadd.s32 %v11352, 120
  %v11368 = vadd.s32 %v11352, 128
  %v11369 = vadd.s32 %v11352, 136
  %v11370 = vadd.s32 %v11352, 144
  %v11371 = vadd.s32 %v11352, 152
  %v11372 = vadd.s32 %v11352, 160
  %v11373 = vadd.s32 %v11352, 168
  %v11374 = vadd.s32 %v11352, 176
  %v11375 = vadd.s32 %v11352, 184
  %v11376 = vadd.s32 %v11352, 192
  %v11377 = vadd.s32 %v11352, 200
  %v11378 = vadd.s32 %v11352, 208
  %v11379 = vadd.s32 %v11352, 216
  %v11380 = vadd.s32 %v11352, 224
  %v11381 = vadd.s32 %v11352, 232
  %v11382 = vadd.s32 %v11352, 240
  %v11383 = vadd.s32 %v11352, 248
  %v11384 = vadd.s32 %v11352, 256
  %v11385 = vadd.s32 %v11352, 264
  %v11386 = vadd.s32 %v11352, 272
  %v11387 = vadd.s32 %v11352, 280
  %v11388 = vadd.s32 %v11352, 288
  %v11389 = vadd.s32 %v11352, 296
  %v11390 = vadd.s32 %v11352, 304
  %v11391 = vadd.s32 %v11352, 312
  %v11392 = vadd.s32 %v11352, 320
  %v11393 = vadd.s32 %v11352, 328
  %v11394 = vadd.s32 %v11352, 336
  %v11395 = vadd.s32 %v11352, 344
  %v11396 = vadd.s32 %v11352, 352
  %v11397 = vadd.s32 %v11352, 360
  %v11398 = vadd.s32 %v11352, 368
  %v11399 = vadd.s32 %v11352, 376
  %v11400 = vadd.s32 %v11352, 384
  %v11401 = vadd.s32 %v11352, 392
  %v11402 = vadd.s32 %v11352, 400
  %v11403 = vadd.s32 %v11352, 408
  %v11404 = vadd.s32 %v11352, 416
  %v11405 = vadd.s32 %v11352, 424
  %v11406 = vadd.s32 %v11352, 432
  %v11407 = vadd.s32 %v11352, 440
  %v11408 = vadd.s32 %v11352, 448
  %v11409 = vadd.s32 %v11352, 456
  %v11410 = vadd.s32 %v11352, 464
  %v11411 = vadd.s32 %v11352, 472
  %v11412 = vadd.s32 %v11352, 480
  %v11413 = vadd.s32 %v11352, 488
  %v11414 = vadd.s32 %v11352, 496
  %v11415 = vadd.s32 %v11352, 504
  %v11416 = vadd.s32 %v11352, 512
  %v11417 = vadd.s32 %v11352, 520
  %v11418 = vadd.s32 %v11352, 528
  %v11419 = vadd.s32 %v11352, 536
  %v11420 = vadd.s32 %v11352, 544
  %v11421 = vadd.s32 %v11352, 552
  %v11422 = vadd.s32 %v11352, 560
  %v11423 = vadd.s32 %v11352, 568
  %vm11424 = vcmp.lt.s32.totalorder %v11352, 0
  %v11425 = vsub.s32 0, %v11352
  %v11426 = vsel %vm11424, %v11425, %v11352
  %v11427 = vmul.u32.u64.compose %v11426, 3817748708
  %v11428 = vextract.low.u32 %v11427
  %v11429 = vextract.high.u32 %v11427
  %v11430 = vshrl.u32 %v11429, 4
  %v11431 = vmul.u32 %v11430, 18
  %v11432 = vsub.s32 %v11426, %v11431
  %v11433 = vsub.s32 0, %v11432
  %v11434 = vsel %vm11424, %v11433, %v11432
  %vm11435 = vcmp.lt.s32.totalorder %v11353, 0
  %v11436 = vsub.s32 0, %v11353
  %v11437 = vsel %vm11435, %v11436, %v11353
  %v11438 = vmul.u32.u64.compose %v11437, 3817748708
  %v11439 = vextract.low.u32 %v11438
  %v11440 = vextract.high.u32 %v11438
  %v11441 = vshrl.u32 %v11440, 4
  %v11442 = vmul.u32 %v11441, 18
  %v11443 = vsub.s32 %v11437, %v11442
  %v11444 = vsub.s32 0, %v11443
  %v11445 = vsel %vm11435, %v11444, %v11443
  %vm11446 = vcmp.lt.s32.totalorder %v11354, 0
  %v11447 = vsub.s32 0, %v11354
  %v11448 = vsel %vm11446, %v11447, %v11354
  %v11449 = vmul.u32.u64.compose %v11448, 3817748708
  %v11450 = vextract.low.u32 %v11449
  %v11451 = vextract.high.u32 %v11449
  %v11452 = vshrl.u32 %v11451, 4
  %v11453 = vmul.u32 %v11452, 18
  %v11454 = vsub.s32 %v11448, %v11453
  %v11455 = vsub.s32 0, %v11454
  %v11456 = vsel %vm11446, %v11455, %v11454
  %vm11457 = vcmp.lt.s32.totalorder %v11355, 0
  %v11458 = vsub.s32 0, %v11355
  %v11459 = vsel %vm11457, %v11458, %v11355
  %v11460 = vmul.u32.u64.compose %v11459, 3817748708
  %v11461 = vextract.low.u32 %v11460
  %v11462 = vextract.high.u32 %v11460
  %v11463 = vshrl.u32 %v11462, 4
  %v11464 = vmul.u32 %v11463, 18
  %v11465 = vsub.s32 %v11459, %v11464
  %v11466 = vsub.s32 0, %v11465
  %v11467 = vsel %vm11457, %v11466, %v11465
  %vm11468 = vcmp.lt.s32.totalorder %v11356, 0
  %v11469 = vsub.s32 0, %v11356
  %v11470 = vsel %vm11468, %v11469, %v11356
  %v11471 = vmul.u32.u64.compose %v11470, 3817748708
  %v11472 = vextract.low.u32 %v11471
  %v11473 = vextract.high.u32 %v11471
  %v11474 = vshrl.u32 %v11473, 4
  %v11475 = vmul.u32 %v11474, 18
  %v11476 = vsub.s32 %v11470, %v11475
  %v11477 = vsub.s32 0, %v11476
  %v11478 = vsel %vm11468, %v11477, %v11476
  %vm11479 = vcmp.lt.s32.totalorder %v11357, 0
  %v11480 = vsub.s32 0, %v11357
  %v11481 = vsel %vm11479, %v11480, %v11357
  %v11482 = vmul.u32.u64.compose %v11481, 3817748708
  %v11483 = vextract.low.u32 %v11482
  %v11484 = vextract.high.u32 %v11482
  %v11485 = vshrl.u32 %v11484, 4
  %v11486 = vmul.u32 %v11485, 18
  %v11487 = vsub.s32 %v11481, %v11486
  %v11488 = vsub.s32 0, %v11487
  %v11489 = vsel %vm11479, %v11488, %v11487
  %vm11490 = vcmp.lt.s32.totalorder %v11358, 0
  %v11491 = vsub.s32 0, %v11358
  %v11492 = vsel %vm11490, %v11491, %v11358
  %v11493 = vmul.u32.u64.compose %v11492, 3817748708
  %v11494 = vextract.low.u32 %v11493
  %v11495 = vextract.high.u32 %v11493
  %v11496 = vshrl.u32 %v11495, 4
  %v11497 = vmul.u32 %v11496, 18
  %v11498 = vsub.s32 %v11492, %v11497
  %v11499 = vsub.s32 0, %v11498
  %v11500 = vsel %vm11490, %v11499, %v11498
  %vm11501 = vcmp.lt.s32.totalorder %v11359, 0
  %v11502 = vsub.s32 0, %v11359
  %v11503 = vsel %vm11501, %v11502, %v11359
  %v11504 = vmul.u32.u64.compose %v11503, 3817748708
  %v11505 = vextract.low.u32 %v11504
  %v11506 = vextract.high.u32 %v11504
  %v11507 = vshrl.u32 %v11506, 4
  %v11508 = vmul.u32 %v11507, 18
  %v11509 = vsub.s32 %v11503, %v11508
  %v11510 = vsub.s32 0, %v11509
  %v11511 = vsel %vm11501, %v11510, %v11509
  %vm11512 = vcmp.lt.s32.totalorder %v11360, 0
  %v11513 = vsub.s32 0, %v11360
  %v11514 = vsel %vm11512, %v11513, %v11360
  %v11515 = vmul.u32.u64.compose %v11514, 3817748708
  %v11516 = vextract.low.u32 %v11515
  %v11517 = vextract.high.u32 %v11515
  %v11518 = vshrl.u32 %v11517, 4
  %v11519 = vmul.u32 %v11518, 18
  %v11520 = vsub.s32 %v11514, %v11519
  %v11521 = vsub.s32 0, %v11520
  %v11522 = vsel %vm11512, %v11521, %v11520
  %vm11523 = vcmp.lt.s32.totalorder %v11361, 0
  %v11524 = vsub.s32 0, %v11361
  %v11525 = vsel %vm11523, %v11524, %v11361
  %v11526 = vmul.u32.u64.compose %v11525, 3817748708
  %v11527 = vextract.low.u32 %v11526
  %v11528 = vextract.high.u32 %v11526
  %v11529 = vshrl.u32 %v11528, 4
  %v11530 = vmul.u32 %v11529, 18
  %v11531 = vsub.s32 %v11525, %v11530
  %v11532 = vsub.s32 0, %v11531
  %v11533 = vsel %vm11523, %v11532, %v11531
  %vm11534 = vcmp.lt.s32.totalorder %v11362, 0
  %v11535 = vsub.s32 0, %v11362
  %v11536 = vsel %vm11534, %v11535, %v11362
  %v11537 = vmul.u32.u64.compose %v11536, 3817748708
  %v11538 = vextract.low.u32 %v11537
  %v11539 = vextract.high.u32 %v11537
  %v11540 = vshrl.u32 %v11539, 4
  %v11541 = vmul.u32 %v11540, 18
  %v11542 = vsub.s32 %v11536, %v11541
  %v11543 = vsub.s32 0, %v11542
  %v11544 = vsel %vm11534, %v11543, %v11542
  %vm11545 = vcmp.lt.s32.totalorder %v11363, 0
  %v11546 = vsub.s32 0, %v11363
  %v11547 = vsel %vm11545, %v11546, %v11363
  %v11548 = vmul.u32.u64.compose %v11547, 3817748708
  %v11549 = vextract.low.u32 %v11548
  %v11550 = vextract.high.u32 %v11548
  %v11551 = vshrl.u32 %v11550, 4
  %v11552 = vmul.u32 %v11551, 18
  %v11553 = vsub.s32 %v11547, %v11552
  %v11554 = vsub.s32 0, %v11553
  %v11555 = vsel %vm11545, %v11554, %v11553
  %vm11556 = vcmp.lt.s32.totalorder %v11364, 0
  %v11557 = vsub.s32 0, %v11364
  %v11558 = vsel %vm11556, %v11557, %v11364
  %v11559 = vmul.u32.u64.compose %v11558, 3817748708
  %v11560 = vextract.low.u32 %v11559
  %v11561 = vextract.high.u32 %v11559
  %v11562 = vshrl.u32 %v11561, 4
  %v11563 = vmul.u32 %v11562, 18
  %v11564 = vsub.s32 %v11558, %v11563
  %v11565 = vsub.s32 0, %v11564
  %v11566 = vsel %vm11556, %v11565, %v11564
  %vm11567 = vcmp.lt.s32.totalorder %v11365, 0
  %v11568 = vsub.s32 0, %v11365
  %v11569 = vsel %vm11567, %v11568, %v11365
  %v11570 = vmul.u32.u64.compose %v11569, 3817748708
  %v11571 = vextract.low.u32 %v11570
  %v11572 = vextract.high.u32 %v11570
  %v11573 = vshrl.u32 %v11572, 4
  %v11574 = vmul.u32 %v11573, 18
  %v11575 = vsub.s32 %v11569, %v11574
  %v11576 = vsub.s32 0, %v11575
  %v11577 = vsel %vm11567, %v11576, %v11575
  %vm11578 = vcmp.lt.s32.totalorder %v11366, 0
  %v11579 = vsub.s32 0, %v11366
  %v11580 = vsel %vm11578, %v11579, %v11366
  %v11581 = vmul.u32.u64.compose %v11580, 3817748708
  %v11582 = vextract.low.u32 %v11581
  %v11583 = vextract.high.u32 %v11581
  %v11584 = vshrl.u32 %v11583, 4
  %v11585 = vmul.u32 %v11584, 18
  %v11586 = vsub.s32 %v11580, %v11585
  %v11587 = vsub.s32 0, %v11586
  %v11588 = vsel %vm11578, %v11587, %v11586
  %vm11589 = vcmp.lt.s32.totalorder %v11367, 0
  %v11590 = vsub.s32 0, %v11367
  %v11591 = vsel %vm11589, %v11590, %v11367
  %v11592 = vmul.u32.u64.compose %v11591, 3817748708
  %v11593 = vextract.low.u32 %v11592
  %v11594 = vextract.high.u32 %v11592
  %v11595 = vshrl.u32 %v11594, 4
  %v11596 = vmul.u32 %v11595, 18
  %v11597 = vsub.s32 %v11591, %v11596
  %v11598 = vsub.s32 0, %v11597
  %v11599 = vsel %vm11589, %v11598, %v11597
  %vm11600 = vcmp.lt.s32.totalorder %v11368, 0
  %v11601 = vsub.s32 0, %v11368
  %v11602 = vsel %vm11600, %v11601, %v11368
  %v11603 = vmul.u32.u64.compose %v11602, 3817748708
  %v11604 = vextract.low.u32 %v11603
  %v11605 = vextract.high.u32 %v11603
  %v11606 = vshrl.u32 %v11605, 4
  %v11607 = vmul.u32 %v11606, 18
  %v11608 = vsub.s32 %v11602, %v11607
  %v11609 = vsub.s32 0, %v11608
  %v11610 = vsel %vm11600, %v11609, %v11608
  %vm11611 = vcmp.lt.s32.totalorder %v11369, 0
  %v11612 = vsub.s32 0, %v11369
  %v11613 = vsel %vm11611, %v11612, %v11369
  %v11614 = vmul.u32.u64.compose %v11613, 3817748708
  %v11615 = vextract.low.u32 %v11614
  %v11616 = vextract.high.u32 %v11614
  %v11617 = vshrl.u32 %v11616, 4
  %v11618 = vmul.u32 %v11617, 18
  %v11619 = vsub.s32 %v11613, %v11618
  %v11620 = vsub.s32 0, %v11619
  %v11621 = vsel %vm11611, %v11620, %v11619
  %vm11622 = vcmp.lt.s32.totalorder %v11370, 0
  %v11623 = vsub.s32 0, %v11370
  %v11624 = vsel %vm11622, %v11623, %v11370
  %v11625 = vmul.u32.u64.compose %v11624, 3817748708
  %v11626 = vextract.low.u32 %v11625
  %v11627 = vextract.high.u32 %v11625
  %v11628 = vshrl.u32 %v11627, 4
  %v11629 = vmul.u32 %v11628, 18
  %v11630 = vsub.s32 %v11624, %v11629
  %v11631 = vsub.s32 0, %v11630
  %v11632 = vsel %vm11622, %v11631, %v11630
  %vm11633 = vcmp.lt.s32.totalorder %v11371, 0
  %v11634 = vsub.s32 0, %v11371
  %v11635 = vsel %vm11633, %v11634, %v11371
  %v11636 = vmul.u32.u64.compose %v11635, 3817748708
  %v11637 = vextract.low.u32 %v11636
  %v11638 = vextract.high.u32 %v11636
  %v11639 = vshrl.u32 %v11638, 4
  %v11640 = vmul.u32 %v11639, 18
  %v11641 = vsub.s32 %v11635, %v11640
  %v11642 = vsub.s32 0, %v11641
  %v11643 = vsel %vm11633, %v11642, %v11641
  %vm11644 = vcmp.lt.s32.totalorder %v11372, 0
  %v11645 = vsub.s32 0, %v11372
  %v11646 = vsel %vm11644, %v11645, %v11372
  %v11647 = vmul.u32.u64.compose %v11646, 3817748708
  %v11648 = vextract.low.u32 %v11647
  %v11649 = vextract.high.u32 %v11647
  %v11650 = vshrl.u32 %v11649, 4
  %v11651 = vmul.u32 %v11650, 18
  %v11652 = vsub.s32 %v11646, %v11651
  %v11653 = vsub.s32 0, %v11652
  %v11654 = vsel %vm11644, %v11653, %v11652
  %vm11655 = vcmp.lt.s32.totalorder %v11373, 0
  %v11656 = vsub.s32 0, %v11373
  %v11657 = vsel %vm11655, %v11656, %v11373
  %v11658 = vmul.u32.u64.compose %v11657, 3817748708
  %v11659 = vextract.low.u32 %v11658
  %v11660 = vextract.high.u32 %v11658
  %v11661 = vshrl.u32 %v11660, 4
  %v11662 = vmul.u32 %v11661, 18
  %v11663 = vsub.s32 %v11657, %v11662
  %v11664 = vsub.s32 0, %v11663
  %v11665 = vsel %vm11655, %v11664, %v11663
  %vm11666 = vcmp.lt.s32.totalorder %v11374, 0
  %v11667 = vsub.s32 0, %v11374
  %v11668 = vsel %vm11666, %v11667, %v11374
  %v11669 = vmul.u32.u64.compose %v11668, 3817748708
  %v11670 = vextract.low.u32 %v11669
  %v11671 = vextract.high.u32 %v11669
  %v11672 = vshrl.u32 %v11671, 4
  %v11673 = vmul.u32 %v11672, 18
  %v11674 = vsub.s32 %v11668, %v11673
  %v11675 = vsub.s32 0, %v11674
  %v11676 = vsel %vm11666, %v11675, %v11674
  %vm11677 = vcmp.lt.s32.totalorder %v11375, 0
  %v11678 = vsub.s32 0, %v11375
  %v11679 = vsel %vm11677, %v11678, %v11375
  %v11680 = vmul.u32.u64.compose %v11679, 3817748708
  %v11681 = vextract.low.u32 %v11680
  %v11682 = vextract.high.u32 %v11680
  %v11683 = vshrl.u32 %v11682, 4
  %v11684 = vmul.u32 %v11683, 18
  %v11685 = vsub.s32 %v11679, %v11684
  %v11686 = vsub.s32 0, %v11685
  %v11687 = vsel %vm11677, %v11686, %v11685
  %vm11688 = vcmp.lt.s32.totalorder %v11376, 0
  %v11689 = vsub.s32 0, %v11376
  %v11690 = vsel %vm11688, %v11689, %v11376
  %v11691 = vmul.u32.u64.compose %v11690, 3817748708
  %v11692 = vextract.low.u32 %v11691
  %v11693 = vextract.high.u32 %v11691
  %v11694 = vshrl.u32 %v11693, 4
  %v11695 = vmul.u32 %v11694, 18
  %v11696 = vsub.s32 %v11690, %v11695
  %v11697 = vsub.s32 0, %v11696
  %v11698 = vsel %vm11688, %v11697, %v11696
  %vm11699 = vcmp.lt.s32.totalorder %v11377, 0
  %v11700 = vsub.s32 0, %v11377
  %v11701 = vsel %vm11699, %v11700, %v11377
  %v11702 = vmul.u32.u64.compose %v11701, 3817748708
  %v11703 = vextract.low.u32 %v11702
  %v11704 = vextract.high.u32 %v11702
  %v11705 = vshrl.u32 %v11704, 4
  %v11706 = vmul.u32 %v11705, 18
  %v11707 = vsub.s32 %v11701, %v11706
  %v11708 = vsub.s32 0, %v11707
  %v11709 = vsel %vm11699, %v11708, %v11707
  %vm11710 = vcmp.lt.s32.totalorder %v11378, 0
  %v11711 = vsub.s32 0, %v11378
  %v11712 = vsel %vm11710, %v11711, %v11378
  %v11713 = vmul.u32.u64.compose %v11712, 3817748708
  %v11714 = vextract.low.u32 %v11713
  %v11715 = vextract.high.u32 %v11713
  %v11716 = vshrl.u32 %v11715, 4
  %v11717 = vmul.u32 %v11716, 18
  %v11718 = vsub.s32 %v11712, %v11717
  %v11719 = vsub.s32 0, %v11718
  %v11720 = vsel %vm11710, %v11719, %v11718
  %vm11721 = vcmp.lt.s32.totalorder %v11379, 0
  %v11722 = vsub.s32 0, %v11379
  %v11723 = vsel %vm11721, %v11722, %v11379
  %v11724 = vmul.u32.u64.compose %v11723, 3817748708
  %v11725 = vextract.low.u32 %v11724
  %v11726 = vextract.high.u32 %v11724
  %v11727 = vshrl.u32 %v11726, 4
  %v11728 = vmul.u32 %v11727, 18
  %v11729 = vsub.s32 %v11723, %v11728
  %v11730 = vsub.s32 0, %v11729
  %v11731 = vsel %vm11721, %v11730, %v11729
  %vm11732 = vcmp.lt.s32.totalorder %v11380, 0
  %v11733 = vsub.s32 0, %v11380
  %v11734 = vsel %vm11732, %v11733, %v11380
  %v11735 = vmul.u32.u64.compose %v11734, 3817748708
  %v11736 = vextract.low.u32 %v11735
  %v11737 = vextract.high.u32 %v11735
  %v11738 = vshrl.u32 %v11737, 4
  %v11739 = vmul.u32 %v11738, 18
  %v11740 = vsub.s32 %v11734, %v11739
  %v11741 = vsub.s32 0, %v11740
  %v11742 = vsel %vm11732, %v11741, %v11740
  %vm11743 = vcmp.lt.s32.totalorder %v11381, 0
  %v11744 = vsub.s32 0, %v11381
  %v11745 = vsel %vm11743, %v11744, %v11381
  %v11746 = vmul.u32.u64.compose %v11745, 3817748708
  %v11747 = vextract.low.u32 %v11746
  %v11748 = vextract.high.u32 %v11746
  %v11749 = vshrl.u32 %v11748, 4
  %v11750 = vmul.u32 %v11749, 18
  %v11751 = vsub.s32 %v11745, %v11750
  %v11752 = vsub.s32 0, %v11751
  %v11753 = vsel %vm11743, %v11752, %v11751
  %vm11754 = vcmp.lt.s32.totalorder %v11382, 0
  %v11755 = vsub.s32 0, %v11382
  %v11756 = vsel %vm11754, %v11755, %v11382
  %v11757 = vmul.u32.u64.compose %v11756, 3817748708
  %v11758 = vextract.low.u32 %v11757
  %v11759 = vextract.high.u32 %v11757
  %v11760 = vshrl.u32 %v11759, 4
  %v11761 = vmul.u32 %v11760, 18
  %v11762 = vsub.s32 %v11756, %v11761
  %v11763 = vsub.s32 0, %v11762
  %v11764 = vsel %vm11754, %v11763, %v11762
  %vm11765 = vcmp.lt.s32.totalorder %v11383, 0
  %v11766 = vsub.s32 0, %v11383
  %v11767 = vsel %vm11765, %v11766, %v11383
  %v11768 = vmul.u32.u64.compose %v11767, 3817748708
  %v11769 = vextract.low.u32 %v11768
  %v11770 = vextract.high.u32 %v11768
  %v11771 = vshrl.u32 %v11770, 4
  %v11772 = vmul.u32 %v11771, 18
  %v11773 = vsub.s32 %v11767, %v11772
  %v11774 = vsub.s32 0, %v11773
  %v11775 = vsel %vm11765, %v11774, %v11773
  %vm11776 = vcmp.lt.s32.totalorder %v11384, 0
  %v11777 = vsub.s32 0, %v11384
  %v11778 = vsel %vm11776, %v11777, %v11384
  %v11779 = vmul.u32.u64.compose %v11778, 3817748708
  %v11780 = vextract.low.u32 %v11779
  %v11781 = vextract.high.u32 %v11779
  %v11782 = vshrl.u32 %v11781, 4
  %v11783 = vmul.u32 %v11782, 18
  %v11784 = vsub.s32 %v11778, %v11783
  %v11785 = vsub.s32 0, %v11784
  %v11786 = vsel %vm11776, %v11785, %v11784
  %vm11787 = vcmp.lt.s32.totalorder %v11385, 0
  %v11788 = vsub.s32 0, %v11385
  %v11789 = vsel %vm11787, %v11788, %v11385
  %v11790 = vmul.u32.u64.compose %v11789, 3817748708
  %v11791 = vextract.low.u32 %v11790
  %v11792 = vextract.high.u32 %v11790
  %v11793 = vshrl.u32 %v11792, 4
  %v11794 = vmul.u32 %v11793, 18
  %v11795 = vsub.s32 %v11789, %v11794
  %v11796 = vsub.s32 0, %v11795
  %v11797 = vsel %vm11787, %v11796, %v11795
  %vm11798 = vcmp.lt.s32.totalorder %v11386, 0
  %v11799 = vsub.s32 0, %v11386
  %v11800 = vsel %vm11798, %v11799, %v11386
  %v11801 = vmul.u32.u64.compose %v11800, 3817748708
  %v11802 = vextract.low.u32 %v11801
  %v11803 = vextract.high.u32 %v11801
  %v11804 = vshrl.u32 %v11803, 4
  %v11805 = vmul.u32 %v11804, 18
  %v11806 = vsub.s32 %v11800, %v11805
  %v11807 = vsub.s32 0, %v11806
  %v11808 = vsel %vm11798, %v11807, %v11806
  %vm11809 = vcmp.lt.s32.totalorder %v11387, 0
  %v11810 = vsub.s32 0, %v11387
  %v11811 = vsel %vm11809, %v11810, %v11387
  %v11812 = vmul.u32.u64.compose %v11811, 3817748708
  %v11813 = vextract.low.u32 %v11812
  %v11814 = vextract.high.u32 %v11812
  %v11815 = vshrl.u32 %v11814, 4
  %v11816 = vmul.u32 %v11815, 18
  %v11817 = vsub.s32 %v11811, %v11816
  %v11818 = vsub.s32 0, %v11817
  %v11819 = vsel %vm11809, %v11818, %v11817
  %vm11820 = vcmp.lt.s32.totalorder %v11388, 0
  %v11821 = vsub.s32 0, %v11388
  %v11822 = vsel %vm11820, %v11821, %v11388
  %v11823 = vmul.u32.u64.compose %v11822, 3817748708
  %v11824 = vextract.low.u32 %v11823
  %v11825 = vextract.high.u32 %v11823
  %v11826 = vshrl.u32 %v11825, 4
  %v11827 = vmul.u32 %v11826, 18
  %v11828 = vsub.s32 %v11822, %v11827
  %v11829 = vsub.s32 0, %v11828
  %v11830 = vsel %vm11820, %v11829, %v11828
  %vm11831 = vcmp.lt.s32.totalorder %v11389, 0
  %v11832 = vsub.s32 0, %v11389
  %v11833 = vsel %vm11831, %v11832, %v11389
  %v11834 = vmul.u32.u64.compose %v11833, 3817748708
  %v11835 = vextract.low.u32 %v11834
  %v11836 = vextract.high.u32 %v11834
  %v11837 = vshrl.u32 %v11836, 4
  %v11838 = vmul.u32 %v11837, 18
  %v11839 = vsub.s32 %v11833, %v11838
  %v11840 = vsub.s32 0, %v11839
  %v11841 = vsel %vm11831, %v11840, %v11839
  %vm11842 = vcmp.lt.s32.totalorder %v11390, 0
  %v11843 = vsub.s32 0, %v11390
  %v11844 = vsel %vm11842, %v11843, %v11390
  %v11845 = vmul.u32.u64.compose %v11844, 3817748708
  %v11846 = vextract.low.u32 %v11845
  %v11847 = vextract.high.u32 %v11845
  %v11848 = vshrl.u32 %v11847, 4
  %v11849 = vmul.u32 %v11848, 18
  %v11850 = vsub.s32 %v11844, %v11849
  %v11851 = vsub.s32 0, %v11850
  %v11852 = vsel %vm11842, %v11851, %v11850
  %vm11853 = vcmp.lt.s32.totalorder %v11391, 0
  %v11854 = vsub.s32 0, %v11391
  %v11855 = vsel %vm11853, %v11854, %v11391
  %v11856 = vmul.u32.u64.compose %v11855, 3817748708
  %v11857 = vextract.low.u32 %v11856
  %v11858 = vextract.high.u32 %v11856
  %v11859 = vshrl.u32 %v11858, 4
  %v11860 = vmul.u32 %v11859, 18
  %v11861 = vsub.s32 %v11855, %v11860
  %v11862 = vsub.s32 0, %v11861
  %v11863 = vsel %vm11853, %v11862, %v11861
  %vm11864 = vcmp.lt.s32.totalorder %v11392, 0
  %v11865 = vsub.s32 0, %v11392
  %v11866 = vsel %vm11864, %v11865, %v11392
  %v11867 = vmul.u32.u64.compose %v11866, 3817748708
  %v11868 = vextract.low.u32 %v11867
  %v11869 = vextract.high.u32 %v11867
  %v11870 = vshrl.u32 %v11869, 4
  %v11871 = vmul.u32 %v11870, 18
  %v11872 = vsub.s32 %v11866, %v11871
  %v11873 = vsub.s32 0, %v11872
  %v11874 = vsel %vm11864, %v11873, %v11872
  %vm11875 = vcmp.lt.s32.totalorder %v11393, 0
  %v11876 = vsub.s32 0, %v11393
  %v11877 = vsel %vm11875, %v11876, %v11393
  %v11878 = vmul.u32.u64.compose %v11877, 3817748708
  %v11879 = vextract.low.u32 %v11878
  %v11880 = vextract.high.u32 %v11878
  %v11881 = vshrl.u32 %v11880, 4
  %v11882 = vmul.u32 %v11881, 18
  %v11883 = vsub.s32 %v11877, %v11882
  %v11884 = vsub.s32 0, %v11883
  %v11885 = vsel %vm11875, %v11884, %v11883
  %vm11886 = vcmp.lt.s32.totalorder %v11394, 0
  %v11887 = vsub.s32 0, %v11394
  %v11888 = vsel %vm11886, %v11887, %v11394
  %v11889 = vmul.u32.u64.compose %v11888, 3817748708
  %v11890 = vextract.low.u32 %v11889
  %v11891 = vextract.high.u32 %v11889
  %v11892 = vshrl.u32 %v11891, 4
  %v11893 = vmul.u32 %v11892, 18
  %v11894 = vsub.s32 %v11888, %v11893
  %v11895 = vsub.s32 0, %v11894
  %v11896 = vsel %vm11886, %v11895, %v11894
  %vm11897 = vcmp.lt.s32.totalorder %v11395, 0
  %v11898 = vsub.s32 0, %v11395
  %v11899 = vsel %vm11897, %v11898, %v11395
  %v11900 = vmul.u32.u64.compose %v11899, 3817748708
  %v11901 = vextract.low.u32 %v11900
  %v11902 = vextract.high.u32 %v11900
  %v11903 = vshrl.u32 %v11902, 4
  %v11904 = vmul.u32 %v11903, 18
  %v11905 = vsub.s32 %v11899, %v11904
  %v11906 = vsub.s32 0, %v11905
  %v11907 = vsel %vm11897, %v11906, %v11905
  %vm11908 = vcmp.lt.s32.totalorder %v11396, 0
  %v11909 = vsub.s32 0, %v11396
  %v11910 = vsel %vm11908, %v11909, %v11396
  %v11911 = vmul.u32.u64.compose %v11910, 3817748708
  %v11912 = vextract.low.u32 %v11911
  %v11913 = vextract.high.u32 %v11911
  %v11914 = vshrl.u32 %v11913, 4
  %v11915 = vmul.u32 %v11914, 18
  %v11916 = vsub.s32 %v11910, %v11915
  %v11917 = vsub.s32 0, %v11916
  %v11918 = vsel %vm11908, %v11917, %v11916
  %vm11919 = vcmp.lt.s32.totalorder %v11397, 0
  %v11920 = vsub.s32 0, %v11397
  %v11921 = vsel %vm11919, %v11920, %v11397
  %v11922 = vmul.u32.u64.compose %v11921, 3817748708
  %v11923 = vextract.low.u32 %v11922
  %v11924 = vextract.high.u32 %v11922
  %v11925 = vshrl.u32 %v11924, 4
  %v11926 = vmul.u32 %v11925, 18
  %v11927 = vsub.s32 %v11921, %v11926
  %v11928 = vsub.s32 0, %v11927
  %v11929 = vsel %vm11919, %v11928, %v11927
  %vm11930 = vcmp.lt.s32.totalorder %v11398, 0
  %v11931 = vsub.s32 0, %v11398
  %v11932 = vsel %vm11930, %v11931, %v11398
  %v11933 = vmul.u32.u64.compose %v11932, 3817748708
  %v11934 = vextract.low.u32 %v11933
  %v11935 = vextract.high.u32 %v11933
  %v11936 = vshrl.u32 %v11935, 4
  %v11937 = vmul.u32 %v11936, 18
  %v11938 = vsub.s32 %v11932, %v11937
  %v11939 = vsub.s32 0, %v11938
  %v11940 = vsel %vm11930, %v11939, %v11938
  %vm11941 = vcmp.lt.s32.totalorder %v11399, 0
  %v11942 = vsub.s32 0, %v11399
  %v11943 = vsel %vm11941, %v11942, %v11399
  %v11944 = vmul.u32.u64.compose %v11943, 3817748708
  %v11945 = vextract.low.u32 %v11944
  %v11946 = vextract.high.u32 %v11944
  %v11947 = vshrl.u32 %v11946, 4
  %v11948 = vmul.u32 %v11947, 18
  %v11949 = vsub.s32 %v11943, %v11948
  %v11950 = vsub.s32 0, %v11949
  %v11951 = vsel %vm11941, %v11950, %v11949
  %vm11952 = vcmp.lt.s32.totalorder %v11400, 0
  %v11953 = vsub.s32 0, %v11400
  %v11954 = vsel %vm11952, %v11953, %v11400
  %v11955 = vmul.u32.u64.compose %v11954, 3817748708
  %v11956 = vextract.low.u32 %v11955
  %v11957 = vextract.high.u32 %v11955
  %v11958 = vshrl.u32 %v11957, 4
  %v11959 = vmul.u32 %v11958, 18
  %v11960 = vsub.s32 %v11954, %v11959
  %v11961 = vsub.s32 0, %v11960
  %v11962 = vsel %vm11952, %v11961, %v11960
  %vm11963 = vcmp.lt.s32.totalorder %v11401, 0
  %v11964 = vsub.s32 0, %v11401
  %v11965 = vsel %vm11963, %v11964, %v11401
  %v11966 = vmul.u32.u64.compose %v11965, 3817748708
  %v11967 = vextract.low.u32 %v11966
  %v11968 = vextract.high.u32 %v11966
  %v11969 = vshrl.u32 %v11968, 4
  %v11970 = vmul.u32 %v11969, 18
  %v11971 = vsub.s32 %v11965, %v11970
  %v11972 = vsub.s32 0, %v11971
  %v11973 = vsel %vm11963, %v11972, %v11971
  %vm11974 = vcmp.lt.s32.totalorder %v11402, 0
  %v11975 = vsub.s32 0, %v11402
  %v11976 = vsel %vm11974, %v11975, %v11402
  %v11977 = vmul.u32.u64.compose %v11976, 3817748708
  %v11978 = vextract.low.u32 %v11977
  %v11979 = vextract.high.u32 %v11977
  %v11980 = vshrl.u32 %v11979, 4
  %v11981 = vmul.u32 %v11980, 18
  %v11982 = vsub.s32 %v11976, %v11981
  %v11983 = vsub.s32 0, %v11982
  %v11984 = vsel %vm11974, %v11983, %v11982
  %vm11985 = vcmp.lt.s32.totalorder %v11403, 0
  %v11986 = vsub.s32 0, %v11403
  %v11987 = vsel %vm11985, %v11986, %v11403
  %v11988 = vmul.u32.u64.compose %v11987, 3817748708
  %v11989 = vextract.low.u32 %v11988
  %v11990 = vextract.high.u32 %v11988
  %v11991 = vshrl.u32 %v11990, 4
  %v11992 = vmul.u32 %v11991, 18
  %v11993 = vsub.s32 %v11987, %v11992
  %v11994 = vsub.s32 0, %v11993
  %v11995 = vsel %vm11985, %v11994, %v11993
  %vm11996 = vcmp.lt.s32.totalorder %v11404, 0
  %v11997 = vsub.s32 0, %v11404
  %v11998 = vsel %vm11996, %v11997, %v11404
  %v11999 = vmul.u32.u64.compose %v11998, 3817748708
  %v12000 = vextract.low.u32 %v11999
  %v12001 = vextract.high.u32 %v11999
  %v12002 = vshrl.u32 %v12001, 4
  %v12003 = vmul.u32 %v12002, 18
  %v12004 = vsub.s32 %v11998, %v12003
  %v12005 = vsub.s32 0, %v12004
  %v12006 = vsel %vm11996, %v12005, %v12004
  %vm12007 = vcmp.lt.s32.totalorder %v11405, 0
  %v12008 = vsub.s32 0, %v11405
  %v12009 = vsel %vm12007, %v12008, %v11405
  %v12010 = vmul.u32.u64.compose %v12009, 3817748708
  %v12011 = vextract.low.u32 %v12010
  %v12012 = vextract.high.u32 %v12010
  %v12013 = vshrl.u32 %v12012, 4
  %v12014 = vmul.u32 %v12013, 18
  %v12015 = vsub.s32 %v12009, %v12014
  %v12016 = vsub.s32 0, %v12015
  %v12017 = vsel %vm12007, %v12016, %v12015
  %vm12018 = vcmp.lt.s32.totalorder %v11406, 0
  %v12019 = vsub.s32 0, %v11406
  %v12020 = vsel %vm12018, %v12019, %v11406
  %v12021 = vmul.u32.u64.compose %v12020, 3817748708
  %v12022 = vextract.low.u32 %v12021
  %v12023 = vextract.high.u32 %v12021
  %v12024 = vshrl.u32 %v12023, 4
  %v12025 = vmul.u32 %v12024, 18
  %v12026 = vsub.s32 %v12020, %v12025
  %v12027 = vsub.s32 0, %v12026
  %v12028 = vsel %vm12018, %v12027, %v12026
  %vm12029 = vcmp.lt.s32.totalorder %v11407, 0
  %v12030 = vsub.s32 0, %v11407
  %v12031 = vsel %vm12029, %v12030, %v11407
  %v12032 = vmul.u32.u64.compose %v12031, 3817748708
  %v12033 = vextract.low.u32 %v12032
  %v12034 = vextract.high.u32 %v12032
  %v12035 = vshrl.u32 %v12034, 4
  %v12036 = vmul.u32 %v12035, 18
  %v12037 = vsub.s32 %v12031, %v12036
  %v12038 = vsub.s32 0, %v12037
  %v12039 = vsel %vm12029, %v12038, %v12037
  %vm12040 = vcmp.lt.s32.totalorder %v11408, 0
  %v12041 = vsub.s32 0, %v11408
  %v12042 = vsel %vm12040, %v12041, %v11408
  %v12043 = vmul.u32.u64.compose %v12042, 3817748708
  %v12044 = vextract.low.u32 %v12043
  %v12045 = vextract.high.u32 %v12043
  %v12046 = vshrl.u32 %v12045, 4
  %v12047 = vmul.u32 %v12046, 18
  %v12048 = vsub.s32 %v12042, %v12047
  %v12049 = vsub.s32 0, %v12048
  %v12050 = vsel %vm12040, %v12049, %v12048
  %vm12051 = vcmp.lt.s32.totalorder %v11409, 0
  %v12052 = vsub.s32 0, %v11409
  %v12053 = vsel %vm12051, %v12052, %v11409
  %v12054 = vmul.u32.u64.compose %v12053, 3817748708
  %v12055 = vextract.low.u32 %v12054
  %v12056 = vextract.high.u32 %v12054
  %v12057 = vshrl.u32 %v12056, 4
  %v12058 = vmul.u32 %v12057, 18
  %v12059 = vsub.s32 %v12053, %v12058
  %v12060 = vsub.s32 0, %v12059
  %v12061 = vsel %vm12051, %v12060, %v12059
  %vm12062 = vcmp.lt.s32.totalorder %v11410, 0
  %v12063 = vsub.s32 0, %v11410
  %v12064 = vsel %vm12062, %v12063, %v11410
  %v12065 = vmul.u32.u64.compose %v12064, 3817748708
  %v12066 = vextract.low.u32 %v12065
  %v12067 = vextract.high.u32 %v12065
  %v12068 = vshrl.u32 %v12067, 4
  %v12069 = vmul.u32 %v12068, 18
  %v12070 = vsub.s32 %v12064, %v12069
  %v12071 = vsub.s32 0, %v12070
  %v12072 = vsel %vm12062, %v12071, %v12070
  %vm12073 = vcmp.lt.s32.totalorder %v11411, 0
  %v12074 = vsub.s32 0, %v11411
  %v12075 = vsel %vm12073, %v12074, %v11411
  %v12076 = vmul.u32.u64.compose %v12075, 3817748708
  %v12077 = vextract.low.u32 %v12076
  %v12078 = vextract.high.u32 %v12076
  %v12079 = vshrl.u32 %v12078, 4
  %v12080 = vmul.u32 %v12079, 18
  %v12081 = vsub.s32 %v12075, %v12080
  %v12082 = vsub.s32 0, %v12081
  %v12083 = vsel %vm12073, %v12082, %v12081
  %vm12084 = vcmp.lt.s32.totalorder %v11412, 0
  %v12085 = vsub.s32 0, %v11412
  %v12086 = vsel %vm12084, %v12085, %v11412
  %v12087 = vmul.u32.u64.compose %v12086, 3817748708
  %v12088 = vextract.low.u32 %v12087
  %v12089 = vextract.high.u32 %v12087
  %v12090 = vshrl.u32 %v12089, 4
  %v12091 = vmul.u32 %v12090, 18
  %v12092 = vsub.s32 %v12086, %v12091
  %v12093 = vsub.s32 0, %v12092
  %v12094 = vsel %vm12084, %v12093, %v12092
  %vm12095 = vcmp.lt.s32.totalorder %v11413, 0
  %v12096 = vsub.s32 0, %v11413
  %v12097 = vsel %vm12095, %v12096, %v11413
  %v12098 = vmul.u32.u64.compose %v12097, 3817748708
  %v12099 = vextract.low.u32 %v12098
  %v12100 = vextract.high.u32 %v12098
  %v12101 = vshrl.u32 %v12100, 4
  %v12102 = vmul.u32 %v12101, 18
  %v12103 = vsub.s32 %v12097, %v12102
  %v12104 = vsub.s32 0, %v12103
  %v12105 = vsel %vm12095, %v12104, %v12103
  %vm12106 = vcmp.lt.s32.totalorder %v11414, 0
  %v12107 = vsub.s32 0, %v11414
  %v12108 = vsel %vm12106, %v12107, %v11414
  %v12109 = vmul.u32.u64.compose %v12108, 3817748708
  %v12110 = vextract.low.u32 %v12109
  %v12111 = vextract.high.u32 %v12109
  %v12112 = vshrl.u32 %v12111, 4
  %v12113 = vmul.u32 %v12112, 18
  %v12114 = vsub.s32 %v12108, %v12113
  %v12115 = vsub.s32 0, %v12114
  %v12116 = vsel %vm12106, %v12115, %v12114
  %vm12117 = vcmp.lt.s32.totalorder %v11415, 0
  %v12118 = vsub.s32 0, %v11415
  %v12119 = vsel %vm12117, %v12118, %v11415
  %v12120 = vmul.u32.u64.compose %v12119, 3817748708
  %v12121 = vextract.low.u32 %v12120
  %v12122 = vextract.high.u32 %v12120
  %v12123 = vshrl.u32 %v12122, 4
  %v12124 = vmul.u32 %v12123, 18
  %v12125 = vsub.s32 %v12119, %v12124
  %v12126 = vsub.s32 0, %v12125
  %v12127 = vsel %vm12117, %v12126, %v12125
  %vm12128 = vcmp.lt.s32.totalorder %v11416, 0
  %v12129 = vsub.s32 0, %v11416
  %v12130 = vsel %vm12128, %v12129, %v11416
  %v12131 = vmul.u32.u64.compose %v12130, 3817748708
  %v12132 = vextract.low.u32 %v12131
  %v12133 = vextract.high.u32 %v12131
  %v12134 = vshrl.u32 %v12133, 4
  %v12135 = vmul.u32 %v12134, 18
  %v12136 = vsub.s32 %v12130, %v12135
  %v12137 = vsub.s32 0, %v12136
  %v12138 = vsel %vm12128, %v12137, %v12136
  %vm12139 = vcmp.lt.s32.totalorder %v11417, 0
  %v12140 = vsub.s32 0, %v11417
  %v12141 = vsel %vm12139, %v12140, %v11417
  %v12142 = vmul.u32.u64.compose %v12141, 3817748708
  %v12143 = vextract.low.u32 %v12142
  %v12144 = vextract.high.u32 %v12142
  %v12145 = vshrl.u32 %v12144, 4
  %v12146 = vmul.u32 %v12145, 18
  %v12147 = vsub.s32 %v12141, %v12146
  %v12148 = vsub.s32 0, %v12147
  %v12149 = vsel %vm12139, %v12148, %v12147
  %vm12150 = vcmp.lt.s32.totalorder %v11418, 0
  %v12151 = vsub.s32 0, %v11418
  %v12152 = vsel %vm12150, %v12151, %v11418
  %v12153 = vmul.u32.u64.compose %v12152, 3817748708
  %v12154 = vextract.low.u32 %v12153
  %v12155 = vextract.high.u32 %v12153
  %v12156 = vshrl.u32 %v12155, 4
  %v12157 = vmul.u32 %v12156, 18
  %v12158 = vsub.s32 %v12152, %v12157
  %v12159 = vsub.s32 0, %v12158
  %v12160 = vsel %vm12150, %v12159, %v12158
  %vm12161 = vcmp.lt.s32.totalorder %v11419, 0
  %v12162 = vsub.s32 0, %v11419
  %v12163 = vsel %vm12161, %v12162, %v11419
  %v12164 = vmul.u32.u64.compose %v12163, 3817748708
  %v12165 = vextract.low.u32 %v12164
  %v12166 = vextract.high.u32 %v12164
  %v12167 = vshrl.u32 %v12166, 4
  %v12168 = vmul.u32 %v12167, 18
  %v12169 = vsub.s32 %v12163, %v12168
  %v12170 = vsub.s32 0, %v12169
  %v12171 = vsel %vm12161, %v12170, %v12169
  %vm12172 = vcmp.lt.s32.totalorder %v11420, 0
  %v12173 = vsub.s32 0, %v11420
  %v12174 = vsel %vm12172, %v12173, %v11420
  %v12175 = vmul.u32.u64.compose %v12174, 3817748708
  %v12176 = vextract.low.u32 %v12175
  %v12177 = vextract.high.u32 %v12175
  %v12178 = vshrl.u32 %v12177, 4
  %v12179 = vmul.u32 %v12178, 18
  %v12180 = vsub.s32 %v12174, %v12179
  %v12181 = vsub.s32 0, %v12180
  %v12182 = vsel %vm12172, %v12181, %v12180
  %vm12183 = vcmp.lt.s32.totalorder %v11421, 0
  %v12184 = vsub.s32 0, %v11421
  %v12185 = vsel %vm12183, %v12184, %v11421
  %v12186 = vmul.u32.u64.compose %v12185, 3817748708
  %v12187 = vextract.low.u32 %v12186
  %v12188 = vextract.high.u32 %v12186
  %v12189 = vshrl.u32 %v12188, 4
  %v12190 = vmul.u32 %v12189, 18
  %v12191 = vsub.s32 %v12185, %v12190
  %v12192 = vsub.s32 0, %v12191
  %v12193 = vsel %vm12183, %v12192, %v12191
  %vm12194 = vcmp.lt.s32.totalorder %v11422, 0
  %v12195 = vsub.s32 0, %v11422
  %v12196 = vsel %vm12194, %v12195, %v11422
  %v12197 = vmul.u32.u64.compose %v12196, 3817748708
  %v12198 = vextract.low.u32 %v12197
  %v12199 = vextract.high.u32 %v12197
  %v12200 = vshrl.u32 %v12199, 4
  %v12201 = vmul.u32 %v12200, 18
  %v12202 = vsub.s32 %v12196, %v12201
  %v12203 = vsub.s32 0, %v12202
  %v12204 = vsel %vm12194, %v12203, %v12202
  %vm12205 = vcmp.lt.s32.totalorder %v11423, 0
  %v12206 = vsub.s32 0, %v11423
  %v12207 = vsel %vm12205, %v12206, %v11423
  %v12208 = vmul.u32.u64.compose %v12207, 3817748708
  %v12209 = vextract.low.u32 %v12208
  %v12210 = vextract.high.u32 %v12208
  %v12211 = vshrl.u32 %v12210, 4
  %v12212 = vmul.u32 %v12211, 18
  %v12213 = vsub.s32 %v12207, %v12212
  %v12214 = vsub.s32 0, %v12213
  %v12215 = vsel %vm12205, %v12214, %v12213
  %vm12216 = vcmp.ne.s32.totalorder %v11434, 0
  %vm12217 = vcmp.ne.s32.totalorder %v11445, 0
  %vm12218 = vcmp.ne.s32.totalorder %v11456, 0
  %vm12219 = vcmp.ne.s32.totalorder %v11467, 0
  %vm12220 = vcmp.ne.s32.totalorder %v11478, 0
  %vm12221 = vcmp.ne.s32.totalorder %v11489, 0
  %vm12222 = vcmp.ne.s32.totalorder %v11500, 0
  %vm12223 = vcmp.ne.s32.totalorder %v11511, 0
  %vm12224 = vcmp.ne.s32.totalorder %v11522, 0
  %vm12225 = vcmp.ne.s32.totalorder %v11533, 0
  %vm12226 = vcmp.ne.s32.totalorder %v11544, 0
  %vm12227 = vcmp.ne.s32.totalorder %v11555, 0
  %vm12228 = vcmp.ne.s32.totalorder %v11566, 0
  %vm12229 = vcmp.ne.s32.totalorder %v11577, 0
  %vm12230 = vcmp.ne.s32.totalorder %v11588, 0
  %vm12231 = vcmp.ne.s32.totalorder %v11599, 0
  %vm12232 = vcmp.ne.s32.totalorder %v11610, 0
  %vm12233 = vcmp.ne.s32.totalorder %v11621, 0
  %vm12234 = vcmp.ne.s32.totalorder %v11632, 0
  %vm12235 = vcmp.ne.s32.totalorder %v11643, 0
  %vm12236 = vcmp.ne.s32.totalorder %v11654, 0
  %vm12237 = vcmp.ne.s32.totalorder %v11665, 0
  %vm12238 = vcmp.ne.s32.totalorder %v11676, 0
  %vm12239 = vcmp.ne.s32.totalorder %v11687, 0
  %vm12240 = vcmp.ne.s32.totalorder %v11698, 0
  %vm12241 = vcmp.ne.s32.totalorder %v11709, 0
  %vm12242 = vcmp.ne.s32.totalorder %v11720, 0
  %vm12243 = vcmp.ne.s32.totalorder %v11731, 0
  %vm12244 = vcmp.ne.s32.totalorder %v11742, 0
  %vm12245 = vcmp.ne.s32.totalorder %v11753, 0
  %vm12246 = vcmp.ne.s32.totalorder %v11764, 0
  %vm12247 = vcmp.ne.s32.totalorder %v11775, 0
  %vm12248 = vcmp.ne.s32.totalorder %v11786, 0
  %vm12249 = vcmp.ne.s32.totalorder %v11797, 0
  %vm12250 = vcmp.ne.s32.totalorder %v11808, 0
  %vm12251 = vcmp.ne.s32.totalorder %v11819, 0
  %vm12252 = vcmp.ne.s32.totalorder %v11830, 0
  %vm12253 = vcmp.ne.s32.totalorder %v11841, 0
  %vm12254 = vcmp.ne.s32.totalorder %v11852, 0
  %vm12255 = vcmp.ne.s32.totalorder %v11863, 0
  %vm12256 = vcmp.ne.s32.totalorder %v11874, 0
  %vm12257 = vcmp.ne.s32.totalorder %v11885, 0
  %vm12258 = vcmp.ne.s32.totalorder %v11896, 0
  %vm12259 = vcmp.ne.s32.totalorder %v11907, 0
  %vm12260 = vcmp.ne.s32.totalorder %v11918, 0
  %vm12261 = vcmp.ne.s32.totalorder %v11929, 0
  %vm12262 = vcmp.ne.s32.totalorder %v11940, 0
  %vm12263 = vcmp.ne.s32.totalorder %v11951, 0
  %vm12264 = vcmp.ne.s32.totalorder %v11962, 0
  %vm12265 = vcmp.ne.s32.totalorder %v11973, 0
  %vm12266 = vcmp.ne.s32.totalorder %v11984, 0
  %vm12267 = vcmp.ne.s32.totalorder %v11995, 0
  %vm12268 = vcmp.ne.s32.totalorder %v12006, 0
  %vm12269 = vcmp.ne.s32.totalorder %v12017, 0
  %vm12270 = vcmp.ne.s32.totalorder %v12028, 0
  %vm12271 = vcmp.ne.s32.totalorder %v12039, 0
  %vm12272 = vcmp.ne.s32.totalorder %v12050, 0
  %vm12273 = vcmp.ne.s32.totalorder %v12061, 0
  %vm12274 = vcmp.ne.s32.totalorder %v12072, 0
  %vm12275 = vcmp.ne.s32.totalorder %v12083, 0
  %vm12276 = vcmp.ne.s32.totalorder %v12094, 0
  %vm12277 = vcmp.ne.s32.totalorder %v12105, 0
  %vm12278 = vcmp.ne.s32.totalorder %v12116, 0
  %vm12279 = vcmp.ne.s32.totalorder %v12127, 0
  %vm12280 = vcmp.ne.s32.totalorder %v12138, 0
  %vm12281 = vcmp.ne.s32.totalorder %v12149, 0
  %vm12282 = vcmp.ne.s32.totalorder %v12160, 0
  %vm12283 = vcmp.ne.s32.totalorder %v12171, 0
  %vm12284 = vcmp.ne.s32.totalorder %v12182, 0
  %vm12285 = vcmp.ne.s32.totalorder %v12193, 0
  %vm12286 = vcmp.ne.s32.totalorder %v12204, 0
  %vm12287 = vcmp.ne.s32.totalorder %v12215, 0
  %vm12288 = vcmp.lt.s32.totalorder %v11434, 0
  %vm12289 = vcmp.lt.s32.totalorder %v11445, 0
  %vm12290 = vcmp.lt.s32.totalorder %v11456, 0
  %vm12291 = vcmp.lt.s32.totalorder %v11467, 0
  %vm12292 = vcmp.lt.s32.totalorder %v11478, 0
  %vm12293 = vcmp.lt.s32.totalorder %v11489, 0
  %vm12294 = vcmp.lt.s32.totalorder %v11500, 0
  %vm12295 = vcmp.lt.s32.totalorder %v11511, 0
  %vm12296 = vcmp.lt.s32.totalorder %v11522, 0
  %vm12297 = vcmp.lt.s32.totalorder %v11533, 0
  %vm12298 = vcmp.lt.s32.totalorder %v11544, 0
  %vm12299 = vcmp.lt.s32.totalorder %v11555, 0
  %vm12300 = vcmp.lt.s32.totalorder %v11566, 0
  %vm12301 = vcmp.lt.s32.totalorder %v11577, 0
  %vm12302 = vcmp.lt.s32.totalorder %v11588, 0
  %vm12303 = vcmp.lt.s32.totalorder %v11599, 0
  %vm12304 = vcmp.lt.s32.totalorder %v11610, 0
  %vm12305 = vcmp.lt.s32.totalorder %v11621, 0
  %vm12306 = vcmp.lt.s32.totalorder %v11632, 0
  %vm12307 = vcmp.lt.s32.totalorder %v11643, 0
  %vm12308 = vcmp.lt.s32.totalorder %v11654, 0
  %vm12309 = vcmp.lt.s32.totalorder %v11665, 0
  %vm12310 = vcmp.lt.s32.totalorder %v11676, 0
  %vm12311 = vcmp.lt.s32.totalorder %v11687, 0
  %vm12312 = vcmp.lt.s32.totalorder %v11698, 0
  %vm12313 = vcmp.lt.s32.totalorder %v11709, 0
  %vm12314 = vcmp.lt.s32.totalorder %v11720, 0
  %vm12315 = vcmp.lt.s32.totalorder %v11731, 0
  %vm12316 = vcmp.lt.s32.totalorder %v11742, 0
  %vm12317 = vcmp.lt.s32.totalorder %v11753, 0
  %vm12318 = vcmp.lt.s32.totalorder %v11764, 0
  %vm12319 = vcmp.lt.s32.totalorder %v11775, 0
  %vm12320 = vcmp.lt.s32.totalorder %v11786, 0
  %vm12321 = vcmp.lt.s32.totalorder %v11797, 0
  %vm12322 = vcmp.lt.s32.totalorder %v11808, 0
  %vm12323 = vcmp.lt.s32.totalorder %v11819, 0
  %vm12324 = vcmp.lt.s32.totalorder %v11830, 0
  %vm12325 = vcmp.lt.s32.totalorder %v11841, 0
  %vm12326 = vcmp.lt.s32.totalorder %v11852, 0
  %vm12327 = vcmp.lt.s32.totalorder %v11863, 0
  %vm12328 = vcmp.lt.s32.totalorder %v11874, 0
  %vm12329 = vcmp.lt.s32.totalorder %v11885, 0
  %vm12330 = vcmp.lt.s32.totalorder %v11896, 0
  %vm12331 = vcmp.lt.s32.totalorder %v11907, 0
  %vm12332 = vcmp.lt.s32.totalorder %v11918, 0
  %vm12333 = vcmp.lt.s32.totalorder %v11929, 0
  %vm12334 = vcmp.lt.s32.totalorder %v11940, 0
  %vm12335 = vcmp.lt.s32.totalorder %v11951, 0
  %vm12336 = vcmp.lt.s32.totalorder %v11962, 0
  %vm12337 = vcmp.lt.s32.totalorder %v11973, 0
  %vm12338 = vcmp.lt.s32.totalorder %v11984, 0
  %vm12339 = vcmp.lt.s32.totalorder %v11995, 0
  %vm12340 = vcmp.lt.s32.totalorder %v12006, 0
  %vm12341 = vcmp.lt.s32.totalorder %v12017, 0
  %vm12342 = vcmp.lt.s32.totalorder %v12028, 0
  %vm12343 = vcmp.lt.s32.totalorder %v12039, 0
  %vm12344 = vcmp.lt.s32.totalorder %v12050, 0
  %vm12345 = vcmp.lt.s32.totalorder %v12061, 0
  %vm12346 = vcmp.lt.s32.totalorder %v12072, 0
  %vm12347 = vcmp.lt.s32.totalorder %v12083, 0
  %vm12348 = vcmp.lt.s32.totalorder %v12094, 0
  %vm12349 = vcmp.lt.s32.totalorder %v12105, 0
  %vm12350 = vcmp.lt.s32.totalorder %v12116, 0
  %vm12351 = vcmp.lt.s32.totalorder %v12127, 0
  %vm12352 = vcmp.lt.s32.totalorder %v12138, 0
  %vm12353 = vcmp.lt.s32.totalorder %v12149, 0
  %vm12354 = vcmp.lt.s32.totalorder %v12160, 0
  %vm12355 = vcmp.lt.s32.totalorder %v12171, 0
  %vm12356 = vcmp.lt.s32.totalorder %v12182, 0
  %vm12357 = vcmp.lt.s32.totalorder %v12193, 0
  %vm12358 = vcmp.lt.s32.totalorder %v12204, 0
  %vm12359 = vcmp.lt.s32.totalorder %v12215, 0
  %vm12360 = vmand %vm12288, %vm12216
  %vm12361 = vmand %vm12289, %vm12217
  %vm12362 = vmand %vm12290, %vm12218
  %vm12363 = vmand %vm12291, %vm12219
  %vm12364 = vmand %vm12292, %vm12220
  %vm12365 = vmand %vm12293, %vm12221
  %vm12366 = vmand %vm12294, %vm12222
  %vm12367 = vmand %vm12295, %vm12223
  %vm12368 = vmand %vm12296, %vm12224
  %vm12369 = vmand %vm12297, %vm12225
  %vm12370 = vmand %vm12298, %vm12226
  %vm12371 = vmand %vm12299, %vm12227
  %vm12372 = vmand %vm12300, %vm12228
  %vm12373 = vmand %vm12301, %vm12229
  %vm12374 = vmand %vm12302, %vm12230
  %vm12375 = vmand %vm12303, %vm12231
  %vm12376 = vmand %vm12304, %vm12232
  %vm12377 = vmand %vm12305, %vm12233
  %vm12378 = vmand %vm12306, %vm12234
  %vm12379 = vmand %vm12307, %vm12235
  %vm12380 = vmand %vm12308, %vm12236
  %vm12381 = vmand %vm12309, %vm12237
  %vm12382 = vmand %vm12310, %vm12238
  %vm12383 = vmand %vm12311, %vm12239
  %vm12384 = vmand %vm12312, %vm12240
  %vm12385 = vmand %vm12313, %vm12241
  %vm12386 = vmand %vm12314, %vm12242
  %vm12387 = vmand %vm12315, %vm12243
  %vm12388 = vmand %vm12316, %vm12244
  %vm12389 = vmand %vm12317, %vm12245
  %vm12390 = vmand %vm12318, %vm12246
  %vm12391 = vmand %vm12319, %vm12247
  %vm12392 = vmand %vm12320, %vm12248
  %vm12393 = vmand %vm12321, %vm12249
  %vm12394 = vmand %vm12322, %vm12250
  %vm12395 = vmand %vm12323, %vm12251
  %vm12396 = vmand %vm12324, %vm12252
  %vm12397 = vmand %vm12325, %vm12253
  %vm12398 = vmand %vm12326, %vm12254
  %vm12399 = vmand %vm12327, %vm12255
  %vm12400 = vmand %vm12328, %vm12256
  %vm12401 = vmand %vm12329, %vm12257
  %vm12402 = vmand %vm12330, %vm12258
  %vm12403 = vmand %vm12331, %vm12259
  %vm12404 = vmand %vm12332, %vm12260
  %vm12405 = vmand %vm12333, %vm12261
  %vm12406 = vmand %vm12334, %vm12262
  %vm12407 = vmand %vm12335, %vm12263
  %vm12408 = vmand %vm12336, %vm12264
  %vm12409 = vmand %vm12337, %vm12265
  %vm12410 = vmand %vm12338, %vm12266
  %vm12411 = vmand %vm12339, %vm12267
  %vm12412 = vmand %vm12340, %vm12268
  %vm12413 = vmand %vm12341, %vm12269
  %vm12414 = vmand %vm12342, %vm12270
  %vm12415 = vmand %vm12343, %vm12271
  %vm12416 = vmand %vm12344, %vm12272
  %vm12417 = vmand %vm12345, %vm12273
  %vm12418 = vmand %vm12346, %vm12274
  %vm12419 = vmand %vm12347, %vm12275
  %vm12420 = vmand %vm12348, %vm12276
  %vm12421 = vmand %vm12349, %vm12277
  %vm12422 = vmand %vm12350, %vm12278
  %vm12423 = vmand %vm12351, %vm12279
  %vm12424 = vmand %vm12352, %vm12280
  %vm12425 = vmand %vm12353, %vm12281
  %vm12426 = vmand %vm12354, %vm12282
  %vm12427 = vmand %vm12355, %vm12283
  %vm12428 = vmand %vm12356, %vm12284
  %vm12429 = vmand %vm12357, %vm12285
  %vm12430 = vmand %vm12358, %vm12286
  %vm12431 = vmand %vm12359, %vm12287
  %v12432 = vadd.s32 %v11434, 18
  %v12433 = vadd.s32 %v11445, 18
  %v12434 = vadd.s32 %v11456, 18
  %v12435 = vadd.s32 %v11467, 18
  %v12436 = vadd.s32 %v11478, 18
  %v12437 = vadd.s32 %v11489, 18
  %v12438 = vadd.s32 %v11500, 18
  %v12439 = vadd.s32 %v11511, 18
  %v12440 = vadd.s32 %v11522, 18
  %v12441 = vadd.s32 %v11533, 18
  %v12442 = vadd.s32 %v11544, 18
  %v12443 = vadd.s32 %v11555, 18
  %v12444 = vadd.s32 %v11566, 18
  %v12445 = vadd.s32 %v11577, 18
  %v12446 = vadd.s32 %v11588, 18
  %v12447 = vadd.s32 %v11599, 18
  %v12448 = vadd.s32 %v11610, 18
  %v12449 = vadd.s32 %v11621, 18
  %v12450 = vadd.s32 %v11632, 18
  %v12451 = vadd.s32 %v11643, 18
  %v12452 = vadd.s32 %v11654, 18
  %v12453 = vadd.s32 %v11665, 18
  %v12454 = vadd.s32 %v11676, 18
  %v12455 = vadd.s32 %v11687, 18
  %v12456 = vadd.s32 %v11698, 18
  %v12457 = vadd.s32 %v11709, 18
  %v12458 = vadd.s32 %v11720, 18
  %v12459 = vadd.s32 %v11731, 18
  %v12460 = vadd.s32 %v11742, 18
  %v12461 = vadd.s32 %v11753, 18
  %v12462 = vadd.s32 %v11764, 18
  %v12463 = vadd.s32 %v11775, 18
  %v12464 = vadd.s32 %v11786, 18
  %v12465 = vadd.s32 %v11797, 18
  %v12466 = vadd.s32 %v11808, 18
  %v12467 = vadd.s32 %v11819, 18
  %v12468 = vadd.s32 %v11830, 18
  %v12469 = vadd.s32 %v11841, 18
  %v12470 = vadd.s32 %v11852, 18
  %v12471 = vadd.s32 %v11863, 18
  %v12472 = vadd.s32 %v11874, 18
  %v12473 = vadd.s32 %v11885, 18
  %v12474 = vadd.s32 %v11896, 18
  %v12475 = vadd.s32 %v11907, 18
  %v12476 = vadd.s32 %v11918, 18
  %v12477 = vadd.s32 %v11929, 18
  %v12478 = vadd.s32 %v11940, 18
  %v12479 = vadd.s32 %v11951, 18
  %v12480 = vadd.s32 %v11962, 18
  %v12481 = vadd.s32 %v11973, 18
  %v12482 = vadd.s32 %v11984, 18
  %v12483 = vadd.s32 %v11995, 18
  %v12484 = vadd.s32 %v12006, 18
  %v12485 = vadd.s32 %v12017, 18
  %v12486 = vadd.s32 %v12028, 18
  %v12487 = vadd.s32 %v12039, 18
  %v12488 = vadd.s32 %v12050, 18
  %v12489 = vadd.s32 %v12061, 18
  %v12490 = vadd.s32 %v12072, 18
  %v12491 = vadd.s32 %v12083, 18
  %v12492 = vadd.s32 %v12094, 18
  %v12493 = vadd.s32 %v12105, 18
  %v12494 = vadd.s32 %v12116, 18
  %v12495 = vadd.s32 %v12127, 18
  %v12496 = vadd.s32 %v12138, 18
  %v12497 = vadd.s32 %v12149, 18
  %v12498 = vadd.s32 %v12160, 18
  %v12499 = vadd.s32 %v12171, 18
  %v12500 = vadd.s32 %v12182, 18
  %v12501 = vadd.s32 %v12193, 18
  %v12502 = vadd.s32 %v12204, 18
  %v12503 = vadd.s32 %v12215, 18
  %v12504 = vsel %vm12360, %v12432, %v11434
  %v12505 = vsel %vm12361, %v12433, %v11445
  %v12506 = vsel %vm12362, %v12434, %v11456
  %v12507 = vsel %vm12363, %v12435, %v11467
  %v12508 = vsel %vm12364, %v12436, %v11478
  %v12509 = vsel %vm12365, %v12437, %v11489
  %v12510 = vsel %vm12366, %v12438, %v11500
  %v12511 = vsel %vm12367, %v12439, %v11511
  %v12512 = vsel %vm12368, %v12440, %v11522
  %v12513 = vsel %vm12369, %v12441, %v11533
  %v12514 = vsel %vm12370, %v12442, %v11544
  %v12515 = vsel %vm12371, %v12443, %v11555
  %v12516 = vsel %vm12372, %v12444, %v11566
  %v12517 = vsel %vm12373, %v12445, %v11577
  %v12518 = vsel %vm12374, %v12446, %v11588
  %v12519 = vsel %vm12375, %v12447, %v11599
  %v12520 = vsel %vm12376, %v12448, %v11610
  %v12521 = vsel %vm12377, %v12449, %v11621
  %v12522 = vsel %vm12378, %v12450, %v11632
  %v12523 = vsel %vm12379, %v12451, %v11643
  %v12524 = vsel %vm12380, %v12452, %v11654
  %v12525 = vsel %vm12381, %v12453, %v11665
  %v12526 = vsel %vm12382, %v12454, %v11676
  %v12527 = vsel %vm12383, %v12455, %v11687
  %v12528 = vsel %vm12384, %v12456, %v11698
  %v12529 = vsel %vm12385, %v12457, %v11709
  %v12530 = vsel %vm12386, %v12458, %v11720
  %v12531 = vsel %vm12387, %v12459, %v11731
  %v12532 = vsel %vm12388, %v12460, %v11742
  %v12533 = vsel %vm12389, %v12461, %v11753
  %v12534 = vsel %vm12390, %v12462, %v11764
  %v12535 = vsel %vm12391, %v12463, %v11775
  %v12536 = vsel %vm12392, %v12464, %v11786
  %v12537 = vsel %vm12393, %v12465, %v11797
  %v12538 = vsel %vm12394, %v12466, %v11808
  %v12539 = vsel %vm12395, %v12467, %v11819
  %v12540 = vsel %vm12396, %v12468, %v11830
  %v12541 = vsel %vm12397, %v12469, %v11841
  %v12542 = vsel %vm12398, %v12470, %v11852
  %v12543 = vsel %vm12399, %v12471, %v11863
  %v12544 = vsel %vm12400, %v12472, %v11874
  %v12545 = vsel %vm12401, %v12473, %v11885
  %v12546 = vsel %vm12402, %v12474, %v11896
  %v12547 = vsel %vm12403, %v12475, %v11907
  %v12548 = vsel %vm12404, %v12476, %v11918
  %v12549 = vsel %vm12405, %v12477, %v11929
  %v12550 = vsel %vm12406, %v12478, %v11940
  %v12551 = vsel %vm12407, %v12479, %v11951
  %v12552 = vsel %vm12408, %v12480, %v11962
  %v12553 = vsel %vm12409, %v12481, %v11973
  %v12554 = vsel %vm12410, %v12482, %v11984
  %v12555 = vsel %vm12411, %v12483, %v11995
  %v12556 = vsel %vm12412, %v12484, %v12006
  %v12557 = vsel %vm12413, %v12485, %v12017
  %v12558 = vsel %vm12414, %v12486, %v12028
  %v12559 = vsel %vm12415, %v12487, %v12039
  %v12560 = vsel %vm12416, %v12488, %v12050
  %v12561 = vsel %vm12417, %v12489, %v12061
  %v12562 = vsel %vm12418, %v12490, %v12072
  %v12563 = vsel %vm12419, %v12491, %v12083
  %v12564 = vsel %vm12420, %v12492, %v12094
  %v12565 = vsel %vm12421, %v12493, %v12105
  %v12566 = vsel %vm12422, %v12494, %v12116
  %v12567 = vsel %vm12423, %v12495, %v12127
  %v12568 = vsel %vm12424, %v12496, %v12138
  %v12569 = vsel %vm12425, %v12497, %v12149
  %v12570 = vsel %vm12426, %v12498, %v12160
  %v12571 = vsel %vm12427, %v12499, %v12171
  %v12572 = vsel %vm12428, %v12500, %v12182
  %v12573 = vsel %vm12429, %v12501, %v12193
  %v12574 = vsel %vm12430, %v12502, %v12204
  %v12575 = vsel %vm12431, %v12503, %v12215
  %vm12576 = vcmp.lt.s32.totalorder %v12504, 16
  %vm12577 = vcmp.lt.s32.totalorder %v12505, 16
  %vm12578 = vcmp.lt.s32.totalorder %v12506, 16
  %vm12579 = vcmp.lt.s32.totalorder %v12507, 16
  %vm12580 = vcmp.lt.s32.totalorder %v12508, 16
  %vm12581 = vcmp.lt.s32.totalorder %v12509, 16
  %vm12582 = vcmp.lt.s32.totalorder %v12510, 16
  %vm12583 = vcmp.lt.s32.totalorder %v12511, 16
  %vm12584 = vcmp.lt.s32.totalorder %v12512, 16
  %vm12585 = vcmp.lt.s32.totalorder %v12513, 16
  %vm12586 = vcmp.lt.s32.totalorder %v12514, 16
  %vm12587 = vcmp.lt.s32.totalorder %v12515, 16
  %vm12588 = vcmp.lt.s32.totalorder %v12516, 16
  %vm12589 = vcmp.lt.s32.totalorder %v12517, 16
  %vm12590 = vcmp.lt.s32.totalorder %v12518, 16
  %vm12591 = vcmp.lt.s32.totalorder %v12519, 16
  %vm12592 = vcmp.lt.s32.totalorder %v12520, 16
  %vm12593 = vcmp.lt.s32.totalorder %v12521, 16
  %vm12594 = vcmp.lt.s32.totalorder %v12522, 16
  %vm12595 = vcmp.lt.s32.totalorder %v12523, 16
  %vm12596 = vcmp.lt.s32.totalorder %v12524, 16
  %vm12597 = vcmp.lt.s32.totalorder %v12525, 16
  %vm12598 = vcmp.lt.s32.totalorder %v12526, 16
  %vm12599 = vcmp.lt.s32.totalorder %v12527, 16
  %vm12600 = vcmp.lt.s32.totalorder %v12528, 16
  %vm12601 = vcmp.lt.s32.totalorder %v12529, 16
  %vm12602 = vcmp.lt.s32.totalorder %v12530, 16
  %vm12603 = vcmp.lt.s32.totalorder %v12531, 16
  %vm12604 = vcmp.lt.s32.totalorder %v12532, 16
  %vm12605 = vcmp.lt.s32.totalorder %v12533, 16
  %vm12606 = vcmp.lt.s32.totalorder %v12534, 16
  %vm12607 = vcmp.lt.s32.totalorder %v12535, 16
  %vm12608 = vcmp.lt.s32.totalorder %v12536, 16
  %vm12609 = vcmp.lt.s32.totalorder %v12537, 16
  %vm12610 = vcmp.lt.s32.totalorder %v12538, 16
  %vm12611 = vcmp.lt.s32.totalorder %v12539, 16
  %vm12612 = vcmp.lt.s32.totalorder %v12540, 16
  %vm12613 = vcmp.lt.s32.totalorder %v12541, 16
  %vm12614 = vcmp.lt.s32.totalorder %v12542, 16
  %vm12615 = vcmp.lt.s32.totalorder %v12543, 16
  %vm12616 = vcmp.lt.s32.totalorder %v12544, 16
  %vm12617 = vcmp.lt.s32.totalorder %v12545, 16
  %vm12618 = vcmp.lt.s32.totalorder %v12546, 16
  %vm12619 = vcmp.lt.s32.totalorder %v12547, 16
  %vm12620 = vcmp.lt.s32.totalorder %v12548, 16
  %vm12621 = vcmp.lt.s32.totalorder %v12549, 16
  %vm12622 = vcmp.lt.s32.totalorder %v12550, 16
  %vm12623 = vcmp.lt.s32.totalorder %v12551, 16
  %vm12624 = vcmp.lt.s32.totalorder %v12552, 16
  %vm12625 = vcmp.lt.s32.totalorder %v12553, 16
  %vm12626 = vcmp.lt.s32.totalorder %v12554, 16
  %vm12627 = vcmp.lt.s32.totalorder %v12555, 16
  %vm12628 = vcmp.lt.s32.totalorder %v12556, 16
  %vm12629 = vcmp.lt.s32.totalorder %v12557, 16
  %vm12630 = vcmp.lt.s32.totalorder %v12558, 16
  %vm12631 = vcmp.lt.s32.totalorder %v12559, 16
  %vm12632 = vcmp.lt.s32.totalorder %v12560, 16
  %vm12633 = vcmp.lt.s32.totalorder %v12561, 16
  %vm12634 = vcmp.lt.s32.totalorder %v12562, 16
  %vm12635 = vcmp.lt.s32.totalorder %v12563, 16
  %vm12636 = vcmp.lt.s32.totalorder %v12564, 16
  %vm12637 = vcmp.lt.s32.totalorder %v12565, 16
  %vm12638 = vcmp.lt.s32.totalorder %v12566, 16
  %vm12639 = vcmp.lt.s32.totalorder %v12567, 16
  %vm12640 = vcmp.lt.s32.totalorder %v12568, 16
  %vm12641 = vcmp.lt.s32.totalorder %v12569, 16
  %vm12642 = vcmp.lt.s32.totalorder %v12570, 16
  %vm12643 = vcmp.lt.s32.totalorder %v12571, 16
  %vm12644 = vcmp.lt.s32.totalorder %v12572, 16
  %vm12645 = vcmp.lt.s32.totalorder %v12573, 16
  %vm12646 = vcmp.lt.s32.totalorder %v12574, 16
  %vm12647 = vcmp.lt.s32.totalorder %v12575, 16
  %v12648 = vsel %vm12576, 1, 0
  %v12649 = vsel %vm12577, 1, 0
  %v12650 = vsel %vm12578, 1, 0
  %v12651 = vsel %vm12579, 1, 0
  %v12652 = vsel %vm12580, 1, 0
  %v12653 = vsel %vm12581, 1, 0
  %v12654 = vsel %vm12582, 1, 0
  %v12655 = vsel %vm12583, 1, 0
  %v12656 = vsel %vm12584, 1, 0
  %v12657 = vsel %vm12585, 1, 0
  %v12658 = vsel %vm12586, 1, 0
  %v12659 = vsel %vm12587, 1, 0
  %v12660 = vsel %vm12588, 1, 0
  %v12661 = vsel %vm12589, 1, 0
  %v12662 = vsel %vm12590, 1, 0
  %v12663 = vsel %vm12591, 1, 0
  %v12664 = vsel %vm12592, 1, 0
  %v12665 = vsel %vm12593, 1, 0
  %v12666 = vsel %vm12594, 1, 0
  %v12667 = vsel %vm12595, 1, 0
  %v12668 = vsel %vm12596, 1, 0
  %v12669 = vsel %vm12597, 1, 0
  %v12670 = vsel %vm12598, 1, 0
  %v12671 = vsel %vm12599, 1, 0
  %v12672 = vsel %vm12600, 1, 0
  %v12673 = vsel %vm12601, 1, 0
  %v12674 = vsel %vm12602, 1, 0
  %v12675 = vsel %vm12603, 1, 0
  %v12676 = vsel %vm12604, 1, 0
  %v12677 = vsel %vm12605, 1, 0
  %v12678 = vsel %vm12606, 1, 0
  %v12679 = vsel %vm12607, 1, 0
  %v12680 = vsel %vm12608, 1, 0
  %v12681 = vsel %vm12609, 1, 0
  %v12682 = vsel %vm12610, 1, 0
  %v12683 = vsel %vm12611, 1, 0
  %v12684 = vsel %vm12612, 1, 0
  %v12685 = vsel %vm12613, 1, 0
  %v12686 = vsel %vm12614, 1, 0
  %v12687 = vsel %vm12615, 1, 0
  %v12688 = vsel %vm12616, 1, 0
  %v12689 = vsel %vm12617, 1, 0
  %v12690 = vsel %vm12618, 1, 0
  %v12691 = vsel %vm12619, 1, 0
  %v12692 = vsel %vm12620, 1, 0
  %v12693 = vsel %vm12621, 1, 0
  %v12694 = vsel %vm12622, 1, 0
  %v12695 = vsel %vm12623, 1, 0
  %v12696 = vsel %vm12624, 1, 0
  %v12697 = vsel %vm12625, 1, 0
  %v12698 = vsel %vm12626, 1, 0
  %v12699 = vsel %vm12627, 1, 0
  %v12700 = vsel %vm12628, 1, 0
  %v12701 = vsel %vm12629, 1, 0
  %v12702 = vsel %vm12630, 1, 0
  %v12703 = vsel %vm12631, 1, 0
  %v12704 = vsel %vm12632, 1, 0
  %v12705 = vsel %vm12633, 1, 0
  %v12706 = vsel %vm12634, 1, 0
  %v12707 = vsel %vm12635, 1, 0
  %v12708 = vsel %vm12636, 1, 0
  %v12709 = vsel %vm12637, 1, 0
  %v12710 = vsel %vm12638, 1, 0
  %v12711 = vsel %vm12639, 1, 0
  %v12712 = vsel %vm12640, 1, 0
  %v12713 = vsel %vm12641, 1, 0
  %v12714 = vsel %vm12642, 1, 0
  %v12715 = vsel %vm12643, 1, 0
  %v12716 = vsel %vm12644, 1, 0
  %v12717 = vsel %vm12645, 1, 0
  %v12718 = vsel %vm12646, 1, 0
  %v12719 = vsel %vm12647, 1, 0
  %vm12720 = vcmp.eq.s32.totalorder %v12648, 1
  %vm12721 = vcmp.eq.s32.totalorder %v12649, 1
  %vm12722 = vcmp.eq.s32.totalorder %v12650, 1
  %vm12723 = vcmp.eq.s32.totalorder %v12651, 1
  %vm12724 = vcmp.eq.s32.totalorder %v12652, 1
  %vm12725 = vcmp.eq.s32.totalorder %v12653, 1
  %vm12726 = vcmp.eq.s32.totalorder %v12654, 1
  %vm12727 = vcmp.eq.s32.totalorder %v12655, 1
  %vm12728 = vcmp.eq.s32.totalorder %v12656, 1
  %vm12729 = vcmp.eq.s32.totalorder %v12657, 1
  %vm12730 = vcmp.eq.s32.totalorder %v12658, 1
  %vm12731 = vcmp.eq.s32.totalorder %v12659, 1
  %vm12732 = vcmp.eq.s32.totalorder %v12660, 1
  %vm12733 = vcmp.eq.s32.totalorder %v12661, 1
  %vm12734 = vcmp.eq.s32.totalorder %v12662, 1
  %vm12735 = vcmp.eq.s32.totalorder %v12663, 1
  %vm12736 = vcmp.eq.s32.totalorder %v12664, 1
  %vm12737 = vcmp.eq.s32.totalorder %v12665, 1
  %vm12738 = vcmp.eq.s32.totalorder %v12666, 1
  %vm12739 = vcmp.eq.s32.totalorder %v12667, 1
  %vm12740 = vcmp.eq.s32.totalorder %v12668, 1
  %vm12741 = vcmp.eq.s32.totalorder %v12669, 1
  %vm12742 = vcmp.eq.s32.totalorder %v12670, 1
  %vm12743 = vcmp.eq.s32.totalorder %v12671, 1
  %vm12744 = vcmp.eq.s32.totalorder %v12672, 1
  %vm12745 = vcmp.eq.s32.totalorder %v12673, 1
  %vm12746 = vcmp.eq.s32.totalorder %v12674, 1
  %vm12747 = vcmp.eq.s32.totalorder %v12675, 1
  %vm12748 = vcmp.eq.s32.totalorder %v12676, 1
  %vm12749 = vcmp.eq.s32.totalorder %v12677, 1
  %vm12750 = vcmp.eq.s32.totalorder %v12678, 1
  %vm12751 = vcmp.eq.s32.totalorder %v12679, 1
  %vm12752 = vcmp.eq.s32.totalorder %v12680, 1
  %vm12753 = vcmp.eq.s32.totalorder %v12681, 1
  %vm12754 = vcmp.eq.s32.totalorder %v12682, 1
  %vm12755 = vcmp.eq.s32.totalorder %v12683, 1
  %vm12756 = vcmp.eq.s32.totalorder %v12684, 1
  %vm12757 = vcmp.eq.s32.totalorder %v12685, 1
  %vm12758 = vcmp.eq.s32.totalorder %v12686, 1
  %vm12759 = vcmp.eq.s32.totalorder %v12687, 1
  %vm12760 = vcmp.eq.s32.totalorder %v12688, 1
  %vm12761 = vcmp.eq.s32.totalorder %v12689, 1
  %vm12762 = vcmp.eq.s32.totalorder %v12690, 1
  %vm12763 = vcmp.eq.s32.totalorder %v12691, 1
  %vm12764 = vcmp.eq.s32.totalorder %v12692, 1
  %vm12765 = vcmp.eq.s32.totalorder %v12693, 1
  %vm12766 = vcmp.eq.s32.totalorder %v12694, 1
  %vm12767 = vcmp.eq.s32.totalorder %v12695, 1
  %vm12768 = vcmp.eq.s32.totalorder %v12696, 1
  %vm12769 = vcmp.eq.s32.totalorder %v12697, 1
  %vm12770 = vcmp.eq.s32.totalorder %v12698, 1
  %vm12771 = vcmp.eq.s32.totalorder %v12699, 1
  %vm12772 = vcmp.eq.s32.totalorder %v12700, 1
  %vm12773 = vcmp.eq.s32.totalorder %v12701, 1
  %vm12774 = vcmp.eq.s32.totalorder %v12702, 1
  %vm12775 = vcmp.eq.s32.totalorder %v12703, 1
  %vm12776 = vcmp.eq.s32.totalorder %v12704, 1
  %vm12777 = vcmp.eq.s32.totalorder %v12705, 1
  %vm12778 = vcmp.eq.s32.totalorder %v12706, 1
  %vm12779 = vcmp.eq.s32.totalorder %v12707, 1
  %vm12780 = vcmp.eq.s32.totalorder %v12708, 1
  %vm12781 = vcmp.eq.s32.totalorder %v12709, 1
  %vm12782 = vcmp.eq.s32.totalorder %v12710, 1
  %vm12783 = vcmp.eq.s32.totalorder %v12711, 1
  %vm12784 = vcmp.eq.s32.totalorder %v12712, 1
  %vm12785 = vcmp.eq.s32.totalorder %v12713, 1
  %vm12786 = vcmp.eq.s32.totalorder %v12714, 1
  %vm12787 = vcmp.eq.s32.totalorder %v12715, 1
  %vm12788 = vcmp.eq.s32.totalorder %v12716, 1
  %vm12789 = vcmp.eq.s32.totalorder %v12717, 1
  %vm12790 = vcmp.eq.s32.totalorder %v12718, 1
  %vm12791 = vcmp.eq.s32.totalorder %v12719, 1
  %v12792 = vsel %vm12720, %v11279, 0.0
  %v12793 = vsel %vm12721, %v11280, 0.0
  %v12794 = vsel %vm12722, %v11281, 0.0
  %v12795 = vsel %vm12723, %v11282, 0.0
  %v12796 = vsel %vm12724, %v11283, 0.0
  %v12797 = vsel %vm12725, %v11284, 0.0
  %v12798 = vsel %vm12726, %v11285, 0.0
  %v12799 = vsel %vm12727, %v11286, 0.0
  %v12800 = vsel %vm12728, %v11287, 0.0
  %v12801 = vsel %vm12729, %v11288, 0.0
  %v12802 = vsel %vm12730, %v11289, 0.0
  %v12803 = vsel %vm12731, %v11290, 0.0
  %v12804 = vsel %vm12732, %v11291, 0.0
  %v12805 = vsel %vm12733, %v11292, 0.0
  %v12806 = vsel %vm12734, %v11293, 0.0
  %v12807 = vsel %vm12735, %v11294, 0.0
  %v12808 = vsel %vm12736, %v11295, 0.0
  %v12809 = vsel %vm12737, %v11296, 0.0
  %v12810 = vsel %vm12738, %v11297, 0.0
  %v12811 = vsel %vm12739, %v11298, 0.0
  %v12812 = vsel %vm12740, %v11299, 0.0
  %v12813 = vsel %vm12741, %v11300, 0.0
  %v12814 = vsel %vm12742, %v11301, 0.0
  %v12815 = vsel %vm12743, %v11302, 0.0
  %v12816 = vsel %vm12744, %v11303, 0.0
  %v12817 = vsel %vm12745, %v11304, 0.0
  %v12818 = vsel %vm12746, %v11305, 0.0
  %v12819 = vsel %vm12747, %v11306, 0.0
  %v12820 = vsel %vm12748, %v11307, 0.0
  %v12821 = vsel %vm12749, %v11308, 0.0
  %v12822 = vsel %vm12750, %v11309, 0.0
  %v12823 = vsel %vm12751, %v11310, 0.0
  %v12824 = vsel %vm12752, %v11311, 0.0
  %v12825 = vsel %vm12753, %v11312, 0.0
  %v12826 = vsel %vm12754, %v11313, 0.0
  %v12827 = vsel %vm12755, %v11314, 0.0
  %v12828 = vsel %vm12756, %v11315, 0.0
  %v12829 = vsel %vm12757, %v11316, 0.0
  %v12830 = vsel %vm12758, %v11317, 0.0
  %v12831 = vsel %vm12759, %v11318, 0.0
  %v12832 = vsel %vm12760, %v11319, 0.0
  %v12833 = vsel %vm12761, %v11320, 0.0
  %v12834 = vsel %vm12762, %v11321, 0.0
  %v12835 = vsel %vm12763, %v11322, 0.0
  %v12836 = vsel %vm12764, %v11323, 0.0
  %v12837 = vsel %vm12765, %v11324, 0.0
  %v12838 = vsel %vm12766, %v11325, 0.0
  %v12839 = vsel %vm12767, %v11326, 0.0
  %v12840 = vsel %vm12768, %v11327, 0.0
  %v12841 = vsel %vm12769, %v11328, 0.0
  %v12842 = vsel %vm12770, %v11329, 0.0
  %v12843 = vsel %vm12771, %v11330, 0.0
  %v12844 = vsel %vm12772, %v11331, 0.0
  %v12845 = vsel %vm12773, %v11332, 0.0
  %v12846 = vsel %vm12774, %v11333, 0.0
  %v12847 = vsel %vm12775, %v11334, 0.0
  %v12848 = vsel %vm12776, %v11335, 0.0
  %v12849 = vsel %vm12777, %v11336, 0.0
  %v12850 = vsel %vm12778, %v11337, 0.0
  %v12851 = vsel %vm12779, %v11338, 0.0
  %v12852 = vsel %vm12780, %v11339, 0.0
  %v12853 = vsel %vm12781, %v11340, 0.0
  %v12854 = vsel %vm12782, %v11341, 0.0
  %v12855 = vsel %vm12783, %v11342, 0.0
  %v12856 = vsel %vm12784, %v11343, 0.0
  %v12857 = vsel %vm12785, %v11344, 0.0
  %v12858 = vsel %vm12786, %v11345, 0.0
  %v12859 = vsel %vm12787, %v11346, 0.0
  %v12860 = vsel %vm12788, %v11347, 0.0
  %v12861 = vsel %vm12789, %v11348, 0.0
  %v12862 = vsel %vm12790, %v11349, 0.0
  %v12863 = vsel %vm12791, %v11350, 0.0
  %v12864 = vadd.f32 %v12792, %v12793
  %v12865 = vadd.f32 %v12864, %v12794
  %v12866 = vadd.f32 %v12865, %v12795
  %v12867 = vadd.f32 %v12866, %v12796
  %v12868 = vadd.f32 %v12867, %v12797
  %v12869 = vadd.f32 %v12868, %v12798
  %v12870 = vadd.f32 %v12869, %v12799
  %v12871 = vadd.f32 %v12870, %v12800
  %v12872 = vadd.f32 %v12871, %v12801
  %v12873 = vadd.f32 %v12872, %v12802
  %v12874 = vadd.f32 %v12873, %v12803
  %v12875 = vadd.f32 %v12874, %v12804
  %v12876 = vadd.f32 %v12875, %v12805
  %v12877 = vadd.f32 %v12876, %v12806
  %v12878 = vadd.f32 %v12877, %v12807
  %v12879 = vadd.f32 %v12878, %v12808
  %v12880 = vadd.f32 %v12879, %v12809
  %v12881 = vadd.f32 %v12880, %v12810
  %v12882 = vadd.f32 %v12881, %v12811
  %v12883 = vadd.f32 %v12882, %v12812
  %v12884 = vadd.f32 %v12883, %v12813
  %v12885 = vadd.f32 %v12884, %v12814
  %v12886 = vadd.f32 %v12885, %v12815
  %v12887 = vadd.f32 %v12886, %v12816
  %v12888 = vadd.f32 %v12887, %v12817
  %v12889 = vadd.f32 %v12888, %v12818
  %v12890 = vadd.f32 %v12889, %v12819
  %v12891 = vadd.f32 %v12890, %v12820
  %v12892 = vadd.f32 %v12891, %v12821
  %v12893 = vadd.f32 %v12892, %v12822
  %v12894 = vadd.f32 %v12893, %v12823
  %v12895 = vadd.f32 %v12894, %v12824
  %v12896 = vadd.f32 %v12895, %v12825
  %v12897 = vadd.f32 %v12896, %v12826
  %v12898 = vadd.f32 %v12897, %v12827
  %v12899 = vrot.slane %v12898, 4
  %v12900 = vadd.f32 %v12898, %v12899
  %v12901 = vrot.slane %v12900, 2
  %v12902 = vadd.f32 %v12900, %v12901
  %v12903 = vrot.slane %v12902, 1
  %v12904 = vadd.f32 %v12902, %v12903
  %v12905 = vadd.f32 %v12828, %v12829
  %v12906 = vadd.f32 %v12905, %v12830
  %v12907 = vadd.f32 %v12906, %v12831
  %v12908 = vadd.f32 %v12907, %v12832
  %v12909 = vadd.f32 %v12908, %v12833
  %v12910 = vadd.f32 %v12909, %v12834
  %v12911 = vadd.f32 %v12910, %v12835
  %v12912 = vadd.f32 %v12911, %v12836
  %v12913 = vadd.f32 %v12912, %v12837
  %v12914 = vadd.f32 %v12913, %v12838
  %v12915 = vadd.f32 %v12914, %v12839
  %v12916 = vadd.f32 %v12915, %v12840
  %v12917 = vadd.f32 %v12916, %v12841
  %v12918 = vadd.f32 %v12917, %v12842
  %v12919 = vadd.f32 %v12918, %v12843
  %v12920 = vadd.f32 %v12919, %v12844
  %v12921 = vadd.f32 %v12920, %v12845
  %v12922 = vadd.f32 %v12921, %v12846
  %v12923 = vadd.f32 %v12922, %v12847
  %v12924 = vadd.f32 %v12923, %v12848
  %v12925 = vadd.f32 %v12924, %v12849
  %v12926 = vadd.f32 %v12925, %v12850
  %v12927 = vadd.f32 %v12926, %v12851
  %v12928 = vadd.f32 %v12927, %v12852
  %v12929 = vadd.f32 %v12928, %v12853
  %v12930 = vadd.f32 %v12929, %v12854
  %v12931 = vadd.f32 %v12930, %v12855
  %v12932 = vadd.f32 %v12931, %v12856
  %v12933 = vadd.f32 %v12932, %v12857
  %v12934 = vadd.f32 %v12933, %v12858
  %v12935 = vadd.f32 %v12934, %v12859
  %v12936 = vadd.f32 %v12935, %v12860
  %v12937 = vadd.f32 %v12936, %v12861
  %v12938 = vadd.f32 %v12937, %v12862
  %v12939 = vadd.f32 %v12938, %v12863
  %v12940 = vrot.slane %v12939, 4
  %v12941 = vadd.f32 %v12939, %v12940
  %v12942 = vrot.slane %v12941, 2
  %v12943 = vadd.f32 %v12941, %v12942
  %v12944 = vrot.slane %v12943, 1
  %v12945 = vadd.f32 %v12943, %v12944
  %v12946 = vmul.f32 %v12904, 0.00390625
  %v12947 = vmul.f32 %v12945, 0.00390625
  %v12948 = vpack.c.bf16 %v12946, %v12946
  %v12949 = vpack.c.bf16 %v12947, %v12947
  %v12950 = vld [vmem:[%s3] sm:$0xff]
  %v12951 = vld [vmem:[%s3 + $0x8] sm:$0xff]
  %v12952 = vld [vmem:[%s3 + $0x10] sm:$0xff]
  %v12953 = vld [vmem:[%s3 + $0x18] sm:$0xff]
  %v12954 = vld [vmem:[%s3 + $0x20] sm:$0xff]
  %v12955 = vld [vmem:[%s3 + $0x28] sm:$0xff]
  %v12956 = vld [vmem:[%s3 + $0x30] sm:$0xff]
  %v12957 = vld [vmem:[%s3 + $0x38] sm:$0xff]
  %v12958 = vld [vmem:[%s3 + $0x40] sm:$0xff]
  %v12959 = vld [vmem:[%s3 + $0x48] sm:$0xff]
  %v12960 = vld [vmem:[%s3 + $0x50] sm:$0xff]
  %v12961 = vld [vmem:[%s3 + $0x58] sm:$0xff]
  %v12962 = vld [vmem:[%s3 + $0x60] sm:$0xff]
  %v12963 = vld [vmem:[%s3 + $0x68] sm:$0xff]
  %v12964 = vld [vmem:[%s3 + $0x70] sm:$0xff]
  %v12965 = vld [vmem:[%s3 + $0x78] sm:$0xff]
  %v12966 = vld [vmem:[%s4] sm:$0x3]
  %v12968 = vlaneseq
  %v12969 = vshrl.u32 %v12968, 7
  %v12970 = vsub.s32 0, %v12969
  %v12971 = vrot.slane %v12966, %v12970
  %v12972 = vlaneseq
  %v12973 = vshrl.u32 %v12972, 7
  %v12974 = vsub.s32 1, %v12973
  %v12975 = vrot.slane %v12966, %v12974
  %v12980 = vunpack.c.l.b16 %v12948
  %v12981 = vunpack.c.l.b16 %v12949
  %vm12982 = vcmask 1041409
  %v12983 = vsel %vm12982, %v12981, %v12980
  %v12984 = vpack.c.b16 %v12983, %v12983
  %v13002 = vunpack.c.l.b16 %v12950
  %v13003 = vunpack.c.h.b16 %v12950
  %v13004 = vunpack.c.l.b16 %v12951
  %v13005 = vunpack.c.h.b16 %v12951
  %v13006 = vunpack.c.l.b16 %v12952
  %v13007 = vunpack.c.h.b16 %v12952
  %v13008 = vunpack.c.l.b16 %v12953
  %v13009 = vunpack.c.h.b16 %v12953
  %v13010 = vunpack.c.l.b16 %v12954
  %v13011 = vunpack.c.h.b16 %v12954
  %v13012 = vunpack.c.l.b16 %v12955
  %v13013 = vunpack.c.h.b16 %v12955
  %v13014 = vunpack.c.l.b16 %v12956
  %v13015 = vunpack.c.h.b16 %v12956
  %v13016 = vunpack.c.l.b16 %v12957
  %v13017 = vunpack.c.h.b16 %v12957
  %v13018 = vunpack.c.l.b16 %v12958
  %v13019 = vunpack.c.h.b16 %v12958
  %v13020 = vunpack.c.l.b16 %v12959
  %v13021 = vunpack.c.h.b16 %v12959
  %v13022 = vunpack.c.l.b16 %v12960
  %v13023 = vunpack.c.h.b16 %v12960
  %v13024 = vunpack.c.l.b16 %v12961
  %v13025 = vunpack.c.h.b16 %v12961
  %v13026 = vunpack.c.l.b16 %v12962
  %v13027 = vunpack.c.h.b16 %v12962
  %v13028 = vunpack.c.l.b16 %v12963
  %v13029 = vunpack.c.h.b16 %v12963
  %v13030 = vunpack.c.l.b16 %v12964
  %v13031 = vunpack.c.h.b16 %v12964
  %v13032 = vunpack.c.l.b16 %v12965
  %v13033 = vunpack.c.h.b16 %v12965
  %v13034 = vpack.c.b16 %v13004, %v13002
  %v13035 = vpack.c.b16 %v13005, %v13003
  %v13036 = vpack.c.b16 %v13008, %v13006
  %v13037 = vpack.c.b16 %v13009, %v13007
  %v13038 = vpack.c.b16 %v13012, %v13010
  %v13039 = vpack.c.b16 %v13013, %v13011
  %v13040 = vpack.c.b16 %v13016, %v13014
  %v13041 = vpack.c.b16 %v13017, %v13015
  %v13042 = vpack.c.b16 %v13020, %v13018
  %v13043 = vpack.c.b16 %v13021, %v13019
  %v13044 = vpack.c.b16 %v13024, %v13022
  %v13045 = vpack.c.b16 %v13025, %v13023
  %v13046 = vpack.c.b16 %v13028, %v13026
  %v13047 = vpack.c.b16 %v13029, %v13027
  %v13048 = vpack.c.b16 %v13032, %v13030
  %v13049 = vpack.c.b16 %v13033, %v13031
  %13066 = vmatprep.subr.bf16.mxu0 %v13049
  %13067 = vmatpush1.bf16.msra.mxu0 %v13048
  %13068 = vmatprep.subr.bf16.mxu0 %v13047
  %13069 = vmatpush1.bf16.msra.mxu0 %v13046
  %13070 = vmatprep.subr.bf16.mxu0 %v13045
  %13071 = vmatpush1.bf16.msra.mxu0 %v13044
  %13072 = vmatprep.subr.bf16.mxu0 %v13043
  %13073 = vmatpush1.bf16.msra.mxu0 %v13042
  %13074 = vmatprep.subr.bf16.mxu0 %v13041
  %13075 = vmatpush1.bf16.msra.mxu0 %v13040
  %13076 = vmatprep.subr.bf16.mxu0 %v13039
  %13077 = vmatpush1.bf16.msra.mxu0 %v13038
  %13078 = vmatprep.subr.bf16.mxu0 %v13037
  %13079 = vmatpush1.bf16.msra.mxu0 %v13036
  %13080 = vmatprep.subr.bf16.mxu0 %v13035
  %13081 = vmatpush1.bf16.msra.mxu0 %v13034
  %13082 = vmatprep.subr.bf16.mxu0 0
  %13083 = vmatpush2.bf16.msra.mxu0 0
  %13084 = vmatprep.subr.bf16.mxu0 0
  %13085 = vmatpush2.bf16.msra.mxu0 0
  %13086 = vmatprep.subr.bf16.mxu0 0
  %13087 = vmatpush2.bf16.msra.mxu0 0
  %13088 = vmatprep.subr.bf16.mxu0 0
  %13089 = vmatpush2.bf16.msra.mxu0 0
  %13090 = vmatprep.subr.bf16.mxu0 0
  %13091 = vmatpush2.bf16.msra.mxu0 0
  %13092 = vmatprep.subr.bf16.mxu0 0
  %13093 = vmatpush2.bf16.msra.mxu0 0
  %13094 = vmatprep.subr.bf16.mxu0 0
  %13095 = vmatpush2.bf16.msra.mxu0 0
  %13096 = vmatprep.subr.bf16.mxu0 0
  %13097 = vmatpush2.bf16.msra.mxu0 0
  %13098 = vmatprep.mubr.bf16.mxu0 0
  %13099 = vmatmul.mubr.bf16.gmra.mxu0 %v12984
  %v13100 = vpop.f32.mrf.mxu0
  %v13101 = vadd.f32 %v12971, %v13100
  %v13102 = vpop.f32.mrf.mxu0
  %v13103 = vadd.f32 %v12975, %v13102
  %v13104 = vpop.f32.mrf.mxu0
  %v13105 = vpop.f32.mrf.mxu0
  %13106 = vdwg.mxu0
  %v13107 = vmax.f32 %v13101, 0.0
  %v13108 = vpack.c.bf16 %v13107, %v13107
  %v13109 = vld [vmem:[%s5] sm:$0xf]
  %v13110 = vld [vmem:[%s5 + $0x4] sm:$0xf]
  %v13111 = vld [vmem:[%s5 + $0x8] sm:$0xf]
  %v13112 = vld [vmem:[%s5 + $0xc] sm:$0xf]
  %v13113 = vld [vmem:[%s5 + $0x10] sm:$0xf]
  %v13114 = vld [vmem:[%s5 + $0x14] sm:$0xf]
  %v13115 = vld [vmem:[%s5 + $0x18] sm:$0xf]
  %v13116 = vld [vmem:[%s5 + $0x1c] sm:$0xf]
  %v13117 = vld [vmem:[%s5 + $0x20] sm:$0xf]
  %v13118 = vld [vmem:[%s5 + $0x24] sm:$0xf]
  %v13119 = vld [vmem:[%s5 + $0x28] sm:$0xf]
  %v13120 = vld [vmem:[%s5 + $0x2c] sm:$0xf]
  %v13121 = vld [vmem:[%s5 + $0x30] sm:$0xf]
  %v13122 = vld [vmem:[%s5 + $0x34] sm:$0xf]
  %v13123 = vld [vmem:[%s5 + $0x38] sm:$0xf]
  %v13124 = vld [vmem:[%s5 + $0x3c] sm:$0xf]
  %v13125 = vld [vmem:[%s6] sm:$0x1]
  %v13127 = vlaneseq
  %v13128 = vshrl.u32 %v13127, 7
  %v13129 = vsub.s32 0, %v13128
  %v13130 = vrot.slane %v13125, %v13129
  %v13148 = vunpack.c.l.b16 %v13109
  %v13149 = vunpack.c.l.b16 %v13110
  %v13150 = vunpack.c.l.b16 %v13111
  %v13151 = vunpack.c.l.b16 %v13112
  %v13152 = vunpack.c.l.b16 %v13113
  %v13153 = vunpack.c.l.b16 %v13114
  %v13154 = vunpack.c.l.b16 %v13115
  %v13155 = vunpack.c.l.b16 %v13116
  %v13156 = vunpack.c.l.b16 %v13117
  %v13157 = vunpack.c.l.b16 %v13118
  %v13158 = vunpack.c.l.b16 %v13119
  %v13159 = vunpack.c.l.b16 %v13120
  %v13160 = vunpack.c.l.b16 %v13121
  %v13161 = vunpack.c.l.b16 %v13122
  %v13162 = vunpack.c.l.b16 %v13123
  %v13163 = vunpack.c.l.b16 %v13124
  %v13164 = vpack.c.b16 %v13149, %v13148
  %v13165 = vpack.c.b16 %v13151, %v13150
  %v13166 = vpack.c.b16 %v13153, %v13152
  %v13167 = vpack.c.b16 %v13155, %v13154
  %v13168 = vpack.c.b16 %v13157, %v13156
  %v13169 = vpack.c.b16 %v13159, %v13158
  %v13170 = vpack.c.b16 %v13161, %v13160
  %v13171 = vpack.c.b16 %v13163, %v13162
  %13180 = vmatprep.subr.bf16.mxu0 0
  %13181 = vmatpush1.bf16.msra.mxu0 %v13171
  %13182 = vmatprep.subr.bf16.mxu0 0
  %13183 = vmatpush1.bf16.msra.mxu0 %v13170
  %13184 = vmatprep.subr.bf16.mxu0 0
  %13185 = vmatpush1.bf16.msra.mxu0 %v13169
  %13186 = vmatprep.subr.bf16.mxu0 0
  %13187 = vmatpush1.bf16.msra.mxu0 %v13168
  %13188 = vmatprep.subr.bf16.mxu0 0
  %13189 = vmatpush1.bf16.msra.mxu0 %v13167
  %13190 = vmatprep.subr.bf16.mxu0 0
  %13191 = vmatpush1.bf16.msra.mxu0 %v13166
  %13192 = vmatprep.subr.bf16.mxu0 0
  %13193 = vmatpush1.bf16.msra.mxu0 %v13165
  %13194 = vmatprep.subr.bf16.mxu0 0
  %13195 = vmatpush1.bf16.msra.mxu0 %v13164
  %13196 = vmatprep.subr.bf16.mxu0 0
  %13197 = vmatpush2.bf16.msra.mxu0 0
  %13198 = vmatprep.subr.bf16.mxu0 0
  %13199 = vmatpush2.bf16.msra.mxu0 0
  %13200 = vmatprep.subr.bf16.mxu0 0
  %13201 = vmatpush2.bf16.msra.mxu0 0
  %13202 = vmatprep.subr.bf16.mxu0 0
  %13203 = vmatpush2.bf16.msra.mxu0 0
  %13204 = vmatprep.subr.bf16.mxu0 0
  %13205 = vmatpush2.bf16.msra.mxu0 0
  %13206 = vmatprep.subr.bf16.mxu0 0
  %13207 = vmatpush2.bf16.msra.mxu0 0
  %13208 = vmatprep.subr.bf16.mxu0 0
  %13209 = vmatpush2.bf16.msra.mxu0 0
  %13210 = vmatprep.subr.bf16.mxu0 0
  %13211 = vmatpush2.bf16.msra.mxu0 0
  %13212 = vmatprep.mubr.bf16.mxu0 0
  %13213 = vmatmul.mubr.bf16.gmra.mxu0 %v13108
  %v13214 = vpop.f32.mrf.mxu0
  %v13215 = vadd.f32 %v13130, %v13214
  %v13216 = vpop.f32.mrf.mxu0
  %v13217 = vpop.f32.mrf.mxu0
  %v13218 = vpop.f32.mrf.mxu0
  %13219 = vdwg.mxu0
  %13220 = vst [vmem:[%s7] sm:$0x3] %v13215
  %13221 = vst [vmem:[%s7 + $0x2] sm:$0x3] %v13103
  // Predicated region
  $region30: #{metric_model_forward.1} parent=0 // pred_check
    _
  $region31: #{metric_model_forward.1} parent=0 // pred_check_branch
    %13223 = sbr.rel (0) target = $region33
  $region32: #{metric_model_forward.1} parent=0 // pred_region
    _
  $region33: #{metric_model_forward.1} parent=0 // pred_fallthru
    _
  // Predicated region
  $region34: #{metric_model_forward.1} parent=0 // pred_check
    _
  $region35: #{metric_model_forward.1} parent=0 // pred_check_branch
    %13225 = sbr.rel (0) target = $region37
  $region36: #{metric_model_forward.1} parent=0 // pred_region
    _
  $region37: #{metric_model_forward.1} parent=0 // pred_fallthru
    _

</llo_original>
